<compile_context>
chip_gen: v7x
topology: tpu7x:2x2x1
jax: 0.10.0
libtpu: 0.0.40
codegen_flags: <defaults>
</compile_context>

<pallas_src>
from functools import partial

import jax
import jax.numpy as jnp
from jax.experimental import pallas as pl
from jax.experimental.pallas import tpu as pltpu


def _reward_kernel(tok_ref, mask_ref, set_ref, dir_ref, out_ref, *, w_cos, w_jac):
    TB, N, L, H = tok_ref.shape          # one batch tile: TB items, N sentences
    E = N - 1
    X = TB * N

    # ---- mean pooling over tokens, as a batched (1,L)x(L,H) MXU matmul ------
    # Folding the mask multiply into the contraction avoids materializing the
    # (TB,N,L,H) masked temporary on the VPU and the XLU reduce over L.
    tok = tok_ref[...].reshape(X, L, H)                       # (X, L, H)
    mask = mask_ref[...].reshape(X, L)                        # (X, L)
    summed = jnp.einsum(
        'xql,xlh->xqh',
        mask.astype(tok.dtype).reshape(X, 1, L), tok,
        preferred_element_type=jnp.float32,
    )[:, 0, :]                                                # (X, H) f32
    counts = jnp.maximum(
        jnp.sum(mask.astype(jnp.float32), axis=-1, keepdims=True), 1e-9)
    emb = (summed / counts).reshape(TB, N, H)                 # (TB, N, H) f32

    gen = emb[:, 0:1, :]                                      # (TB, 1, H)
    ans = emb[:, 1:, :]                                       # (TB, E, H)

    # ---- cosine similarity, clamped at 0 (dots on the MXU) ------------------
    dots = jnp.einsum('bqh,beh->bqe', gen, ans,
                      preferred_element_type=jnp.float32,
                      precision=jax.lax.Precision.HIGHEST)[:, 0, :]   # (TB, E)
    g_norm = jnp.sqrt(jnp.sum(gen[:, 0, :] * gen[:, 0, :], axis=-1,
                              keepdims=True))                 # (TB, 1)
    a_norm = jnp.sqrt(jnp.sum(ans * ans, axis=-1))            # (TB, E)
    eps = 1e-8
    cos = dots / (jnp.maximum(g_norm, eps) * jnp.maximum(a_norm, eps))
    cos = jnp.maximum(cos, 0.0)                               # coses[coses<0] = 0

    # ---- jaccard of token-id sets via binary-indicator algebra --------------
    # tok_set is strictly {0,1}: min(g,a) == g*a and max(g,a) == g+a-g*a, so
    # |g&a| = g.a (MXU) and |g|a| = |g| + |a| - g.a.  Counts are small
    # integers, exact in f32 accumulation.
    ind = set_ref[...].astype(jnp.float32)                    # (TB, N, V)
    sizes = jnp.sum(ind, axis=-1)                             # (TB, N)
    g_set = ind[:, 0:1, :]                                    # (TB, 1, V)
    a_set = ind[:, 1:, :]                                     # (TB, E, V)
    inter = jnp.einsum('bqv,bev->bqe', g_set, a_set,
                       preferred_element_type=jnp.float32)[:, 0, :]   # (TB, E)
    union = sizes[:, 0:1] + sizes[:, 1:] - inter
    jac = inter / jnp.maximum(union, 1e-9)

    sim = w_cos * cos + w_jac * jac                           # (TB, E)

    # ---- max over answers; pick the matching reward direction ---------------
    value = jnp.max(sim, axis=-1, keepdims=True)              # (TB, 1)
    idx = jnp.argmax(sim, axis=-1)                            # (TB,)
    e_iota = jax.lax.broadcasted_iota(jnp.int32, sim.shape, 1)
    onehot = (e_iota == idx[:, None]).astype(sim.dtype)       # (TB, E)
    dir_sel = jnp.sum(onehot * dir_ref[...], axis=-1, keepdims=True)  # (TB, 1)

    out_ref[...] = (value * dir_sel).astype(out_ref.dtype)


def reward_by_similarity(tok_emb, mask, tok_set, direction,
                         weight_for_cos_and_jaccard=(0.5, 0.5),
                         batch_tile=None):
    B, N, L, H = tok_emb.shape
    V = tok_set.shape[-1]
    E = N - 1

    # Batch tile: pick the biggest that fits VMEM with double buffering.
    # At real BERT sizes re-derive per generation (v7x has 64 MiB VMEM vs
    # 128 MiB on v5e/v6e, so roughly half the tile).
    if batch_tile is None:
        batch_tile = B
    TB = min(batch_tile, B)
    assert B % TB == 0, "batch must be divisible by batch_tile"
    grid = (B // TB,)

    kernel = partial(
        _reward_kernel,
        w_cos=float(weight_for_cos_and_jaccard[0]),
        w_jac=float(weight_for_cos_and_jaccard[1]),
    )

    return pl.pallas_call(
        kernel,
        out_shape=jax.ShapeDtypeStruct((B, 1), jnp.float32),
        grid=grid,
        in_specs=[
            pl.BlockSpec((TB, N, L, H), lambda b: (b, 0, 0, 0)),
            pl.BlockSpec((TB, N, L), lambda b: (b, 0, 0)),
            pl.BlockSpec((TB, N, V), lambda b: (b, 0, 0)),
            pl.BlockSpec((1, E), lambda b: (0, 0)),
        ],
        out_specs=pl.BlockSpec((TB, 1), lambda b: (b, 0)),
        compiler_params=pltpu.CompilerParams(
            # Batch grid steps are independent -> shard across TCs (v7x).
            dimension_semantics=("parallel",),
            # Explicit scoped-VMEM budget, safely below every generation's
            # physical VMEM (v7x = 64 MiB); raise on v5e/v6e for bigger tiles.
            vmem_limit_bytes=48 * 1024 * 1024,
        ),
    )(tok_emb, mask, tok_set, direction)


def _reference(tok_emb, mask, tok_set, direction, w=(0.5, 0.5)):
    tok_emb = tok_emb.astype(jnp.float32)
    summed = jnp.sum(tok_emb * mask[..., None], axis=2)
    counts = jnp.maximum(jnp.sum(mask, axis=2), 1e-9)[..., None]
    emb = summed / counts
    gen, ans = emb[:, :1], emb[:, 1:]
    dots = jnp.sum(gen * ans, -1)
    cos = dots / (jnp.maximum(jnp.linalg.norm(gen, axis=-1), 1e-8) *
                  jnp.maximum(jnp.linalg.norm(ans, axis=-1), 1e-8))
    cos = jnp.maximum(cos, 0.0)
    gs, as_ = tok_set[:, :1], tok_set[:, 1:]
    jac = (jnp.sum(jnp.minimum(gs, as_), -1) /
           jnp.maximum(jnp.sum(jnp.maximum(gs, as_), -1), 1e-9))
    sim = w[0] * cos + w[1] * jac
    val = jnp.max(sim, -1, keepdims=True)
    idx = jnp.argmax(sim, -1)
    return val * direction[0, idx][:, None]


if __name__ == "__main__":
    key = jax.random.PRNGKey(0)
    B = 16                               # sized so the batch-tiled grid has 2 steps
    E_good, E_bad = 2, 2                 # 2 good + 2 bad answers per item
    E = E_good + E_bad
    N = 1 + E                            # gen text + answers
    L, H, V = 8, 32, 128                 # seq len, hidden, vocab (jaccard sets)

    k_emb, k_len, k_ids = jax.random.split(key, 3)
    # Large tensor fed as bf16 (MXU/DMA dtype); accumulation stays f32 in-kernel.
    tok_emb = jax.random.normal(k_emb, (B, N, L, H), jnp.float32).astype(jnp.bfloat16)

    lengths = jax.random.randint(k_len, (B, N), 3, L + 1)
    pos = jnp.arange(L)[None, None, :]
    mask = (pos < lengths[..., None]).astype(jnp.float32)            # (B, N, L)

    ids = jax.random.randint(k_ids, (B, N, L), 0, V)                 # token ids
    onehot_ids = jax.nn.one_hot(ids, V, dtype=jnp.float32)           # (B, N, L, V)
    tok_set = (jnp.sum(onehot_ids * mask[..., None], axis=2) > 0).astype(jnp.float32)

    direction = jnp.concatenate(
        [jnp.ones((E_good,), jnp.float32), -jnp.ones((E_bad,), jnp.float32)]
    ).reshape(1, E)

    reward = reward_by_similarity(tok_emb, mask, tok_set, direction, batch_tile=8)
    reward = jax.block_until_ready(reward)

    ref = _reference(tok_emb, mask, tok_set, direction)
    assert reward.shape == (B, 1)
    assert jnp.allclose(reward, ref, rtol=1e-3, atol=1e-3), (reward, ref)

    print("KERNEL_OK")
</pallas_src>

<mosaic_0001>
module attributes {stable_mosaic.version = 11 : i64} {
  func.func @_reward_kernel(%arg0: i32, %arg1: memref<8x5x8x32xbf16, #tpu.memory_space<vmem>>, %arg2: memref<8x5x8xf32, #tpu.memory_space<vmem>>, %arg3: memref<8x5x128xf32, #tpu.memory_space<vmem>>, %arg4: memref<1x4xf32, #tpu.memory_space<vmem>>, %arg5: memref<8x1xf32, #tpu.memory_space<vmem>>) attributes {dimension_semantics = [#tpu.dimension_semantics<parallel>], iteration_bounds = array<i64: 2>, scalar_prefetch = 0 : i64, scratch_operands = 0 : i64, tpu.core_type = #tpu.core_type<tc>, window_params = [{transform_indices = @transform_0, window_bounds = array<i64: 8, 5, 8, 32>}, {transform_indices = @transform_1, window_bounds = array<i64: 8, 5, 8>}, {transform_indices = @transform_2, window_bounds = array<i64: 8, 5, 128>}, {pipeline_mode = #tpu.pipeline_mode<synchronous>, transform_indices = @transform_3, window_bounds = array<i64: 1, 4>}, {transform_indices = @transform_4, window_bounds = array<i64: 8, 1>}]} {
    %c0 = arith.constant 0 : index
    %c0_0 = arith.constant 0 : index
    %c0_1 = arith.constant 0 : index
    %c0_2 = arith.constant 0 : index
    %0 = vector.load %arg1[%c0, %c0_0, %c0_1, %c0_2] : memref<8x5x8x32xbf16, #tpu.memory_space<vmem>>, vector<8x5x8x32xbf16>
    %1 = vector.shape_cast %0 : vector<8x5x8x32xbf16> to vector<40x8x32xbf16>
    %c0_3 = arith.constant 0 : index
    %c0_4 = arith.constant 0 : index
    %c0_5 = arith.constant 0 : index
    %2 = vector.load %arg2[%c0_3, %c0_4, %c0_5] : memref<8x5x8xf32, #tpu.memory_space<vmem>>, vector<8x5x8xf32>
    %3 = vector.shape_cast %2 : vector<8x5x8xf32> to vector<40x8xf32>
    %4 = arith.truncf %3 : vector<40x8xf32> to vector<40x8xbf16>
    %5 = vector.shape_cast %4 : vector<40x8xbf16> to vector<40x1x8xbf16>
    "tpu.trace_start"() <{level = 10 : i32, message = "xql,xlh->xqh"}> : () -> ()
    %cst = arith.constant dense<0.000000e+00> : vector<40x1x32xf32>
    %6 = tpu.matmul %5, %1, %cst {dimension_numbers = #tpu.dot_dimension_numbers<[2], [1], [1], [2], [0, 0, 0, 1, 1, 2], [0], [0]>} : vector<40x1x8xbf16>, vector<40x8x32xbf16>, vector<40x1x32xf32> -> vector<40x1x32xf32>
    "tpu.trace_stop"() : () -> ()
    %7 = vector.shape_cast %6 : vector<40x1x32xf32> to vector<40x32xf32>
    %cst_6 = arith.constant dense<0.000000e+00> : vector<40xf32>
    %8 = vector.multi_reduction <add>, %3, %cst_6 [1] : vector<40x8xf32> to vector<40xf32>
    %9 = vector.shape_cast %8 : vector<40xf32> to vector<40x1xf32>
    %cst_7 = arith.constant 9.99999971E-10 : f32
    %10 = vector.broadcast %cst_7 : f32 to vector<40x1xf32>
    %11 = arith.maximumf %9, %10 : vector<40x1xf32>
    %12 = vector.broadcast %11 : vector<40x1xf32> to vector<40x32xf32>
    %13 = arith.divf %7, %12 : vector<40x32xf32>
    %14 = vector.shape_cast %13 : vector<40x32xf32> to vector<8x5x32xf32>
    %15 = vector.extract_strided_slice %14 {offsets = [0, 0, 0], sizes = [8, 1, 32], strides = [1, 1, 1]} : vector<8x5x32xf32> to vector<8x1x32xf32>
    %16 = vector.extract_strided_slice %14 {offsets = [0, 1, 0], sizes = [8, 4, 32], strides = [1, 1, 1]} : vector<8x5x32xf32> to vector<8x4x32xf32>
    "tpu.trace_start"() <{level = 10 : i32, message = "bqh,beh->bqe"}> : () -> ()
    %cst_8 = arith.constant dense<0.000000e+00> : vector<8x1x4xf32>
    %17 = tpu.matmul %15, %16, %cst_8 {dimension_numbers = #tpu.dot_dimension_numbers<[2], [2], [1], [1], [0, 0, 0, 1, 1, 1], [0], [0]>, precision = #tpu.contract_precision<fp32>} : vector<8x1x32xf32>, vector<8x4x32xf32>, vector<8x1x4xf32> -> vector<8x1x4xf32>
    "tpu.trace_stop"() : () -> ()
    %18 = vector.shape_cast %17 : vector<8x1x4xf32> to vector<8x4xf32>
    %19 = vector.shape_cast %15 : vector<8x1x32xf32> to vector<8x32xf32>
    %20 = vector.shape_cast %15 : vector<8x1x32xf32> to vector<8x32xf32>
    %21 = arith.mulf %19, %20 : vector<8x32xf32>
    %cst_9 = arith.constant dense<0.000000e+00> : vector<8xf32>
    %22 = vector.multi_reduction <add>, %21, %cst_9 [1] : vector<8x32xf32> to vector<8xf32>
    %23 = vector.shape_cast %22 : vector<8xf32> to vector<8x1xf32>
    %24 = math.sqrt %23 : vector<8x1xf32>
    %25 = arith.mulf %16, %16 : vector<8x4x32xf32>
    %cst_10 = arith.constant dense<0.000000e+00> : vector<8x4xf32>
    %26 = vector.multi_reduction <add>, %25, %cst_10 [2] : vector<8x4x32xf32> to vector<8x4xf32>
    %27 = math.sqrt %26 : vector<8x4xf32>
    %cst_11 = arith.constant 9.99999993E-9 : f32
    %28 = vector.broadcast %cst_11 : f32 to vector<8x1xf32>
    %29 = arith.maximumf %24, %28 : vector<8x1xf32>
    %cst_12 = arith.constant 9.99999993E-9 : f32
    %30 = vector.broadcast %cst_12 : f32 to vector<8x4xf32>
    %31 = arith.maximumf %27, %30 : vector<8x4xf32>
    %32 = vector.broadcast %29 : vector<8x1xf32> to vector<8x4xf32>
    %33 = arith.mulf %32, %31 : vector<8x4xf32>
    %34 = arith.divf %18, %33 : vector<8x4xf32>
    %cst_13 = arith.constant 0.000000e+00 : f32
    %35 = vector.broadcast %cst_13 : f32 to vector<8x4xf32>
    %36 = arith.maximumf %34, %35 : vector<8x4xf32>
    %c0_14 = arith.constant 0 : index
    %c0_15 = arith.constant 0 : index
    %c0_16 = arith.constant 0 : index
    %37 = vector.load %arg3[%c0_14, %c0_15, %c0_16] : memref<8x5x128xf32, #tpu.memory_space<vmem>>, vector<8x5x128xf32>
    %cst_17 = arith.constant dense<0.000000e+00> : vector<8x5xf32>
    %38 = vector.multi_reduction <add>, %37, %cst_17 [2] : vector<8x5x128xf32> to vector<8x5xf32>
    %39 = vector.extract_strided_slice %37 {offsets = [0, 0, 0], sizes = [8, 1, 128], strides = [1, 1, 1]} : vector<8x5x128xf32> to vector<8x1x128xf32>
    %40 = vector.extract_strided_slice %37 {offsets = [0, 1, 0], sizes = [8, 4, 128], strides = [1, 1, 1]} : vector<8x5x128xf32> to vector<8x4x128xf32>
    "tpu.trace_start"() <{level = 10 : i32, message = "bqv,bev->bqe"}> : () -> ()
    %cst_18 = arith.constant dense<0.000000e+00> : vector<8x1x4xf32>
    %41 = tpu.matmul %39, %40, %cst_18 {dimension_numbers = #tpu.dot_dimension_numbers<[2], [2], [1], [1], [0, 0, 0, 1, 1, 1], [0], [0]>} : vector<8x1x128xf32>, vector<8x4x128xf32>, vector<8x1x4xf32> -> vector<8x1x4xf32>
    "tpu.trace_stop"() : () -> ()
    %42 = vector.shape_cast %41 : vector<8x1x4xf32> to vector<8x4xf32>
    %43 = vector.extract_strided_slice %38 {offsets = [0, 0], sizes = [8, 1], strides = [1, 1]} : vector<8x5xf32> to vector<8x1xf32>
    %44 = vector.extract_strided_slice %38 {offsets = [0, 1], sizes = [8, 4], strides = [1, 1]} : vector<8x5xf32> to vector<8x4xf32>
    %45 = vector.broadcast %43 : vector<8x1xf32> to vector<8x4xf32>
    %46 = arith.addf %45, %44 : vector<8x4xf32>
    %47 = arith.subf %46, %42 : vector<8x4xf32>
    %cst_19 = arith.constant 9.99999971E-10 : f32
    %48 = vector.broadcast %cst_19 : f32 to vector<8x4xf32>
    %49 = arith.maximumf %47, %48 : vector<8x4xf32>
    %50 = arith.divf %42, %49 : vector<8x4xf32>
    %cst_20 = arith.constant 5.000000e-01 : f32
    %51 = vector.broadcast %cst_20 : f32 to vector<8x4xf32>
    %52 = arith.mulf %51, %36 : vector<8x4xf32>
    %cst_21 = arith.constant 5.000000e-01 : f32
    %53 = vector.broadcast %cst_21 : f32 to vector<8x4xf32>
    %54 = arith.mulf %53, %50 : vector<8x4xf32>
    %55 = arith.addf %52, %54 : vector<8x4xf32>
    %cst_22 = arith.constant dense<0xFF800000> : vector<8xf32>
    %56 = vector.multi_reduction <maximumf>, %55, %cst_22 [1] : vector<8x4xf32> to vector<8xf32>
    %57 = vector.shape_cast %56 : vector<8xf32> to vector<8x1xf32>
    %58 = tpu.reduce_index %55 {axis = 1 : i32, kind = #tpu.reduction_kind<arg_max>} : vector<8x4xf32> -> vector<8xi32>
    %59 = tpu.iota {dimensions = array<i32: 1>} : vector<8x4xi32>
    %60 = vector.shape_cast %58 : vector<8xi32> to vector<8x1xi32>
    %61 = vector.broadcast %60 : vector<8x1xi32> to vector<8x4xi32>
    %62 = arith.cmpi eq, %59, %61 : vector<8x4xi32>
    %63 = arith.extui %62 : vector<8x4xi1> to vector<8x4xi32>
    %64 = arith.sitofp %63 : vector<8x4xi32> to vector<8x4xf32>
    %c0_23 = arith.constant 0 : index
    %c0_24 = arith.constant 0 : index
    %65 = vector.load %arg4[%c0_23, %c0_24] : memref<1x4xf32, #tpu.memory_space<vmem>>, vector<1x4xf32>
    %66 = vector.broadcast %65 : vector<1x4xf32> to vector<8x4xf32>
    %67 = arith.mulf %64, %66 : vector<8x4xf32>
    %cst_25 = arith.constant dense<0.000000e+00> : vector<8xf32>
    %68 = vector.multi_reduction <add>, %67, %cst_25 [1] : vector<8x4xf32> to vector<8xf32>
    %69 = vector.shape_cast %68 : vector<8xf32> to vector<8x1xf32>
    %70 = arith.mulf %57, %69 : vector<8x1xf32>
    %c0_26 = arith.constant 0 : index
    %c0_27 = arith.constant 0 : index
    %71 = vector.load %arg5[%c0_26, %c0_27] : memref<8x1xf32, #tpu.memory_space<vmem>>, vector<8x1xf32>
    tpu.vector_store %arg5[%c0_26, %c0_27], %70 {strides = array<i32>} : memref<8x1xf32, #tpu.memory_space<vmem>>, vector<8x1xf32>,
    return
  }
  func.func @transform_0(%arg0: i32) -> (i32, i32, i32, i32) {
    %c0_i32 = arith.constant 0 : i32
    %c0_i32_0 = arith.constant 0 : i32
    %c0_i32_1 = arith.constant 0 : i32
    %c0_i32_2 = arith.constant 0 : i32
    return %arg0, %c0_i32, %c0_i32_0, %c0_i32_1 : i32, i32, i32, i32
  }
  func.func @transform_1(%arg0: i32) -> (i32, i32, i32) {
    %c0_i32 = arith.constant 0 : i32
    %c0_i32_0 = arith.constant 0 : i32
    %c0_i32_1 = arith.constant 0 : i32
    return %arg0, %c0_i32, %c0_i32_0 : i32, i32, i32
  }
  func.func @transform_2(%arg0: i32) -> (i32, i32, i32) {
    %c0_i32 = arith.constant 0 : i32
    %c0_i32_0 = arith.constant 0 : i32
    %c0_i32_1 = arith.constant 0 : i32
    return %arg0, %c0_i32, %c0_i32_0 : i32, i32, i32
  }
  func.func @transform_3(%arg0: i32) -> (i32, i32) {
    %c0_i32 = arith.constant 0 : i32
    %c0_i32_0 = arith.constant 0 : i32
    %c0_i32_1 = arith.constant 0 : i32
    return %c0_i32, %c0_i32_0 : i32, i32
  }
  func.func @transform_4(%arg0: i32) -> (i32, i32) {
    %c0_i32 = arith.constant 0 : i32
    %c0_i32_0 = arith.constant 0 : i32
    return %arg0, %c0_i32 : i32, i32
  }
}

</mosaic_0001>

<llo_original>
// kernel: tpu_custom_call.1
$region0: #{tpu_custom_call.1}
  #allocation0 [shape = 'u32[]', space=smem, size = 0x4, offset = 0x4, fixed_abs, tag = 'smem constant byte address 0x4 - core index']
  #allocation1 [shape = 'u32[144,128]{1,0:T(1,128)}', space=vmem, size = 0x12000, scoped, tag = 'internal scratch']
  %s0 = inlined_call_operand.vmem [shape: bf16[16,5,8,32], index: 0, kind: input, shape index: {}]
  %s1 = inlined_call_operand.vmem [shape: f32[16,5,8], index: 1, kind: input, shape index: {}]
  %s2 = inlined_call_operand.vmem [shape: f32[16,5,128], index: 2, kind: input, shape index: {}]
  %s3 = inlined_call_operand.vmem [shape: f32[1,4], index: 3, kind: input, shape index: {}]
  %s4 = inlined_call_operand.vmem [shape: f32[16,1], index: 4, kind: output, shape index: {}]
  %s5 = sld [smem:[#allocation0]]
  $region49: #{tpu_custom_call.1} parent=0
    _
  %s7 = ssub.s32 1, %s5
  %s8 = scalar_select 0, %s7, %s5
  loop: start=0, step=1, limit=4
  $region2: #{tpu_custom_call.1} parent=0 // loop_pre_header
    _
  $region3: #{tpu_custom_call.1} parent=0 // loop_header
    %s10 = sphi 0, %s14
    %p11 = scmp.ge.s32.totalorder %s10, 4
    %s20 = sphi 0, %s22
    %s23 = sphi 0, %s20
    %s24 = sphi 0, %s23
    %s40 = sphi 0, %s24
    %s46 = sphi 0, %s48
    %s49 = sphi 0, %s46
    %s50 = sphi 0, %s49
    %s66 = sphi 0, %s50
    %s72 = sphi 0, %s74
    %s75 = sphi 0, %s72
    %s76 = sphi 0, %s75
    %s92 = sphi 0, %s76
    %s96 = sphi 0, %s96
    %s98 = sphi 0, %s96
    %s99 = sphi 0, %s98
    %s113 = sphi 0, %s99
    %s119 = sphi 0, %s121
    %s122 = sphi 0, %s119
    %s123 = sphi 0, %s122
    %s139 = sphi 0, %s123
  $region4: #{tpu_custom_call.1} parent=0 // loop_header_branch
    %13 = sbr.rel (%p11) target = $region8
  $region5: #{tpu_custom_call.1} parent=0 // loop_body
    %s15 = ssub.s32 %s10, 1
    %s16 = ssub.s32 %s10, 2
    %s17 = sadd.s32 %s10, 1
    %s18 = ssub.s32 %s10, %s17
    %p19 = scmp.eq.s32.totalorder %s18, 0
    %s21 = sadd.s32 %s20, 1
    %s22 = scalar_select %p19, %s20, %s21
    %p25 = pneg %p19
    %p26 = scmp.eq.s32.totalorder %s10, 1
    %p27 = por %p25, %p26
    %p28 = scmp.ne.s32.totalorder %s20, %s23
    %p29 = scmp.eq.s32.totalorder %s10, 0
    %p30 = por %p28, %p29
    %p31 = scmp.ne.s32.totalorder %s20, %s23
    %p32 = scmp.eq.s32.totalorder %s15, 1
    %p33 = por %p31, %p32
    %p34 = scmp.ne.s32.totalorder %s23, %s24
    %p35 = scmp.eq.s32.totalorder %s15, 0
    %p36 = por %p34, %p35
    %p37 = scmp.ne.s32.totalorder %s23, %s24
    %p38 = scmp.eq.s32.totalorder %s16, 1
    %p39 = por %p37, %p38
    %p41 = scmp.ne.s32.totalorder %s24, %s40
    %p42 = scmp.eq.s32.totalorder %s16, 0
    %p43 = por %p41, %p42
    %s44 = ssub.s32 %s10, %s17
    %p45 = scmp.eq.s32.totalorder %s44, 0
    %s47 = sadd.s32 %s46, 1
    %s48 = scalar_select %p45, %s46, %s47
    %p51 = pneg %p45
    %p52 = scmp.eq.s32.totalorder %s10, 1
    %p53 = por %p51, %p52
    %p54 = scmp.ne.s32.totalorder %s46, %s49
    %p55 = scmp.eq.s32.totalorder %s10, 0
    %p56 = por %p54, %p55
    %p57 = scmp.ne.s32.totalorder %s46, %s49
    %p58 = scmp.eq.s32.totalorder %s15, 1
    %p59 = por %p57, %p58
    %p60 = scmp.ne.s32.totalorder %s49, %s50
    %p61 = scmp.eq.s32.totalorder %s15, 0
    %p62 = por %p60, %p61
    %p63 = scmp.ne.s32.totalorder %s49, %s50
    %p64 = scmp.eq.s32.totalorder %s16, 1
    %p65 = por %p63, %p64
    %p67 = scmp.ne.s32.totalorder %s50, %s66
    %p68 = scmp.eq.s32.totalorder %s16, 0
    %p69 = por %p67, %p68
    %s70 = ssub.s32 %s10, %s17
    %p71 = scmp.eq.s32.totalorder %s70, 0
    %s73 = sadd.s32 %s72, 1
    %s74 = scalar_select %p71, %s72, %s73
    %p77 = pneg %p71
    %p78 = scmp.eq.s32.totalorder %s10, 1
    %p79 = por %p77, %p78
    %p80 = scmp.ne.s32.totalorder %s72, %s75
    %p81 = scmp.eq.s32.totalorder %s10, 0
    %p82 = por %p80, %p81
    %p83 = scmp.ne.s32.totalorder %s72, %s75
    %p84 = scmp.eq.s32.totalorder %s15, 1
    %p85 = por %p83, %p84
    %p86 = scmp.ne.s32.totalorder %s75, %s76
    %p87 = scmp.eq.s32.totalorder %s15, 0
    %p88 = por %p86, %p87
    %p89 = scmp.ne.s32.totalorder %s75, %s76
    %p90 = scmp.eq.s32.totalorder %s16, 1
    %p91 = por %p89, %p90
    %p93 = scmp.ne.s32.totalorder %s76, %s92
    %p94 = scmp.eq.s32.totalorder %s16, 0
    %p95 = por %p93, %p94
    %s97 = sadd.s32 %s96, 1
    %p100 = scmp.eq.s32.totalorder %s10, 1
    %p101 = scmp.ne.s32.totalorder %s96, %s98
    %p102 = scmp.eq.s32.totalorder %s10, 0
    %p103 = por %p101, %p102
    %p104 = scmp.ne.s32.totalorder %s96, %s98
    %p105 = scmp.eq.s32.totalorder %s15, 1
    %p106 = por %p104, %p105
    %p107 = scmp.ne.s32.totalorder %s98, %s99
    %p108 = scmp.eq.s32.totalorder %s15, 0
    %p109 = por %p107, %p108
    %p110 = scmp.ne.s32.totalorder %s98, %s99
    %p111 = scmp.eq.s32.totalorder %s16, 1
    %p112 = por %p110, %p111
    %p114 = scmp.ne.s32.totalorder %s99, %s113
    %p115 = scmp.eq.s32.totalorder %s16, 0
    %p116 = por %p114, %p115
    %s117 = ssub.s32 %s10, %s17
    %p118 = scmp.eq.s32.totalorder %s117, 0
    %s120 = sadd.s32 %s119, 1
    %s121 = scalar_select %p118, %s119, %s120
    %p124 = pneg %p118
    %p125 = scmp.eq.s32.totalorder %s10, 1
    %p126 = por %p124, %p125
    %p127 = scmp.ne.s32.totalorder %s119, %s122
    %p128 = scmp.eq.s32.totalorder %s10, 0
    %p129 = por %p127, %p128
    %p130 = scmp.ne.s32.totalorder %s119, %s122
    %p131 = scmp.eq.s32.totalorder %s15, 1
    %p132 = por %p130, %p131
    %p133 = scmp.ne.s32.totalorder %s122, %s123
    %p134 = scmp.eq.s32.totalorder %s15, 0
    %p135 = por %p133, %p134
    %p136 = scmp.ne.s32.totalorder %s122, %s123
    %p137 = scmp.eq.s32.totalorder %s16, 1
    %p138 = por %p136, %p137
    %p140 = scmp.ne.s32.totalorder %s123, %s139
    %p141 = scmp.eq.s32.totalorder %s16, 0
    %p142 = por %p140, %p141
    %p143 = scmp.le.s32.totalorder 1, %s10
    %p144 = scmp.lt.s32.totalorder %s10, 3
    %p145 = pnand %p143, %p144
    %p146 = pneg %p145
    // Predicated region
    $region9: #{tpu_custom_call.1} parent=5 // pred_check
      _
    $region10: #{tpu_custom_call.1} parent=5 // pred_check_branch
      %148 = sbr.rel (%p145) target = $region12
    $region11: #{tpu_custom_call.1} parent=5 // pred_region
      %s149 = ssub.s32 %s10, 1
      // Predicated region
      $region13: #{tpu_custom_call.1} parent=11 // pred_check
        %p150 = pneg %p109
      $region14: #{tpu_custom_call.1} parent=11 // pred_check_branch
        %152 = sbr.rel (%p150) target = $region16
      $region15: #{tpu_custom_call.1} parent=11 // pred_region
        _
      $region16: #{tpu_custom_call.1} parent=11 // pred_fallthru
        _
    $region12: #{tpu_custom_call.1} parent=5 // pred_fallthru
      _
    %p153 = scmp.lt.s32.totalorder %s10, 2
    // Predicated region
    $region17: #{tpu_custom_call.1} parent=5 // pred_check
      %p154 = pneg %p153
    $region18: #{tpu_custom_call.1} parent=5 // pred_check_branch
      %156 = sbr.rel (%p154) target = $region20
    $region19: #{tpu_custom_call.1} parent=5 // pred_region
      // Predicated region
      $region21: #{tpu_custom_call.1} parent=19 // pred_check
        %p157 = pneg %p30
      $region22: #{tpu_custom_call.1} parent=19 // pred_check_branch
        %159 = sbr.rel (%p157) target = $region24
      $region23: #{tpu_custom_call.1} parent=19 // pred_region
        %s160 = smul.u32 8, %s10
        %p161 = scmp.lt.s32.totalorder %s160, 15
        %s162 = scalar_select %p161, %s160, 15
        %s163 = smul.addr %s162, 5
        %s164 = smul.addr %s163, 4
        %s165 = scalar_lea.vmem %s0, %s164
        %s166 = smul.u32 8, %s10
      $region24: #{tpu_custom_call.1} parent=19 // pred_fallthru
        _
      // Predicated region
      $region25: #{tpu_custom_call.1} parent=19 // pred_check
        %p167 = pneg %p56
      $region26: #{tpu_custom_call.1} parent=19 // pred_check_branch
        %169 = sbr.rel (%p167) target = $region28
      $region27: #{tpu_custom_call.1} parent=19 // pred_region
        %s170 = smul.u32 8, %s10
        %p171 = scmp.lt.s32.totalorder %s170, 15
        %s172 = scalar_select %p171, %s170, 15
        %s173 = smul.addr %s172, 8
        %s174 = scalar_lea.vmem %s1, %s173
        %s175 = smul.u32 8, %s10
      $region28: #{tpu_custom_call.1} parent=19 // pred_fallthru
        _
      // Predicated region
      $region29: #{tpu_custom_call.1} parent=19 // pred_check
        %p176 = pneg %p82
      $region30: #{tpu_custom_call.1} parent=19 // pred_check_branch
        %178 = sbr.rel (%p176) target = $region32
      $region31: #{tpu_custom_call.1} parent=19 // pred_region
        %s179 = smul.u32 8, %s10
        %p180 = scmp.lt.s32.totalorder %s179, 15
        %s181 = scalar_select %p180, %s179, 15
        %s182 = smul.addr %s181, 8
        %s183 = scalar_lea.vmem %s2, %s182
        %s184 = smul.u32 8, %s10
      $region32: #{tpu_custom_call.1} parent=19 // pred_fallthru
        _
    $region20: #{tpu_custom_call.1} parent=5 // pred_fallthru
      _
    %p185 = scmp.le.s32.totalorder 1, %s10
    %p186 = scmp.lt.s32.totalorder %s10, 3
    %p187 = pnand %p185, %p186
    %p188 = pneg %p187
    // Predicated region
    $region33: #{tpu_custom_call.1} parent=5 // pred_check
      _
    $region34: #{tpu_custom_call.1} parent=5 // pred_check_branch
      %190 = sbr.rel (%p187) target = $region36
    $region35: #{tpu_custom_call.1} parent=5 // pred_region
      %s191 = ssub.s32 %s10, 1
      %s192 = smul.u32 8, %s15
      %p193 = scmp.lt.s32.totalorder %s192, 15
      %s194 = scalar_select %p193, %s192, 15
      %s195 = smul.addr %s194, 5
      %s196 = smul.addr %s195, 4
      %s197 = scalar_lea.vmem %s0, %s196
      %p198 = pneg %p36
      %p199 = pneg %p33
      %s200 = smul.u32 8, %s15
      %p201 = scmp.lt.s32.totalorder %s200, 15
      %s202 = scalar_select %p201, %s200, 15
      %s203 = smul.addr %s202, 8
      %s204 = scalar_lea.vmem %s1, %s203
      %p205 = pneg %p62
      %p206 = pneg %p59
      %s207 = smul.u32 8, %s15
      %p208 = scmp.lt.s32.totalorder %s207, 15
      %s209 = scalar_select %p208, %s207, 15
      %s210 = smul.addr %s209, 8
      %s211 = scalar_lea.vmem %s2, %s210
      %p212 = pneg %p88
      %p213 = pneg %p85
      %p214 = pneg %p109
      %p215 = pneg %p106
      %p216 = pneg %p135
      %p217 = pneg %p132
      %p218 = scmp.lt.s32.totalorder %s15, 1
      %s219 = scalar_select %p218, %s15, 1
      %s220 = smul.addr %s219, 8
      %s221 = scalar_lea.vmem %s4, %s220
      %s222 = smul.u32 8, %s15
      %p223 = scmp.lt.s32.totalorder %s222, 15
      %s224 = scalar_select %p223, %s222, 15
      %s225 = smul.addr %s224, 5
      %s226 = smul.addr %s225, 4
      %s227 = scalar_lea.vmem %s0, %s226
      %s228 = smul.u32 8, %s15
      %s229 = smul.u32 8, %s15
      %p230 = scmp.lt.s32.totalorder %s229, 15
      %s231 = scalar_select %p230, %s229, 15
      %s232 = smul.addr %s231, 8
      %s233 = scalar_lea.vmem %s1, %s232
      %s234 = smul.u32 8, %s15
      %s235 = smul.u32 8, %s15
      %p236 = scmp.lt.s32.totalorder %s235, 15
      %s237 = scalar_select %p236, %s235, 15
      %s238 = smul.addr %s237, 8
      %s239 = scalar_lea.vmem %s2, %s238
      %s240 = smul.u32 8, %s15
      %p241 = scmp.lt.s32.totalorder %s15, 1
      %s242 = scalar_select %p241, %s15, 1
      %s243 = smul.addr %s242, 8
      %s244 = scalar_lea.vmem %s4, %s243
      %v246 = vld [vmem:[%s227] sm:$0xf]
      %v247 = vld [vmem:[%s227 + $0x4] sm:$0xf]
      %v248 = vld [vmem:[%s227 + $0x8] sm:$0xf]
      %v249 = vld [vmem:[%s227 + $0xc] sm:$0xf]
      %v250 = vld [vmem:[%s227 + $0x10] sm:$0xf]
      %v251 = vld [vmem:[%s227 + $0x14] sm:$0xf]
      %v252 = vld [vmem:[%s227 + $0x18] sm:$0xf]
      %v253 = vld [vmem:[%s227 + $0x1c] sm:$0xf]
      %v254 = vld [vmem:[%s227 + $0x20] sm:$0xf]
      %v255 = vld [vmem:[%s227 + $0x24] sm:$0xf]
      %v256 = vld [vmem:[%s227 + $0x28] sm:$0xf]
      %v257 = vld [vmem:[%s227 + $0x2c] sm:$0xf]
      %v258 = vld [vmem:[%s227 + $0x30] sm:$0xf]
      %v259 = vld [vmem:[%s227 + $0x34] sm:$0xf]
      %v260 = vld [vmem:[%s227 + $0x38] sm:$0xf]
      %v261 = vld [vmem:[%s227 + $0x3c] sm:$0xf]
      %v262 = vld [vmem:[%s227 + $0x40] sm:$0xf]
      %v263 = vld [vmem:[%s227 + $0x44] sm:$0xf]
      %v264 = vld [vmem:[%s227 + $0x48] sm:$0xf]
      %v265 = vld [vmem:[%s227 + $0x4c] sm:$0xf]
      %v266 = vld [vmem:[%s227 + $0x50] sm:$0xf]
      %v267 = vld [vmem:[%s227 + $0x54] sm:$0xf]
      %v268 = vld [vmem:[%s227 + $0x58] sm:$0xf]
      %v269 = vld [vmem:[%s227 + $0x5c] sm:$0xf]
      %v270 = vld [vmem:[%s227 + $0x60] sm:$0xf]
      %v271 = vld [vmem:[%s227 + $0x64] sm:$0xf]
      %v272 = vld [vmem:[%s227 + $0x68] sm:$0xf]
      %v273 = vld [vmem:[%s227 + $0x6c] sm:$0xf]
      %v274 = vld [vmem:[%s227 + $0x70] sm:$0xf]
      %v275 = vld [vmem:[%s227 + $0x74] sm:$0xf]
      %v276 = vld [vmem:[%s227 + $0x78] sm:$0xf]
      %v277 = vld [vmem:[%s227 + $0x7c] sm:$0xf]
      %v278 = vld [vmem:[%s227 + $0x80] sm:$0xf]
      %v279 = vld [vmem:[%s227 + $0x84] sm:$0xf]
      %v280 = vld [vmem:[%s227 + $0x88] sm:$0xf]
      %v281 = vld [vmem:[%s227 + $0x8c] sm:$0xf]
      %v282 = vld [vmem:[%s227 + $0x90] sm:$0xf]
      %v283 = vld [vmem:[%s227 + $0x94] sm:$0xf]
      %v284 = vld [vmem:[%s227 + $0x98] sm:$0xf]
      %v285 = vld [vmem:[%s227 + $0x9c] sm:$0xf]
      %v286 = vld [vmem:[%s233] sm:$0x1f]
      %v287 = vld [vmem:[%s233 + $0x8] sm:$0x1f]
      %v288 = vld [vmem:[%s233 + $0x10] sm:$0x1f]
      %v289 = vld [vmem:[%s233 + $0x18] sm:$0x1f]
      %v290 = vld [vmem:[%s233 + $0x20] sm:$0x1f]
      %v291 = vld [vmem:[%s233 + $0x28] sm:$0x1f]
      %v292 = vld [vmem:[%s233 + $0x30] sm:$0x1f]
      %v293 = vld [vmem:[%s233 + $0x38] sm:$0x1f]
      %v302 = vcombine.high %v286, %v286
      %v304 = vunpack.c.l.s4 1966171168
      %v305 = vunpack.c.0.s8 %v304
      %v306 = vlaneseq
      %v307 = vshrl.u32 %v306, 7
      %v308 = vsub.s32 %v305, %v307
      %v309 = vrot.slane %v286, %v308
      %v311 = vunpack.c.l.s4 1966171168
      %v312 = vunpack.c.0.s8 %v311
      %v313 = vlaneseq
      %v314 = vshrl.u32 %v313, 7
      %v315 = vsub.s32 %v312, %v314
      %v316 = vrot.slane %v302, %v315
      %v317 = vcombine.high %v309, %v309
      %v319 = vunpack.c.l.s4 1966171168
      %v320 = vunpack.c.0.s8 %v319
      %v321 = vlaneseq
      %v322 = vshrl.u32 %v321, 7
      %v323 = vsub.s32 %v320, %v322
      %v324 = vrot.slane %v309, %v323
      %v326 = vunpack.c.l.s4 1966171168
      %v327 = vunpack.c.0.s8 %v326
      %v328 = vlaneseq
      %v329 = vshrl.u32 %v328, 7
      %v330 = vsub.s32 %v327, %v329
      %v331 = vrot.slane %v316, %v330
      %v333 = vunpack.c.l.s4 1966171168
      %v334 = vunpack.c.0.s8 %v333
      %v335 = vlaneseq
      %v336 = vshrl.u32 %v335, 7
      %v337 = vsub.s32 %v334, %v336
      %v338 = vrot.slane %v317, %v337
      %v339 = vcombine.high %v324, %v324
      %v340 = vcombine.high %v338, %v338
      %v341 = vcombine.high %v287, %v287
      %v343 = vunpack.c.l.s4 1966171168
      %v344 = vunpack.c.0.s8 %v343
      %v345 = vlaneseq
      %v346 = vshrl.u32 %v345, 7
      %v347 = vsub.s32 %v344, %v346
      %v348 = vrot.slane %v287, %v347
      %v350 = vunpack.c.l.s4 1966171168
      %v351 = vunpack.c.0.s8 %v350
      %v352 = vlaneseq
      %v353 = vshrl.u32 %v352, 7
      %v354 = vsub.s32 %v351, %v353
      %v355 = vrot.slane %v341, %v354
      %v356 = vcombine.high %v348, %v348
      %v358 = vunpack.c.l.s4 1966171168
      %v359 = vunpack.c.0.s8 %v358
      %v360 = vlaneseq
      %v361 = vshrl.u32 %v360, 7
      %v362 = vsub.s32 %v359, %v361
      %v363 = vrot.slane %v348, %v362
      %v365 = vunpack.c.l.s4 1966171168
      %v366 = vunpack.c.0.s8 %v365
      %v367 = vlaneseq
      %v368 = vshrl.u32 %v367, 7
      %v369 = vsub.s32 %v366, %v368
      %v370 = vrot.slane %v355, %v369
      %v372 = vunpack.c.l.s4 1966171168
      %v373 = vunpack.c.0.s8 %v372
      %v374 = vlaneseq
      %v375 = vshrl.u32 %v374, 7
      %v376 = vsub.s32 %v373, %v375
      %v377 = vrot.slane %v356, %v376
      %v378 = vcombine.high %v363, %v363
      %v379 = vcombine.high %v377, %v377
      %v380 = vcombine.high %v288, %v288
      %v382 = vunpack.c.l.s4 1966171168
      %v383 = vunpack.c.0.s8 %v382
      %v384 = vlaneseq
      %v385 = vshrl.u32 %v384, 7
      %v386 = vsub.s32 %v383, %v385
      %v387 = vrot.slane %v288, %v386
      %v389 = vunpack.c.l.s4 1966171168
      %v390 = vunpack.c.0.s8 %v389
      %v391 = vlaneseq
      %v392 = vshrl.u32 %v391, 7
      %v393 = vsub.s32 %v390, %v392
      %v394 = vrot.slane %v380, %v393
      %v395 = vcombine.high %v387, %v387
      %v397 = vunpack.c.l.s4 1966171168
      %v398 = vunpack.c.0.s8 %v397
      %v399 = vlaneseq
      %v400 = vshrl.u32 %v399, 7
      %v401 = vsub.s32 %v398, %v400
      %v402 = vrot.slane %v387, %v401
      %v404 = vunpack.c.l.s4 1966171168
      %v405 = vunpack.c.0.s8 %v404
      %v406 = vlaneseq
      %v407 = vshrl.u32 %v406, 7
      %v408 = vsub.s32 %v405, %v407
      %v409 = vrot.slane %v394, %v408
      %v411 = vunpack.c.l.s4 1966171168
      %v412 = vunpack.c.0.s8 %v411
      %v413 = vlaneseq
      %v414 = vshrl.u32 %v413, 7
      %v415 = vsub.s32 %v412, %v414
      %v416 = vrot.slane %v395, %v415
      %v417 = vcombine.high %v402, %v402
      %v418 = vcombine.high %v416, %v416
      %v419 = vcombine.high %v289, %v289
      %v421 = vunpack.c.l.s4 1966171168
      %v422 = vunpack.c.0.s8 %v421
      %v423 = vlaneseq
      %v424 = vshrl.u32 %v423, 7
      %v425 = vsub.s32 %v422, %v424
      %v426 = vrot.slane %v289, %v425
      %v428 = vunpack.c.l.s4 1966171168
      %v429 = vunpack.c.0.s8 %v428
      %v430 = vlaneseq
      %v431 = vshrl.u32 %v430, 7
      %v432 = vsub.s32 %v429, %v431
      %v433 = vrot.slane %v419, %v432
      %v434 = vcombine.high %v426, %v426
      %v436 = vunpack.c.l.s4 1966171168
      %v437 = vunpack.c.0.s8 %v436
      %v438 = vlaneseq
      %v439 = vshrl.u32 %v438, 7
      %v440 = vsub.s32 %v437, %v439
      %v441 = vrot.slane %v426, %v440
      %v443 = vunpack.c.l.s4 1966171168
      %v444 = vunpack.c.0.s8 %v443
      %v445 = vlaneseq
      %v446 = vshrl.u32 %v445, 7
      %v447 = vsub.s32 %v444, %v446
      %v448 = vrot.slane %v433, %v447
      %v450 = vunpack.c.l.s4 1966171168
      %v451 = vunpack.c.0.s8 %v450
      %v452 = vlaneseq
      %v453 = vshrl.u32 %v452, 7
      %v454 = vsub.s32 %v451, %v453
      %v455 = vrot.slane %v434, %v454
      %v456 = vcombine.high %v441, %v441
      %v457 = vcombine.high %v455, %v455
      %v458 = vcombine.high %v290, %v290
      %v460 = vunpack.c.l.s4 1966171168
      %v461 = vunpack.c.0.s8 %v460
      %v462 = vlaneseq
      %v463 = vshrl.u32 %v462, 7
      %v464 = vsub.s32 %v461, %v463
      %v465 = vrot.slane %v290, %v464
      %v467 = vunpack.c.l.s4 1966171168
      %v468 = vunpack.c.0.s8 %v467
      %v469 = vlaneseq
      %v470 = vshrl.u32 %v469, 7
      %v471 = vsub.s32 %v468, %v470
      %v472 = vrot.slane %v458, %v471
      %v473 = vcombine.high %v465, %v465
      %v475 = vunpack.c.l.s4 1966171168
      %v476 = vunpack.c.0.s8 %v475
      %v477 = vlaneseq
      %v478 = vshrl.u32 %v477, 7
      %v479 = vsub.s32 %v476, %v478
      %v480 = vrot.slane %v465, %v479
      %v482 = vunpack.c.l.s4 1966171168
      %v483 = vunpack.c.0.s8 %v482
      %v484 = vlaneseq
      %v485 = vshrl.u32 %v484, 7
      %v486 = vsub.s32 %v483, %v485
      %v487 = vrot.slane %v472, %v486
      %v489 = vunpack.c.l.s4 1966171168
      %v490 = vunpack.c.0.s8 %v489
      %v491 = vlaneseq
      %v492 = vshrl.u32 %v491, 7
      %v493 = vsub.s32 %v490, %v492
      %v494 = vrot.slane %v473, %v493
      %v495 = vcombine.high %v480, %v480
      %v496 = vcombine.high %v494, %v494
      %v497 = vcombine.high %v291, %v291
      %v499 = vunpack.c.l.s4 1966171168
      %v500 = vunpack.c.0.s8 %v499
      %v501 = vlaneseq
      %v502 = vshrl.u32 %v501, 7
      %v503 = vsub.s32 %v500, %v502
      %v504 = vrot.slane %v291, %v503
      %v506 = vunpack.c.l.s4 1966171168
      %v507 = vunpack.c.0.s8 %v506
      %v508 = vlaneseq
      %v509 = vshrl.u32 %v508, 7
      %v510 = vsub.s32 %v507, %v509
      %v511 = vrot.slane %v497, %v510
      %v512 = vcombine.high %v504, %v504
      %v514 = vunpack.c.l.s4 1966171168
      %v515 = vunpack.c.0.s8 %v514
      %v516 = vlaneseq
      %v517 = vshrl.u32 %v516, 7
      %v518 = vsub.s32 %v515, %v517
      %v519 = vrot.slane %v504, %v518
      %v521 = vunpack.c.l.s4 1966171168
      %v522 = vunpack.c.0.s8 %v521
      %v523 = vlaneseq
      %v524 = vshrl.u32 %v523, 7
      %v525 = vsub.s32 %v522, %v524
      %v526 = vrot.slane %v511, %v525
      %v528 = vunpack.c.l.s4 1966171168
      %v529 = vunpack.c.0.s8 %v528
      %v530 = vlaneseq
      %v531 = vshrl.u32 %v530, 7
      %v532 = vsub.s32 %v529, %v531
      %v533 = vrot.slane %v512, %v532
      %v534 = vcombine.high %v519, %v519
      %v535 = vcombine.high %v533, %v533
      %v536 = vcombine.high %v292, %v292
      %v538 = vunpack.c.l.s4 1966171168
      %v539 = vunpack.c.0.s8 %v538
      %v540 = vlaneseq
      %v541 = vshrl.u32 %v540, 7
      %v542 = vsub.s32 %v539, %v541
      %v543 = vrot.slane %v292, %v542
      %v545 = vunpack.c.l.s4 1966171168
      %v546 = vunpack.c.0.s8 %v545
      %v547 = vlaneseq
      %v548 = vshrl.u32 %v547, 7
      %v549 = vsub.s32 %v546, %v548
      %v550 = vrot.slane %v536, %v549
      %v551 = vcombine.high %v543, %v543
      %v553 = vunpack.c.l.s4 1966171168
      %v554 = vunpack.c.0.s8 %v553
      %v555 = vlaneseq
      %v556 = vshrl.u32 %v555, 7
      %v557 = vsub.s32 %v554, %v556
      %v558 = vrot.slane %v543, %v557
      %v560 = vunpack.c.l.s4 1966171168
      %v561 = vunpack.c.0.s8 %v560
      %v562 = vlaneseq
      %v563 = vshrl.u32 %v562, 7
      %v564 = vsub.s32 %v561, %v563
      %v565 = vrot.slane %v550, %v564
      %v567 = vunpack.c.l.s4 1966171168
      %v568 = vunpack.c.0.s8 %v567
      %v569 = vlaneseq
      %v570 = vshrl.u32 %v569, 7
      %v571 = vsub.s32 %v568, %v570
      %v572 = vrot.slane %v551, %v571
      %v573 = vcombine.high %v558, %v558
      %v574 = vcombine.high %v572, %v572
      %v575 = vcombine.high %v293, %v293
      %v577 = vunpack.c.l.s4 1966171168
      %v578 = vunpack.c.0.s8 %v577
      %v579 = vlaneseq
      %v580 = vshrl.u32 %v579, 7
      %v581 = vsub.s32 %v578, %v580
      %v582 = vrot.slane %v293, %v581
      %v584 = vunpack.c.l.s4 1966171168
      %v585 = vunpack.c.0.s8 %v584
      %v586 = vlaneseq
      %v587 = vshrl.u32 %v586, 7
      %v588 = vsub.s32 %v585, %v587
      %v589 = vrot.slane %v575, %v588
      %v590 = vcombine.high %v582, %v582
      %v592 = vunpack.c.l.s4 1966171168
      %v593 = vunpack.c.0.s8 %v592
      %v594 = vlaneseq
      %v595 = vshrl.u32 %v594, 7
      %v596 = vsub.s32 %v593, %v595
      %v597 = vrot.slane %v582, %v596
      %v599 = vunpack.c.l.s4 1966171168
      %v600 = vunpack.c.0.s8 %v599
      %v601 = vlaneseq
      %v602 = vshrl.u32 %v601, 7
      %v603 = vsub.s32 %v600, %v602
      %v604 = vrot.slane %v589, %v603
      %v606 = vunpack.c.l.s4 1966171168
      %v607 = vunpack.c.0.s8 %v606
      %v608 = vlaneseq
      %v609 = vshrl.u32 %v608, 7
      %v610 = vsub.s32 %v607, %v609
      %v611 = vrot.slane %v590, %v610
      %v612 = vcombine.high %v597, %v597
      %v613 = vcombine.high %v611, %v611
      %v614 = vcombine.low %v324, %v338
      %v615 = vcombine.low %v339, %v340
      %v616 = vcombine.low %v331, %v363
      %v617 = vcombine.low %v377, %v378
      %v619 = vunpack.c.l.s4 1966171168
      %v620 = vunpack.c.0.s8 %v619
      %v621 = vlaneseq
      %v622 = vshrl.u32 %v621, 7
      %v623 = vsub.s32 %v620, %v622
      %v624 = vrot.slane %v614, %v623
      %v626 = vunpack.c.l.s4 1966171168
      %v627 = vunpack.c.0.s8 %v626
      %v628 = vlaneseq
      %v629 = vshrl.u32 %v628, 7
      %v630 = vsub.s32 %v627, %v629
      %v631 = vrot.slane %v615, %v630
      %v633 = vunpack.c.l.s4 1966171168
      %v634 = vunpack.c.0.s8 %v633
      %v635 = vlaneseq
      %v636 = vshrl.u32 %v635, 7
      %v637 = vsub.s32 %v634, %v636
      %v638 = vrot.slane %v616, %v637
      %v640 = vunpack.c.l.s4 1966171168
      %v641 = vunpack.c.0.s8 %v640
      %v642 = vlaneseq
      %v643 = vshrl.u32 %v642, 7
      %v644 = vsub.s32 %v641, %v643
      %v645 = vrot.slane %v617, %v644
      %v646 = vcombine.low %v624, %v631
      %v647 = vcombine.low %v638, %v645
      %v649 = vunpack.c.l.s4 1966171168
      %v650 = vunpack.c.0.s8 %v649
      %v651 = vlaneseq
      %v652 = vshrl.u32 %v651, 7
      %v653 = vsub.s32 %v650, %v652
      %v654 = vrot.slane %v646, %v653
      %v656 = vunpack.c.l.s4 1966171168
      %v657 = vunpack.c.0.s8 %v656
      %v658 = vlaneseq
      %v659 = vshrl.u32 %v658, 7
      %v660 = vsub.s32 %v657, %v659
      %v661 = vrot.slane %v647, %v660
      %v662 = vcombine.low %v654, %v661
      %v663 = vcombine.low %v379, %v370
      %v664 = vcombine.low %v402, %v416
      %v665 = vcombine.low %v417, %v418
      %v666 = vcombine.low %v409, %v441
      %v668 = vunpack.c.l.s4 1966171168
      %v669 = vunpack.c.0.s8 %v668
      %v670 = vlaneseq
      %v671 = vshrl.u32 %v670, 7
      %v672 = vsub.s32 %v669, %v671
      %v673 = vrot.slane %v663, %v672
      %v675 = vunpack.c.l.s4 1966171168
      %v676 = vunpack.c.0.s8 %v675
      %v677 = vlaneseq
      %v678 = vshrl.u32 %v677, 7
      %v679 = vsub.s32 %v676, %v678
      %v680 = vrot.slane %v664, %v679
      %v682 = vunpack.c.l.s4 1966171168
      %v683 = vunpack.c.0.s8 %v682
      %v684 = vlaneseq
      %v685 = vshrl.u32 %v684, 7
      %v686 = vsub.s32 %v683, %v685
      %v687 = vrot.slane %v665, %v686
      %v689 = vunpack.c.l.s4 1966171168
      %v690 = vunpack.c.0.s8 %v689
      %v691 = vlaneseq
      %v692 = vshrl.u32 %v691, 7
      %v693 = vsub.s32 %v690, %v692
      %v694 = vrot.slane %v666, %v693
      %v695 = vcombine.low %v673, %v680
      %v696 = vcombine.low %v687, %v694
      %v698 = vunpack.c.l.s4 1966171168
      %v699 = vunpack.c.0.s8 %v698
      %v700 = vlaneseq
      %v701 = vshrl.u32 %v700, 7
      %v702 = vsub.s32 %v699, %v701
      %v703 = vrot.slane %v695, %v702
      %v705 = vunpack.c.l.s4 1966171168
      %v706 = vunpack.c.0.s8 %v705
      %v707 = vlaneseq
      %v708 = vshrl.u32 %v707, 7
      %v709 = vsub.s32 %v706, %v708
      %v710 = vrot.slane %v696, %v709
      %v711 = vcombine.low %v703, %v710
      %v712 = vcombine.low %v455, %v456
      %v713 = vcombine.low %v457, %v448
      %v714 = vcombine.low %v480, %v494
      %v715 = vcombine.low %v495, %v496
      %v717 = vunpack.c.l.s4 1966171168
      %v718 = vunpack.c.0.s8 %v717
      %v719 = vlaneseq
      %v720 = vshrl.u32 %v719, 7
      %v721 = vsub.s32 %v718, %v720
      %v722 = vrot.slane %v712, %v721
      %v724 = vunpack.c.l.s4 1966171168
      %v725 = vunpack.c.0.s8 %v724
      %v726 = vlaneseq
      %v727 = vshrl.u32 %v726, 7
      %v728 = vsub.s32 %v725, %v727
      %v729 = vrot.slane %v713, %v728
      %v731 = vunpack.c.l.s4 1966171168
      %v732 = vunpack.c.0.s8 %v731
      %v733 = vlaneseq
      %v734 = vshrl.u32 %v733, 7
      %v735 = vsub.s32 %v732, %v734
      %v736 = vrot.slane %v714, %v735
      %v738 = vunpack.c.l.s4 1966171168
      %v739 = vunpack.c.0.s8 %v738
      %v740 = vlaneseq
      %v741 = vshrl.u32 %v740, 7
      %v742 = vsub.s32 %v739, %v741
      %v743 = vrot.slane %v715, %v742
      %v744 = vcombine.low %v722, %v729
      %v745 = vcombine.low %v736, %v743
      %v747 = vunpack.c.l.s4 1966171168
      %v748 = vunpack.c.0.s8 %v747
      %v749 = vlaneseq
      %v750 = vshrl.u32 %v749, 7
      %v751 = vsub.s32 %v748, %v750
      %v752 = vrot.slane %v744, %v751
      %v754 = vunpack.c.l.s4 1966171168
      %v755 = vunpack.c.0.s8 %v754
      %v756 = vlaneseq
      %v757 = vshrl.u32 %v756, 7
      %v758 = vsub.s32 %v755, %v757
      %v759 = vrot.slane %v745, %v758
      %v760 = vcombine.low %v752, %v759
      %v761 = vcombine.low %v487, %v519
      %v762 = vcombine.low %v533, %v534
      %v763 = vcombine.low %v535, %v526
      %v764 = vcombine.low %v558, %v572
      %v766 = vunpack.c.l.s4 1966171168
      %v767 = vunpack.c.0.s8 %v766
      %v768 = vlaneseq
      %v769 = vshrl.u32 %v768, 7
      %v770 = vsub.s32 %v767, %v769
      %v771 = vrot.slane %v761, %v770
      %v773 = vunpack.c.l.s4 1966171168
      %v774 = vunpack.c.0.s8 %v773
      %v775 = vlaneseq
      %v776 = vshrl.u32 %v775, 7
      %v777 = vsub.s32 %v774, %v776
      %v778 = vrot.slane %v762, %v777
      %v780 = vunpack.c.l.s4 1966171168
      %v781 = vunpack.c.0.s8 %v780
      %v782 = vlaneseq
      %v783 = vshrl.u32 %v782, 7
      %v784 = vsub.s32 %v781, %v783
      %v785 = vrot.slane %v763, %v784
      %v787 = vunpack.c.l.s4 1966171168
      %v788 = vunpack.c.0.s8 %v787
      %v789 = vlaneseq
      %v790 = vshrl.u32 %v789, 7
      %v791 = vsub.s32 %v788, %v790
      %v792 = vrot.slane %v764, %v791
      %v793 = vcombine.low %v771, %v778
      %v794 = vcombine.low %v785, %v792
      %v796 = vunpack.c.l.s4 1966171168
      %v797 = vunpack.c.0.s8 %v796
      %v798 = vlaneseq
      %v799 = vshrl.u32 %v798, 7
      %v800 = vsub.s32 %v797, %v799
      %v801 = vrot.slane %v793, %v800
      %v803 = vunpack.c.l.s4 1966171168
      %v804 = vunpack.c.0.s8 %v803
      %v805 = vlaneseq
      %v806 = vshrl.u32 %v805, 7
      %v807 = vsub.s32 %v804, %v806
      %v808 = vrot.slane %v794, %v807
      %v809 = vcombine.low %v801, %v808
      %v810 = vcombine.low %v573, %v574
      %v811 = vcombine.low %v565, %v597
      %v812 = vcombine.low %v611, %v612
      %v813 = vcombine.low %v613, %v604
      %v815 = vunpack.c.l.s4 1966171168
      %v816 = vunpack.c.0.s8 %v815
      %v817 = vlaneseq
      %v818 = vshrl.u32 %v817, 7
      %v819 = vsub.s32 %v816, %v818
      %v820 = vrot.slane %v810, %v819
      %v822 = vunpack.c.l.s4 1966171168
      %v823 = vunpack.c.0.s8 %v822
      %v824 = vlaneseq
      %v825 = vshrl.u32 %v824, 7
      %v826 = vsub.s32 %v823, %v825
      %v827 = vrot.slane %v811, %v826
      %v829 = vunpack.c.l.s4 1966171168
      %v830 = vunpack.c.0.s8 %v829
      %v831 = vlaneseq
      %v832 = vshrl.u32 %v831, 7
      %v833 = vsub.s32 %v830, %v832
      %v834 = vrot.slane %v812, %v833
      %v836 = vunpack.c.l.s4 1966171168
      %v837 = vunpack.c.0.s8 %v836
      %v838 = vlaneseq
      %v839 = vshrl.u32 %v838, 7
      %v840 = vsub.s32 %v837, %v839
      %v841 = vrot.slane %v813, %v840
      %v842 = vcombine.low %v820, %v827
      %v843 = vcombine.low %v834, %v841
      %v845 = vunpack.c.l.s4 1966171168
      %v846 = vunpack.c.0.s8 %v845
      %v847 = vlaneseq
      %v848 = vshrl.u32 %v847, 7
      %v849 = vsub.s32 %v846, %v848
      %v850 = vrot.slane %v842, %v849
      %v852 = vunpack.c.l.s4 1966171168
      %v853 = vunpack.c.0.s8 %v852
      %v854 = vlaneseq
      %v855 = vshrl.u32 %v854, 7
      %v856 = vsub.s32 %v853, %v855
      %v857 = vrot.slane %v843, %v856
      %v858 = vcombine.low %v850, %v857
      %v864 = vpack.c.bf16 %v711, %v662
      %v865 = vpack.c.bf16 %v809, %v760
      %v866 = vpack.c.bf16 %v858, %v858
      %v870 = vcombine.high %v864, %v864
      %v872 = vunpack.c.l.s4 1966171168
      %v873 = vunpack.c.0.s8 %v872
      %v874 = vlaneseq
      %v875 = vshrl.u32 %v874, 7
      %v876 = vsub.s32 %v873, %v875
      %v877 = vrot.slane %v864, %v876
      %v879 = vunpack.c.l.s4 1966171168
      %v880 = vunpack.c.0.s8 %v879
      %v881 = vlaneseq
      %v882 = vshrl.u32 %v881, 7
      %v883 = vsub.s32 %v880, %v882
      %v884 = vrot.slane %v870, %v883
      %v885 = vcombine.high %v877, %v877
      %v886 = vcombine.high %v884, %v884
      %v888 = vunpack.c.l.s4 1966171168
      %v889 = vunpack.c.0.s8 %v888
      %v890 = vlaneseq
      %v891 = vshrl.u32 %v890, 7
      %v892 = vsub.s32 %v889, %v891
      %v893 = vrot.slane %v877, %v892
      %v895 = vunpack.c.l.s4 1966171168
      %v896 = vunpack.c.0.s8 %v895
      %v897 = vlaneseq
      %v898 = vshrl.u32 %v897, 7
      %v899 = vsub.s32 %v896, %v898
      %v900 = vrot.slane %v884, %v899
      %v902 = vunpack.c.l.s4 1966171168
      %v903 = vunpack.c.0.s8 %v902
      %v904 = vlaneseq
      %v905 = vshrl.u32 %v904, 7
      %v906 = vsub.s32 %v903, %v905
      %v907 = vrot.slane %v885, %v906
      %v909 = vunpack.c.l.s4 1966171168
      %v910 = vunpack.c.0.s8 %v909
      %v911 = vlaneseq
      %v912 = vshrl.u32 %v911, 7
      %v913 = vsub.s32 %v910, %v912
      %v914 = vrot.slane %v886, %v913
      %v915 = vcombine.high %v893, %v893
      %v916 = vcombine.high %v900, %v900
      %v917 = vcombine.high %v907, %v907
      %v918 = vcombine.high %v914, %v914
      %v919 = vcombine.high %v865, %v865
      %v921 = vunpack.c.l.s4 1966171168
      %v922 = vunpack.c.0.s8 %v921
      %v923 = vlaneseq
      %v924 = vshrl.u32 %v923, 7
      %v925 = vsub.s32 %v922, %v924
      %v926 = vrot.slane %v865, %v925
      %v928 = vunpack.c.l.s4 1966171168
      %v929 = vunpack.c.0.s8 %v928
      %v930 = vlaneseq
      %v931 = vshrl.u32 %v930, 7
      %v932 = vsub.s32 %v929, %v931
      %v933 = vrot.slane %v919, %v932
      %v934 = vcombine.high %v926, %v926
      %v935 = vcombine.high %v933, %v933
      %v937 = vunpack.c.l.s4 1966171168
      %v938 = vunpack.c.0.s8 %v937
      %v939 = vlaneseq
      %v940 = vshrl.u32 %v939, 7
      %v941 = vsub.s32 %v938, %v940
      %v942 = vrot.slane %v926, %v941
      %v944 = vunpack.c.l.s4 1966171168
      %v945 = vunpack.c.0.s8 %v944
      %v946 = vlaneseq
      %v947 = vshrl.u32 %v946, 7
      %v948 = vsub.s32 %v945, %v947
      %v949 = vrot.slane %v933, %v948
      %v951 = vunpack.c.l.s4 1966171168
      %v952 = vunpack.c.0.s8 %v951
      %v953 = vlaneseq
      %v954 = vshrl.u32 %v953, 7
      %v955 = vsub.s32 %v952, %v954
      %v956 = vrot.slane %v934, %v955
      %v958 = vunpack.c.l.s4 1966171168
      %v959 = vunpack.c.0.s8 %v958
      %v960 = vlaneseq
      %v961 = vshrl.u32 %v960, 7
      %v962 = vsub.s32 %v959, %v961
      %v963 = vrot.slane %v935, %v962
      %v964 = vcombine.high %v942, %v942
      %v965 = vcombine.high %v949, %v949
      %v966 = vcombine.high %v956, %v956
      %v967 = vcombine.high %v963, %v963
      %v969 = vunpack.c.l.s4 1966171168
      %v970 = vunpack.c.0.s8 %v969
      %v971 = vlaneseq
      %v972 = vshrl.u32 %v971, 7
      %v973 = vsub.s32 %v970, %v972
      %v974 = vrot.slane %v866, %v973
      %v975 = vcombine.high %v974, %v974
      %v977 = vunpack.c.l.s4 1966171168
      %v978 = vunpack.c.0.s8 %v977
      %v979 = vlaneseq
      %v980 = vshrl.u32 %v979, 7
      %v981 = vsub.s32 %v978, %v980
      %v982 = vrot.slane %v974, %v981
      %v984 = vunpack.c.l.s4 1966171168
      %v985 = vunpack.c.0.s8 %v984
      %v986 = vlaneseq
      %v987 = vshrl.u32 %v986, 7
      %v988 = vsub.s32 %v985, %v987
      %v989 = vrot.slane %v975, %v988
      %v990 = vcombine.high %v982, %v982
      %v991 = vcombine.high %v989, %v989
      %v992 = vunpack.i.l.s16 %v893
      %v993 = vunpack.i.h.s16 %v893
      %v994 = vunpack.i.l.s16 %v907
      %v995 = vunpack.i.h.s16 %v907
      %v996 = vunpack.i.l.s16 %v915
      %v997 = vunpack.i.h.s16 %v915
      %v998 = vunpack.i.l.s16 %v917
      %v999 = vunpack.i.h.s16 %v917
      %v1000 = vunpack.i.l.s16 %v900
      %v1001 = vunpack.i.h.s16 %v900
      %v1002 = vunpack.i.l.s16 %v914
      %v1003 = vunpack.i.h.s16 %v914
      %v1004 = vunpack.i.l.s16 %v916
      %v1005 = vunpack.i.h.s16 %v916
      %v1006 = vunpack.i.l.s16 %v918
      %v1007 = vunpack.i.h.s16 %v918
      %v1008 = vunpack.i.l.s16 %v942
      %v1009 = vunpack.i.h.s16 %v942
      %v1010 = vunpack.i.l.s16 %v956
      %v1011 = vunpack.i.h.s16 %v956
      %v1012 = vunpack.i.l.s16 %v964
      %v1013 = vunpack.i.h.s16 %v964
      %v1014 = vunpack.i.l.s16 %v966
      %v1015 = vunpack.i.h.s16 %v966
      %v1016 = vunpack.i.l.s16 %v949
      %v1017 = vunpack.i.h.s16 %v949
      %v1018 = vunpack.i.l.s16 %v963
      %v1019 = vunpack.i.h.s16 %v963
      %v1020 = vunpack.i.l.s16 %v965
      %v1021 = vunpack.i.h.s16 %v965
      %v1022 = vunpack.i.l.s16 %v967
      %v1023 = vunpack.i.h.s16 %v967
      %v1024 = vunpack.i.l.s16 %v982
      %v1025 = vunpack.i.h.s16 %v982
      %v1026 = vunpack.i.l.s16 %v989
      %v1027 = vunpack.i.h.s16 %v989
      %v1028 = vunpack.i.l.s16 %v990
      %v1029 = vunpack.i.h.s16 %v990
      %v1030 = vunpack.i.l.s16 %v991
      %v1031 = vunpack.i.h.s16 %v991
      %v1032 = vpack.i.b16 %v992, %v992
      %v1033 = vlaneseq
      %v1034 = vshrl.u32 %v1033, 7
      %v1035 = vsub.s32 0, %v1034
      %v1036 = vrot.slane %v1032, %v1035
      %vm1037 = vcmask 64512
      %v1039 = vsel %vm1037, %v1036, 0
      %vm1041 = vcmask 1043456
      %v1043 = vsel %vm1041, %v246, 0
      %1045 = vmatprep.subr.bf16.mxu0 0
      %1046 = vmatpush1.bf16.msra.mxu0 %v1043
      %1047 = vmatprep.subr.bf16.mxu0 0
      %1048 = vmatpush1.bf16.msra.mxu0 0
      %1049 = vmatprep.subr.bf16.mxu0 0
      %1050 = vmatpush1.bf16.msra.mxu0 0
      %1051 = vmatprep.subr.bf16.mxu0 0
      %1052 = vmatpush1.bf16.msra.mxu0 0
      %1053 = vmatprep.subr.bf16.mxu0 0
      %1054 = vmatpush1.bf16.msra.mxu0 0
      %1055 = vmatprep.subr.bf16.mxu0 0
      %1056 = vmatpush1.bf16.msra.mxu0 0
      %1057 = vmatprep.subr.bf16.mxu0 0
      %1058 = vmatpush1.bf16.msra.mxu0 0
      %1059 = vmatprep.subr.bf16.mxu0 0
      %1060 = vmatpush1.bf16.msra.mxu0 0
      %1061 = vmatprep.subr.bf16.mxu0 0
      %1062 = vmatpush1.bf16.msra.mxu0 0
      %1063 = vmatprep.subr.bf16.mxu0 0
      %1064 = vmatpush1.bf16.msra.mxu0 0
      %1065 = vmatprep.subr.bf16.mxu0 0
      %1066 = vmatpush1.bf16.msra.mxu0 0
      %1067 = vmatprep.subr.bf16.mxu0 0
      %1068 = vmatpush1.bf16.msra.mxu0 0
      %1069 = vmatprep.subr.bf16.mxu0 0
      %1070 = vmatpush1.bf16.msra.mxu0 0
      %1071 = vmatprep.subr.bf16.mxu0 0
      %1072 = vmatpush1.bf16.msra.mxu0 0
      %1073 = vmatprep.subr.bf16.mxu0 0
      %1074 = vmatpush1.bf16.msra.mxu0 0
      %1075 = vmatprep.subr.bf16.mxu0 0
      %1076 = vmatpush1.bf16.msra.mxu0 0
      %1077 = vmatprep.mubr.bf16.mxu0 0
      %1078 = vmatmul.mubr.bf16.gmra.mrb[0].mxu0 %v1039
      %v1079 = vpop.f32.mrb[0].mxu0
      %v1080 = vadd.f32 0.0, %v1079
      %v1081 = vpop.f32.mrb[0].mxu0
      %v1082 = vpop.f32.mrb[0].mxu0
      %v1083 = vpop.f32.mrb[0].mxu0
      %1084 = vdwg.mxu0
      %v1085 = vpack.i.b16 %v993, %v993
      %v1086 = vlaneseq
      %v1087 = vshrl.u32 %v1086, 7
      %v1088 = vsub.s32 0, %v1087
      %v1089 = vrot.slane %v1085, %v1088
      %v1091 = vsel %vm1037, %v1089, 0
      %v1094 = vsel %vm1041, %v247, 0
      %1096 = vmatprep.subr.bf16.mxu0 0
      %1097 = vmatpush1.bf16.msra.mxu0 %v1094
      %1098 = vmatprep.subr.bf16.mxu0 0
      %1099 = vmatpush1.bf16.msra.mxu0 0
      %1100 = vmatprep.subr.bf16.mxu0 0
      %1101 = vmatpush1.bf16.msra.mxu0 0
      %1102 = vmatprep.subr.bf16.mxu0 0
      %1103 = vmatpush1.bf16.msra.mxu0 0
      %1104 = vmatprep.subr.bf16.mxu0 0
      %1105 = vmatpush1.bf16.msra.mxu0 0
      %1106 = vmatprep.subr.bf16.mxu0 0
      %1107 = vmatpush1.bf16.msra.mxu0 0
      %1108 = vmatprep.subr.bf16.mxu0 0
      %1109 = vmatpush1.bf16.msra.mxu0 0
      %1110 = vmatprep.subr.bf16.mxu0 0
      %1111 = vmatpush1.bf16.msra.mxu0 0
      %1112 = vmatprep.subr.bf16.mxu0 0
      %1113 = vmatpush1.bf16.msra.mxu0 0
      %1114 = vmatprep.subr.bf16.mxu0 0
      %1115 = vmatpush1.bf16.msra.mxu0 0
      %1116 = vmatprep.subr.bf16.mxu0 0
      %1117 = vmatpush1.bf16.msra.mxu0 0
      %1118 = vmatprep.subr.bf16.mxu0 0
      %1119 = vmatpush1.bf16.msra.mxu0 0
      %1120 = vmatprep.subr.bf16.mxu0 0
      %1121 = vmatpush1.bf16.msra.mxu0 0
      %1122 = vmatprep.subr.bf16.mxu0 0
      %1123 = vmatpush1.bf16.msra.mxu0 0
      %1124 = vmatprep.subr.bf16.mxu0 0
      %1125 = vmatpush1.bf16.msra.mxu0 0
      %1126 = vmatprep.subr.bf16.mxu0 0
      %1127 = vmatpush1.bf16.msra.mxu0 0
      %1128 = vmatprep.mubr.bf16.mxu0 0
      %1129 = vmatmul.mubr.bf16.gmra.mrb[0].mxu0 %v1091
      %v1130 = vpop.f32.mrb[0].mxu0
      %v1131 = vadd.f32 0.0, %v1130
      %v1132 = vpop.f32.mrb[0].mxu0
      %v1133 = vpop.f32.mrb[0].mxu0
      %v1134 = vpop.f32.mrb[0].mxu0
      %1135 = vdwg.mxu0
      %v1136 = vpack.i.b16 %v994, %v994
      %v1137 = vlaneseq
      %v1138 = vshrl.u32 %v1137, 7
      %v1139 = vsub.s32 0, %v1138
      %v1140 = vrot.slane %v1136, %v1139
      %v1142 = vsel %vm1037, %v1140, 0
      %v1145 = vsel %vm1041, %v248, 0
      %1147 = vmatprep.subr.bf16.mxu0 0
      %1148 = vmatpush1.bf16.msra.mxu0 %v1145
      %1149 = vmatprep.subr.bf16.mxu0 0
      %1150 = vmatpush1.bf16.msra.mxu0 0
      %1151 = vmatprep.subr.bf16.mxu0 0
      %1152 = vmatpush1.bf16.msra.mxu0 0
      %1153 = vmatprep.subr.bf16.mxu0 0
      %1154 = vmatpush1.bf16.msra.mxu0 0
      %1155 = vmatprep.subr.bf16.mxu0 0
      %1156 = vmatpush1.bf16.msra.mxu0 0
      %1157 = vmatprep.subr.bf16.mxu0 0
      %1158 = vmatpush1.bf16.msra.mxu0 0
      %1159 = vmatprep.subr.bf16.mxu0 0
      %1160 = vmatpush1.bf16.msra.mxu0 0
      %1161 = vmatprep.subr.bf16.mxu0 0
      %1162 = vmatpush1.bf16.msra.mxu0 0
      %1163 = vmatprep.subr.bf16.mxu0 0
      %1164 = vmatpush1.bf16.msra.mxu0 0
      %1165 = vmatprep.subr.bf16.mxu0 0
      %1166 = vmatpush1.bf16.msra.mxu0 0
      %1167 = vmatprep.subr.bf16.mxu0 0
      %1168 = vmatpush1.bf16.msra.mxu0 0
      %1169 = vmatprep.subr.bf16.mxu0 0
      %1170 = vmatpush1.bf16.msra.mxu0 0
      %1171 = vmatprep.subr.bf16.mxu0 0
      %1172 = vmatpush1.bf16.msra.mxu0 0
      %1173 = vmatprep.subr.bf16.mxu0 0
      %1174 = vmatpush1.bf16.msra.mxu0 0
      %1175 = vmatprep.subr.bf16.mxu0 0
      %1176 = vmatpush1.bf16.msra.mxu0 0
      %1177 = vmatprep.subr.bf16.mxu0 0
      %1178 = vmatpush1.bf16.msra.mxu0 0
      %1179 = vmatprep.mubr.bf16.mxu0 0
      %1180 = vmatmul.mubr.bf16.gmra.mrb[0].mxu0 %v1142
      %v1181 = vpop.f32.mrb[0].mxu0
      %v1182 = vadd.f32 0.0, %v1181
      %v1183 = vpop.f32.mrb[0].mxu0
      %v1184 = vpop.f32.mrb[0].mxu0
      %v1185 = vpop.f32.mrb[0].mxu0
      %1186 = vdwg.mxu0
      %v1187 = vpack.i.b16 %v995, %v995
      %v1188 = vlaneseq
      %v1189 = vshrl.u32 %v1188, 7
      %v1190 = vsub.s32 0, %v1189
      %v1191 = vrot.slane %v1187, %v1190
      %v1193 = vsel %vm1037, %v1191, 0
      %v1196 = vsel %vm1041, %v249, 0
      %1198 = vmatprep.subr.bf16.mxu0 0
      %1199 = vmatpush1.bf16.msra.mxu0 %v1196
      %1200 = vmatprep.subr.bf16.mxu0 0
      %1201 = vmatpush1.bf16.msra.mxu0 0
      %1202 = vmatprep.subr.bf16.mxu0 0
      %1203 = vmatpush1.bf16.msra.mxu0 0
      %1204 = vmatprep.subr.bf16.mxu0 0
      %1205 = vmatpush1.bf16.msra.mxu0 0
      %1206 = vmatprep.subr.bf16.mxu0 0
      %1207 = vmatpush1.bf16.msra.mxu0 0
      %1208 = vmatprep.subr.bf16.mxu0 0
      %1209 = vmatpush1.bf16.msra.mxu0 0
      %1210 = vmatprep.subr.bf16.mxu0 0
      %1211 = vmatpush1.bf16.msra.mxu0 0
      %1212 = vmatprep.subr.bf16.mxu0 0
      %1213 = vmatpush1.bf16.msra.mxu0 0
      %1214 = vmatprep.subr.bf16.mxu0 0
      %1215 = vmatpush1.bf16.msra.mxu0 0
      %1216 = vmatprep.subr.bf16.mxu0 0
      %1217 = vmatpush1.bf16.msra.mxu0 0
      %1218 = vmatprep.subr.bf16.mxu0 0
      %1219 = vmatpush1.bf16.msra.mxu0 0
      %1220 = vmatprep.subr.bf16.mxu0 0
      %1221 = vmatpush1.bf16.msra.mxu0 0
      %1222 = vmatprep.subr.bf16.mxu0 0
      %1223 = vmatpush1.bf16.msra.mxu0 0
      %1224 = vmatprep.subr.bf16.mxu0 0
      %1225 = vmatpush1.bf16.msra.mxu0 0
      %1226 = vmatprep.subr.bf16.mxu0 0
      %1227 = vmatpush1.bf16.msra.mxu0 0
      %1228 = vmatprep.subr.bf16.mxu0 0
      %1229 = vmatpush1.bf16.msra.mxu0 0
      %1230 = vmatprep.mubr.bf16.mxu0 0
      %1231 = vmatmul.mubr.bf16.gmra.mrb[0].mxu0 %v1193
      %v1232 = vpop.f32.mrb[0].mxu0
      %v1233 = vadd.f32 0.0, %v1232
      %v1234 = vpop.f32.mrb[0].mxu0
      %v1235 = vpop.f32.mrb[0].mxu0
      %v1236 = vpop.f32.mrb[0].mxu0
      %1237 = vdwg.mxu0
      %v1238 = vpack.i.b16 %v996, %v996
      %v1239 = vlaneseq
      %v1240 = vshrl.u32 %v1239, 7
      %v1241 = vsub.s32 0, %v1240
      %v1242 = vrot.slane %v1238, %v1241
      %v1244 = vsel %vm1037, %v1242, 0
      %v1247 = vsel %vm1041, %v250, 0
      %1249 = vmatprep.subr.bf16.mxu0 0
      %1250 = vmatpush1.bf16.msra.mxu0 %v1247
      %1251 = vmatprep.subr.bf16.mxu0 0
      %1252 = vmatpush1.bf16.msra.mxu0 0
      %1253 = vmatprep.subr.bf16.mxu0 0
      %1254 = vmatpush1.bf16.msra.mxu0 0
      %1255 = vmatprep.subr.bf16.mxu0 0
      %1256 = vmatpush1.bf16.msra.mxu0 0
      %1257 = vmatprep.subr.bf16.mxu0 0
      %1258 = vmatpush1.bf16.msra.mxu0 0
      %1259 = vmatprep.subr.bf16.mxu0 0
      %1260 = vmatpush1.bf16.msra.mxu0 0
      %1261 = vmatprep.subr.bf16.mxu0 0
      %1262 = vmatpush1.bf16.msra.mxu0 0
      %1263 = vmatprep.subr.bf16.mxu0 0
      %1264 = vmatpush1.bf16.msra.mxu0 0
      %1265 = vmatprep.subr.bf16.mxu0 0
      %1266 = vmatpush1.bf16.msra.mxu0 0
      %1267 = vmatprep.subr.bf16.mxu0 0
      %1268 = vmatpush1.bf16.msra.mxu0 0
      %1269 = vmatprep.subr.bf16.mxu0 0
      %1270 = vmatpush1.bf16.msra.mxu0 0
      %1271 = vmatprep.subr.bf16.mxu0 0
      %1272 = vmatpush1.bf16.msra.mxu0 0
      %1273 = vmatprep.subr.bf16.mxu0 0
      %1274 = vmatpush1.bf16.msra.mxu0 0
      %1275 = vmatprep.subr.bf16.mxu0 0
      %1276 = vmatpush1.bf16.msra.mxu0 0
      %1277 = vmatprep.subr.bf16.mxu0 0
      %1278 = vmatpush1.bf16.msra.mxu0 0
      %1279 = vmatprep.subr.bf16.mxu0 0
      %1280 = vmatpush1.bf16.msra.mxu0 0
      %1281 = vmatprep.mubr.bf16.mxu0 0
      %1282 = vmatmul.mubr.bf16.gmra.mrb[0].mxu0 %v1244
      %v1283 = vpop.f32.mrb[0].mxu0
      %v1284 = vadd.f32 0.0, %v1283
      %v1285 = vpop.f32.mrb[0].mxu0
      %v1286 = vpop.f32.mrb[0].mxu0
      %v1287 = vpop.f32.mrb[0].mxu0
      %1288 = vdwg.mxu0
      %v1289 = vpack.i.b16 %v997, %v997
      %v1290 = vlaneseq
      %v1291 = vshrl.u32 %v1290, 7
      %v1292 = vsub.s32 0, %v1291
      %v1293 = vrot.slane %v1289, %v1292
      %v1295 = vsel %vm1037, %v1293, 0
      %v1298 = vsel %vm1041, %v251, 0
      %1300 = vmatprep.subr.bf16.mxu0 0
      %1301 = vmatpush1.bf16.msra.mxu0 %v1298
      %1302 = vmatprep.subr.bf16.mxu0 0
      %1303 = vmatpush1.bf16.msra.mxu0 0
      %1304 = vmatprep.subr.bf16.mxu0 0
      %1305 = vmatpush1.bf16.msra.mxu0 0
      %1306 = vmatprep.subr.bf16.mxu0 0
      %1307 = vmatpush1.bf16.msra.mxu0 0
      %1308 = vmatprep.subr.bf16.mxu0 0
      %1309 = vmatpush1.bf16.msra.mxu0 0
      %1310 = vmatprep.subr.bf16.mxu0 0
      %1311 = vmatpush1.bf16.msra.mxu0 0
      %1312 = vmatprep.subr.bf16.mxu0 0
      %1313 = vmatpush1.bf16.msra.mxu0 0
      %1314 = vmatprep.subr.bf16.mxu0 0
      %1315 = vmatpush1.bf16.msra.mxu0 0
      %1316 = vmatprep.subr.bf16.mxu0 0
      %1317 = vmatpush1.bf16.msra.mxu0 0
      %1318 = vmatprep.subr.bf16.mxu0 0
      %1319 = vmatpush1.bf16.msra.mxu0 0
      %1320 = vmatprep.subr.bf16.mxu0 0
      %1321 = vmatpush1.bf16.msra.mxu0 0
      %1322 = vmatprep.subr.bf16.mxu0 0
      %1323 = vmatpush1.bf16.msra.mxu0 0
      %1324 = vmatprep.subr.bf16.mxu0 0
      %1325 = vmatpush1.bf16.msra.mxu0 0
      %1326 = vmatprep.subr.bf16.mxu0 0
      %1327 = vmatpush1.bf16.msra.mxu0 0
      %1328 = vmatprep.subr.bf16.mxu0 0
      %1329 = vmatpush1.bf16.msra.mxu0 0
      %1330 = vmatprep.subr.bf16.mxu0 0
      %1331 = vmatpush1.bf16.msra.mxu0 0
      %1332 = vmatprep.mubr.bf16.mxu0 0
      %1333 = vmatmul.mubr.bf16.gmra.mrb[0].mxu0 %v1295
      %v1334 = vpop.f32.mrb[0].mxu0
      %v1335 = vadd.f32 0.0, %v1334
      %v1336 = vpop.f32.mrb[0].mxu0
      %v1337 = vpop.f32.mrb[0].mxu0
      %v1338 = vpop.f32.mrb[0].mxu0
      %1339 = vdwg.mxu0
      %v1340 = vpack.i.b16 %v998, %v998
      %v1341 = vlaneseq
      %v1342 = vshrl.u32 %v1341, 7
      %v1343 = vsub.s32 0, %v1342
      %v1344 = vrot.slane %v1340, %v1343
      %v1346 = vsel %vm1037, %v1344, 0
      %v1349 = vsel %vm1041, %v252, 0
      %1351 = vmatprep.subr.bf16.mxu0 0
      %1352 = vmatpush1.bf16.msra.mxu0 %v1349
      %1353 = vmatprep.subr.bf16.mxu0 0
      %1354 = vmatpush1.bf16.msra.mxu0 0
      %1355 = vmatprep.subr.bf16.mxu0 0
      %1356 = vmatpush1.bf16.msra.mxu0 0
      %1357 = vmatprep.subr.bf16.mxu0 0
      %1358 = vmatpush1.bf16.msra.mxu0 0
      %1359 = vmatprep.subr.bf16.mxu0 0
      %1360 = vmatpush1.bf16.msra.mxu0 0
      %1361 = vmatprep.subr.bf16.mxu0 0
      %1362 = vmatpush1.bf16.msra.mxu0 0
      %1363 = vmatprep.subr.bf16.mxu0 0
      %1364 = vmatpush1.bf16.msra.mxu0 0
      %1365 = vmatprep.subr.bf16.mxu0 0
      %1366 = vmatpush1.bf16.msra.mxu0 0
      %1367 = vmatprep.subr.bf16.mxu0 0
      %1368 = vmatpush1.bf16.msra.mxu0 0
      %1369 = vmatprep.subr.bf16.mxu0 0
      %1370 = vmatpush1.bf16.msra.mxu0 0
      %1371 = vmatprep.subr.bf16.mxu0 0
      %1372 = vmatpush1.bf16.msra.mxu0 0
      %1373 = vmatprep.subr.bf16.mxu0 0
      %1374 = vmatpush1.bf16.msra.mxu0 0
      %1375 = vmatprep.subr.bf16.mxu0 0
      %1376 = vmatpush1.bf16.msra.mxu0 0
      %1377 = vmatprep.subr.bf16.mxu0 0
      %1378 = vmatpush1.bf16.msra.mxu0 0
      %1379 = vmatprep.subr.bf16.mxu0 0
      %1380 = vmatpush1.bf16.msra.mxu0 0
      %1381 = vmatprep.subr.bf16.mxu0 0
      %1382 = vmatpush1.bf16.msra.mxu0 0
      %1383 = vmatprep.mubr.bf16.mxu0 0
      %1384 = vmatmul.mubr.bf16.gmra.mrb[0].mxu0 %v1346
      %v1385 = vpop.f32.mrb[0].mxu0
      %v1386 = vadd.f32 0.0, %v1385
      %v1387 = vpop.f32.mrb[0].mxu0
      %v1388 = vpop.f32.mrb[0].mxu0
      %v1389 = vpop.f32.mrb[0].mxu0
      %1390 = vdwg.mxu0
      %v1391 = vpack.i.b16 %v999, %v999
      %v1392 = vlaneseq
      %v1393 = vshrl.u32 %v1392, 7
      %v1394 = vsub.s32 0, %v1393
      %v1395 = vrot.slane %v1391, %v1394
      %v1397 = vsel %vm1037, %v1395, 0
      %v1400 = vsel %vm1041, %v253, 0
      %1402 = vmatprep.subr.bf16.mxu0 0
      %1403 = vmatpush1.bf16.msra.mxu0 %v1400
      %1404 = vmatprep.subr.bf16.mxu0 0
      %1405 = vmatpush1.bf16.msra.mxu0 0
      %1406 = vmatprep.subr.bf16.mxu0 0
      %1407 = vmatpush1.bf16.msra.mxu0 0
      %1408 = vmatprep.subr.bf16.mxu0 0
      %1409 = vmatpush1.bf16.msra.mxu0 0
      %1410 = vmatprep.subr.bf16.mxu0 0
      %1411 = vmatpush1.bf16.msra.mxu0 0
      %1412 = vmatprep.subr.bf16.mxu0 0
      %1413 = vmatpush1.bf16.msra.mxu0 0
      %1414 = vmatprep.subr.bf16.mxu0 0
      %1415 = vmatpush1.bf16.msra.mxu0 0
      %1416 = vmatprep.subr.bf16.mxu0 0
      %1417 = vmatpush1.bf16.msra.mxu0 0
      %1418 = vmatprep.subr.bf16.mxu0 0
      %1419 = vmatpush1.bf16.msra.mxu0 0
      %1420 = vmatprep.subr.bf16.mxu0 0
      %1421 = vmatpush1.bf16.msra.mxu0 0
      %1422 = vmatprep.subr.bf16.mxu0 0
      %1423 = vmatpush1.bf16.msra.mxu0 0
      %1424 = vmatprep.subr.bf16.mxu0 0
      %1425 = vmatpush1.bf16.msra.mxu0 0
      %1426 = vmatprep.subr.bf16.mxu0 0
      %1427 = vmatpush1.bf16.msra.mxu0 0
      %1428 = vmatprep.subr.bf16.mxu0 0
      %1429 = vmatpush1.bf16.msra.mxu0 0
      %1430 = vmatprep.subr.bf16.mxu0 0
      %1431 = vmatpush1.bf16.msra.mxu0 0
      %1432 = vmatprep.subr.bf16.mxu0 0
      %1433 = vmatpush1.bf16.msra.mxu0 0
      %1434 = vmatprep.mubr.bf16.mxu0 0
      %1435 = vmatmul.mubr.bf16.gmra.mrb[0].mxu0 %v1397
      %v1436 = vpop.f32.mrb[0].mxu0
      %v1437 = vadd.f32 0.0, %v1436
      %v1438 = vpop.f32.mrb[0].mxu0
      %v1439 = vpop.f32.mrb[0].mxu0
      %v1440 = vpop.f32.mrb[0].mxu0
      %1441 = vdwg.mxu0
      %v1442 = vpack.i.b16 %v1000, %v1000
      %v1443 = vlaneseq
      %v1444 = vshrl.u32 %v1443, 7
      %v1445 = vsub.s32 0, %v1444
      %v1446 = vrot.slane %v1442, %v1445
      %v1448 = vsel %vm1037, %v1446, 0
      %v1451 = vsel %vm1041, %v254, 0
      %1453 = vmatprep.subr.bf16.mxu0 0
      %1454 = vmatpush1.bf16.msra.mxu0 %v1451
      %1455 = vmatprep.subr.bf16.mxu0 0
      %1456 = vmatpush1.bf16.msra.mxu0 0
      %1457 = vmatprep.subr.bf16.mxu0 0
      %1458 = vmatpush1.bf16.msra.mxu0 0
      %1459 = vmatprep.subr.bf16.mxu0 0
      %1460 = vmatpush1.bf16.msra.mxu0 0
      %1461 = vmatprep.subr.bf16.mxu0 0
      %1462 = vmatpush1.bf16.msra.mxu0 0
      %1463 = vmatprep.subr.bf16.mxu0 0
      %1464 = vmatpush1.bf16.msra.mxu0 0
      %1465 = vmatprep.subr.bf16.mxu0 0
      %1466 = vmatpush1.bf16.msra.mxu0 0
      %1467 = vmatprep.subr.bf16.mxu0 0
      %1468 = vmatpush1.bf16.msra.mxu0 0
      %1469 = vmatprep.subr.bf16.mxu0 0
      %1470 = vmatpush1.bf16.msra.mxu0 0
      %1471 = vmatprep.subr.bf16.mxu0 0
      %1472 = vmatpush1.bf16.msra.mxu0 0
      %1473 = vmatprep.subr.bf16.mxu0 0
      %1474 = vmatpush1.bf16.msra.mxu0 0
      %1475 = vmatprep.subr.bf16.mxu0 0
      %1476 = vmatpush1.bf16.msra.mxu0 0
      %1477 = vmatprep.subr.bf16.mxu0 0
      %1478 = vmatpush1.bf16.msra.mxu0 0
      %1479 = vmatprep.subr.bf16.mxu0 0
      %1480 = vmatpush1.bf16.msra.mxu0 0
      %1481 = vmatprep.subr.bf16.mxu0 0
      %1482 = vmatpush1.bf16.msra.mxu0 0
      %1483 = vmatprep.subr.bf16.mxu0 0
      %1484 = vmatpush1.bf16.msra.mxu0 0
      %1485 = vmatprep.mubr.bf16.mxu0 0
      %1486 = vmatmul.mubr.bf16.gmra.mrb[0].mxu0 %v1448
      %v1487 = vpop.f32.mrb[0].mxu0
      %v1488 = vadd.f32 0.0, %v1487
      %v1489 = vpop.f32.mrb[0].mxu0
      %v1490 = vpop.f32.mrb[0].mxu0
      %v1491 = vpop.f32.mrb[0].mxu0
      %1492 = vdwg.mxu0
      %v1493 = vpack.i.b16 %v1001, %v1001
      %v1494 = vlaneseq
      %v1495 = vshrl.u32 %v1494, 7
      %v1496 = vsub.s32 0, %v1495
      %v1497 = vrot.slane %v1493, %v1496
      %v1499 = vsel %vm1037, %v1497, 0
      %v1502 = vsel %vm1041, %v255, 0
      %1504 = vmatprep.subr.bf16.mxu0 0
      %1505 = vmatpush1.bf16.msra.mxu0 %v1502
      %1506 = vmatprep.subr.bf16.mxu0 0
      %1507 = vmatpush1.bf16.msra.mxu0 0
      %1508 = vmatprep.subr.bf16.mxu0 0
      %1509 = vmatpush1.bf16.msra.mxu0 0
      %1510 = vmatprep.subr.bf16.mxu0 0
      %1511 = vmatpush1.bf16.msra.mxu0 0
      %1512 = vmatprep.subr.bf16.mxu0 0
      %1513 = vmatpush1.bf16.msra.mxu0 0
      %1514 = vmatprep.subr.bf16.mxu0 0
      %1515 = vmatpush1.bf16.msra.mxu0 0
      %1516 = vmatprep.subr.bf16.mxu0 0
      %1517 = vmatpush1.bf16.msra.mxu0 0
      %1518 = vmatprep.subr.bf16.mxu0 0
      %1519 = vmatpush1.bf16.msra.mxu0 0
      %1520 = vmatprep.subr.bf16.mxu0 0
      %1521 = vmatpush1.bf16.msra.mxu0 0
      %1522 = vmatprep.subr.bf16.mxu0 0
      %1523 = vmatpush1.bf16.msra.mxu0 0
      %1524 = vmatprep.subr.bf16.mxu0 0
      %1525 = vmatpush1.bf16.msra.mxu0 0
      %1526 = vmatprep.subr.bf16.mxu0 0
      %1527 = vmatpush1.bf16.msra.mxu0 0
      %1528 = vmatprep.subr.bf16.mxu0 0
      %1529 = vmatpush1.bf16.msra.mxu0 0
      %1530 = vmatprep.subr.bf16.mxu0 0
      %1531 = vmatpush1.bf16.msra.mxu0 0
      %1532 = vmatprep.subr.bf16.mxu0 0
      %1533 = vmatpush1.bf16.msra.mxu0 0
      %1534 = vmatprep.subr.bf16.mxu0 0
      %1535 = vmatpush1.bf16.msra.mxu0 0
      %1536 = vmatprep.mubr.bf16.mxu0 0
      %1537 = vmatmul.mubr.bf16.gmra.mrb[0].mxu0 %v1499
      %v1538 = vpop.f32.mrb[0].mxu0
      %v1539 = vadd.f32 0.0, %v1538
      %v1540 = vpop.f32.mrb[0].mxu0
      %v1541 = vpop.f32.mrb[0].mxu0
      %v1542 = vpop.f32.mrb[0].mxu0
      %1543 = vdwg.mxu0
      %v1544 = vpack.i.b16 %v1002, %v1002
      %v1545 = vlaneseq
      %v1546 = vshrl.u32 %v1545, 7
      %v1547 = vsub.s32 0, %v1546
      %v1548 = vrot.slane %v1544, %v1547
      %v1550 = vsel %vm1037, %v1548, 0
      %v1553 = vsel %vm1041, %v256, 0
      %1555 = vmatprep.subr.bf16.mxu0 0
      %1556 = vmatpush1.bf16.msra.mxu0 %v1553
      %1557 = vmatprep.subr.bf16.mxu0 0
      %1558 = vmatpush1.bf16.msra.mxu0 0
      %1559 = vmatprep.subr.bf16.mxu0 0
      %1560 = vmatpush1.bf16.msra.mxu0 0
      %1561 = vmatprep.subr.bf16.mxu0 0
      %1562 = vmatpush1.bf16.msra.mxu0 0
      %1563 = vmatprep.subr.bf16.mxu0 0
      %1564 = vmatpush1.bf16.msra.mxu0 0
      %1565 = vmatprep.subr.bf16.mxu0 0
      %1566 = vmatpush1.bf16.msra.mxu0 0
      %1567 = vmatprep.subr.bf16.mxu0 0
      %1568 = vmatpush1.bf16.msra.mxu0 0
      %1569 = vmatprep.subr.bf16.mxu0 0
      %1570 = vmatpush1.bf16.msra.mxu0 0
      %1571 = vmatprep.subr.bf16.mxu0 0
      %1572 = vmatpush1.bf16.msra.mxu0 0
      %1573 = vmatprep.subr.bf16.mxu0 0
      %1574 = vmatpush1.bf16.msra.mxu0 0
      %1575 = vmatprep.subr.bf16.mxu0 0
      %1576 = vmatpush1.bf16.msra.mxu0 0
      %1577 = vmatprep.subr.bf16.mxu0 0
      %1578 = vmatpush1.bf16.msra.mxu0 0
      %1579 = vmatprep.subr.bf16.mxu0 0
      %1580 = vmatpush1.bf16.msra.mxu0 0
      %1581 = vmatprep.subr.bf16.mxu0 0
      %1582 = vmatpush1.bf16.msra.mxu0 0
      %1583 = vmatprep.subr.bf16.mxu0 0
      %1584 = vmatpush1.bf16.msra.mxu0 0
      %1585 = vmatprep.subr.bf16.mxu0 0
      %1586 = vmatpush1.bf16.msra.mxu0 0
      %1587 = vmatprep.mubr.bf16.mxu0 0
      %1588 = vmatmul.mubr.bf16.gmra.mrb[0].mxu0 %v1550
      %v1589 = vpop.f32.mrb[0].mxu0
      %v1590 = vadd.f32 0.0, %v1589
      %v1591 = vpop.f32.mrb[0].mxu0
      %v1592 = vpop.f32.mrb[0].mxu0
      %v1593 = vpop.f32.mrb[0].mxu0
      %1594 = vdwg.mxu0
      %v1595 = vpack.i.b16 %v1003, %v1003
      %v1596 = vlaneseq
      %v1597 = vshrl.u32 %v1596, 7
      %v1598 = vsub.s32 0, %v1597
      %v1599 = vrot.slane %v1595, %v1598
      %v1601 = vsel %vm1037, %v1599, 0
      %v1604 = vsel %vm1041, %v257, 0
      %1606 = vmatprep.subr.bf16.mxu0 0
      %1607 = vmatpush1.bf16.msra.mxu0 %v1604
      %1608 = vmatprep.subr.bf16.mxu0 0
      %1609 = vmatpush1.bf16.msra.mxu0 0
      %1610 = vmatprep.subr.bf16.mxu0 0
      %1611 = vmatpush1.bf16.msra.mxu0 0
      %1612 = vmatprep.subr.bf16.mxu0 0
      %1613 = vmatpush1.bf16.msra.mxu0 0
      %1614 = vmatprep.subr.bf16.mxu0 0
      %1615 = vmatpush1.bf16.msra.mxu0 0
      %1616 = vmatprep.subr.bf16.mxu0 0
      %1617 = vmatpush1.bf16.msra.mxu0 0
      %1618 = vmatprep.subr.bf16.mxu0 0
      %1619 = vmatpush1.bf16.msra.mxu0 0
      %1620 = vmatprep.subr.bf16.mxu0 0
      %1621 = vmatpush1.bf16.msra.mxu0 0
      %1622 = vmatprep.subr.bf16.mxu0 0
      %1623 = vmatpush1.bf16.msra.mxu0 0
      %1624 = vmatprep.subr.bf16.mxu0 0
      %1625 = vmatpush1.bf16.msra.mxu0 0
      %1626 = vmatprep.subr.bf16.mxu0 0
      %1627 = vmatpush1.bf16.msra.mxu0 0
      %1628 = vmatprep.subr.bf16.mxu0 0
      %1629 = vmatpush1.bf16.msra.mxu0 0
      %1630 = vmatprep.subr.bf16.mxu0 0
      %1631 = vmatpush1.bf16.msra.mxu0 0
      %1632 = vmatprep.subr.bf16.mxu0 0
      %1633 = vmatpush1.bf16.msra.mxu0 0
      %1634 = vmatprep.subr.bf16.mxu0 0
      %1635 = vmatpush1.bf16.msra.mxu0 0
      %1636 = vmatprep.subr.bf16.mxu0 0
      %1637 = vmatpush1.bf16.msra.mxu0 0
      %1638 = vmatprep.mubr.bf16.mxu0 0
      %1639 = vmatmul.mubr.bf16.gmra.mrb[0].mxu0 %v1601
      %v1640 = vpop.f32.mrb[0].mxu0
      %v1641 = vadd.f32 0.0, %v1640
      %v1642 = vpop.f32.mrb[0].mxu0
      %v1643 = vpop.f32.mrb[0].mxu0
      %v1644 = vpop.f32.mrb[0].mxu0
      %1645 = vdwg.mxu0
      %v1646 = vpack.i.b16 %v1004, %v1004
      %v1647 = vlaneseq
      %v1648 = vshrl.u32 %v1647, 7
      %v1649 = vsub.s32 0, %v1648
      %v1650 = vrot.slane %v1646, %v1649
      %v1652 = vsel %vm1037, %v1650, 0
      %v1655 = vsel %vm1041, %v258, 0
      %1657 = vmatprep.subr.bf16.mxu0 0
      %1658 = vmatpush1.bf16.msra.mxu0 %v1655
      %1659 = vmatprep.subr.bf16.mxu0 0
      %1660 = vmatpush1.bf16.msra.mxu0 0
      %1661 = vmatprep.subr.bf16.mxu0 0
      %1662 = vmatpush1.bf16.msra.mxu0 0
      %1663 = vmatprep.subr.bf16.mxu0 0
      %1664 = vmatpush1.bf16.msra.mxu0 0
      %1665 = vmatprep.subr.bf16.mxu0 0
      %1666 = vmatpush1.bf16.msra.mxu0 0
      %1667 = vmatprep.subr.bf16.mxu0 0
      %1668 = vmatpush1.bf16.msra.mxu0 0
      %1669 = vmatprep.subr.bf16.mxu0 0
      %1670 = vmatpush1.bf16.msra.mxu0 0
      %1671 = vmatprep.subr.bf16.mxu0 0
      %1672 = vmatpush1.bf16.msra.mxu0 0
      %1673 = vmatprep.subr.bf16.mxu0 0
      %1674 = vmatpush1.bf16.msra.mxu0 0
      %1675 = vmatprep.subr.bf16.mxu0 0
      %1676 = vmatpush1.bf16.msra.mxu0 0
      %1677 = vmatprep.subr.bf16.mxu0 0
      %1678 = vmatpush1.bf16.msra.mxu0 0
      %1679 = vmatprep.subr.bf16.mxu0 0
      %1680 = vmatpush1.bf16.msra.mxu0 0
      %1681 = vmatprep.subr.bf16.mxu0 0
      %1682 = vmatpush1.bf16.msra.mxu0 0
      %1683 = vmatprep.subr.bf16.mxu0 0
      %1684 = vmatpush1.bf16.msra.mxu0 0
      %1685 = vmatprep.subr.bf16.mxu0 0
      %1686 = vmatpush1.bf16.msra.mxu0 0
      %1687 = vmatprep.subr.bf16.mxu0 0
      %1688 = vmatpush1.bf16.msra.mxu0 0
      %1689 = vmatprep.mubr.bf16.mxu0 0
      %1690 = vmatmul.mubr.bf16.gmra.mrb[0].mxu0 %v1652
      %v1691 = vpop.f32.mrb[0].mxu0
      %v1692 = vadd.f32 0.0, %v1691
      %v1693 = vpop.f32.mrb[0].mxu0
      %v1694 = vpop.f32.mrb[0].mxu0
      %v1695 = vpop.f32.mrb[0].mxu0
      %1696 = vdwg.mxu0
      %v1697 = vpack.i.b16 %v1005, %v1005
      %v1698 = vlaneseq
      %v1699 = vshrl.u32 %v1698, 7
      %v1700 = vsub.s32 0, %v1699
      %v1701 = vrot.slane %v1697, %v1700
      %v1703 = vsel %vm1037, %v1701, 0
      %v1706 = vsel %vm1041, %v259, 0
      %1708 = vmatprep.subr.bf16.mxu0 0
      %1709 = vmatpush1.bf16.msra.mxu0 %v1706
      %1710 = vmatprep.subr.bf16.mxu0 0
      %1711 = vmatpush1.bf16.msra.mxu0 0
      %1712 = vmatprep.subr.bf16.mxu0 0
      %1713 = vmatpush1.bf16.msra.mxu0 0
      %1714 = vmatprep.subr.bf16.mxu0 0
      %1715 = vmatpush1.bf16.msra.mxu0 0
      %1716 = vmatprep.subr.bf16.mxu0 0
      %1717 = vmatpush1.bf16.msra.mxu0 0
      %1718 = vmatprep.subr.bf16.mxu0 0
      %1719 = vmatpush1.bf16.msra.mxu0 0
      %1720 = vmatprep.subr.bf16.mxu0 0
      %1721 = vmatpush1.bf16.msra.mxu0 0
      %1722 = vmatprep.subr.bf16.mxu0 0
      %1723 = vmatpush1.bf16.msra.mxu0 0
      %1724 = vmatprep.subr.bf16.mxu0 0
      %1725 = vmatpush1.bf16.msra.mxu0 0
      %1726 = vmatprep.subr.bf16.mxu0 0
      %1727 = vmatpush1.bf16.msra.mxu0 0
      %1728 = vmatprep.subr.bf16.mxu0 0
      %1729 = vmatpush1.bf16.msra.mxu0 0
      %1730 = vmatprep.subr.bf16.mxu0 0
      %1731 = vmatpush1.bf16.msra.mxu0 0
      %1732 = vmatprep.subr.bf16.mxu0 0
      %1733 = vmatpush1.bf16.msra.mxu0 0
      %1734 = vmatprep.subr.bf16.mxu0 0
      %1735 = vmatpush1.bf16.msra.mxu0 0
      %1736 = vmatprep.subr.bf16.mxu0 0
      %1737 = vmatpush1.bf16.msra.mxu0 0
      %1738 = vmatprep.subr.bf16.mxu0 0
      %1739 = vmatpush1.bf16.msra.mxu0 0
      %1740 = vmatprep.mubr.bf16.mxu0 0
      %1741 = vmatmul.mubr.bf16.gmra.mrb[0].mxu0 %v1703
      %v1742 = vpop.f32.mrb[0].mxu0
      %v1743 = vadd.f32 0.0, %v1742
      %v1744 = vpop.f32.mrb[0].mxu0
      %v1745 = vpop.f32.mrb[0].mxu0
      %v1746 = vpop.f32.mrb[0].mxu0
      %1747 = vdwg.mxu0
      %v1748 = vpack.i.b16 %v1006, %v1006
      %v1749 = vlaneseq
      %v1750 = vshrl.u32 %v1749, 7
      %v1751 = vsub.s32 0, %v1750
      %v1752 = vrot.slane %v1748, %v1751
      %v1754 = vsel %vm1037, %v1752, 0
      %v1757 = vsel %vm1041, %v260, 0
      %1759 = vmatprep.subr.bf16.mxu0 0
      %1760 = vmatpush1.bf16.msra.mxu0 %v1757
      %1761 = vmatprep.subr.bf16.mxu0 0
      %1762 = vmatpush1.bf16.msra.mxu0 0
      %1763 = vmatprep.subr.bf16.mxu0 0
      %1764 = vmatpush1.bf16.msra.mxu0 0
      %1765 = vmatprep.subr.bf16.mxu0 0
      %1766 = vmatpush1.bf16.msra.mxu0 0
      %1767 = vmatprep.subr.bf16.mxu0 0
      %1768 = vmatpush1.bf16.msra.mxu0 0
      %1769 = vmatprep.subr.bf16.mxu0 0
      %1770 = vmatpush1.bf16.msra.mxu0 0
      %1771 = vmatprep.subr.bf16.mxu0 0
      %1772 = vmatpush1.bf16.msra.mxu0 0
      %1773 = vmatprep.subr.bf16.mxu0 0
      %1774 = vmatpush1.bf16.msra.mxu0 0
      %1775 = vmatprep.subr.bf16.mxu0 0
      %1776 = vmatpush1.bf16.msra.mxu0 0
      %1777 = vmatprep.subr.bf16.mxu0 0
      %1778 = vmatpush1.bf16.msra.mxu0 0
      %1779 = vmatprep.subr.bf16.mxu0 0
      %1780 = vmatpush1.bf16.msra.mxu0 0
      %1781 = vmatprep.subr.bf16.mxu0 0
      %1782 = vmatpush1.bf16.msra.mxu0 0
      %1783 = vmatprep.subr.bf16.mxu0 0
      %1784 = vmatpush1.bf16.msra.mxu0 0
      %1785 = vmatprep.subr.bf16.mxu0 0
      %1786 = vmatpush1.bf16.msra.mxu0 0
      %1787 = vmatprep.subr.bf16.mxu0 0
      %1788 = vmatpush1.bf16.msra.mxu0 0
      %1789 = vmatprep.subr.bf16.mxu0 0
      %1790 = vmatpush1.bf16.msra.mxu0 0
      %1791 = vmatprep.mubr.bf16.mxu0 0
      %1792 = vmatmul.mubr.bf16.gmra.mrb[0].mxu0 %v1754
      %v1793 = vpop.f32.mrb[0].mxu0
      %v1794 = vadd.f32 0.0, %v1793
      %v1795 = vpop.f32.mrb[0].mxu0
      %v1796 = vpop.f32.mrb[0].mxu0
      %v1797 = vpop.f32.mrb[0].mxu0
      %1798 = vdwg.mxu0
      %v1799 = vpack.i.b16 %v1007, %v1007
      %v1800 = vlaneseq
      %v1801 = vshrl.u32 %v1800, 7
      %v1802 = vsub.s32 0, %v1801
      %v1803 = vrot.slane %v1799, %v1802
      %v1805 = vsel %vm1037, %v1803, 0
      %v1808 = vsel %vm1041, %v261, 0
      %1810 = vmatprep.subr.bf16.mxu0 0
      %1811 = vmatpush1.bf16.msra.mxu0 %v1808
      %1812 = vmatprep.subr.bf16.mxu0 0
      %1813 = vmatpush1.bf16.msra.mxu0 0
      %1814 = vmatprep.subr.bf16.mxu0 0
      %1815 = vmatpush1.bf16.msra.mxu0 0
      %1816 = vmatprep.subr.bf16.mxu0 0
      %1817 = vmatpush1.bf16.msra.mxu0 0
      %1818 = vmatprep.subr.bf16.mxu0 0
      %1819 = vmatpush1.bf16.msra.mxu0 0
      %1820 = vmatprep.subr.bf16.mxu0 0
      %1821 = vmatpush1.bf16.msra.mxu0 0
      %1822 = vmatprep.subr.bf16.mxu0 0
      %1823 = vmatpush1.bf16.msra.mxu0 0
      %1824 = vmatprep.subr.bf16.mxu0 0
      %1825 = vmatpush1.bf16.msra.mxu0 0
      %1826 = vmatprep.subr.bf16.mxu0 0
      %1827 = vmatpush1.bf16.msra.mxu0 0
      %1828 = vmatprep.subr.bf16.mxu0 0
      %1829 = vmatpush1.bf16.msra.mxu0 0
      %1830 = vmatprep.subr.bf16.mxu0 0
      %1831 = vmatpush1.bf16.msra.mxu0 0
      %1832 = vmatprep.subr.bf16.mxu0 0
      %1833 = vmatpush1.bf16.msra.mxu0 0
      %1834 = vmatprep.subr.bf16.mxu0 0
      %1835 = vmatpush1.bf16.msra.mxu0 0
      %1836 = vmatprep.subr.bf16.mxu0 0
      %1837 = vmatpush1.bf16.msra.mxu0 0
      %1838 = vmatprep.subr.bf16.mxu0 0
      %1839 = vmatpush1.bf16.msra.mxu0 0
      %1840 = vmatprep.subr.bf16.mxu0 0
      %1841 = vmatpush1.bf16.msra.mxu0 0
      %1842 = vmatprep.mubr.bf16.mxu0 0
      %1843 = vmatmul.mubr.bf16.gmra.mrb[0].mxu0 %v1805
      %v1844 = vpop.f32.mrb[0].mxu0
      %v1845 = vadd.f32 0.0, %v1844
      %v1846 = vpop.f32.mrb[0].mxu0
      %v1847 = vpop.f32.mrb[0].mxu0
      %v1848 = vpop.f32.mrb[0].mxu0
      %1849 = vdwg.mxu0
      %v1850 = vpack.i.b16 %v1008, %v1008
      %v1851 = vlaneseq
      %v1852 = vshrl.u32 %v1851, 7
      %v1853 = vsub.s32 0, %v1852
      %v1854 = vrot.slane %v1850, %v1853
      %v1856 = vsel %vm1037, %v1854, 0
      %v1859 = vsel %vm1041, %v262, 0
      %1861 = vmatprep.subr.bf16.mxu0 0
      %1862 = vmatpush1.bf16.msra.mxu0 %v1859
      %1863 = vmatprep.subr.bf16.mxu0 0
      %1864 = vmatpush1.bf16.msra.mxu0 0
      %1865 = vmatprep.subr.bf16.mxu0 0
      %1866 = vmatpush1.bf16.msra.mxu0 0
      %1867 = vmatprep.subr.bf16.mxu0 0
      %1868 = vmatpush1.bf16.msra.mxu0 0
      %1869 = vmatprep.subr.bf16.mxu0 0
      %1870 = vmatpush1.bf16.msra.mxu0 0
      %1871 = vmatprep.subr.bf16.mxu0 0
      %1872 = vmatpush1.bf16.msra.mxu0 0
      %1873 = vmatprep.subr.bf16.mxu0 0
      %1874 = vmatpush1.bf16.msra.mxu0 0
      %1875 = vmatprep.subr.bf16.mxu0 0
      %1876 = vmatpush1.bf16.msra.mxu0 0
      %1877 = vmatprep.subr.bf16.mxu0 0
      %1878 = vmatpush1.bf16.msra.mxu0 0
      %1879 = vmatprep.subr.bf16.mxu0 0
      %1880 = vmatpush1.bf16.msra.mxu0 0
      %1881 = vmatprep.subr.bf16.mxu0 0
      %1882 = vmatpush1.bf16.msra.mxu0 0
      %1883 = vmatprep.subr.bf16.mxu0 0
      %1884 = vmatpush1.bf16.msra.mxu0 0
      %1885 = vmatprep.subr.bf16.mxu0 0
      %1886 = vmatpush1.bf16.msra.mxu0 0
      %1887 = vmatprep.subr.bf16.mxu0 0
      %1888 = vmatpush1.bf16.msra.mxu0 0
      %1889 = vmatprep.subr.bf16.mxu0 0
      %1890 = vmatpush1.bf16.msra.mxu0 0
      %1891 = vmatprep.subr.bf16.mxu0 0
      %1892 = vmatpush1.bf16.msra.mxu0 0
      %1893 = vmatprep.mubr.bf16.mxu0 0
      %1894 = vmatmul.mubr.bf16.gmra.mrb[0].mxu0 %v1856
      %v1895 = vpop.f32.mrb[0].mxu0
      %v1896 = vadd.f32 0.0, %v1895
      %v1897 = vpop.f32.mrb[0].mxu0
      %v1898 = vpop.f32.mrb[0].mxu0
      %v1899 = vpop.f32.mrb[0].mxu0
      %1900 = vdwg.mxu0
      %v1901 = vpack.i.b16 %v1009, %v1009
      %v1902 = vlaneseq
      %v1903 = vshrl.u32 %v1902, 7
      %v1904 = vsub.s32 0, %v1903
      %v1905 = vrot.slane %v1901, %v1904
      %v1907 = vsel %vm1037, %v1905, 0
      %v1910 = vsel %vm1041, %v263, 0
      %1912 = vmatprep.subr.bf16.mxu0 0
      %1913 = vmatpush1.bf16.msra.mxu0 %v1910
      %1914 = vmatprep.subr.bf16.mxu0 0
      %1915 = vmatpush1.bf16.msra.mxu0 0
      %1916 = vmatprep.subr.bf16.mxu0 0
      %1917 = vmatpush1.bf16.msra.mxu0 0
      %1918 = vmatprep.subr.bf16.mxu0 0
      %1919 = vmatpush1.bf16.msra.mxu0 0
      %1920 = vmatprep.subr.bf16.mxu0 0
      %1921 = vmatpush1.bf16.msra.mxu0 0
      %1922 = vmatprep.subr.bf16.mxu0 0
      %1923 = vmatpush1.bf16.msra.mxu0 0
      %1924 = vmatprep.subr.bf16.mxu0 0
      %1925 = vmatpush1.bf16.msra.mxu0 0
      %1926 = vmatprep.subr.bf16.mxu0 0
      %1927 = vmatpush1.bf16.msra.mxu0 0
      %1928 = vmatprep.subr.bf16.mxu0 0
      %1929 = vmatpush1.bf16.msra.mxu0 0
      %1930 = vmatprep.subr.bf16.mxu0 0
      %1931 = vmatpush1.bf16.msra.mxu0 0
      %1932 = vmatprep.subr.bf16.mxu0 0
      %1933 = vmatpush1.bf16.msra.mxu0 0
      %1934 = vmatprep.subr.bf16.mxu0 0
      %1935 = vmatpush1.bf16.msra.mxu0 0
      %1936 = vmatprep.subr.bf16.mxu0 0
      %1937 = vmatpush1.bf16.msra.mxu0 0
      %1938 = vmatprep.subr.bf16.mxu0 0
      %1939 = vmatpush1.bf16.msra.mxu0 0
      %1940 = vmatprep.subr.bf16.mxu0 0
      %1941 = vmatpush1.bf16.msra.mxu0 0
      %1942 = vmatprep.subr.bf16.mxu0 0
      %1943 = vmatpush1.bf16.msra.mxu0 0
      %1944 = vmatprep.mubr.bf16.mxu0 0
      %1945 = vmatmul.mubr.bf16.gmra.mrb[0].mxu0 %v1907
      %v1946 = vpop.f32.mrb[0].mxu0
      %v1947 = vadd.f32 0.0, %v1946
      %v1948 = vpop.f32.mrb[0].mxu0
      %v1949 = vpop.f32.mrb[0].mxu0
      %v1950 = vpop.f32.mrb[0].mxu0
      %1951 = vdwg.mxu0
      %v1952 = vpack.i.b16 %v1010, %v1010
      %v1953 = vlaneseq
      %v1954 = vshrl.u32 %v1953, 7
      %v1955 = vsub.s32 0, %v1954
      %v1956 = vrot.slane %v1952, %v1955
      %v1958 = vsel %vm1037, %v1956, 0
      %v1961 = vsel %vm1041, %v264, 0
      %1963 = vmatprep.subr.bf16.mxu0 0
      %1964 = vmatpush1.bf16.msra.mxu0 %v1961
      %1965 = vmatprep.subr.bf16.mxu0 0
      %1966 = vmatpush1.bf16.msra.mxu0 0
      %1967 = vmatprep.subr.bf16.mxu0 0
      %1968 = vmatpush1.bf16.msra.mxu0 0
      %1969 = vmatprep.subr.bf16.mxu0 0
      %1970 = vmatpush1.bf16.msra.mxu0 0
      %1971 = vmatprep.subr.bf16.mxu0 0
      %1972 = vmatpush1.bf16.msra.mxu0 0
      %1973 = vmatprep.subr.bf16.mxu0 0
      %1974 = vmatpush1.bf16.msra.mxu0 0
      %1975 = vmatprep.subr.bf16.mxu0 0
      %1976 = vmatpush1.bf16.msra.mxu0 0
      %1977 = vmatprep.subr.bf16.mxu0 0
      %1978 = vmatpush1.bf16.msra.mxu0 0
      %1979 = vmatprep.subr.bf16.mxu0 0
      %1980 = vmatpush1.bf16.msra.mxu0 0
      %1981 = vmatprep.subr.bf16.mxu0 0
      %1982 = vmatpush1.bf16.msra.mxu0 0
      %1983 = vmatprep.subr.bf16.mxu0 0
      %1984 = vmatpush1.bf16.msra.mxu0 0
      %1985 = vmatprep.subr.bf16.mxu0 0
      %1986 = vmatpush1.bf16.msra.mxu0 0
      %1987 = vmatprep.subr.bf16.mxu0 0
      %1988 = vmatpush1.bf16.msra.mxu0 0
      %1989 = vmatprep.subr.bf16.mxu0 0
      %1990 = vmatpush1.bf16.msra.mxu0 0
      %1991 = vmatprep.subr.bf16.mxu0 0
      %1992 = vmatpush1.bf16.msra.mxu0 0
      %1993 = vmatprep.subr.bf16.mxu0 0
      %1994 = vmatpush1.bf16.msra.mxu0 0
      %1995 = vmatprep.mubr.bf16.mxu0 0
      %1996 = vmatmul.mubr.bf16.gmra.mrb[0].mxu0 %v1958
      %v1997 = vpop.f32.mrb[0].mxu0
      %v1998 = vadd.f32 0.0, %v1997
      %v1999 = vpop.f32.mrb[0].mxu0
      %v2000 = vpop.f32.mrb[0].mxu0
      %v2001 = vpop.f32.mrb[0].mxu0
      %2002 = vdwg.mxu0
      %v2003 = vpack.i.b16 %v1011, %v1011
      %v2004 = vlaneseq
      %v2005 = vshrl.u32 %v2004, 7
      %v2006 = vsub.s32 0, %v2005
      %v2007 = vrot.slane %v2003, %v2006
      %v2009 = vsel %vm1037, %v2007, 0
      %v2012 = vsel %vm1041, %v265, 0
      %2014 = vmatprep.subr.bf16.mxu0 0
      %2015 = vmatpush1.bf16.msra.mxu0 %v2012
      %2016 = vmatprep.subr.bf16.mxu0 0
      %2017 = vmatpush1.bf16.msra.mxu0 0
      %2018 = vmatprep.subr.bf16.mxu0 0
      %2019 = vmatpush1.bf16.msra.mxu0 0
      %2020 = vmatprep.subr.bf16.mxu0 0
      %2021 = vmatpush1.bf16.msra.mxu0 0
      %2022 = vmatprep.subr.bf16.mxu0 0
      %2023 = vmatpush1.bf16.msra.mxu0 0
      %2024 = vmatprep.subr.bf16.mxu0 0
      %2025 = vmatpush1.bf16.msra.mxu0 0
      %2026 = vmatprep.subr.bf16.mxu0 0
      %2027 = vmatpush1.bf16.msra.mxu0 0
      %2028 = vmatprep.subr.bf16.mxu0 0
      %2029 = vmatpush1.bf16.msra.mxu0 0
      %2030 = vmatprep.subr.bf16.mxu0 0
      %2031 = vmatpush1.bf16.msra.mxu0 0
      %2032 = vmatprep.subr.bf16.mxu0 0
      %2033 = vmatpush1.bf16.msra.mxu0 0
      %2034 = vmatprep.subr.bf16.mxu0 0
      %2035 = vmatpush1.bf16.msra.mxu0 0
      %2036 = vmatprep.subr.bf16.mxu0 0
      %2037 = vmatpush1.bf16.msra.mxu0 0
      %2038 = vmatprep.subr.bf16.mxu0 0
      %2039 = vmatpush1.bf16.msra.mxu0 0
      %2040 = vmatprep.subr.bf16.mxu0 0
      %2041 = vmatpush1.bf16.msra.mxu0 0
      %2042 = vmatprep.subr.bf16.mxu0 0
      %2043 = vmatpush1.bf16.msra.mxu0 0
      %2044 = vmatprep.subr.bf16.mxu0 0
      %2045 = vmatpush1.bf16.msra.mxu0 0
      %2046 = vmatprep.mubr.bf16.mxu0 0
      %2047 = vmatmul.mubr.bf16.gmra.mrb[0].mxu0 %v2009
      %v2048 = vpop.f32.mrb[0].mxu0
      %v2049 = vadd.f32 0.0, %v2048
      %v2050 = vpop.f32.mrb[0].mxu0
      %v2051 = vpop.f32.mrb[0].mxu0
      %v2052 = vpop.f32.mrb[0].mxu0
      %2053 = vdwg.mxu0
      %v2054 = vpack.i.b16 %v1012, %v1012
      %v2055 = vlaneseq
      %v2056 = vshrl.u32 %v2055, 7
      %v2057 = vsub.s32 0, %v2056
      %v2058 = vrot.slane %v2054, %v2057
      %v2060 = vsel %vm1037, %v2058, 0
      %v2063 = vsel %vm1041, %v266, 0
      %2065 = vmatprep.subr.bf16.mxu0 0
      %2066 = vmatpush1.bf16.msra.mxu0 %v2063
      %2067 = vmatprep.subr.bf16.mxu0 0
      %2068 = vmatpush1.bf16.msra.mxu0 0
      %2069 = vmatprep.subr.bf16.mxu0 0
      %2070 = vmatpush1.bf16.msra.mxu0 0
      %2071 = vmatprep.subr.bf16.mxu0 0
      %2072 = vmatpush1.bf16.msra.mxu0 0
      %2073 = vmatprep.subr.bf16.mxu0 0
      %2074 = vmatpush1.bf16.msra.mxu0 0
      %2075 = vmatprep.subr.bf16.mxu0 0
      %2076 = vmatpush1.bf16.msra.mxu0 0
      %2077 = vmatprep.subr.bf16.mxu0 0
      %2078 = vmatpush1.bf16.msra.mxu0 0
      %2079 = vmatprep.subr.bf16.mxu0 0
      %2080 = vmatpush1.bf16.msra.mxu0 0
      %2081 = vmatprep.subr.bf16.mxu0 0
      %2082 = vmatpush1.bf16.msra.mxu0 0
      %2083 = vmatprep.subr.bf16.mxu0 0
      %2084 = vmatpush1.bf16.msra.mxu0 0
      %2085 = vmatprep.subr.bf16.mxu0 0
      %2086 = vmatpush1.bf16.msra.mxu0 0
      %2087 = vmatprep.subr.bf16.mxu0 0
      %2088 = vmatpush1.bf16.msra.mxu0 0
      %2089 = vmatprep.subr.bf16.mxu0 0
      %2090 = vmatpush1.bf16.msra.mxu0 0
      %2091 = vmatprep.subr.bf16.mxu0 0
      %2092 = vmatpush1.bf16.msra.mxu0 0
      %2093 = vmatprep.subr.bf16.mxu0 0
      %2094 = vmatpush1.bf16.msra.mxu0 0
      %2095 = vmatprep.subr.bf16.mxu0 0
      %2096 = vmatpush1.bf16.msra.mxu0 0
      %2097 = vmatprep.mubr.bf16.mxu0 0
      %2098 = vmatmul.mubr.bf16.gmra.mrb[0].mxu0 %v2060
      %v2099 = vpop.f32.mrb[0].mxu0
      %v2100 = vadd.f32 0.0, %v2099
      %v2101 = vpop.f32.mrb[0].mxu0
      %v2102 = vpop.f32.mrb[0].mxu0
      %v2103 = vpop.f32.mrb[0].mxu0
      %2104 = vdwg.mxu0
      %v2105 = vpack.i.b16 %v1013, %v1013
      %v2106 = vlaneseq
      %v2107 = vshrl.u32 %v2106, 7
      %v2108 = vsub.s32 0, %v2107
      %v2109 = vrot.slane %v2105, %v2108
      %v2111 = vsel %vm1037, %v2109, 0
      %v2114 = vsel %vm1041, %v267, 0
      %2116 = vmatprep.subr.bf16.mxu0 0
      %2117 = vmatpush1.bf16.msra.mxu0 %v2114
      %2118 = vmatprep.subr.bf16.mxu0 0
      %2119 = vmatpush1.bf16.msra.mxu0 0
      %2120 = vmatprep.subr.bf16.mxu0 0
      %2121 = vmatpush1.bf16.msra.mxu0 0
      %2122 = vmatprep.subr.bf16.mxu0 0
      %2123 = vmatpush1.bf16.msra.mxu0 0
      %2124 = vmatprep.subr.bf16.mxu0 0
      %2125 = vmatpush1.bf16.msra.mxu0 0
      %2126 = vmatprep.subr.bf16.mxu0 0
      %2127 = vmatpush1.bf16.msra.mxu0 0
      %2128 = vmatprep.subr.bf16.mxu0 0
      %2129 = vmatpush1.bf16.msra.mxu0 0
      %2130 = vmatprep.subr.bf16.mxu0 0
      %2131 = vmatpush1.bf16.msra.mxu0 0
      %2132 = vmatprep.subr.bf16.mxu0 0
      %2133 = vmatpush1.bf16.msra.mxu0 0
      %2134 = vmatprep.subr.bf16.mxu0 0
      %2135 = vmatpush1.bf16.msra.mxu0 0
      %2136 = vmatprep.subr.bf16.mxu0 0
      %2137 = vmatpush1.bf16.msra.mxu0 0
      %2138 = vmatprep.subr.bf16.mxu0 0
      %2139 = vmatpush1.bf16.msra.mxu0 0
      %2140 = vmatprep.subr.bf16.mxu0 0
      %2141 = vmatpush1.bf16.msra.mxu0 0
      %2142 = vmatprep.subr.bf16.mxu0 0
      %2143 = vmatpush1.bf16.msra.mxu0 0
      %2144 = vmatprep.subr.bf16.mxu0 0
      %2145 = vmatpush1.bf16.msra.mxu0 0
      %2146 = vmatprep.subr.bf16.mxu0 0
      %2147 = vmatpush1.bf16.msra.mxu0 0
      %2148 = vmatprep.mubr.bf16.mxu0 0
      %2149 = vmatmul.mubr.bf16.gmra.mrb[0].mxu0 %v2111
      %v2150 = vpop.f32.mrb[0].mxu0
      %v2151 = vadd.f32 0.0, %v2150
      %v2152 = vpop.f32.mrb[0].mxu0
      %v2153 = vpop.f32.mrb[0].mxu0
      %v2154 = vpop.f32.mrb[0].mxu0
      %2155 = vdwg.mxu0
      %v2156 = vpack.i.b16 %v1014, %v1014
      %v2157 = vlaneseq
      %v2158 = vshrl.u32 %v2157, 7
      %v2159 = vsub.s32 0, %v2158
      %v2160 = vrot.slane %v2156, %v2159
      %v2162 = vsel %vm1037, %v2160, 0
      %v2165 = vsel %vm1041, %v268, 0
      %2167 = vmatprep.subr.bf16.mxu0 0
      %2168 = vmatpush1.bf16.msra.mxu0 %v2165
      %2169 = vmatprep.subr.bf16.mxu0 0
      %2170 = vmatpush1.bf16.msra.mxu0 0
      %2171 = vmatprep.subr.bf16.mxu0 0
      %2172 = vmatpush1.bf16.msra.mxu0 0
      %2173 = vmatprep.subr.bf16.mxu0 0
      %2174 = vmatpush1.bf16.msra.mxu0 0
      %2175 = vmatprep.subr.bf16.mxu0 0
      %2176 = vmatpush1.bf16.msra.mxu0 0
      %2177 = vmatprep.subr.bf16.mxu0 0
      %2178 = vmatpush1.bf16.msra.mxu0 0
      %2179 = vmatprep.subr.bf16.mxu0 0
      %2180 = vmatpush1.bf16.msra.mxu0 0
      %2181 = vmatprep.subr.bf16.mxu0 0
      %2182 = vmatpush1.bf16.msra.mxu0 0
      %2183 = vmatprep.subr.bf16.mxu0 0
      %2184 = vmatpush1.bf16.msra.mxu0 0
      %2185 = vmatprep.subr.bf16.mxu0 0
      %2186 = vmatpush1.bf16.msra.mxu0 0
      %2187 = vmatprep.subr.bf16.mxu0 0
      %2188 = vmatpush1.bf16.msra.mxu0 0
      %2189 = vmatprep.subr.bf16.mxu0 0
      %2190 = vmatpush1.bf16.msra.mxu0 0
      %2191 = vmatprep.subr.bf16.mxu0 0
      %2192 = vmatpush1.bf16.msra.mxu0 0
      %2193 = vmatprep.subr.bf16.mxu0 0
      %2194 = vmatpush1.bf16.msra.mxu0 0
      %2195 = vmatprep.subr.bf16.mxu0 0
      %2196 = vmatpush1.bf16.msra.mxu0 0
      %2197 = vmatprep.subr.bf16.mxu0 0
      %2198 = vmatpush1.bf16.msra.mxu0 0
      %2199 = vmatprep.mubr.bf16.mxu0 0
      %2200 = vmatmul.mubr.bf16.gmra.mrb[0].mxu0 %v2162
      %v2201 = vpop.f32.mrb[0].mxu0
      %v2202 = vadd.f32 0.0, %v2201
      %v2203 = vpop.f32.mrb[0].mxu0
      %v2204 = vpop.f32.mrb[0].mxu0
      %v2205 = vpop.f32.mrb[0].mxu0
      %2206 = vdwg.mxu0
      %v2207 = vpack.i.b16 %v1015, %v1015
      %v2208 = vlaneseq
      %v2209 = vshrl.u32 %v2208, 7
      %v2210 = vsub.s32 0, %v2209
      %v2211 = vrot.slane %v2207, %v2210
      %v2213 = vsel %vm1037, %v2211, 0
      %v2216 = vsel %vm1041, %v269, 0
      %2218 = vmatprep.subr.bf16.mxu0 0
      %2219 = vmatpush1.bf16.msra.mxu0 %v2216
      %2220 = vmatprep.subr.bf16.mxu0 0
      %2221 = vmatpush1.bf16.msra.mxu0 0
      %2222 = vmatprep.subr.bf16.mxu0 0
      %2223 = vmatpush1.bf16.msra.mxu0 0
      %2224 = vmatprep.subr.bf16.mxu0 0
      %2225 = vmatpush1.bf16.msra.mxu0 0
      %2226 = vmatprep.subr.bf16.mxu0 0
      %2227 = vmatpush1.bf16.msra.mxu0 0
      %2228 = vmatprep.subr.bf16.mxu0 0
      %2229 = vmatpush1.bf16.msra.mxu0 0
      %2230 = vmatprep.subr.bf16.mxu0 0
      %2231 = vmatpush1.bf16.msra.mxu0 0
      %2232 = vmatprep.subr.bf16.mxu0 0
      %2233 = vmatpush1.bf16.msra.mxu0 0
      %2234 = vmatprep.subr.bf16.mxu0 0
      %2235 = vmatpush1.bf16.msra.mxu0 0
      %2236 = vmatprep.subr.bf16.mxu0 0
      %2237 = vmatpush1.bf16.msra.mxu0 0
      %2238 = vmatprep.subr.bf16.mxu0 0
      %2239 = vmatpush1.bf16.msra.mxu0 0
      %2240 = vmatprep.subr.bf16.mxu0 0
      %2241 = vmatpush1.bf16.msra.mxu0 0
      %2242 = vmatprep.subr.bf16.mxu0 0
      %2243 = vmatpush1.bf16.msra.mxu0 0
      %2244 = vmatprep.subr.bf16.mxu0 0
      %2245 = vmatpush1.bf16.msra.mxu0 0
      %2246 = vmatprep.subr.bf16.mxu0 0
      %2247 = vmatpush1.bf16.msra.mxu0 0
      %2248 = vmatprep.subr.bf16.mxu0 0
      %2249 = vmatpush1.bf16.msra.mxu0 0
      %2250 = vmatprep.mubr.bf16.mxu0 0
      %2251 = vmatmul.mubr.bf16.gmra.mrb[0].mxu0 %v2213
      %v2252 = vpop.f32.mrb[0].mxu0
      %v2253 = vadd.f32 0.0, %v2252
      %v2254 = vpop.f32.mrb[0].mxu0
      %v2255 = vpop.f32.mrb[0].mxu0
      %v2256 = vpop.f32.mrb[0].mxu0
      %2257 = vdwg.mxu0
      %v2258 = vpack.i.b16 %v1016, %v1016
      %v2259 = vlaneseq
      %v2260 = vshrl.u32 %v2259, 7
      %v2261 = vsub.s32 0, %v2260
      %v2262 = vrot.slane %v2258, %v2261
      %v2264 = vsel %vm1037, %v2262, 0
      %v2267 = vsel %vm1041, %v270, 0
      %2269 = vmatprep.subr.bf16.mxu0 0
      %2270 = vmatpush1.bf16.msra.mxu0 %v2267
      %2271 = vmatprep.subr.bf16.mxu0 0
      %2272 = vmatpush1.bf16.msra.mxu0 0
      %2273 = vmatprep.subr.bf16.mxu0 0
      %2274 = vmatpush1.bf16.msra.mxu0 0
      %2275 = vmatprep.subr.bf16.mxu0 0
      %2276 = vmatpush1.bf16.msra.mxu0 0
      %2277 = vmatprep.subr.bf16.mxu0 0
      %2278 = vmatpush1.bf16.msra.mxu0 0
      %2279 = vmatprep.subr.bf16.mxu0 0
      %2280 = vmatpush1.bf16.msra.mxu0 0
      %2281 = vmatprep.subr.bf16.mxu0 0
      %2282 = vmatpush1.bf16.msra.mxu0 0
      %2283 = vmatprep.subr.bf16.mxu0 0
      %2284 = vmatpush1.bf16.msra.mxu0 0
      %2285 = vmatprep.subr.bf16.mxu0 0
      %2286 = vmatpush1.bf16.msra.mxu0 0
      %2287 = vmatprep.subr.bf16.mxu0 0
      %2288 = vmatpush1.bf16.msra.mxu0 0
      %2289 = vmatprep.subr.bf16.mxu0 0
      %2290 = vmatpush1.bf16.msra.mxu0 0
      %2291 = vmatprep.subr.bf16.mxu0 0
      %2292 = vmatpush1.bf16.msra.mxu0 0
      %2293 = vmatprep.subr.bf16.mxu0 0
      %2294 = vmatpush1.bf16.msra.mxu0 0
      %2295 = vmatprep.subr.bf16.mxu0 0
      %2296 = vmatpush1.bf16.msra.mxu0 0
      %2297 = vmatprep.subr.bf16.mxu0 0
      %2298 = vmatpush1.bf16.msra.mxu0 0
      %2299 = vmatprep.subr.bf16.mxu0 0
      %2300 = vmatpush1.bf16.msra.mxu0 0
      %2301 = vmatprep.mubr.bf16.mxu0 0
      %2302 = vmatmul.mubr.bf16.gmra.mrb[0].mxu0 %v2264
      %v2303 = vpop.f32.mrb[0].mxu0
      %v2304 = vadd.f32 0.0, %v2303
      %v2305 = vpop.f32.mrb[0].mxu0
      %v2306 = vpop.f32.mrb[0].mxu0
      %v2307 = vpop.f32.mrb[0].mxu0
      %2308 = vdwg.mxu0
      %v2309 = vpack.i.b16 %v1017, %v1017
      %v2310 = vlaneseq
      %v2311 = vshrl.u32 %v2310, 7
      %v2312 = vsub.s32 0, %v2311
      %v2313 = vrot.slane %v2309, %v2312
      %v2315 = vsel %vm1037, %v2313, 0
      %v2318 = vsel %vm1041, %v271, 0
      %2320 = vmatprep.subr.bf16.mxu0 0
      %2321 = vmatpush1.bf16.msra.mxu0 %v2318
      %2322 = vmatprep.subr.bf16.mxu0 0
      %2323 = vmatpush1.bf16.msra.mxu0 0
      %2324 = vmatprep.subr.bf16.mxu0 0
      %2325 = vmatpush1.bf16.msra.mxu0 0
      %2326 = vmatprep.subr.bf16.mxu0 0
      %2327 = vmatpush1.bf16.msra.mxu0 0
      %2328 = vmatprep.subr.bf16.mxu0 0
      %2329 = vmatpush1.bf16.msra.mxu0 0
      %2330 = vmatprep.subr.bf16.mxu0 0
      %2331 = vmatpush1.bf16.msra.mxu0 0
      %2332 = vmatprep.subr.bf16.mxu0 0
      %2333 = vmatpush1.bf16.msra.mxu0 0
      %2334 = vmatprep.subr.bf16.mxu0 0
      %2335 = vmatpush1.bf16.msra.mxu0 0
      %2336 = vmatprep.subr.bf16.mxu0 0
      %2337 = vmatpush1.bf16.msra.mxu0 0
      %2338 = vmatprep.subr.bf16.mxu0 0
      %2339 = vmatpush1.bf16.msra.mxu0 0
      %2340 = vmatprep.subr.bf16.mxu0 0
      %2341 = vmatpush1.bf16.msra.mxu0 0
      %2342 = vmatprep.subr.bf16.mxu0 0
      %2343 = vmatpush1.bf16.msra.mxu0 0
      %2344 = vmatprep.subr.bf16.mxu0 0
      %2345 = vmatpush1.bf16.msra.mxu0 0
      %2346 = vmatprep.subr.bf16.mxu0 0
      %2347 = vmatpush1.bf16.msra.mxu0 0
      %2348 = vmatprep.subr.bf16.mxu0 0
      %2349 = vmatpush1.bf16.msra.mxu0 0
      %2350 = vmatprep.subr.bf16.mxu0 0
      %2351 = vmatpush1.bf16.msra.mxu0 0
      %2352 = vmatprep.mubr.bf16.mxu0 0
      %2353 = vmatmul.mubr.bf16.gmra.mrb[0].mxu0 %v2315
      %v2354 = vpop.f32.mrb[0].mxu0
      %v2355 = vadd.f32 0.0, %v2354
      %v2356 = vpop.f32.mrb[0].mxu0
      %v2357 = vpop.f32.mrb[0].mxu0
      %v2358 = vpop.f32.mrb[0].mxu0
      %2359 = vdwg.mxu0
      %v2360 = vpack.i.b16 %v1018, %v1018
      %v2361 = vlaneseq
      %v2362 = vshrl.u32 %v2361, 7
      %v2363 = vsub.s32 0, %v2362
      %v2364 = vrot.slane %v2360, %v2363
      %v2366 = vsel %vm1037, %v2364, 0
      %v2369 = vsel %vm1041, %v272, 0
      %2371 = vmatprep.subr.bf16.mxu0 0
      %2372 = vmatpush1.bf16.msra.mxu0 %v2369
      %2373 = vmatprep.subr.bf16.mxu0 0
      %2374 = vmatpush1.bf16.msra.mxu0 0
      %2375 = vmatprep.subr.bf16.mxu0 0
      %2376 = vmatpush1.bf16.msra.mxu0 0
      %2377 = vmatprep.subr.bf16.mxu0 0
      %2378 = vmatpush1.bf16.msra.mxu0 0
      %2379 = vmatprep.subr.bf16.mxu0 0
      %2380 = vmatpush1.bf16.msra.mxu0 0
      %2381 = vmatprep.subr.bf16.mxu0 0
      %2382 = vmatpush1.bf16.msra.mxu0 0
      %2383 = vmatprep.subr.bf16.mxu0 0
      %2384 = vmatpush1.bf16.msra.mxu0 0
      %2385 = vmatprep.subr.bf16.mxu0 0
      %2386 = vmatpush1.bf16.msra.mxu0 0
      %2387 = vmatprep.subr.bf16.mxu0 0
      %2388 = vmatpush1.bf16.msra.mxu0 0
      %2389 = vmatprep.subr.bf16.mxu0 0
      %2390 = vmatpush1.bf16.msra.mxu0 0
      %2391 = vmatprep.subr.bf16.mxu0 0
      %2392 = vmatpush1.bf16.msra.mxu0 0
      %2393 = vmatprep.subr.bf16.mxu0 0
      %2394 = vmatpush1.bf16.msra.mxu0 0
      %2395 = vmatprep.subr.bf16.mxu0 0
      %2396 = vmatpush1.bf16.msra.mxu0 0
      %2397 = vmatprep.subr.bf16.mxu0 0
      %2398 = vmatpush1.bf16.msra.mxu0 0
      %2399 = vmatprep.subr.bf16.mxu0 0
      %2400 = vmatpush1.bf16.msra.mxu0 0
      %2401 = vmatprep.subr.bf16.mxu0 0
      %2402 = vmatpush1.bf16.msra.mxu0 0
      %2403 = vmatprep.mubr.bf16.mxu0 0
      %2404 = vmatmul.mubr.bf16.gmra.mrb[0].mxu0 %v2366
      %v2405 = vpop.f32.mrb[0].mxu0
      %v2406 = vadd.f32 0.0, %v2405
      %v2407 = vpop.f32.mrb[0].mxu0
      %v2408 = vpop.f32.mrb[0].mxu0
      %v2409 = vpop.f32.mrb[0].mxu0
      %2410 = vdwg.mxu0
      %v2411 = vpack.i.b16 %v1019, %v1019
      %v2412 = vlaneseq
      %v2413 = vshrl.u32 %v2412, 7
      %v2414 = vsub.s32 0, %v2413
      %v2415 = vrot.slane %v2411, %v2414
      %v2417 = vsel %vm1037, %v2415, 0
      %v2420 = vsel %vm1041, %v273, 0
      %2422 = vmatprep.subr.bf16.mxu0 0
      %2423 = vmatpush1.bf16.msra.mxu0 %v2420
      %2424 = vmatprep.subr.bf16.mxu0 0
      %2425 = vmatpush1.bf16.msra.mxu0 0
      %2426 = vmatprep.subr.bf16.mxu0 0
      %2427 = vmatpush1.bf16.msra.mxu0 0
      %2428 = vmatprep.subr.bf16.mxu0 0
      %2429 = vmatpush1.bf16.msra.mxu0 0
      %2430 = vmatprep.subr.bf16.mxu0 0
      %2431 = vmatpush1.bf16.msra.mxu0 0
      %2432 = vmatprep.subr.bf16.mxu0 0
      %2433 = vmatpush1.bf16.msra.mxu0 0
      %2434 = vmatprep.subr.bf16.mxu0 0
      %2435 = vmatpush1.bf16.msra.mxu0 0
      %2436 = vmatprep.subr.bf16.mxu0 0
      %2437 = vmatpush1.bf16.msra.mxu0 0
      %2438 = vmatprep.subr.bf16.mxu0 0
      %2439 = vmatpush1.bf16.msra.mxu0 0
      %2440 = vmatprep.subr.bf16.mxu0 0
      %2441 = vmatpush1.bf16.msra.mxu0 0
      %2442 = vmatprep.subr.bf16.mxu0 0
      %2443 = vmatpush1.bf16.msra.mxu0 0
      %2444 = vmatprep.subr.bf16.mxu0 0
      %2445 = vmatpush1.bf16.msra.mxu0 0
      %2446 = vmatprep.subr.bf16.mxu0 0
      %2447 = vmatpush1.bf16.msra.mxu0 0
      %2448 = vmatprep.subr.bf16.mxu0 0
      %2449 = vmatpush1.bf16.msra.mxu0 0
      %2450 = vmatprep.subr.bf16.mxu0 0
      %2451 = vmatpush1.bf16.msra.mxu0 0
      %2452 = vmatprep.subr.bf16.mxu0 0
      %2453 = vmatpush1.bf16.msra.mxu0 0
      %2454 = vmatprep.mubr.bf16.mxu0 0
      %2455 = vmatmul.mubr.bf16.gmra.mrb[0].mxu0 %v2417
      %v2456 = vpop.f32.mrb[0].mxu0
      %v2457 = vadd.f32 0.0, %v2456
      %v2458 = vpop.f32.mrb[0].mxu0
      %v2459 = vpop.f32.mrb[0].mxu0
      %v2460 = vpop.f32.mrb[0].mxu0
      %2461 = vdwg.mxu0
      %v2462 = vpack.i.b16 %v1020, %v1020
      %v2463 = vlaneseq
      %v2464 = vshrl.u32 %v2463, 7
      %v2465 = vsub.s32 0, %v2464
      %v2466 = vrot.slane %v2462, %v2465
      %v2468 = vsel %vm1037, %v2466, 0
      %v2471 = vsel %vm1041, %v274, 0
      %2473 = vmatprep.subr.bf16.mxu0 0
      %2474 = vmatpush1.bf16.msra.mxu0 %v2471
      %2475 = vmatprep.subr.bf16.mxu0 0
      %2476 = vmatpush1.bf16.msra.mxu0 0
      %2477 = vmatprep.subr.bf16.mxu0 0
      %2478 = vmatpush1.bf16.msra.mxu0 0
      %2479 = vmatprep.subr.bf16.mxu0 0
      %2480 = vmatpush1.bf16.msra.mxu0 0
      %2481 = vmatprep.subr.bf16.mxu0 0
      %2482 = vmatpush1.bf16.msra.mxu0 0
      %2483 = vmatprep.subr.bf16.mxu0 0
      %2484 = vmatpush1.bf16.msra.mxu0 0
      %2485 = vmatprep.subr.bf16.mxu0 0
      %2486 = vmatpush1.bf16.msra.mxu0 0
      %2487 = vmatprep.subr.bf16.mxu0 0
      %2488 = vmatpush1.bf16.msra.mxu0 0
      %2489 = vmatprep.subr.bf16.mxu0 0
      %2490 = vmatpush1.bf16.msra.mxu0 0
      %2491 = vmatprep.subr.bf16.mxu0 0
      %2492 = vmatpush1.bf16.msra.mxu0 0
      %2493 = vmatprep.subr.bf16.mxu0 0
      %2494 = vmatpush1.bf16.msra.mxu0 0
      %2495 = vmatprep.subr.bf16.mxu0 0
      %2496 = vmatpush1.bf16.msra.mxu0 0
      %2497 = vmatprep.subr.bf16.mxu0 0
      %2498 = vmatpush1.bf16.msra.mxu0 0
      %2499 = vmatprep.subr.bf16.mxu0 0
      %2500 = vmatpush1.bf16.msra.mxu0 0
      %2501 = vmatprep.subr.bf16.mxu0 0
      %2502 = vmatpush1.bf16.msra.mxu0 0
      %2503 = vmatprep.subr.bf16.mxu0 0
      %2504 = vmatpush1.bf16.msra.mxu0 0
      %2505 = vmatprep.mubr.bf16.mxu0 0
      %2506 = vmatmul.mubr.bf16.gmra.mrb[0].mxu0 %v2468
      %v2507 = vpop.f32.mrb[0].mxu0
      %v2508 = vadd.f32 0.0, %v2507
      %v2509 = vpop.f32.mrb[0].mxu0
      %v2510 = vpop.f32.mrb[0].mxu0
      %v2511 = vpop.f32.mrb[0].mxu0
      %2512 = vdwg.mxu0
      %v2513 = vpack.i.b16 %v1021, %v1021
      %v2514 = vlaneseq
      %v2515 = vshrl.u32 %v2514, 7
      %v2516 = vsub.s32 0, %v2515
      %v2517 = vrot.slane %v2513, %v2516
      %v2519 = vsel %vm1037, %v2517, 0
      %v2522 = vsel %vm1041, %v275, 0
      %2524 = vmatprep.subr.bf16.mxu0 0
      %2525 = vmatpush1.bf16.msra.mxu0 %v2522
      %2526 = vmatprep.subr.bf16.mxu0 0
      %2527 = vmatpush1.bf16.msra.mxu0 0
      %2528 = vmatprep.subr.bf16.mxu0 0
      %2529 = vmatpush1.bf16.msra.mxu0 0
      %2530 = vmatprep.subr.bf16.mxu0 0
      %2531 = vmatpush1.bf16.msra.mxu0 0
      %2532 = vmatprep.subr.bf16.mxu0 0
      %2533 = vmatpush1.bf16.msra.mxu0 0
      %2534 = vmatprep.subr.bf16.mxu0 0
      %2535 = vmatpush1.bf16.msra.mxu0 0
      %2536 = vmatprep.subr.bf16.mxu0 0
      %2537 = vmatpush1.bf16.msra.mxu0 0
      %2538 = vmatprep.subr.bf16.mxu0 0
      %2539 = vmatpush1.bf16.msra.mxu0 0
      %2540 = vmatprep.subr.bf16.mxu0 0
      %2541 = vmatpush1.bf16.msra.mxu0 0
      %2542 = vmatprep.subr.bf16.mxu0 0
      %2543 = vmatpush1.bf16.msra.mxu0 0
      %2544 = vmatprep.subr.bf16.mxu0 0
      %2545 = vmatpush1.bf16.msra.mxu0 0
      %2546 = vmatprep.subr.bf16.mxu0 0
      %2547 = vmatpush1.bf16.msra.mxu0 0
      %2548 = vmatprep.subr.bf16.mxu0 0
      %2549 = vmatpush1.bf16.msra.mxu0 0
      %2550 = vmatprep.subr.bf16.mxu0 0
      %2551 = vmatpush1.bf16.msra.mxu0 0
      %2552 = vmatprep.subr.bf16.mxu0 0
      %2553 = vmatpush1.bf16.msra.mxu0 0
      %2554 = vmatprep.subr.bf16.mxu0 0
      %2555 = vmatpush1.bf16.msra.mxu0 0
      %2556 = vmatprep.mubr.bf16.mxu0 0
      %2557 = vmatmul.mubr.bf16.gmra.mrb[0].mxu0 %v2519
      %v2558 = vpop.f32.mrb[0].mxu0
      %v2559 = vadd.f32 0.0, %v2558
      %v2560 = vpop.f32.mrb[0].mxu0
      %v2561 = vpop.f32.mrb[0].mxu0
      %v2562 = vpop.f32.mrb[0].mxu0
      %2563 = vdwg.mxu0
      %v2564 = vpack.i.b16 %v1022, %v1022
      %v2565 = vlaneseq
      %v2566 = vshrl.u32 %v2565, 7
      %v2567 = vsub.s32 0, %v2566
      %v2568 = vrot.slane %v2564, %v2567
      %v2570 = vsel %vm1037, %v2568, 0
      %v2573 = vsel %vm1041, %v276, 0
      %2575 = vmatprep.subr.bf16.mxu0 0
      %2576 = vmatpush1.bf16.msra.mxu0 %v2573
      %2577 = vmatprep.subr.bf16.mxu0 0
      %2578 = vmatpush1.bf16.msra.mxu0 0
      %2579 = vmatprep.subr.bf16.mxu0 0
      %2580 = vmatpush1.bf16.msra.mxu0 0
      %2581 = vmatprep.subr.bf16.mxu0 0
      %2582 = vmatpush1.bf16.msra.mxu0 0
      %2583 = vmatprep.subr.bf16.mxu0 0
      %2584 = vmatpush1.bf16.msra.mxu0 0
      %2585 = vmatprep.subr.bf16.mxu0 0
      %2586 = vmatpush1.bf16.msra.mxu0 0
      %2587 = vmatprep.subr.bf16.mxu0 0
      %2588 = vmatpush1.bf16.msra.mxu0 0
      %2589 = vmatprep.subr.bf16.mxu0 0
      %2590 = vmatpush1.bf16.msra.mxu0 0
      %2591 = vmatprep.subr.bf16.mxu0 0
      %2592 = vmatpush1.bf16.msra.mxu0 0
      %2593 = vmatprep.subr.bf16.mxu0 0
      %2594 = vmatpush1.bf16.msra.mxu0 0
      %2595 = vmatprep.subr.bf16.mxu0 0
      %2596 = vmatpush1.bf16.msra.mxu0 0
      %2597 = vmatprep.subr.bf16.mxu0 0
      %2598 = vmatpush1.bf16.msra.mxu0 0
      %2599 = vmatprep.subr.bf16.mxu0 0
      %2600 = vmatpush1.bf16.msra.mxu0 0
      %2601 = vmatprep.subr.bf16.mxu0 0
      %2602 = vmatpush1.bf16.msra.mxu0 0
      %2603 = vmatprep.subr.bf16.mxu0 0
      %2604 = vmatpush1.bf16.msra.mxu0 0
      %2605 = vmatprep.subr.bf16.mxu0 0
      %2606 = vmatpush1.bf16.msra.mxu0 0
      %2607 = vmatprep.mubr.bf16.mxu0 0
      %2608 = vmatmul.mubr.bf16.gmra.mrb[0].mxu0 %v2570
      %v2609 = vpop.f32.mrb[0].mxu0
      %v2610 = vadd.f32 0.0, %v2609
      %v2611 = vpop.f32.mrb[0].mxu0
      %v2612 = vpop.f32.mrb[0].mxu0
      %v2613 = vpop.f32.mrb[0].mxu0
      %2614 = vdwg.mxu0
      %v2615 = vpack.i.b16 %v1023, %v1023
      %v2616 = vlaneseq
      %v2617 = vshrl.u32 %v2616, 7
      %v2618 = vsub.s32 0, %v2617
      %v2619 = vrot.slane %v2615, %v2618
      %v2621 = vsel %vm1037, %v2619, 0
      %v2624 = vsel %vm1041, %v277, 0
      %2626 = vmatprep.subr.bf16.mxu0 0
      %2627 = vmatpush1.bf16.msra.mxu0 %v2624
      %2628 = vmatprep.subr.bf16.mxu0 0
      %2629 = vmatpush1.bf16.msra.mxu0 0
      %2630 = vmatprep.subr.bf16.mxu0 0
      %2631 = vmatpush1.bf16.msra.mxu0 0
      %2632 = vmatprep.subr.bf16.mxu0 0
      %2633 = vmatpush1.bf16.msra.mxu0 0
      %2634 = vmatprep.subr.bf16.mxu0 0
      %2635 = vmatpush1.bf16.msra.mxu0 0
      %2636 = vmatprep.subr.bf16.mxu0 0
      %2637 = vmatpush1.bf16.msra.mxu0 0
      %2638 = vmatprep.subr.bf16.mxu0 0
      %2639 = vmatpush1.bf16.msra.mxu0 0
      %2640 = vmatprep.subr.bf16.mxu0 0
      %2641 = vmatpush1.bf16.msra.mxu0 0
      %2642 = vmatprep.subr.bf16.mxu0 0
      %2643 = vmatpush1.bf16.msra.mxu0 0
      %2644 = vmatprep.subr.bf16.mxu0 0
      %2645 = vmatpush1.bf16.msra.mxu0 0
      %2646 = vmatprep.subr.bf16.mxu0 0
      %2647 = vmatpush1.bf16.msra.mxu0 0
      %2648 = vmatprep.subr.bf16.mxu0 0
      %2649 = vmatpush1.bf16.msra.mxu0 0
      %2650 = vmatprep.subr.bf16.mxu0 0
      %2651 = vmatpush1.bf16.msra.mxu0 0
      %2652 = vmatprep.subr.bf16.mxu0 0
      %2653 = vmatpush1.bf16.msra.mxu0 0
      %2654 = vmatprep.subr.bf16.mxu0 0
      %2655 = vmatpush1.bf16.msra.mxu0 0
      %2656 = vmatprep.subr.bf16.mxu0 0
      %2657 = vmatpush1.bf16.msra.mxu0 0
      %2658 = vmatprep.mubr.bf16.mxu0 0
      %2659 = vmatmul.mubr.bf16.gmra.mrb[0].mxu0 %v2621
      %v2660 = vpop.f32.mrb[0].mxu0
      %v2661 = vadd.f32 0.0, %v2660
      %v2662 = vpop.f32.mrb[0].mxu0
      %v2663 = vpop.f32.mrb[0].mxu0
      %v2664 = vpop.f32.mrb[0].mxu0
      %2665 = vdwg.mxu0
      %v2666 = vpack.i.b16 %v1024, %v1024
      %v2667 = vlaneseq
      %v2668 = vshrl.u32 %v2667, 7
      %v2669 = vsub.s32 0, %v2668
      %v2670 = vrot.slane %v2666, %v2669
      %v2672 = vsel %vm1037, %v2670, 0
      %v2675 = vsel %vm1041, %v278, 0
      %2677 = vmatprep.subr.bf16.mxu0 0
      %2678 = vmatpush1.bf16.msra.mxu0 %v2675
      %2679 = vmatprep.subr.bf16.mxu0 0
      %2680 = vmatpush1.bf16.msra.mxu0 0
      %2681 = vmatprep.subr.bf16.mxu0 0
      %2682 = vmatpush1.bf16.msra.mxu0 0
      %2683 = vmatprep.subr.bf16.mxu0 0
      %2684 = vmatpush1.bf16.msra.mxu0 0
      %2685 = vmatprep.subr.bf16.mxu0 0
      %2686 = vmatpush1.bf16.msra.mxu0 0
      %2687 = vmatprep.subr.bf16.mxu0 0
      %2688 = vmatpush1.bf16.msra.mxu0 0
      %2689 = vmatprep.subr.bf16.mxu0 0
      %2690 = vmatpush1.bf16.msra.mxu0 0
      %2691 = vmatprep.subr.bf16.mxu0 0
      %2692 = vmatpush1.bf16.msra.mxu0 0
      %2693 = vmatprep.subr.bf16.mxu0 0
      %2694 = vmatpush1.bf16.msra.mxu0 0
      %2695 = vmatprep.subr.bf16.mxu0 0
      %2696 = vmatpush1.bf16.msra.mxu0 0
      %2697 = vmatprep.subr.bf16.mxu0 0
      %2698 = vmatpush1.bf16.msra.mxu0 0
      %2699 = vmatprep.subr.bf16.mxu0 0
      %2700 = vmatpush1.bf16.msra.mxu0 0
      %2701 = vmatprep.subr.bf16.mxu0 0
      %2702 = vmatpush1.bf16.msra.mxu0 0
      %2703 = vmatprep.subr.bf16.mxu0 0
      %2704 = vmatpush1.bf16.msra.mxu0 0
      %2705 = vmatprep.subr.bf16.mxu0 0
      %2706 = vmatpush1.bf16.msra.mxu0 0
      %2707 = vmatprep.subr.bf16.mxu0 0
      %2708 = vmatpush1.bf16.msra.mxu0 0
      %2709 = vmatprep.mubr.bf16.mxu0 0
      %2710 = vmatmul.mubr.bf16.gmra.mrb[0].mxu0 %v2672
      %v2711 = vpop.f32.mrb[0].mxu0
      %v2712 = vadd.f32 0.0, %v2711
      %v2713 = vpop.f32.mrb[0].mxu0
      %v2714 = vpop.f32.mrb[0].mxu0
      %v2715 = vpop.f32.mrb[0].mxu0
      %2716 = vdwg.mxu0
      %v2717 = vpack.i.b16 %v1025, %v1025
      %v2718 = vlaneseq
      %v2719 = vshrl.u32 %v2718, 7
      %v2720 = vsub.s32 0, %v2719
      %v2721 = vrot.slane %v2717, %v2720
      %v2723 = vsel %vm1037, %v2721, 0
      %v2726 = vsel %vm1041, %v279, 0
      %2728 = vmatprep.subr.bf16.mxu0 0
      %2729 = vmatpush1.bf16.msra.mxu0 %v2726
      %2730 = vmatprep.subr.bf16.mxu0 0
      %2731 = vmatpush1.bf16.msra.mxu0 0
      %2732 = vmatprep.subr.bf16.mxu0 0
      %2733 = vmatpush1.bf16.msra.mxu0 0
      %2734 = vmatprep.subr.bf16.mxu0 0
      %2735 = vmatpush1.bf16.msra.mxu0 0
      %2736 = vmatprep.subr.bf16.mxu0 0
      %2737 = vmatpush1.bf16.msra.mxu0 0
      %2738 = vmatprep.subr.bf16.mxu0 0
      %2739 = vmatpush1.bf16.msra.mxu0 0
      %2740 = vmatprep.subr.bf16.mxu0 0
      %2741 = vmatpush1.bf16.msra.mxu0 0
      %2742 = vmatprep.subr.bf16.mxu0 0
      %2743 = vmatpush1.bf16.msra.mxu0 0
      %2744 = vmatprep.subr.bf16.mxu0 0
      %2745 = vmatpush1.bf16.msra.mxu0 0
      %2746 = vmatprep.subr.bf16.mxu0 0
      %2747 = vmatpush1.bf16.msra.mxu0 0
      %2748 = vmatprep.subr.bf16.mxu0 0
      %2749 = vmatpush1.bf16.msra.mxu0 0
      %2750 = vmatprep.subr.bf16.mxu0 0
      %2751 = vmatpush1.bf16.msra.mxu0 0
      %2752 = vmatprep.subr.bf16.mxu0 0
      %2753 = vmatpush1.bf16.msra.mxu0 0
      %2754 = vmatprep.subr.bf16.mxu0 0
      %2755 = vmatpush1.bf16.msra.mxu0 0
      %2756 = vmatprep.subr.bf16.mxu0 0
      %2757 = vmatpush1.bf16.msra.mxu0 0
      %2758 = vmatprep.subr.bf16.mxu0 0
      %2759 = vmatpush1.bf16.msra.mxu0 0
      %2760 = vmatprep.mubr.bf16.mxu0 0
      %2761 = vmatmul.mubr.bf16.gmra.mrb[0].mxu0 %v2723
      %v2762 = vpop.f32.mrb[0].mxu0
      %v2763 = vadd.f32 0.0, %v2762
      %v2764 = vpop.f32.mrb[0].mxu0
      %v2765 = vpop.f32.mrb[0].mxu0
      %v2766 = vpop.f32.mrb[0].mxu0
      %2767 = vdwg.mxu0
      %v2768 = vpack.i.b16 %v1026, %v1026
      %v2769 = vlaneseq
      %v2770 = vshrl.u32 %v2769, 7
      %v2771 = vsub.s32 0, %v2770
      %v2772 = vrot.slane %v2768, %v2771
      %v2774 = vsel %vm1037, %v2772, 0
      %v2777 = vsel %vm1041, %v280, 0
      %2779 = vmatprep.subr.bf16.mxu0 0
      %2780 = vmatpush1.bf16.msra.mxu0 %v2777
      %2781 = vmatprep.subr.bf16.mxu0 0
      %2782 = vmatpush1.bf16.msra.mxu0 0
      %2783 = vmatprep.subr.bf16.mxu0 0
      %2784 = vmatpush1.bf16.msra.mxu0 0
      %2785 = vmatprep.subr.bf16.mxu0 0
      %2786 = vmatpush1.bf16.msra.mxu0 0
      %2787 = vmatprep.subr.bf16.mxu0 0
      %2788 = vmatpush1.bf16.msra.mxu0 0
      %2789 = vmatprep.subr.bf16.mxu0 0
      %2790 = vmatpush1.bf16.msra.mxu0 0
      %2791 = vmatprep.subr.bf16.mxu0 0
      %2792 = vmatpush1.bf16.msra.mxu0 0
      %2793 = vmatprep.subr.bf16.mxu0 0
      %2794 = vmatpush1.bf16.msra.mxu0 0
      %2795 = vmatprep.subr.bf16.mxu0 0
      %2796 = vmatpush1.bf16.msra.mxu0 0
      %2797 = vmatprep.subr.bf16.mxu0 0
      %2798 = vmatpush1.bf16.msra.mxu0 0
      %2799 = vmatprep.subr.bf16.mxu0 0
      %2800 = vmatpush1.bf16.msra.mxu0 0
      %2801 = vmatprep.subr.bf16.mxu0 0
      %2802 = vmatpush1.bf16.msra.mxu0 0
      %2803 = vmatprep.subr.bf16.mxu0 0
      %2804 = vmatpush1.bf16.msra.mxu0 0
      %2805 = vmatprep.subr.bf16.mxu0 0
      %2806 = vmatpush1.bf16.msra.mxu0 0
      %2807 = vmatprep.subr.bf16.mxu0 0
      %2808 = vmatpush1.bf16.msra.mxu0 0
      %2809 = vmatprep.subr.bf16.mxu0 0
      %2810 = vmatpush1.bf16.msra.mxu0 0
      %2811 = vmatprep.mubr.bf16.mxu0 0
      %2812 = vmatmul.mubr.bf16.gmra.mrb[0].mxu0 %v2774
      %v2813 = vpop.f32.mrb[0].mxu0
      %v2814 = vadd.f32 0.0, %v2813
      %v2815 = vpop.f32.mrb[0].mxu0
      %v2816 = vpop.f32.mrb[0].mxu0
      %v2817 = vpop.f32.mrb[0].mxu0
      %2818 = vdwg.mxu0
      %v2819 = vpack.i.b16 %v1027, %v1027
      %v2820 = vlaneseq
      %v2821 = vshrl.u32 %v2820, 7
      %v2822 = vsub.s32 0, %v2821
      %v2823 = vrot.slane %v2819, %v2822
      %v2825 = vsel %vm1037, %v2823, 0
      %v2828 = vsel %vm1041, %v281, 0
      %2830 = vmatprep.subr.bf16.mxu0 0
      %2831 = vmatpush1.bf16.msra.mxu0 %v2828
      %2832 = vmatprep.subr.bf16.mxu0 0
      %2833 = vmatpush1.bf16.msra.mxu0 0
      %2834 = vmatprep.subr.bf16.mxu0 0
      %2835 = vmatpush1.bf16.msra.mxu0 0
      %2836 = vmatprep.subr.bf16.mxu0 0
      %2837 = vmatpush1.bf16.msra.mxu0 0
      %2838 = vmatprep.subr.bf16.mxu0 0
      %2839 = vmatpush1.bf16.msra.mxu0 0
      %2840 = vmatprep.subr.bf16.mxu0 0
      %2841 = vmatpush1.bf16.msra.mxu0 0
      %2842 = vmatprep.subr.bf16.mxu0 0
      %2843 = vmatpush1.bf16.msra.mxu0 0
      %2844 = vmatprep.subr.bf16.mxu0 0
      %2845 = vmatpush1.bf16.msra.mxu0 0
      %2846 = vmatprep.subr.bf16.mxu0 0
      %2847 = vmatpush1.bf16.msra.mxu0 0
      %2848 = vmatprep.subr.bf16.mxu0 0
      %2849 = vmatpush1.bf16.msra.mxu0 0
      %2850 = vmatprep.subr.bf16.mxu0 0
      %2851 = vmatpush1.bf16.msra.mxu0 0
      %2852 = vmatprep.subr.bf16.mxu0 0
      %2853 = vmatpush1.bf16.msra.mxu0 0
      %2854 = vmatprep.subr.bf16.mxu0 0
      %2855 = vmatpush1.bf16.msra.mxu0 0
      %2856 = vmatprep.subr.bf16.mxu0 0
      %2857 = vmatpush1.bf16.msra.mxu0 0
      %2858 = vmatprep.subr.bf16.mxu0 0
      %2859 = vmatpush1.bf16.msra.mxu0 0
      %2860 = vmatprep.subr.bf16.mxu0 0
      %2861 = vmatpush1.bf16.msra.mxu0 0
      %2862 = vmatprep.mubr.bf16.mxu0 0
      %2863 = vmatmul.mubr.bf16.gmra.mrb[0].mxu0 %v2825
      %v2864 = vpop.f32.mrb[0].mxu0
      %v2865 = vadd.f32 0.0, %v2864
      %v2866 = vpop.f32.mrb[0].mxu0
      %v2867 = vpop.f32.mrb[0].mxu0
      %v2868 = vpop.f32.mrb[0].mxu0
      %2869 = vdwg.mxu0
      %v2870 = vpack.i.b16 %v1028, %v1028
      %v2871 = vlaneseq
      %v2872 = vshrl.u32 %v2871, 7
      %v2873 = vsub.s32 0, %v2872
      %v2874 = vrot.slane %v2870, %v2873
      %v2876 = vsel %vm1037, %v2874, 0
      %v2879 = vsel %vm1041, %v282, 0
      %2881 = vmatprep.subr.bf16.mxu0 0
      %2882 = vmatpush1.bf16.msra.mxu0 %v2879
      %2883 = vmatprep.subr.bf16.mxu0 0
      %2884 = vmatpush1.bf16.msra.mxu0 0
      %2885 = vmatprep.subr.bf16.mxu0 0
      %2886 = vmatpush1.bf16.msra.mxu0 0
      %2887 = vmatprep.subr.bf16.mxu0 0
      %2888 = vmatpush1.bf16.msra.mxu0 0
      %2889 = vmatprep.subr.bf16.mxu0 0
      %2890 = vmatpush1.bf16.msra.mxu0 0
      %2891 = vmatprep.subr.bf16.mxu0 0
      %2892 = vmatpush1.bf16.msra.mxu0 0
      %2893 = vmatprep.subr.bf16.mxu0 0
      %2894 = vmatpush1.bf16.msra.mxu0 0
      %2895 = vmatprep.subr.bf16.mxu0 0
      %2896 = vmatpush1.bf16.msra.mxu0 0
      %2897 = vmatprep.subr.bf16.mxu0 0
      %2898 = vmatpush1.bf16.msra.mxu0 0
      %2899 = vmatprep.subr.bf16.mxu0 0
      %2900 = vmatpush1.bf16.msra.mxu0 0
      %2901 = vmatprep.subr.bf16.mxu0 0
      %2902 = vmatpush1.bf16.msra.mxu0 0
      %2903 = vmatprep.subr.bf16.mxu0 0
      %2904 = vmatpush1.bf16.msra.mxu0 0
      %2905 = vmatprep.subr.bf16.mxu0 0
      %2906 = vmatpush1.bf16.msra.mxu0 0
      %2907 = vmatprep.subr.bf16.mxu0 0
      %2908 = vmatpush1.bf16.msra.mxu0 0
      %2909 = vmatprep.subr.bf16.mxu0 0
      %2910 = vmatpush1.bf16.msra.mxu0 0
      %2911 = vmatprep.subr.bf16.mxu0 0
      %2912 = vmatpush1.bf16.msra.mxu0 0
      %2913 = vmatprep.mubr.bf16.mxu0 0
      %2914 = vmatmul.mubr.bf16.gmra.mrb[0].mxu0 %v2876
      %v2915 = vpop.f32.mrb[0].mxu0
      %v2916 = vadd.f32 0.0, %v2915
      %v2917 = vpop.f32.mrb[0].mxu0
      %v2918 = vpop.f32.mrb[0].mxu0
      %v2919 = vpop.f32.mrb[0].mxu0
      %2920 = vdwg.mxu0
      %v2921 = vpack.i.b16 %v1029, %v1029
      %v2922 = vlaneseq
      %v2923 = vshrl.u32 %v2922, 7
      %v2924 = vsub.s32 0, %v2923
      %v2925 = vrot.slane %v2921, %v2924
      %v2927 = vsel %vm1037, %v2925, 0
      %v2930 = vsel %vm1041, %v283, 0
      %2932 = vmatprep.subr.bf16.mxu0 0
      %2933 = vmatpush1.bf16.msra.mxu0 %v2930
      %2934 = vmatprep.subr.bf16.mxu0 0
      %2935 = vmatpush1.bf16.msra.mxu0 0
      %2936 = vmatprep.subr.bf16.mxu0 0
      %2937 = vmatpush1.bf16.msra.mxu0 0
      %2938 = vmatprep.subr.bf16.mxu0 0
      %2939 = vmatpush1.bf16.msra.mxu0 0
      %2940 = vmatprep.subr.bf16.mxu0 0
      %2941 = vmatpush1.bf16.msra.mxu0 0
      %2942 = vmatprep.subr.bf16.mxu0 0
      %2943 = vmatpush1.bf16.msra.mxu0 0
      %2944 = vmatprep.subr.bf16.mxu0 0
      %2945 = vmatpush1.bf16.msra.mxu0 0
      %2946 = vmatprep.subr.bf16.mxu0 0
      %2947 = vmatpush1.bf16.msra.mxu0 0
      %2948 = vmatprep.subr.bf16.mxu0 0
      %2949 = vmatpush1.bf16.msra.mxu0 0
      %2950 = vmatprep.subr.bf16.mxu0 0
      %2951 = vmatpush1.bf16.msra.mxu0 0
      %2952 = vmatprep.subr.bf16.mxu0 0
      %2953 = vmatpush1.bf16.msra.mxu0 0
      %2954 = vmatprep.subr.bf16.mxu0 0
      %2955 = vmatpush1.bf16.msra.mxu0 0
      %2956 = vmatprep.subr.bf16.mxu0 0
      %2957 = vmatpush1.bf16.msra.mxu0 0
      %2958 = vmatprep.subr.bf16.mxu0 0
      %2959 = vmatpush1.bf16.msra.mxu0 0
      %2960 = vmatprep.subr.bf16.mxu0 0
      %2961 = vmatpush1.bf16.msra.mxu0 0
      %2962 = vmatprep.subr.bf16.mxu0 0
      %2963 = vmatpush1.bf16.msra.mxu0 0
      %2964 = vmatprep.mubr.bf16.mxu0 0
      %2965 = vmatmul.mubr.bf16.gmra.mrb[0].mxu0 %v2927
      %v2966 = vpop.f32.mrb[0].mxu0
      %v2967 = vadd.f32 0.0, %v2966
      %v2968 = vpop.f32.mrb[0].mxu0
      %v2969 = vpop.f32.mrb[0].mxu0
      %v2970 = vpop.f32.mrb[0].mxu0
      %2971 = vdwg.mxu0
      %v2972 = vpack.i.b16 %v1030, %v1030
      %v2973 = vlaneseq
      %v2974 = vshrl.u32 %v2973, 7
      %v2975 = vsub.s32 0, %v2974
      %v2976 = vrot.slane %v2972, %v2975
      %v2978 = vsel %vm1037, %v2976, 0
      %v2981 = vsel %vm1041, %v284, 0
      %2983 = vmatprep.subr.bf16.mxu0 0
      %2984 = vmatpush1.bf16.msra.mxu0 %v2981
      %2985 = vmatprep.subr.bf16.mxu0 0
      %2986 = vmatpush1.bf16.msra.mxu0 0
      %2987 = vmatprep.subr.bf16.mxu0 0
      %2988 = vmatpush1.bf16.msra.mxu0 0
      %2989 = vmatprep.subr.bf16.mxu0 0
      %2990 = vmatpush1.bf16.msra.mxu0 0
      %2991 = vmatprep.subr.bf16.mxu0 0
      %2992 = vmatpush1.bf16.msra.mxu0 0
      %2993 = vmatprep.subr.bf16.mxu0 0
      %2994 = vmatpush1.bf16.msra.mxu0 0
      %2995 = vmatprep.subr.bf16.mxu0 0
      %2996 = vmatpush1.bf16.msra.mxu0 0
      %2997 = vmatprep.subr.bf16.mxu0 0
      %2998 = vmatpush1.bf16.msra.mxu0 0
      %2999 = vmatprep.subr.bf16.mxu0 0
      %3000 = vmatpush1.bf16.msra.mxu0 0
      %3001 = vmatprep.subr.bf16.mxu0 0
      %3002 = vmatpush1.bf16.msra.mxu0 0
      %3003 = vmatprep.subr.bf16.mxu0 0
      %3004 = vmatpush1.bf16.msra.mxu0 0
      %3005 = vmatprep.subr.bf16.mxu0 0
      %3006 = vmatpush1.bf16.msra.mxu0 0
      %3007 = vmatprep.subr.bf16.mxu0 0
      %3008 = vmatpush1.bf16.msra.mxu0 0
      %3009 = vmatprep.subr.bf16.mxu0 0
      %3010 = vmatpush1.bf16.msra.mxu0 0
      %3011 = vmatprep.subr.bf16.mxu0 0
      %3012 = vmatpush1.bf16.msra.mxu0 0
      %3013 = vmatprep.subr.bf16.mxu0 0
      %3014 = vmatpush1.bf16.msra.mxu0 0
      %3015 = vmatprep.mubr.bf16.mxu0 0
      %3016 = vmatmul.mubr.bf16.gmra.mrb[0].mxu0 %v2978
      %v3017 = vpop.f32.mrb[0].mxu0
      %v3018 = vadd.f32 0.0, %v3017
      %v3019 = vpop.f32.mrb[0].mxu0
      %v3020 = vpop.f32.mrb[0].mxu0
      %v3021 = vpop.f32.mrb[0].mxu0
      %3022 = vdwg.mxu0
      %v3023 = vpack.i.b16 %v1031, %v1031
      %v3024 = vlaneseq
      %v3025 = vshrl.u32 %v3024, 7
      %v3026 = vsub.s32 0, %v3025
      %v3027 = vrot.slane %v3023, %v3026
      %v3029 = vsel %vm1037, %v3027, 0
      %v3032 = vsel %vm1041, %v285, 0
      %3034 = vmatprep.subr.bf16.mxu0 0
      %3035 = vmatpush1.bf16.msra.mxu0 %v3032
      %3036 = vmatprep.subr.bf16.mxu0 0
      %3037 = vmatpush1.bf16.msra.mxu0 0
      %3038 = vmatprep.subr.bf16.mxu0 0
      %3039 = vmatpush1.bf16.msra.mxu0 0
      %3040 = vmatprep.subr.bf16.mxu0 0
      %3041 = vmatpush1.bf16.msra.mxu0 0
      %3042 = vmatprep.subr.bf16.mxu0 0
      %3043 = vmatpush1.bf16.msra.mxu0 0
      %3044 = vmatprep.subr.bf16.mxu0 0
      %3045 = vmatpush1.bf16.msra.mxu0 0
      %3046 = vmatprep.subr.bf16.mxu0 0
      %3047 = vmatpush1.bf16.msra.mxu0 0
      %3048 = vmatprep.subr.bf16.mxu0 0
      %3049 = vmatpush1.bf16.msra.mxu0 0
      %3050 = vmatprep.subr.bf16.mxu0 0
      %3051 = vmatpush1.bf16.msra.mxu0 0
      %3052 = vmatprep.subr.bf16.mxu0 0
      %3053 = vmatpush1.bf16.msra.mxu0 0
      %3054 = vmatprep.subr.bf16.mxu0 0
      %3055 = vmatpush1.bf16.msra.mxu0 0
      %3056 = vmatprep.subr.bf16.mxu0 0
      %3057 = vmatpush1.bf16.msra.mxu0 0
      %3058 = vmatprep.subr.bf16.mxu0 0
      %3059 = vmatpush1.bf16.msra.mxu0 0
      %3060 = vmatprep.subr.bf16.mxu0 0
      %3061 = vmatpush1.bf16.msra.mxu0 0
      %3062 = vmatprep.subr.bf16.mxu0 0
      %3063 = vmatpush1.bf16.msra.mxu0 0
      %3064 = vmatprep.subr.bf16.mxu0 0
      %3065 = vmatpush1.bf16.msra.mxu0 0
      %3066 = vmatprep.mubr.bf16.mxu0 0
      %3067 = vmatmul.mubr.bf16.gmra.mrb[0].mxu0 %v3029
      %v3068 = vpop.f32.mrb[0].mxu0
      %v3069 = vadd.f32 0.0, %v3068
      %v3070 = vpop.f32.mrb[0].mxu0
      %v3071 = vpop.f32.mrb[0].mxu0
      %v3072 = vpop.f32.mrb[0].mxu0
      %3073 = vdwg.mxu0
      %v3074 = vsel %vm1037, %v662, 0.0
      %3075 = vadd.xlane.f32.xlu0 %v3074
      %v3076 = vpop.xlane.xlu0 %3075
      %v3077 = vsel %vm1037, %v711, 0.0
      %3078 = vadd.xlane.f32.xlu0 %v3077
      %v3079 = vpop.xlane.xlu0 %3078
      %v3080 = vsel %vm1037, %v760, 0.0
      %3081 = vadd.xlane.f32.xlu0 %v3080
      %v3082 = vpop.xlane.xlu0 %3081
      %v3083 = vsel %vm1037, %v809, 0.0
      %3084 = vadd.xlane.f32.xlu0 %v3083
      %v3085 = vpop.xlane.xlu0 %3084
      %v3086 = vsel %vm1037, %v858, 0.0
      %3087 = vadd.xlane.f32.xlu0 %v3086
      %v3088 = vpop.xlane.xlu0 %3087
      %v3089 = vmax.f32 %v3076, 1e-09
      %v3090 = vmax.f32 %v3079, 1e-09
      %v3091 = vmax.f32 %v3082, 1e-09
      %v3092 = vmax.f32 %v3085, 1e-09
      %v3093 = vmax.f32 %v3088, 1e-09
      %v3099 = vrot.slane %v3089, 1
      %v3100 = vrot.slane %v3089, 2
      %v3101 = vrot.slane %v3089, 3
      %v3102 = vrot.slane %v3089, 4
      %v3103 = vrot.slane %v3089, 5
      %v3104 = vrot.slane %v3089, 6
      %v3105 = vrot.slane %v3089, 7
      %v3106 = vrot.slane %v3090, 1
      %v3107 = vrot.slane %v3090, 2
      %v3108 = vrot.slane %v3090, 3
      %v3109 = vrot.slane %v3090, 4
      %v3110 = vrot.slane %v3090, 5
      %v3111 = vrot.slane %v3090, 6
      %v3112 = vrot.slane %v3090, 7
      %v3113 = vrot.slane %v3091, 1
      %v3114 = vrot.slane %v3091, 2
      %v3115 = vrot.slane %v3091, 3
      %v3116 = vrot.slane %v3091, 4
      %v3117 = vrot.slane %v3091, 5
      %v3118 = vrot.slane %v3091, 6
      %v3119 = vrot.slane %v3091, 7
      %v3120 = vrot.slane %v3092, 1
      %v3121 = vrot.slane %v3092, 2
      %v3122 = vrot.slane %v3092, 3
      %v3123 = vrot.slane %v3092, 4
      %v3124 = vrot.slane %v3092, 5
      %v3125 = vrot.slane %v3092, 6
      %v3126 = vrot.slane %v3092, 7
      %v3127 = vrot.slane %v3093, 1
      %v3128 = vrot.slane %v3093, 2
      %v3129 = vrot.slane %v3093, 3
      %v3130 = vrot.slane %v3093, 4
      %v3131 = vrot.slane %v3093, 5
      %v3132 = vrot.slane %v3093, 6
      %v3133 = vrot.slane %v3093, 7
      %v3174 = vrcp.pop %v3089
      %v3175 = vmul.f32 %v1080, %v3174
      %v3176 = vrcp.pop %v3099
      %v3177 = vmul.f32 %v1131, %v3176
      %v3178 = vrcp.pop %v3100
      %v3179 = vmul.f32 %v1182, %v3178
      %v3180 = vrcp.pop %v3101
      %v3181 = vmul.f32 %v1233, %v3180
      %v3182 = vrcp.pop %v3102
      %v3183 = vmul.f32 %v1284, %v3182
      %v3184 = vrcp.pop %v3103
      %v3185 = vmul.f32 %v1335, %v3184
      %v3186 = vrcp.pop %v3104
      %v3187 = vmul.f32 %v1386, %v3186
      %v3188 = vrcp.pop %v3105
      %v3189 = vmul.f32 %v1437, %v3188
      %v3190 = vrcp.pop %v3090
      %v3191 = vmul.f32 %v1488, %v3190
      %v3192 = vrcp.pop %v3106
      %v3193 = vmul.f32 %v1539, %v3192
      %v3194 = vrcp.pop %v3107
      %v3195 = vmul.f32 %v1590, %v3194
      %v3196 = vrcp.pop %v3108
      %v3197 = vmul.f32 %v1641, %v3196
      %v3198 = vrcp.pop %v3109
      %v3199 = vmul.f32 %v1692, %v3198
      %v3200 = vrcp.pop %v3110
      %v3201 = vmul.f32 %v1743, %v3200
      %v3202 = vrcp.pop %v3111
      %v3203 = vmul.f32 %v1794, %v3202
      %v3204 = vrcp.pop %v3112
      %v3205 = vmul.f32 %v1845, %v3204
      %v3206 = vrcp.pop %v3091
      %v3207 = vmul.f32 %v1896, %v3206
      %v3208 = vrcp.pop %v3113
      %v3209 = vmul.f32 %v1947, %v3208
      %v3210 = vrcp.pop %v3114
      %v3211 = vmul.f32 %v1998, %v3210
      %v3212 = vrcp.pop %v3115
      %v3213 = vmul.f32 %v2049, %v3212
      %v3214 = vrcp.pop %v3116
      %v3215 = vmul.f32 %v2100, %v3214
      %v3216 = vrcp.pop %v3117
      %v3217 = vmul.f32 %v2151, %v3216
      %v3218 = vrcp.pop %v3118
      %v3219 = vmul.f32 %v2202, %v3218
      %v3220 = vrcp.pop %v3119
      %v3221 = vmul.f32 %v2253, %v3220
      %v3222 = vrcp.pop %v3092
      %v3223 = vmul.f32 %v2304, %v3222
      %v3224 = vrcp.pop %v3120
      %v3225 = vmul.f32 %v2355, %v3224
      %v3226 = vrcp.pop %v3121
      %v3227 = vmul.f32 %v2406, %v3226
      %v3228 = vrcp.pop %v3122
      %v3229 = vmul.f32 %v2457, %v3228
      %v3230 = vrcp.pop %v3123
      %v3231 = vmul.f32 %v2508, %v3230
      %v3232 = vrcp.pop %v3124
      %v3233 = vmul.f32 %v2559, %v3232
      %v3234 = vrcp.pop %v3125
      %v3235 = vmul.f32 %v2610, %v3234
      %v3236 = vrcp.pop %v3126
      %v3237 = vmul.f32 %v2661, %v3236
      %v3238 = vrcp.pop %v3093
      %v3239 = vmul.f32 %v2712, %v3238
      %v3240 = vrcp.pop %v3127
      %v3241 = vmul.f32 %v2763, %v3240
      %v3242 = vrcp.pop %v3128
      %v3243 = vmul.f32 %v2814, %v3242
      %v3244 = vrcp.pop %v3129
      %v3245 = vmul.f32 %v2865, %v3244
      %v3246 = vrcp.pop %v3130
      %v3247 = vmul.f32 %v2916, %v3246
      %v3248 = vrcp.pop %v3131
      %v3249 = vmul.f32 %v2967, %v3248
      %v3250 = vrcp.pop %v3132
      %v3251 = vmul.f32 %v3018, %v3250
      %v3252 = vrcp.pop %v3133
      %v3253 = vmul.f32 %v3069, %v3252
      %v3258 = vrot.slane %v3179, 7
      %vm3259 = vcmask 1041409
      %v3260 = vsel %vm3259, %v3258, %v3177
      %v3261 = vrot.slane %v3181, 6
      %vm3262 = vcmask 1042434
      %v3263 = vsel %vm3262, %v3261, %v3260
      %v3264 = vrot.slane %v3183, 5
      %vm3265 = vcmask 1043459
      %v3266 = vsel %vm3265, %v3264, %v3263
      %vm3267 = vcmask 261120
      %v3269 = vsel %vm3267, %v3175, 0
      %v3271 = vsel %vm3267, %v3266, 0
      %3273 = vmatprep.subr.mxu0 0.0
      %v3274 = vand.u32 %v3271, 4294901760
      %3275 = vmatpush1.xpose.msra.mxu0 %v3274
      %3276 = vmatprep.subr.mxu0 0.0
      %3277 = vmatpush1.xpose.msra.mxu0 0.0
      %3278 = vmatprep.subr.mxu0 0.0
      %3279 = vmatpush1.xpose.msra.mxu0 0.0
      %3280 = vmatprep.subr.mxu0 0.0
      %3281 = vmatpush1.xpose.msra.mxu0 0.0
      %3282 = vmatprep.subr.mxu0 0.0
      %3283 = vmatpush1.xpose.msra.mxu0 0.0
      %3284 = vmatprep.subr.mxu0 0.0
      %3285 = vmatpush1.xpose.msra.mxu0 0.0
      %3286 = vmatprep.subr.mxu0 0.0
      %3287 = vmatpush1.xpose.msra.mxu0 0.0
      %3288 = vmatprep.subr.mxu0 0.0
      %3289 = vmatpush1.xpose.msra.mxu0 0.0
      %3290 = vmatprep.subr.mxu0 0.0
      %3291 = vmatpush1.xpose.msra.mxu0 0.0
      %3292 = vmatprep.subr.mxu0 0.0
      %3293 = vmatpush1.xpose.msra.mxu0 0.0
      %3294 = vmatprep.subr.mxu0 0.0
      %3295 = vmatpush1.xpose.msra.mxu0 0.0
      %3296 = vmatprep.subr.mxu0 0.0
      %3297 = vmatpush1.xpose.msra.mxu0 0.0
      %3298 = vmatprep.subr.mxu0 0.0
      %3299 = vmatpush1.xpose.msra.mxu0 0.0
      %3300 = vmatprep.subr.mxu0 0.0
      %3301 = vmatpush1.xpose.msra.mxu0 0.0
      %3302 = vmatprep.subr.mxu0 0.0
      %3303 = vmatpush1.xpose.msra.mxu0 0.0
      %3304 = vmatprep.subr.mxu0 0.0
      %3305 = vmatpush1.xpose.msra.mxu0 0.0
      %3306 = vmatprep.subr.mxu0 0.0
      %3307 = vmatpush1.xpose.msra.mxu0 0.0
      %3308 = vmatprep.subr.mxu0 0.0
      %3309 = vmatpush1.xpose.msra.mxu0 0.0
      %3310 = vmatprep.subr.mxu0 0.0
      %3311 = vmatpush1.xpose.msra.mxu0 0.0
      %3312 = vmatprep.subr.mxu0 0.0
      %3313 = vmatpush1.xpose.msra.mxu0 0.0
      %3314 = vmatprep.subr.mxu0 0.0
      %3315 = vmatpush1.xpose.msra.mxu0 0.0
      %3316 = vmatprep.subr.mxu0 0.0
      %3317 = vmatpush1.xpose.msra.mxu0 0.0
      %3318 = vmatprep.subr.mxu0 0.0
      %3319 = vmatpush1.xpose.msra.mxu0 0.0
      %3320 = vmatprep.subr.mxu0 0.0
      %3321 = vmatpush1.xpose.msra.mxu0 0.0
      %3322 = vmatprep.subr.mxu0 0.0
      %3323 = vmatpush1.xpose.msra.mxu0 0.0
      %3324 = vmatprep.subr.mxu0 0.0
      %3325 = vmatpush1.xpose.msra.mxu0 0.0
      %3326 = vmatprep.subr.mxu0 0.0
      %3327 = vmatpush1.xpose.msra.mxu0 0.0
      %3328 = vmatprep.subr.mxu0 0.0
      %3329 = vmatpush1.xpose.msra.mxu0 0.0
      %3330 = vmatprep.subr.mxu0 0.0
      %3331 = vmatpush1.xpose.msra.mxu0 0.0
      %3332 = vmatprep.subr.mxu0 0.0
      %3333 = vmatpush1.xpose.msra.mxu0 0.0
      %3334 = vmatprep.subr.mxu0 0.0
      %3335 = vmatpush1.xpose.msra.mxu0 0.0
      %3336 = vmatprep.subr.mxu0 0.0
      %3337 = vmatpush1.xpose.msra.mxu0 0.0
      %3338 = vmatprep.mubr.f32.mxu0 0.0
      %v3339 = vand.u32 %v3269, 4294901760
      %v3340 = vsub.f32 %v3269, %v3339
      %v3341 = vand.u32 %v3340, 4294901760
      %v3342 = vsub.f32 %v3340, %v3341
      %v3343 = vand.u32 %v3342, 4294901760
      %3344 = vmatmul.mubr.f32.gmra.mrb[0].mxu0 %v3343
      %v3345 = vpop.f32.mrb[0].mxu0
      %v3346 = vadd.f32 0.0, %v3345
      %v3347 = vpop.f32.mrb[0].mxu0
      %3348 = vdwg.mxu0
      %3349 = vmatprep.subr.mxu0 0.0
      %v3350 = vand.u32 %v3271, 4294901760
      %v3351 = vsub.f32 %v3271, %v3350
      %v3352 = vand.u32 %v3351, 4294901760
      %v3353 = vsub.f32 %v3351, %v3352
      %v3354 = vand.u32 %v3353, 4294901760
      %3355 = vmatpush1.xpose.msra.mxu0 %v3354
      %3356 = vmatprep.subr.mxu0 0.0
      %3357 = vmatpush1.xpose.msra.mxu0 0.0
      %3358 = vmatprep.subr.mxu0 0.0
      %3359 = vmatpush1.xpose.msra.mxu0 0.0
      %3360 = vmatprep.subr.mxu0 0.0
      %3361 = vmatpush1.xpose.msra.mxu0 0.0
      %3362 = vmatprep.subr.mxu0 0.0
      %3363 = vmatpush1.xpose.msra.mxu0 0.0
      %3364 = vmatprep.subr.mxu0 0.0
      %3365 = vmatpush1.xpose.msra.mxu0 0.0
      %3366 = vmatprep.subr.mxu0 0.0
      %3367 = vmatpush1.xpose.msra.mxu0 0.0
      %3368 = vmatprep.subr.mxu0 0.0
      %3369 = vmatpush1.xpose.msra.mxu0 0.0
      %3370 = vmatprep.subr.mxu0 0.0
      %3371 = vmatpush1.xpose.msra.mxu0 0.0
      %3372 = vmatprep.subr.mxu0 0.0
      %3373 = vmatpush1.xpose.msra.mxu0 0.0
      %3374 = vmatprep.subr.mxu0 0.0
      %3375 = vmatpush1.xpose.msra.mxu0 0.0
      %3376 = vmatprep.subr.mxu0 0.0
      %3377 = vmatpush1.xpose.msra.mxu0 0.0
      %3378 = vmatprep.subr.mxu0 0.0
      %3379 = vmatpush1.xpose.msra.mxu0 0.0
      %3380 = vmatprep.subr.mxu0 0.0
      %3381 = vmatpush1.xpose.msra.mxu0 0.0
      %3382 = vmatprep.subr.mxu0 0.0
      %3383 = vmatpush1.xpose.msra.mxu0 0.0
      %3384 = vmatprep.subr.mxu0 0.0
      %3385 = vmatpush1.xpose.msra.mxu0 0.0
      %3386 = vmatprep.subr.mxu0 0.0
      %3387 = vmatpush1.xpose.msra.mxu0 0.0
      %3388 = vmatprep.subr.mxu0 0.0
      %3389 = vmatpush1.xpose.msra.mxu0 0.0
      %3390 = vmatprep.subr.mxu0 0.0
      %3391 = vmatpush1.xpose.msra.mxu0 0.0
      %3392 = vmatprep.subr.mxu0 0.0
      %3393 = vmatpush1.xpose.msra.mxu0 0.0
      %3394 = vmatprep.subr.mxu0 0.0
      %3395 = vmatpush1.xpose.msra.mxu0 0.0
      %3396 = vmatprep.subr.mxu0 0.0
      %3397 = vmatpush1.xpose.msra.mxu0 0.0
      %3398 = vmatprep.subr.mxu0 0.0
      %3399 = vmatpush1.xpose.msra.mxu0 0.0
      %3400 = vmatprep.subr.mxu0 0.0
      %3401 = vmatpush1.xpose.msra.mxu0 0.0
      %3402 = vmatprep.subr.mxu0 0.0
      %3403 = vmatpush1.xpose.msra.mxu0 0.0
      %3404 = vmatprep.subr.mxu0 0.0
      %3405 = vmatpush1.xpose.msra.mxu0 0.0
      %3406 = vmatprep.subr.mxu0 0.0
      %3407 = vmatpush1.xpose.msra.mxu0 0.0
      %3408 = vmatprep.subr.mxu0 0.0
      %3409 = vmatpush1.xpose.msra.mxu0 0.0
      %3410 = vmatprep.subr.mxu0 0.0
      %3411 = vmatpush1.xpose.msra.mxu0 0.0
      %3412 = vmatprep.subr.mxu0 0.0
      %3413 = vmatpush1.xpose.msra.mxu0 0.0
      %3414 = vmatprep.subr.mxu0 0.0
      %3415 = vmatpush1.xpose.msra.mxu0 0.0
      %3416 = vmatprep.subr.mxu0 0.0
      %3417 = vmatpush1.xpose.msra.mxu0 0.0
      %3418 = vmatprep.mubr.f32.mxu0 0.0
      %v3419 = vand.u32 %v3269, 4294901760
      %3420 = vmatmul.mubr.f32.gmra.mrb[0].mxu0 %v3419
      %v3421 = vpop.f32.mrb[0].mxu0
      %v3422 = vadd.f32 %v3346, %v3421
      %v3423 = vpop.f32.mrb[0].mxu0
      %3424 = vdwg.mxu0
      %3425 = vmatprep.subr.mxu0 0.0
      %v3426 = vand.u32 %v3271, 4294901760
      %v3427 = vsub.f32 %v3271, %v3426
      %3428 = vmatpush1.xpose.msra.mxu0 %v3427
      %3429 = vmatprep.subr.mxu0 0.0
      %3430 = vmatpush1.xpose.msra.mxu0 0.0
      %3431 = vmatprep.subr.mxu0 0.0
      %3432 = vmatpush1.xpose.msra.mxu0 0.0
      %3433 = vmatprep.subr.mxu0 0.0
      %3434 = vmatpush1.xpose.msra.mxu0 0.0
      %3435 = vmatprep.subr.mxu0 0.0
      %3436 = vmatpush1.xpose.msra.mxu0 0.0
      %3437 = vmatprep.subr.mxu0 0.0
      %3438 = vmatpush1.xpose.msra.mxu0 0.0
      %3439 = vmatprep.subr.mxu0 0.0
      %3440 = vmatpush1.xpose.msra.mxu0 0.0
      %3441 = vmatprep.subr.mxu0 0.0
      %3442 = vmatpush1.xpose.msra.mxu0 0.0
      %3443 = vmatprep.subr.mxu0 0.0
      %3444 = vmatpush1.xpose.msra.mxu0 0.0
      %3445 = vmatprep.subr.mxu0 0.0
      %3446 = vmatpush1.xpose.msra.mxu0 0.0
      %3447 = vmatprep.subr.mxu0 0.0
      %3448 = vmatpush1.xpose.msra.mxu0 0.0
      %3449 = vmatprep.subr.mxu0 0.0
      %3450 = vmatpush1.xpose.msra.mxu0 0.0
      %3451 = vmatprep.subr.mxu0 0.0
      %3452 = vmatpush1.xpose.msra.mxu0 0.0
      %3453 = vmatprep.subr.mxu0 0.0
      %3454 = vmatpush1.xpose.msra.mxu0 0.0
      %3455 = vmatprep.subr.mxu0 0.0
      %3456 = vmatpush1.xpose.msra.mxu0 0.0
      %3457 = vmatprep.subr.mxu0 0.0
      %3458 = vmatpush1.xpose.msra.mxu0 0.0
      %3459 = vmatprep.subr.mxu0 0.0
      %3460 = vmatpush1.xpose.msra.mxu0 0.0
      %3461 = vmatprep.subr.mxu0 0.0
      %3462 = vmatpush1.xpose.msra.mxu0 0.0
      %3463 = vmatprep.subr.mxu0 0.0
      %3464 = vmatpush1.xpose.msra.mxu0 0.0
      %3465 = vmatprep.subr.mxu0 0.0
      %3466 = vmatpush1.xpose.msra.mxu0 0.0
      %3467 = vmatprep.subr.mxu0 0.0
      %3468 = vmatpush1.xpose.msra.mxu0 0.0
      %3469 = vmatprep.subr.mxu0 0.0
      %3470 = vmatpush1.xpose.msra.mxu0 0.0
      %3471 = vmatprep.subr.mxu0 0.0
      %3472 = vmatpush1.xpose.msra.mxu0 0.0
      %3473 = vmatprep.subr.mxu0 0.0
      %3474 = vmatpush1.xpose.msra.mxu0 0.0
      %3475 = vmatprep.subr.mxu0 0.0
      %3476 = vmatpush1.xpose.msra.mxu0 0.0
      %3477 = vmatprep.subr.mxu0 0.0
      %3478 = vmatpush1.xpose.msra.mxu0 0.0
      %3479 = vmatprep.subr.mxu0 0.0
      %3480 = vmatpush1.xpose.msra.mxu0 0.0
      %3481 = vmatprep.subr.mxu0 0.0
      %3482 = vmatpush1.xpose.msra.mxu0 0.0
      %3483 = vmatprep.subr.mxu0 0.0
      %3484 = vmatpush1.xpose.msra.mxu0 0.0
      %3485 = vmatprep.subr.mxu0 0.0
      %3486 = vmatpush1.xpose.msra.mxu0 0.0
      %3487 = vmatprep.subr.mxu0 0.0
      %3488 = vmatpush1.xpose.msra.mxu0 0.0
      %3489 = vmatprep.subr.mxu0 0.0
      %3490 = vmatpush1.xpose.msra.mxu0 0.0
      %3491 = vmatprep.mubr.f32.mxu0 0.0
      %v3492 = vand.u32 %v3269, 4294901760
      %v3493 = vsub.f32 %v3269, %v3492
      %3494 = vmatmul.mubr.f32.gmra.mrb[0].mxu0 %v3493
      %v3495 = vpop.f32.mrb[0].mxu0
      %v3496 = vadd.f32 %v3422, %v3495
      %v3497 = vpop.f32.mrb[0].mxu0
      %3498 = vdwg.mxu0
      %3499 = vmatprep.subr.mxu0 0.0
      %v3500 = vand.u32 %v3271, 4294901760
      %3501 = vmatpush1.xpose.msra.mxu0 %v3500
      %3502 = vmatprep.subr.mxu0 0.0
      %3503 = vmatpush1.xpose.msra.mxu0 0.0
      %3504 = vmatprep.subr.mxu0 0.0
      %3505 = vmatpush1.xpose.msra.mxu0 0.0
      %3506 = vmatprep.subr.mxu0 0.0
      %3507 = vmatpush1.xpose.msra.mxu0 0.0
      %3508 = vmatprep.subr.mxu0 0.0
      %3509 = vmatpush1.xpose.msra.mxu0 0.0
      %3510 = vmatprep.subr.mxu0 0.0
      %3511 = vmatpush1.xpose.msra.mxu0 0.0
      %3512 = vmatprep.subr.mxu0 0.0
      %3513 = vmatpush1.xpose.msra.mxu0 0.0
      %3514 = vmatprep.subr.mxu0 0.0
      %3515 = vmatpush1.xpose.msra.mxu0 0.0
      %3516 = vmatprep.subr.mxu0 0.0
      %3517 = vmatpush1.xpose.msra.mxu0 0.0
      %3518 = vmatprep.subr.mxu0 0.0
      %3519 = vmatpush1.xpose.msra.mxu0 0.0
      %3520 = vmatprep.subr.mxu0 0.0
      %3521 = vmatpush1.xpose.msra.mxu0 0.0
      %3522 = vmatprep.subr.mxu0 0.0
      %3523 = vmatpush1.xpose.msra.mxu0 0.0
      %3524 = vmatprep.subr.mxu0 0.0
      %3525 = vmatpush1.xpose.msra.mxu0 0.0
      %3526 = vmatprep.subr.mxu0 0.0
      %3527 = vmatpush1.xpose.msra.mxu0 0.0
      %3528 = vmatprep.subr.mxu0 0.0
      %3529 = vmatpush1.xpose.msra.mxu0 0.0
      %3530 = vmatprep.subr.mxu0 0.0
      %3531 = vmatpush1.xpose.msra.mxu0 0.0
      %3532 = vmatprep.subr.mxu0 0.0
      %3533 = vmatpush1.xpose.msra.mxu0 0.0
      %3534 = vmatprep.subr.mxu0 0.0
      %3535 = vmatpush1.xpose.msra.mxu0 0.0
      %3536 = vmatprep.subr.mxu0 0.0
      %3537 = vmatpush1.xpose.msra.mxu0 0.0
      %3538 = vmatprep.subr.mxu0 0.0
      %3539 = vmatpush1.xpose.msra.mxu0 0.0
      %3540 = vmatprep.subr.mxu0 0.0
      %3541 = vmatpush1.xpose.msra.mxu0 0.0
      %3542 = vmatprep.subr.mxu0 0.0
      %3543 = vmatpush1.xpose.msra.mxu0 0.0
      %3544 = vmatprep.subr.mxu0 0.0
      %3545 = vmatpush1.xpose.msra.mxu0 0.0
      %3546 = vmatprep.subr.mxu0 0.0
      %3547 = vmatpush1.xpose.msra.mxu0 0.0
      %3548 = vmatprep.subr.mxu0 0.0
      %3549 = vmatpush1.xpose.msra.mxu0 0.0
      %3550 = vmatprep.subr.mxu0 0.0
      %3551 = vmatpush1.xpose.msra.mxu0 0.0
      %3552 = vmatprep.subr.mxu0 0.0
      %3553 = vmatpush1.xpose.msra.mxu0 0.0
      %3554 = vmatprep.subr.mxu0 0.0
      %3555 = vmatpush1.xpose.msra.mxu0 0.0
      %3556 = vmatprep.subr.mxu0 0.0
      %3557 = vmatpush1.xpose.msra.mxu0 0.0
      %3558 = vmatprep.subr.mxu0 0.0
      %3559 = vmatpush1.xpose.msra.mxu0 0.0
      %3560 = vmatprep.subr.mxu0 0.0
      %3561 = vmatpush1.xpose.msra.mxu0 0.0
      %3562 = vmatprep.subr.mxu0 0.0
      %3563 = vmatpush1.xpose.msra.mxu0 0.0
      %3564 = vmatprep.mubr.f32.mxu0 0.0
      %v3565 = vand.u32 %v3269, 4294901760
      %v3566 = vsub.f32 %v3269, %v3565
      %v3567 = vand.u32 %v3566, 4294901760
      %3568 = vmatmul.mubr.f32.gmra.mrb[0].mxu0 %v3567
      %v3569 = vpop.f32.mrb[0].mxu0
      %v3570 = vadd.f32 %v3496, %v3569
      %v3571 = vpop.f32.mrb[0].mxu0
      %3572 = vdwg.mxu0
      %3573 = vmatprep.subr.mxu0 0.0
      %v3574 = vand.u32 %v3271, 4294901760
      %v3575 = vsub.f32 %v3271, %v3574
      %v3576 = vand.u32 %v3575, 4294901760
      %3577 = vmatpush1.xpose.msra.mxu0 %v3576
      %3578 = vmatprep.subr.mxu0 0.0
      %3579 = vmatpush1.xpose.msra.mxu0 0.0
      %3580 = vmatprep.subr.mxu0 0.0
      %3581 = vmatpush1.xpose.msra.mxu0 0.0
      %3582 = vmatprep.subr.mxu0 0.0
      %3583 = vmatpush1.xpose.msra.mxu0 0.0
      %3584 = vmatprep.subr.mxu0 0.0
      %3585 = vmatpush1.xpose.msra.mxu0 0.0
      %3586 = vmatprep.subr.mxu0 0.0
      %3587 = vmatpush1.xpose.msra.mxu0 0.0
      %3588 = vmatprep.subr.mxu0 0.0
      %3589 = vmatpush1.xpose.msra.mxu0 0.0
      %3590 = vmatprep.subr.mxu0 0.0
      %3591 = vmatpush1.xpose.msra.mxu0 0.0
      %3592 = vmatprep.subr.mxu0 0.0
      %3593 = vmatpush1.xpose.msra.mxu0 0.0
      %3594 = vmatprep.subr.mxu0 0.0
      %3595 = vmatpush1.xpose.msra.mxu0 0.0
      %3596 = vmatprep.subr.mxu0 0.0
      %3597 = vmatpush1.xpose.msra.mxu0 0.0
      %3598 = vmatprep.subr.mxu0 0.0
      %3599 = vmatpush1.xpose.msra.mxu0 0.0
      %3600 = vmatprep.subr.mxu0 0.0
      %3601 = vmatpush1.xpose.msra.mxu0 0.0
      %3602 = vmatprep.subr.mxu0 0.0
      %3603 = vmatpush1.xpose.msra.mxu0 0.0
      %3604 = vmatprep.subr.mxu0 0.0
      %3605 = vmatpush1.xpose.msra.mxu0 0.0
      %3606 = vmatprep.subr.mxu0 0.0
      %3607 = vmatpush1.xpose.msra.mxu0 0.0
      %3608 = vmatprep.subr.mxu0 0.0
      %3609 = vmatpush1.xpose.msra.mxu0 0.0
      %3610 = vmatprep.subr.mxu0 0.0
      %3611 = vmatpush1.xpose.msra.mxu0 0.0
      %3612 = vmatprep.subr.mxu0 0.0
      %3613 = vmatpush1.xpose.msra.mxu0 0.0
      %3614 = vmatprep.subr.mxu0 0.0
      %3615 = vmatpush1.xpose.msra.mxu0 0.0
      %3616 = vmatprep.subr.mxu0 0.0
      %3617 = vmatpush1.xpose.msra.mxu0 0.0
      %3618 = vmatprep.subr.mxu0 0.0
      %3619 = vmatpush1.xpose.msra.mxu0 0.0
      %3620 = vmatprep.subr.mxu0 0.0
      %3621 = vmatpush1.xpose.msra.mxu0 0.0
      %3622 = vmatprep.subr.mxu0 0.0
      %3623 = vmatpush1.xpose.msra.mxu0 0.0
      %3624 = vmatprep.subr.mxu0 0.0
      %3625 = vmatpush1.xpose.msra.mxu0 0.0
      %3626 = vmatprep.subr.mxu0 0.0
      %3627 = vmatpush1.xpose.msra.mxu0 0.0
      %3628 = vmatprep.subr.mxu0 0.0
      %3629 = vmatpush1.xpose.msra.mxu0 0.0
      %3630 = vmatprep.subr.mxu0 0.0
      %3631 = vmatpush1.xpose.msra.mxu0 0.0
      %3632 = vmatprep.subr.mxu0 0.0
      %3633 = vmatpush1.xpose.msra.mxu0 0.0
      %3634 = vmatprep.subr.mxu0 0.0
      %3635 = vmatpush1.xpose.msra.mxu0 0.0
      %3636 = vmatprep.subr.mxu0 0.0
      %3637 = vmatpush1.xpose.msra.mxu0 0.0
      %3638 = vmatprep.subr.mxu0 0.0
      %3639 = vmatpush1.xpose.msra.mxu0 0.0
      %3640 = vmatprep.mubr.f32.mxu0 0.0
      %v3641 = vand.u32 %v3269, 4294901760
      %3642 = vmatmul.mubr.f32.gmra.mrb[0].mxu0 %v3641
      %v3643 = vpop.f32.mrb[0].mxu0
      %v3644 = vadd.f32 %v3570, %v3643
      %v3645 = vpop.f32.mrb[0].mxu0
      %3646 = vdwg.mxu0
      %3647 = vmatprep.subr.mxu0 0.0
      %v3648 = vand.u32 %v3271, 4294901760
      %3649 = vmatpush1.xpose.msra.mxu0 %v3648
      %3650 = vmatprep.subr.mxu0 0.0
      %3651 = vmatpush1.xpose.msra.mxu0 0.0
      %3652 = vmatprep.subr.mxu0 0.0
      %3653 = vmatpush1.xpose.msra.mxu0 0.0
      %3654 = vmatprep.subr.mxu0 0.0
      %3655 = vmatpush1.xpose.msra.mxu0 0.0
      %3656 = vmatprep.subr.mxu0 0.0
      %3657 = vmatpush1.xpose.msra.mxu0 0.0
      %3658 = vmatprep.subr.mxu0 0.0
      %3659 = vmatpush1.xpose.msra.mxu0 0.0
      %3660 = vmatprep.subr.mxu0 0.0
      %3661 = vmatpush1.xpose.msra.mxu0 0.0
      %3662 = vmatprep.subr.mxu0 0.0
      %3663 = vmatpush1.xpose.msra.mxu0 0.0
      %3664 = vmatprep.subr.mxu0 0.0
      %3665 = vmatpush1.xpose.msra.mxu0 0.0
      %3666 = vmatprep.subr.mxu0 0.0
      %3667 = vmatpush1.xpose.msra.mxu0 0.0
      %3668 = vmatprep.subr.mxu0 0.0
      %3669 = vmatpush1.xpose.msra.mxu0 0.0
      %3670 = vmatprep.subr.mxu0 0.0
      %3671 = vmatpush1.xpose.msra.mxu0 0.0
      %3672 = vmatprep.subr.mxu0 0.0
      %3673 = vmatpush1.xpose.msra.mxu0 0.0
      %3674 = vmatprep.subr.mxu0 0.0
      %3675 = vmatpush1.xpose.msra.mxu0 0.0
      %3676 = vmatprep.subr.mxu0 0.0
      %3677 = vmatpush1.xpose.msra.mxu0 0.0
      %3678 = vmatprep.subr.mxu0 0.0
      %3679 = vmatpush1.xpose.msra.mxu0 0.0
      %3680 = vmatprep.subr.mxu0 0.0
      %3681 = vmatpush1.xpose.msra.mxu0 0.0
      %3682 = vmatprep.subr.mxu0 0.0
      %3683 = vmatpush1.xpose.msra.mxu0 0.0
      %3684 = vmatprep.subr.mxu0 0.0
      %3685 = vmatpush1.xpose.msra.mxu0 0.0
      %3686 = vmatprep.subr.mxu0 0.0
      %3687 = vmatpush1.xpose.msra.mxu0 0.0
      %3688 = vmatprep.subr.mxu0 0.0
      %3689 = vmatpush1.xpose.msra.mxu0 0.0
      %3690 = vmatprep.subr.mxu0 0.0
      %3691 = vmatpush1.xpose.msra.mxu0 0.0
      %3692 = vmatprep.subr.mxu0 0.0
      %3693 = vmatpush1.xpose.msra.mxu0 0.0
      %3694 = vmatprep.subr.mxu0 0.0
      %3695 = vmatpush1.xpose.msra.mxu0 0.0
      %3696 = vmatprep.subr.mxu0 0.0
      %3697 = vmatpush1.xpose.msra.mxu0 0.0
      %3698 = vmatprep.subr.mxu0 0.0
      %3699 = vmatpush1.xpose.msra.mxu0 0.0
      %3700 = vmatprep.subr.mxu0 0.0
      %3701 = vmatpush1.xpose.msra.mxu0 0.0
      %3702 = vmatprep.subr.mxu0 0.0
      %3703 = vmatpush1.xpose.msra.mxu0 0.0
      %3704 = vmatprep.subr.mxu0 0.0
      %3705 = vmatpush1.xpose.msra.mxu0 0.0
      %3706 = vmatprep.subr.mxu0 0.0
      %3707 = vmatpush1.xpose.msra.mxu0 0.0
      %3708 = vmatprep.subr.mxu0 0.0
      %3709 = vmatpush1.xpose.msra.mxu0 0.0
      %3710 = vmatprep.subr.mxu0 0.0
      %3711 = vmatpush1.xpose.msra.mxu0 0.0
      %3712 = vmatprep.mubr.f32.mxu0 0.0
      %v3713 = vand.u32 %v3269, 4294901760
      %3714 = vmatmul.mubr.f32.gmra.mrb[0].mxu0 %v3713
      %v3715 = vpop.f32.mrb[0].mxu0
      %v3716 = vadd.f32 %v3644, %v3715
      %v3717 = vpop.f32.mrb[0].mxu0
      %3718 = vdwg.mxu0
      %v3723 = vrot.slane %v3189, 7
      %v3724 = vsel %vm3259, %v3723, %v3187
      %v3725 = vrot.slane %v3191, 6
      %v3726 = vsel %vm3262, %v3725, %v3724
      %v3727 = vrot.slane %v3193, 5
      %v3728 = vsel %vm3265, %v3727, %v3726
      %v3730 = vsel %vm3267, %v3185, 0
      %v3732 = vsel %vm3267, %v3728, 0
      %3734 = vmatprep.subr.mxu0 0.0
      %v3735 = vand.u32 %v3732, 4294901760
      %3736 = vmatpush1.xpose.msra.mxu0 %v3735
      %3737 = vmatprep.subr.mxu0 0.0
      %3738 = vmatpush1.xpose.msra.mxu0 0.0
      %3739 = vmatprep.subr.mxu0 0.0
      %3740 = vmatpush1.xpose.msra.mxu0 0.0
      %3741 = vmatprep.subr.mxu0 0.0
      %3742 = vmatpush1.xpose.msra.mxu0 0.0
      %3743 = vmatprep.subr.mxu0 0.0
      %3744 = vmatpush1.xpose.msra.mxu0 0.0
      %3745 = vmatprep.subr.mxu0 0.0
      %3746 = vmatpush1.xpose.msra.mxu0 0.0
      %3747 = vmatprep.subr.mxu0 0.0
      %3748 = vmatpush1.xpose.msra.mxu0 0.0
      %3749 = vmatprep.subr.mxu0 0.0
      %3750 = vmatpush1.xpose.msra.mxu0 0.0
      %3751 = vmatprep.subr.mxu0 0.0
      %3752 = vmatpush1.xpose.msra.mxu0 0.0
      %3753 = vmatprep.subr.mxu0 0.0
      %3754 = vmatpush1.xpose.msra.mxu0 0.0
      %3755 = vmatprep.subr.mxu0 0.0
      %3756 = vmatpush1.xpose.msra.mxu0 0.0
      %3757 = vmatprep.subr.mxu0 0.0
      %3758 = vmatpush1.xpose.msra.mxu0 0.0
      %3759 = vmatprep.subr.mxu0 0.0
      %3760 = vmatpush1.xpose.msra.mxu0 0.0
      %3761 = vmatprep.subr.mxu0 0.0
      %3762 = vmatpush1.xpose.msra.mxu0 0.0
      %3763 = vmatprep.subr.mxu0 0.0
      %3764 = vmatpush1.xpose.msra.mxu0 0.0
      %3765 = vmatprep.subr.mxu0 0.0
      %3766 = vmatpush1.xpose.msra.mxu0 0.0
      %3767 = vmatprep.subr.mxu0 0.0
      %3768 = vmatpush1.xpose.msra.mxu0 0.0
      %3769 = vmatprep.subr.mxu0 0.0
      %3770 = vmatpush1.xpose.msra.mxu0 0.0
      %3771 = vmatprep.subr.mxu0 0.0
      %3772 = vmatpush1.xpose.msra.mxu0 0.0
      %3773 = vmatprep.subr.mxu0 0.0
      %3774 = vmatpush1.xpose.msra.mxu0 0.0
      %3775 = vmatprep.subr.mxu0 0.0
      %3776 = vmatpush1.xpose.msra.mxu0 0.0
      %3777 = vmatprep.subr.mxu0 0.0
      %3778 = vmatpush1.xpose.msra.mxu0 0.0
      %3779 = vmatprep.subr.mxu0 0.0
      %3780 = vmatpush1.xpose.msra.mxu0 0.0
      %3781 = vmatprep.subr.mxu0 0.0
      %3782 = vmatpush1.xpose.msra.mxu0 0.0
      %3783 = vmatprep.subr.mxu0 0.0
      %3784 = vmatpush1.xpose.msra.mxu0 0.0
      %3785 = vmatprep.subr.mxu0 0.0
      %3786 = vmatpush1.xpose.msra.mxu0 0.0
      %3787 = vmatprep.subr.mxu0 0.0
      %3788 = vmatpush1.xpose.msra.mxu0 0.0
      %3789 = vmatprep.subr.mxu0 0.0
      %3790 = vmatpush1.xpose.msra.mxu0 0.0
      %3791 = vmatprep.subr.mxu0 0.0
      %3792 = vmatpush1.xpose.msra.mxu0 0.0
      %3793 = vmatprep.subr.mxu0 0.0
      %3794 = vmatpush1.xpose.msra.mxu0 0.0
      %3795 = vmatprep.subr.mxu0 0.0
      %3796 = vmatpush1.xpose.msra.mxu0 0.0
      %3797 = vmatprep.subr.mxu0 0.0
      %3798 = vmatpush1.xpose.msra.mxu0 0.0
      %3799 = vmatprep.mubr.f32.mxu0 0.0
      %v3800 = vand.u32 %v3730, 4294901760
      %v3801 = vsub.f32 %v3730, %v3800
      %v3802 = vand.u32 %v3801, 4294901760
      %v3803 = vsub.f32 %v3801, %v3802
      %v3804 = vand.u32 %v3803, 4294901760
      %3805 = vmatmul.mubr.f32.gmra.mrb[0].mxu0 %v3804
      %v3806 = vpop.f32.mrb[0].mxu0
      %v3807 = vadd.f32 0.0, %v3806
      %v3808 = vpop.f32.mrb[0].mxu0
      %3809 = vdwg.mxu0
      %3810 = vmatprep.subr.mxu0 0.0
      %v3811 = vand.u32 %v3732, 4294901760
      %v3812 = vsub.f32 %v3732, %v3811
      %v3813 = vand.u32 %v3812, 4294901760
      %v3814 = vsub.f32 %v3812, %v3813
      %v3815 = vand.u32 %v3814, 4294901760
      %3816 = vmatpush1.xpose.msra.mxu0 %v3815
      %3817 = vmatprep.subr.mxu0 0.0
      %3818 = vmatpush1.xpose.msra.mxu0 0.0
      %3819 = vmatprep.subr.mxu0 0.0
      %3820 = vmatpush1.xpose.msra.mxu0 0.0
      %3821 = vmatprep.subr.mxu0 0.0
      %3822 = vmatpush1.xpose.msra.mxu0 0.0
      %3823 = vmatprep.subr.mxu0 0.0
      %3824 = vmatpush1.xpose.msra.mxu0 0.0
      %3825 = vmatprep.subr.mxu0 0.0
      %3826 = vmatpush1.xpose.msra.mxu0 0.0
      %3827 = vmatprep.subr.mxu0 0.0
      %3828 = vmatpush1.xpose.msra.mxu0 0.0
      %3829 = vmatprep.subr.mxu0 0.0
      %3830 = vmatpush1.xpose.msra.mxu0 0.0
      %3831 = vmatprep.subr.mxu0 0.0
      %3832 = vmatpush1.xpose.msra.mxu0 0.0
      %3833 = vmatprep.subr.mxu0 0.0
      %3834 = vmatpush1.xpose.msra.mxu0 0.0
      %3835 = vmatprep.subr.mxu0 0.0
      %3836 = vmatpush1.xpose.msra.mxu0 0.0
      %3837 = vmatprep.subr.mxu0 0.0
      %3838 = vmatpush1.xpose.msra.mxu0 0.0
      %3839 = vmatprep.subr.mxu0 0.0
      %3840 = vmatpush1.xpose.msra.mxu0 0.0
      %3841 = vmatprep.subr.mxu0 0.0
      %3842 = vmatpush1.xpose.msra.mxu0 0.0
      %3843 = vmatprep.subr.mxu0 0.0
      %3844 = vmatpush1.xpose.msra.mxu0 0.0
      %3845 = vmatprep.subr.mxu0 0.0
      %3846 = vmatpush1.xpose.msra.mxu0 0.0
      %3847 = vmatprep.subr.mxu0 0.0
      %3848 = vmatpush1.xpose.msra.mxu0 0.0
      %3849 = vmatprep.subr.mxu0 0.0
      %3850 = vmatpush1.xpose.msra.mxu0 0.0
      %3851 = vmatprep.subr.mxu0 0.0
      %3852 = vmatpush1.xpose.msra.mxu0 0.0
      %3853 = vmatprep.subr.mxu0 0.0
      %3854 = vmatpush1.xpose.msra.mxu0 0.0
      %3855 = vmatprep.subr.mxu0 0.0
      %3856 = vmatpush1.xpose.msra.mxu0 0.0
      %3857 = vmatprep.subr.mxu0 0.0
      %3858 = vmatpush1.xpose.msra.mxu0 0.0
      %3859 = vmatprep.subr.mxu0 0.0
      %3860 = vmatpush1.xpose.msra.mxu0 0.0
      %3861 = vmatprep.subr.mxu0 0.0
      %3862 = vmatpush1.xpose.msra.mxu0 0.0
      %3863 = vmatprep.subr.mxu0 0.0
      %3864 = vmatpush1.xpose.msra.mxu0 0.0
      %3865 = vmatprep.subr.mxu0 0.0
      %3866 = vmatpush1.xpose.msra.mxu0 0.0
      %3867 = vmatprep.subr.mxu0 0.0
      %3868 = vmatpush1.xpose.msra.mxu0 0.0
      %3869 = vmatprep.subr.mxu0 0.0
      %3870 = vmatpush1.xpose.msra.mxu0 0.0
      %3871 = vmatprep.subr.mxu0 0.0
      %3872 = vmatpush1.xpose.msra.mxu0 0.0
      %3873 = vmatprep.subr.mxu0 0.0
      %3874 = vmatpush1.xpose.msra.mxu0 0.0
      %3875 = vmatprep.subr.mxu0 0.0
      %3876 = vmatpush1.xpose.msra.mxu0 0.0
      %3877 = vmatprep.subr.mxu0 0.0
      %3878 = vmatpush1.xpose.msra.mxu0 0.0
      %3879 = vmatprep.mubr.f32.mxu0 0.0
      %v3880 = vand.u32 %v3730, 4294901760
      %3881 = vmatmul.mubr.f32.gmra.mrb[0].mxu0 %v3880
      %v3882 = vpop.f32.mrb[0].mxu0
      %v3883 = vadd.f32 %v3807, %v3882
      %v3884 = vpop.f32.mrb[0].mxu0
      %3885 = vdwg.mxu0
      %3886 = vmatprep.subr.mxu0 0.0
      %v3887 = vand.u32 %v3732, 4294901760
      %v3888 = vsub.f32 %v3732, %v3887
      %3889 = vmatpush1.xpose.msra.mxu0 %v3888
      %3890 = vmatprep.subr.mxu0 0.0
      %3891 = vmatpush1.xpose.msra.mxu0 0.0
      %3892 = vmatprep.subr.mxu0 0.0
      %3893 = vmatpush1.xpose.msra.mxu0 0.0
      %3894 = vmatprep.subr.mxu0 0.0
      %3895 = vmatpush1.xpose.msra.mxu0 0.0
      %3896 = vmatprep.subr.mxu0 0.0
      %3897 = vmatpush1.xpose.msra.mxu0 0.0
      %3898 = vmatprep.subr.mxu0 0.0
      %3899 = vmatpush1.xpose.msra.mxu0 0.0
      %3900 = vmatprep.subr.mxu0 0.0
      %3901 = vmatpush1.xpose.msra.mxu0 0.0
      %3902 = vmatprep.subr.mxu0 0.0
      %3903 = vmatpush1.xpose.msra.mxu0 0.0
      %3904 = vmatprep.subr.mxu0 0.0
      %3905 = vmatpush1.xpose.msra.mxu0 0.0
      %3906 = vmatprep.subr.mxu0 0.0
      %3907 = vmatpush1.xpose.msra.mxu0 0.0
      %3908 = vmatprep.subr.mxu0 0.0
      %3909 = vmatpush1.xpose.msra.mxu0 0.0
      %3910 = vmatprep.subr.mxu0 0.0
      %3911 = vmatpush1.xpose.msra.mxu0 0.0
      %3912 = vmatprep.subr.mxu0 0.0
      %3913 = vmatpush1.xpose.msra.mxu0 0.0
      %3914 = vmatprep.subr.mxu0 0.0
      %3915 = vmatpush1.xpose.msra.mxu0 0.0
      %3916 = vmatprep.subr.mxu0 0.0
      %3917 = vmatpush1.xpose.msra.mxu0 0.0
      %3918 = vmatprep.subr.mxu0 0.0
      %3919 = vmatpush1.xpose.msra.mxu0 0.0
      %3920 = vmatprep.subr.mxu0 0.0
      %3921 = vmatpush1.xpose.msra.mxu0 0.0
      %3922 = vmatprep.subr.mxu0 0.0
      %3923 = vmatpush1.xpose.msra.mxu0 0.0
      %3924 = vmatprep.subr.mxu0 0.0
      %3925 = vmatpush1.xpose.msra.mxu0 0.0
      %3926 = vmatprep.subr.mxu0 0.0
      %3927 = vmatpush1.xpose.msra.mxu0 0.0
      %3928 = vmatprep.subr.mxu0 0.0
      %3929 = vmatpush1.xpose.msra.mxu0 0.0
      %3930 = vmatprep.subr.mxu0 0.0
      %3931 = vmatpush1.xpose.msra.mxu0 0.0
      %3932 = vmatprep.subr.mxu0 0.0
      %3933 = vmatpush1.xpose.msra.mxu0 0.0
      %3934 = vmatprep.subr.mxu0 0.0
      %3935 = vmatpush1.xpose.msra.mxu0 0.0
      %3936 = vmatprep.subr.mxu0 0.0
      %3937 = vmatpush1.xpose.msra.mxu0 0.0
      %3938 = vmatprep.subr.mxu0 0.0
      %3939 = vmatpush1.xpose.msra.mxu0 0.0
      %3940 = vmatprep.subr.mxu0 0.0
      %3941 = vmatpush1.xpose.msra.mxu0 0.0
      %3942 = vmatprep.subr.mxu0 0.0
      %3943 = vmatpush1.xpose.msra.mxu0 0.0
      %3944 = vmatprep.subr.mxu0 0.0
      %3945 = vmatpush1.xpose.msra.mxu0 0.0
      %3946 = vmatprep.subr.mxu0 0.0
      %3947 = vmatpush1.xpose.msra.mxu0 0.0
      %3948 = vmatprep.subr.mxu0 0.0
      %3949 = vmatpush1.xpose.msra.mxu0 0.0
      %3950 = vmatprep.subr.mxu0 0.0
      %3951 = vmatpush1.xpose.msra.mxu0 0.0
      %3952 = vmatprep.mubr.f32.mxu0 0.0
      %v3953 = vand.u32 %v3730, 4294901760
      %v3954 = vsub.f32 %v3730, %v3953
      %3955 = vmatmul.mubr.f32.gmra.mrb[0].mxu0 %v3954
      %v3956 = vpop.f32.mrb[0].mxu0
      %v3957 = vadd.f32 %v3883, %v3956
      %v3958 = vpop.f32.mrb[0].mxu0
      %3959 = vdwg.mxu0
      %3960 = vmatprep.subr.mxu0 0.0
      %v3961 = vand.u32 %v3732, 4294901760
      %3962 = vmatpush1.xpose.msra.mxu0 %v3961
      %3963 = vmatprep.subr.mxu0 0.0
      %3964 = vmatpush1.xpose.msra.mxu0 0.0
      %3965 = vmatprep.subr.mxu0 0.0
      %3966 = vmatpush1.xpose.msra.mxu0 0.0
      %3967 = vmatprep.subr.mxu0 0.0
      %3968 = vmatpush1.xpose.msra.mxu0 0.0
      %3969 = vmatprep.subr.mxu0 0.0
      %3970 = vmatpush1.xpose.msra.mxu0 0.0
      %3971 = vmatprep.subr.mxu0 0.0
      %3972 = vmatpush1.xpose.msra.mxu0 0.0
      %3973 = vmatprep.subr.mxu0 0.0
      %3974 = vmatpush1.xpose.msra.mxu0 0.0
      %3975 = vmatprep.subr.mxu0 0.0
      %3976 = vmatpush1.xpose.msra.mxu0 0.0
      %3977 = vmatprep.subr.mxu0 0.0
      %3978 = vmatpush1.xpose.msra.mxu0 0.0
      %3979 = vmatprep.subr.mxu0 0.0
      %3980 = vmatpush1.xpose.msra.mxu0 0.0
      %3981 = vmatprep.subr.mxu0 0.0
      %3982 = vmatpush1.xpose.msra.mxu0 0.0
      %3983 = vmatprep.subr.mxu0 0.0
      %3984 = vmatpush1.xpose.msra.mxu0 0.0
      %3985 = vmatprep.subr.mxu0 0.0
      %3986 = vmatpush1.xpose.msra.mxu0 0.0
      %3987 = vmatprep.subr.mxu0 0.0
      %3988 = vmatpush1.xpose.msra.mxu0 0.0
      %3989 = vmatprep.subr.mxu0 0.0
      %3990 = vmatpush1.xpose.msra.mxu0 0.0
      %3991 = vmatprep.subr.mxu0 0.0
      %3992 = vmatpush1.xpose.msra.mxu0 0.0
      %3993 = vmatprep.subr.mxu0 0.0
      %3994 = vmatpush1.xpose.msra.mxu0 0.0
      %3995 = vmatprep.subr.mxu0 0.0
      %3996 = vmatpush1.xpose.msra.mxu0 0.0
      %3997 = vmatprep.subr.mxu0 0.0
      %3998 = vmatpush1.xpose.msra.mxu0 0.0
      %3999 = vmatprep.subr.mxu0 0.0
      %4000 = vmatpush1.xpose.msra.mxu0 0.0
      %4001 = vmatprep.subr.mxu0 0.0
      %4002 = vmatpush1.xpose.msra.mxu0 0.0
      %4003 = vmatprep.subr.mxu0 0.0
      %4004 = vmatpush1.xpose.msra.mxu0 0.0
      %4005 = vmatprep.subr.mxu0 0.0
      %4006 = vmatpush1.xpose.msra.mxu0 0.0
      %4007 = vmatprep.subr.mxu0 0.0
      %4008 = vmatpush1.xpose.msra.mxu0 0.0
      %4009 = vmatprep.subr.mxu0 0.0
      %4010 = vmatpush1.xpose.msra.mxu0 0.0
      %4011 = vmatprep.subr.mxu0 0.0
      %4012 = vmatpush1.xpose.msra.mxu0 0.0
      %4013 = vmatprep.subr.mxu0 0.0
      %4014 = vmatpush1.xpose.msra.mxu0 0.0
      %4015 = vmatprep.subr.mxu0 0.0
      %4016 = vmatpush1.xpose.msra.mxu0 0.0
      %4017 = vmatprep.subr.mxu0 0.0
      %4018 = vmatpush1.xpose.msra.mxu0 0.0
      %4019 = vmatprep.subr.mxu0 0.0
      %4020 = vmatpush1.xpose.msra.mxu0 0.0
      %4021 = vmatprep.subr.mxu0 0.0
      %4022 = vmatpush1.xpose.msra.mxu0 0.0
      %4023 = vmatprep.subr.mxu0 0.0
      %4024 = vmatpush1.xpose.msra.mxu0 0.0
      %4025 = vmatprep.mubr.f32.mxu0 0.0
      %v4026 = vand.u32 %v3730, 4294901760
      %v4027 = vsub.f32 %v3730, %v4026
      %v4028 = vand.u32 %v4027, 4294901760
      %4029 = vmatmul.mubr.f32.gmra.mrb[0].mxu0 %v4028
      %v4030 = vpop.f32.mrb[0].mxu0
      %v4031 = vadd.f32 %v3957, %v4030
      %v4032 = vpop.f32.mrb[0].mxu0
      %4033 = vdwg.mxu0
      %4034 = vmatprep.subr.mxu0 0.0
      %v4035 = vand.u32 %v3732, 4294901760
      %v4036 = vsub.f32 %v3732, %v4035
      %v4037 = vand.u32 %v4036, 4294901760
      %4038 = vmatpush1.xpose.msra.mxu0 %v4037
      %4039 = vmatprep.subr.mxu0 0.0
      %4040 = vmatpush1.xpose.msra.mxu0 0.0
      %4041 = vmatprep.subr.mxu0 0.0
      %4042 = vmatpush1.xpose.msra.mxu0 0.0
      %4043 = vmatprep.subr.mxu0 0.0
      %4044 = vmatpush1.xpose.msra.mxu0 0.0
      %4045 = vmatprep.subr.mxu0 0.0
      %4046 = vmatpush1.xpose.msra.mxu0 0.0
      %4047 = vmatprep.subr.mxu0 0.0
      %4048 = vmatpush1.xpose.msra.mxu0 0.0
      %4049 = vmatprep.subr.mxu0 0.0
      %4050 = vmatpush1.xpose.msra.mxu0 0.0
      %4051 = vmatprep.subr.mxu0 0.0
      %4052 = vmatpush1.xpose.msra.mxu0 0.0
      %4053 = vmatprep.subr.mxu0 0.0
      %4054 = vmatpush1.xpose.msra.mxu0 0.0
      %4055 = vmatprep.subr.mxu0 0.0
      %4056 = vmatpush1.xpose.msra.mxu0 0.0
      %4057 = vmatprep.subr.mxu0 0.0
      %4058 = vmatpush1.xpose.msra.mxu0 0.0
      %4059 = vmatprep.subr.mxu0 0.0
      %4060 = vmatpush1.xpose.msra.mxu0 0.0
      %4061 = vmatprep.subr.mxu0 0.0
      %4062 = vmatpush1.xpose.msra.mxu0 0.0
      %4063 = vmatprep.subr.mxu0 0.0
      %4064 = vmatpush1.xpose.msra.mxu0 0.0
      %4065 = vmatprep.subr.mxu0 0.0
      %4066 = vmatpush1.xpose.msra.mxu0 0.0
      %4067 = vmatprep.subr.mxu0 0.0
      %4068 = vmatpush1.xpose.msra.mxu0 0.0
      %4069 = vmatprep.subr.mxu0 0.0
      %4070 = vmatpush1.xpose.msra.mxu0 0.0
      %4071 = vmatprep.subr.mxu0 0.0
      %4072 = vmatpush1.xpose.msra.mxu0 0.0
      %4073 = vmatprep.subr.mxu0 0.0
      %4074 = vmatpush1.xpose.msra.mxu0 0.0
      %4075 = vmatprep.subr.mxu0 0.0
      %4076 = vmatpush1.xpose.msra.mxu0 0.0
      %4077 = vmatprep.subr.mxu0 0.0
      %4078 = vmatpush1.xpose.msra.mxu0 0.0
      %4079 = vmatprep.subr.mxu0 0.0
      %4080 = vmatpush1.xpose.msra.mxu0 0.0
      %4081 = vmatprep.subr.mxu0 0.0
      %4082 = vmatpush1.xpose.msra.mxu0 0.0
      %4083 = vmatprep.subr.mxu0 0.0
      %4084 = vmatpush1.xpose.msra.mxu0 0.0
      %4085 = vmatprep.subr.mxu0 0.0
      %4086 = vmatpush1.xpose.msra.mxu0 0.0
      %4087 = vmatprep.subr.mxu0 0.0
      %4088 = vmatpush1.xpose.msra.mxu0 0.0
      %4089 = vmatprep.subr.mxu0 0.0
      %4090 = vmatpush1.xpose.msra.mxu0 0.0
      %4091 = vmatprep.subr.mxu0 0.0
      %4092 = vmatpush1.xpose.msra.mxu0 0.0
      %4093 = vmatprep.subr.mxu0 0.0
      %4094 = vmatpush1.xpose.msra.mxu0 0.0
      %4095 = vmatprep.subr.mxu0 0.0
      %4096 = vmatpush1.xpose.msra.mxu0 0.0
      %4097 = vmatprep.subr.mxu0 0.0
      %4098 = vmatpush1.xpose.msra.mxu0 0.0
      %4099 = vmatprep.subr.mxu0 0.0
      %4100 = vmatpush1.xpose.msra.mxu0 0.0
      %4101 = vmatprep.mubr.f32.mxu0 0.0
      %v4102 = vand.u32 %v3730, 4294901760
      %4103 = vmatmul.mubr.f32.gmra.mrb[0].mxu0 %v4102
      %v4104 = vpop.f32.mrb[0].mxu0
      %v4105 = vadd.f32 %v4031, %v4104
      %v4106 = vpop.f32.mrb[0].mxu0
      %4107 = vdwg.mxu0
      %4108 = vmatprep.subr.mxu0 0.0
      %v4109 = vand.u32 %v3732, 4294901760
      %4110 = vmatpush1.xpose.msra.mxu0 %v4109
      %4111 = vmatprep.subr.mxu0 0.0
      %4112 = vmatpush1.xpose.msra.mxu0 0.0
      %4113 = vmatprep.subr.mxu0 0.0
      %4114 = vmatpush1.xpose.msra.mxu0 0.0
      %4115 = vmatprep.subr.mxu0 0.0
      %4116 = vmatpush1.xpose.msra.mxu0 0.0
      %4117 = vmatprep.subr.mxu0 0.0
      %4118 = vmatpush1.xpose.msra.mxu0 0.0
      %4119 = vmatprep.subr.mxu0 0.0
      %4120 = vmatpush1.xpose.msra.mxu0 0.0
      %4121 = vmatprep.subr.mxu0 0.0
      %4122 = vmatpush1.xpose.msra.mxu0 0.0
      %4123 = vmatprep.subr.mxu0 0.0
      %4124 = vmatpush1.xpose.msra.mxu0 0.0
      %4125 = vmatprep.subr.mxu0 0.0
      %4126 = vmatpush1.xpose.msra.mxu0 0.0
      %4127 = vmatprep.subr.mxu0 0.0
      %4128 = vmatpush1.xpose.msra.mxu0 0.0
      %4129 = vmatprep.subr.mxu0 0.0
      %4130 = vmatpush1.xpose.msra.mxu0 0.0
      %4131 = vmatprep.subr.mxu0 0.0
      %4132 = vmatpush1.xpose.msra.mxu0 0.0
      %4133 = vmatprep.subr.mxu0 0.0
      %4134 = vmatpush1.xpose.msra.mxu0 0.0
      %4135 = vmatprep.subr.mxu0 0.0
      %4136 = vmatpush1.xpose.msra.mxu0 0.0
      %4137 = vmatprep.subr.mxu0 0.0
      %4138 = vmatpush1.xpose.msra.mxu0 0.0
      %4139 = vmatprep.subr.mxu0 0.0
      %4140 = vmatpush1.xpose.msra.mxu0 0.0
      %4141 = vmatprep.subr.mxu0 0.0
      %4142 = vmatpush1.xpose.msra.mxu0 0.0
      %4143 = vmatprep.subr.mxu0 0.0
      %4144 = vmatpush1.xpose.msra.mxu0 0.0
      %4145 = vmatprep.subr.mxu0 0.0
      %4146 = vmatpush1.xpose.msra.mxu0 0.0
      %4147 = vmatprep.subr.mxu0 0.0
      %4148 = vmatpush1.xpose.msra.mxu0 0.0
      %4149 = vmatprep.subr.mxu0 0.0
      %4150 = vmatpush1.xpose.msra.mxu0 0.0
      %4151 = vmatprep.subr.mxu0 0.0
      %4152 = vmatpush1.xpose.msra.mxu0 0.0
      %4153 = vmatprep.subr.mxu0 0.0
      %4154 = vmatpush1.xpose.msra.mxu0 0.0
      %4155 = vmatprep.subr.mxu0 0.0
      %4156 = vmatpush1.xpose.msra.mxu0 0.0
      %4157 = vmatprep.subr.mxu0 0.0
      %4158 = vmatpush1.xpose.msra.mxu0 0.0
      %4159 = vmatprep.subr.mxu0 0.0
      %4160 = vmatpush1.xpose.msra.mxu0 0.0
      %4161 = vmatprep.subr.mxu0 0.0
      %4162 = vmatpush1.xpose.msra.mxu0 0.0
      %4163 = vmatprep.subr.mxu0 0.0
      %4164 = vmatpush1.xpose.msra.mxu0 0.0
      %4165 = vmatprep.subr.mxu0 0.0
      %4166 = vmatpush1.xpose.msra.mxu0 0.0
      %4167 = vmatprep.subr.mxu0 0.0
      %4168 = vmatpush1.xpose.msra.mxu0 0.0
      %4169 = vmatprep.subr.mxu0 0.0
      %4170 = vmatpush1.xpose.msra.mxu0 0.0
      %4171 = vmatprep.subr.mxu0 0.0
      %4172 = vmatpush1.xpose.msra.mxu0 0.0
      %4173 = vmatprep.mubr.f32.mxu0 0.0
      %v4174 = vand.u32 %v3730, 4294901760
      %4175 = vmatmul.mubr.f32.gmra.mrb[0].mxu0 %v4174
      %v4176 = vpop.f32.mrb[0].mxu0
      %v4177 = vadd.f32 %v4105, %v4176
      %v4178 = vpop.f32.mrb[0].mxu0
      %4179 = vdwg.mxu0
      %v4184 = vrot.slane %v3199, 7
      %v4185 = vsel %vm3259, %v4184, %v3197
      %v4186 = vrot.slane %v3201, 6
      %v4187 = vsel %vm3262, %v4186, %v4185
      %v4188 = vrot.slane %v3203, 5
      %v4189 = vsel %vm3265, %v4188, %v4187
      %v4191 = vsel %vm3267, %v3195, 0
      %v4193 = vsel %vm3267, %v4189, 0
      %4195 = vmatprep.subr.mxu0 0.0
      %v4196 = vand.u32 %v4193, 4294901760
      %4197 = vmatpush1.xpose.msra.mxu0 %v4196
      %4198 = vmatprep.subr.mxu0 0.0
      %4199 = vmatpush1.xpose.msra.mxu0 0.0
      %4200 = vmatprep.subr.mxu0 0.0
      %4201 = vmatpush1.xpose.msra.mxu0 0.0
      %4202 = vmatprep.subr.mxu0 0.0
      %4203 = vmatpush1.xpose.msra.mxu0 0.0
      %4204 = vmatprep.subr.mxu0 0.0
      %4205 = vmatpush1.xpose.msra.mxu0 0.0
      %4206 = vmatprep.subr.mxu0 0.0
      %4207 = vmatpush1.xpose.msra.mxu0 0.0
      %4208 = vmatprep.subr.mxu0 0.0
      %4209 = vmatpush1.xpose.msra.mxu0 0.0
      %4210 = vmatprep.subr.mxu0 0.0
      %4211 = vmatpush1.xpose.msra.mxu0 0.0
      %4212 = vmatprep.subr.mxu0 0.0
      %4213 = vmatpush1.xpose.msra.mxu0 0.0
      %4214 = vmatprep.subr.mxu0 0.0
      %4215 = vmatpush1.xpose.msra.mxu0 0.0
      %4216 = vmatprep.subr.mxu0 0.0
      %4217 = vmatpush1.xpose.msra.mxu0 0.0
      %4218 = vmatprep.subr.mxu0 0.0
      %4219 = vmatpush1.xpose.msra.mxu0 0.0
      %4220 = vmatprep.subr.mxu0 0.0
      %4221 = vmatpush1.xpose.msra.mxu0 0.0
      %4222 = vmatprep.subr.mxu0 0.0
      %4223 = vmatpush1.xpose.msra.mxu0 0.0
      %4224 = vmatprep.subr.mxu0 0.0
      %4225 = vmatpush1.xpose.msra.mxu0 0.0
      %4226 = vmatprep.subr.mxu0 0.0
      %4227 = vmatpush1.xpose.msra.mxu0 0.0
      %4228 = vmatprep.subr.mxu0 0.0
      %4229 = vmatpush1.xpose.msra.mxu0 0.0
      %4230 = vmatprep.subr.mxu0 0.0
      %4231 = vmatpush1.xpose.msra.mxu0 0.0
      %4232 = vmatprep.subr.mxu0 0.0
      %4233 = vmatpush1.xpose.msra.mxu0 0.0
      %4234 = vmatprep.subr.mxu0 0.0
      %4235 = vmatpush1.xpose.msra.mxu0 0.0
      %4236 = vmatprep.subr.mxu0 0.0
      %4237 = vmatpush1.xpose.msra.mxu0 0.0
      %4238 = vmatprep.subr.mxu0 0.0
      %4239 = vmatpush1.xpose.msra.mxu0 0.0
      %4240 = vmatprep.subr.mxu0 0.0
      %4241 = vmatpush1.xpose.msra.mxu0 0.0
      %4242 = vmatprep.subr.mxu0 0.0
      %4243 = vmatpush1.xpose.msra.mxu0 0.0
      %4244 = vmatprep.subr.mxu0 0.0
      %4245 = vmatpush1.xpose.msra.mxu0 0.0
      %4246 = vmatprep.subr.mxu0 0.0
      %4247 = vmatpush1.xpose.msra.mxu0 0.0
      %4248 = vmatprep.subr.mxu0 0.0
      %4249 = vmatpush1.xpose.msra.mxu0 0.0
      %4250 = vmatprep.subr.mxu0 0.0
      %4251 = vmatpush1.xpose.msra.mxu0 0.0
      %4252 = vmatprep.subr.mxu0 0.0
      %4253 = vmatpush1.xpose.msra.mxu0 0.0
      %4254 = vmatprep.subr.mxu0 0.0
      %4255 = vmatpush1.xpose.msra.mxu0 0.0
      %4256 = vmatprep.subr.mxu0 0.0
      %4257 = vmatpush1.xpose.msra.mxu0 0.0
      %4258 = vmatprep.subr.mxu0 0.0
      %4259 = vmatpush1.xpose.msra.mxu0 0.0
      %4260 = vmatprep.mubr.f32.mxu0 0.0
      %v4261 = vand.u32 %v4191, 4294901760
      %v4262 = vsub.f32 %v4191, %v4261
      %v4263 = vand.u32 %v4262, 4294901760
      %v4264 = vsub.f32 %v4262, %v4263
      %v4265 = vand.u32 %v4264, 4294901760
      %4266 = vmatmul.mubr.f32.gmra.mrb[0].mxu0 %v4265
      %v4267 = vpop.f32.mrb[0].mxu0
      %v4268 = vadd.f32 0.0, %v4267
      %v4269 = vpop.f32.mrb[0].mxu0
      %4270 = vdwg.mxu0
      %4271 = vmatprep.subr.mxu0 0.0
      %v4272 = vand.u32 %v4193, 4294901760
      %v4273 = vsub.f32 %v4193, %v4272
      %v4274 = vand.u32 %v4273, 4294901760
      %v4275 = vsub.f32 %v4273, %v4274
      %v4276 = vand.u32 %v4275, 4294901760
      %4277 = vmatpush1.xpose.msra.mxu0 %v4276
      %4278 = vmatprep.subr.mxu0 0.0
      %4279 = vmatpush1.xpose.msra.mxu0 0.0
      %4280 = vmatprep.subr.mxu0 0.0
      %4281 = vmatpush1.xpose.msra.mxu0 0.0
      %4282 = vmatprep.subr.mxu0 0.0
      %4283 = vmatpush1.xpose.msra.mxu0 0.0
      %4284 = vmatprep.subr.mxu0 0.0
      %4285 = vmatpush1.xpose.msra.mxu0 0.0
      %4286 = vmatprep.subr.mxu0 0.0
      %4287 = vmatpush1.xpose.msra.mxu0 0.0
      %4288 = vmatprep.subr.mxu0 0.0
      %4289 = vmatpush1.xpose.msra.mxu0 0.0
      %4290 = vmatprep.subr.mxu0 0.0
      %4291 = vmatpush1.xpose.msra.mxu0 0.0
      %4292 = vmatprep.subr.mxu0 0.0
      %4293 = vmatpush1.xpose.msra.mxu0 0.0
      %4294 = vmatprep.subr.mxu0 0.0
      %4295 = vmatpush1.xpose.msra.mxu0 0.0
      %4296 = vmatprep.subr.mxu0 0.0
      %4297 = vmatpush1.xpose.msra.mxu0 0.0
      %4298 = vmatprep.subr.mxu0 0.0
      %4299 = vmatpush1.xpose.msra.mxu0 0.0
      %4300 = vmatprep.subr.mxu0 0.0
      %4301 = vmatpush1.xpose.msra.mxu0 0.0
      %4302 = vmatprep.subr.mxu0 0.0
      %4303 = vmatpush1.xpose.msra.mxu0 0.0
      %4304 = vmatprep.subr.mxu0 0.0
      %4305 = vmatpush1.xpose.msra.mxu0 0.0
      %4306 = vmatprep.subr.mxu0 0.0
      %4307 = vmatpush1.xpose.msra.mxu0 0.0
      %4308 = vmatprep.subr.mxu0 0.0
      %4309 = vmatpush1.xpose.msra.mxu0 0.0
      %4310 = vmatprep.subr.mxu0 0.0
      %4311 = vmatpush1.xpose.msra.mxu0 0.0
      %4312 = vmatprep.subr.mxu0 0.0
      %4313 = vmatpush1.xpose.msra.mxu0 0.0
      %4314 = vmatprep.subr.mxu0 0.0
      %4315 = vmatpush1.xpose.msra.mxu0 0.0
      %4316 = vmatprep.subr.mxu0 0.0
      %4317 = vmatpush1.xpose.msra.mxu0 0.0
      %4318 = vmatprep.subr.mxu0 0.0
      %4319 = vmatpush1.xpose.msra.mxu0 0.0
      %4320 = vmatprep.subr.mxu0 0.0
      %4321 = vmatpush1.xpose.msra.mxu0 0.0
      %4322 = vmatprep.subr.mxu0 0.0
      %4323 = vmatpush1.xpose.msra.mxu0 0.0
      %4324 = vmatprep.subr.mxu0 0.0
      %4325 = vmatpush1.xpose.msra.mxu0 0.0
      %4326 = vmatprep.subr.mxu0 0.0
      %4327 = vmatpush1.xpose.msra.mxu0 0.0
      %4328 = vmatprep.subr.mxu0 0.0
      %4329 = vmatpush1.xpose.msra.mxu0 0.0
      %4330 = vmatprep.subr.mxu0 0.0
      %4331 = vmatpush1.xpose.msra.mxu0 0.0
      %4332 = vmatprep.subr.mxu0 0.0
      %4333 = vmatpush1.xpose.msra.mxu0 0.0
      %4334 = vmatprep.subr.mxu0 0.0
      %4335 = vmatpush1.xpose.msra.mxu0 0.0
      %4336 = vmatprep.subr.mxu0 0.0
      %4337 = vmatpush1.xpose.msra.mxu0 0.0
      %4338 = vmatprep.subr.mxu0 0.0
      %4339 = vmatpush1.xpose.msra.mxu0 0.0
      %4340 = vmatprep.mubr.f32.mxu0 0.0
      %v4341 = vand.u32 %v4191, 4294901760
      %4342 = vmatmul.mubr.f32.gmra.mrb[0].mxu0 %v4341
      %v4343 = vpop.f32.mrb[0].mxu0
      %v4344 = vadd.f32 %v4268, %v4343
      %v4345 = vpop.f32.mrb[0].mxu0
      %4346 = vdwg.mxu0
      %4347 = vmatprep.subr.mxu0 0.0
      %v4348 = vand.u32 %v4193, 4294901760
      %v4349 = vsub.f32 %v4193, %v4348
      %4350 = vmatpush1.xpose.msra.mxu0 %v4349
      %4351 = vmatprep.subr.mxu0 0.0
      %4352 = vmatpush1.xpose.msra.mxu0 0.0
      %4353 = vmatprep.subr.mxu0 0.0
      %4354 = vmatpush1.xpose.msra.mxu0 0.0
      %4355 = vmatprep.subr.mxu0 0.0
      %4356 = vmatpush1.xpose.msra.mxu0 0.0
      %4357 = vmatprep.subr.mxu0 0.0
      %4358 = vmatpush1.xpose.msra.mxu0 0.0
      %4359 = vmatprep.subr.mxu0 0.0
      %4360 = vmatpush1.xpose.msra.mxu0 0.0
      %4361 = vmatprep.subr.mxu0 0.0
      %4362 = vmatpush1.xpose.msra.mxu0 0.0
      %4363 = vmatprep.subr.mxu0 0.0
      %4364 = vmatpush1.xpose.msra.mxu0 0.0
      %4365 = vmatprep.subr.mxu0 0.0
      %4366 = vmatpush1.xpose.msra.mxu0 0.0
      %4367 = vmatprep.subr.mxu0 0.0
      %4368 = vmatpush1.xpose.msra.mxu0 0.0
      %4369 = vmatprep.subr.mxu0 0.0
      %4370 = vmatpush1.xpose.msra.mxu0 0.0
      %4371 = vmatprep.subr.mxu0 0.0
      %4372 = vmatpush1.xpose.msra.mxu0 0.0
      %4373 = vmatprep.subr.mxu0 0.0
      %4374 = vmatpush1.xpose.msra.mxu0 0.0
      %4375 = vmatprep.subr.mxu0 0.0
      %4376 = vmatpush1.xpose.msra.mxu0 0.0
      %4377 = vmatprep.subr.mxu0 0.0
      %4378 = vmatpush1.xpose.msra.mxu0 0.0
      %4379 = vmatprep.subr.mxu0 0.0
      %4380 = vmatpush1.xpose.msra.mxu0 0.0
      %4381 = vmatprep.subr.mxu0 0.0
      %4382 = vmatpush1.xpose.msra.mxu0 0.0
      %4383 = vmatprep.subr.mxu0 0.0
      %4384 = vmatpush1.xpose.msra.mxu0 0.0
      %4385 = vmatprep.subr.mxu0 0.0
      %4386 = vmatpush1.xpose.msra.mxu0 0.0
      %4387 = vmatprep.subr.mxu0 0.0
      %4388 = vmatpush1.xpose.msra.mxu0 0.0
      %4389 = vmatprep.subr.mxu0 0.0
      %4390 = vmatpush1.xpose.msra.mxu0 0.0
      %4391 = vmatprep.subr.mxu0 0.0
      %4392 = vmatpush1.xpose.msra.mxu0 0.0
      %4393 = vmatprep.subr.mxu0 0.0
      %4394 = vmatpush1.xpose.msra.mxu0 0.0
      %4395 = vmatprep.subr.mxu0 0.0
      %4396 = vmatpush1.xpose.msra.mxu0 0.0
      %4397 = vmatprep.subr.mxu0 0.0
      %4398 = vmatpush1.xpose.msra.mxu0 0.0
      %4399 = vmatprep.subr.mxu0 0.0
      %4400 = vmatpush1.xpose.msra.mxu0 0.0
      %4401 = vmatprep.subr.mxu0 0.0
      %4402 = vmatpush1.xpose.msra.mxu0 0.0
      %4403 = vmatprep.subr.mxu0 0.0
      %4404 = vmatpush1.xpose.msra.mxu0 0.0
      %4405 = vmatprep.subr.mxu0 0.0
      %4406 = vmatpush1.xpose.msra.mxu0 0.0
      %4407 = vmatprep.subr.mxu0 0.0
      %4408 = vmatpush1.xpose.msra.mxu0 0.0
      %4409 = vmatprep.subr.mxu0 0.0
      %4410 = vmatpush1.xpose.msra.mxu0 0.0
      %4411 = vmatprep.subr.mxu0 0.0
      %4412 = vmatpush1.xpose.msra.mxu0 0.0
      %4413 = vmatprep.mubr.f32.mxu0 0.0
      %v4414 = vand.u32 %v4191, 4294901760
      %v4415 = vsub.f32 %v4191, %v4414
      %4416 = vmatmul.mubr.f32.gmra.mrb[0].mxu0 %v4415
      %v4417 = vpop.f32.mrb[0].mxu0
      %v4418 = vadd.f32 %v4344, %v4417
      %v4419 = vpop.f32.mrb[0].mxu0
      %4420 = vdwg.mxu0
      %4421 = vmatprep.subr.mxu0 0.0
      %v4422 = vand.u32 %v4193, 4294901760
      %4423 = vmatpush1.xpose.msra.mxu0 %v4422
      %4424 = vmatprep.subr.mxu0 0.0
      %4425 = vmatpush1.xpose.msra.mxu0 0.0
      %4426 = vmatprep.subr.mxu0 0.0
      %4427 = vmatpush1.xpose.msra.mxu0 0.0
      %4428 = vmatprep.subr.mxu0 0.0
      %4429 = vmatpush1.xpose.msra.mxu0 0.0
      %4430 = vmatprep.subr.mxu0 0.0
      %4431 = vmatpush1.xpose.msra.mxu0 0.0
      %4432 = vmatprep.subr.mxu0 0.0
      %4433 = vmatpush1.xpose.msra.mxu0 0.0
      %4434 = vmatprep.subr.mxu0 0.0
      %4435 = vmatpush1.xpose.msra.mxu0 0.0
      %4436 = vmatprep.subr.mxu0 0.0
      %4437 = vmatpush1.xpose.msra.mxu0 0.0
      %4438 = vmatprep.subr.mxu0 0.0
      %4439 = vmatpush1.xpose.msra.mxu0 0.0
      %4440 = vmatprep.subr.mxu0 0.0
      %4441 = vmatpush1.xpose.msra.mxu0 0.0
      %4442 = vmatprep.subr.mxu0 0.0
      %4443 = vmatpush1.xpose.msra.mxu0 0.0
      %4444 = vmatprep.subr.mxu0 0.0
      %4445 = vmatpush1.xpose.msra.mxu0 0.0
      %4446 = vmatprep.subr.mxu0 0.0
      %4447 = vmatpush1.xpose.msra.mxu0 0.0
      %4448 = vmatprep.subr.mxu0 0.0
      %4449 = vmatpush1.xpose.msra.mxu0 0.0
      %4450 = vmatprep.subr.mxu0 0.0
      %4451 = vmatpush1.xpose.msra.mxu0 0.0
      %4452 = vmatprep.subr.mxu0 0.0
      %4453 = vmatpush1.xpose.msra.mxu0 0.0
      %4454 = vmatprep.subr.mxu0 0.0
      %4455 = vmatpush1.xpose.msra.mxu0 0.0
      %4456 = vmatprep.subr.mxu0 0.0
      %4457 = vmatpush1.xpose.msra.mxu0 0.0
      %4458 = vmatprep.subr.mxu0 0.0
      %4459 = vmatpush1.xpose.msra.mxu0 0.0
      %4460 = vmatprep.subr.mxu0 0.0
      %4461 = vmatpush1.xpose.msra.mxu0 0.0
      %4462 = vmatprep.subr.mxu0 0.0
      %4463 = vmatpush1.xpose.msra.mxu0 0.0
      %4464 = vmatprep.subr.mxu0 0.0
      %4465 = vmatpush1.xpose.msra.mxu0 0.0
      %4466 = vmatprep.subr.mxu0 0.0
      %4467 = vmatpush1.xpose.msra.mxu0 0.0
      %4468 = vmatprep.subr.mxu0 0.0
      %4469 = vmatpush1.xpose.msra.mxu0 0.0
      %4470 = vmatprep.subr.mxu0 0.0
      %4471 = vmatpush1.xpose.msra.mxu0 0.0
      %4472 = vmatprep.subr.mxu0 0.0
      %4473 = vmatpush1.xpose.msra.mxu0 0.0
      %4474 = vmatprep.subr.mxu0 0.0
      %4475 = vmatpush1.xpose.msra.mxu0 0.0
      %4476 = vmatprep.subr.mxu0 0.0
      %4477 = vmatpush1.xpose.msra.mxu0 0.0
      %4478 = vmatprep.subr.mxu0 0.0
      %4479 = vmatpush1.xpose.msra.mxu0 0.0
      %4480 = vmatprep.subr.mxu0 0.0
      %4481 = vmatpush1.xpose.msra.mxu0 0.0
      %4482 = vmatprep.subr.mxu0 0.0
      %4483 = vmatpush1.xpose.msra.mxu0 0.0
      %4484 = vmatprep.subr.mxu0 0.0
      %4485 = vmatpush1.xpose.msra.mxu0 0.0
      %4486 = vmatprep.mubr.f32.mxu0 0.0
      %v4487 = vand.u32 %v4191, 4294901760
      %v4488 = vsub.f32 %v4191, %v4487
      %v4489 = vand.u32 %v4488, 4294901760
      %4490 = vmatmul.mubr.f32.gmra.mrb[0].mxu0 %v4489
      %v4491 = vpop.f32.mrb[0].mxu0
      %v4492 = vadd.f32 %v4418, %v4491
      %v4493 = vpop.f32.mrb[0].mxu0
      %4494 = vdwg.mxu0
      %4495 = vmatprep.subr.mxu0 0.0
      %v4496 = vand.u32 %v4193, 4294901760
      %v4497 = vsub.f32 %v4193, %v4496
      %v4498 = vand.u32 %v4497, 4294901760
      %4499 = vmatpush1.xpose.msra.mxu0 %v4498
      %4500 = vmatprep.subr.mxu0 0.0
      %4501 = vmatpush1.xpose.msra.mxu0 0.0
      %4502 = vmatprep.subr.mxu0 0.0
      %4503 = vmatpush1.xpose.msra.mxu0 0.0
      %4504 = vmatprep.subr.mxu0 0.0
      %4505 = vmatpush1.xpose.msra.mxu0 0.0
      %4506 = vmatprep.subr.mxu0 0.0
      %4507 = vmatpush1.xpose.msra.mxu0 0.0
      %4508 = vmatprep.subr.mxu0 0.0
      %4509 = vmatpush1.xpose.msra.mxu0 0.0
      %4510 = vmatprep.subr.mxu0 0.0
      %4511 = vmatpush1.xpose.msra.mxu0 0.0
      %4512 = vmatprep.subr.mxu0 0.0
      %4513 = vmatpush1.xpose.msra.mxu0 0.0
      %4514 = vmatprep.subr.mxu0 0.0
      %4515 = vmatpush1.xpose.msra.mxu0 0.0
      %4516 = vmatprep.subr.mxu0 0.0
      %4517 = vmatpush1.xpose.msra.mxu0 0.0
      %4518 = vmatprep.subr.mxu0 0.0
      %4519 = vmatpush1.xpose.msra.mxu0 0.0
      %4520 = vmatprep.subr.mxu0 0.0
      %4521 = vmatpush1.xpose.msra.mxu0 0.0
      %4522 = vmatprep.subr.mxu0 0.0
      %4523 = vmatpush1.xpose.msra.mxu0 0.0
      %4524 = vmatprep.subr.mxu0 0.0
      %4525 = vmatpush1.xpose.msra.mxu0 0.0
      %4526 = vmatprep.subr.mxu0 0.0
      %4527 = vmatpush1.xpose.msra.mxu0 0.0
      %4528 = vmatprep.subr.mxu0 0.0
      %4529 = vmatpush1.xpose.msra.mxu0 0.0
      %4530 = vmatprep.subr.mxu0 0.0
      %4531 = vmatpush1.xpose.msra.mxu0 0.0
      %4532 = vmatprep.subr.mxu0 0.0
      %4533 = vmatpush1.xpose.msra.mxu0 0.0
      %4534 = vmatprep.subr.mxu0 0.0
      %4535 = vmatpush1.xpose.msra.mxu0 0.0
      %4536 = vmatprep.subr.mxu0 0.0
      %4537 = vmatpush1.xpose.msra.mxu0 0.0
      %4538 = vmatprep.subr.mxu0 0.0
      %4539 = vmatpush1.xpose.msra.mxu0 0.0
      %4540 = vmatprep.subr.mxu0 0.0
      %4541 = vmatpush1.xpose.msra.mxu0 0.0
      %4542 = vmatprep.subr.mxu0 0.0
      %4543 = vmatpush1.xpose.msra.mxu0 0.0
      %4544 = vmatprep.subr.mxu0 0.0
      %4545 = vmatpush1.xpose.msra.mxu0 0.0
      %4546 = vmatprep.subr.mxu0 0.0
      %4547 = vmatpush1.xpose.msra.mxu0 0.0
      %4548 = vmatprep.subr.mxu0 0.0
      %4549 = vmatpush1.xpose.msra.mxu0 0.0
      %4550 = vmatprep.subr.mxu0 0.0
      %4551 = vmatpush1.xpose.msra.mxu0 0.0
      %4552 = vmatprep.subr.mxu0 0.0
      %4553 = vmatpush1.xpose.msra.mxu0 0.0
      %4554 = vmatprep.subr.mxu0 0.0
      %4555 = vmatpush1.xpose.msra.mxu0 0.0
      %4556 = vmatprep.subr.mxu0 0.0
      %4557 = vmatpush1.xpose.msra.mxu0 0.0
      %4558 = vmatprep.subr.mxu0 0.0
      %4559 = vmatpush1.xpose.msra.mxu0 0.0
      %4560 = vmatprep.subr.mxu0 0.0
      %4561 = vmatpush1.xpose.msra.mxu0 0.0
      %4562 = vmatprep.mubr.f32.mxu0 0.0
      %v4563 = vand.u32 %v4191, 4294901760
      %4564 = vmatmul.mubr.f32.gmra.mrb[0].mxu0 %v4563
      %v4565 = vpop.f32.mrb[0].mxu0
      %v4566 = vadd.f32 %v4492, %v4565
      %v4567 = vpop.f32.mrb[0].mxu0
      %4568 = vdwg.mxu0
      %4569 = vmatprep.subr.mxu0 0.0
      %v4570 = vand.u32 %v4193, 4294901760
      %4571 = vmatpush1.xpose.msra.mxu0 %v4570
      %4572 = vmatprep.subr.mxu0 0.0
      %4573 = vmatpush1.xpose.msra.mxu0 0.0
      %4574 = vmatprep.subr.mxu0 0.0
      %4575 = vmatpush1.xpose.msra.mxu0 0.0
      %4576 = vmatprep.subr.mxu0 0.0
      %4577 = vmatpush1.xpose.msra.mxu0 0.0
      %4578 = vmatprep.subr.mxu0 0.0
      %4579 = vmatpush1.xpose.msra.mxu0 0.0
      %4580 = vmatprep.subr.mxu0 0.0
      %4581 = vmatpush1.xpose.msra.mxu0 0.0
      %4582 = vmatprep.subr.mxu0 0.0
      %4583 = vmatpush1.xpose.msra.mxu0 0.0
      %4584 = vmatprep.subr.mxu0 0.0
      %4585 = vmatpush1.xpose.msra.mxu0 0.0
      %4586 = vmatprep.subr.mxu0 0.0
      %4587 = vmatpush1.xpose.msra.mxu0 0.0
      %4588 = vmatprep.subr.mxu0 0.0
      %4589 = vmatpush1.xpose.msra.mxu0 0.0
      %4590 = vmatprep.subr.mxu0 0.0
      %4591 = vmatpush1.xpose.msra.mxu0 0.0
      %4592 = vmatprep.subr.mxu0 0.0
      %4593 = vmatpush1.xpose.msra.mxu0 0.0
      %4594 = vmatprep.subr.mxu0 0.0
      %4595 = vmatpush1.xpose.msra.mxu0 0.0
      %4596 = vmatprep.subr.mxu0 0.0
      %4597 = vmatpush1.xpose.msra.mxu0 0.0
      %4598 = vmatprep.subr.mxu0 0.0
      %4599 = vmatpush1.xpose.msra.mxu0 0.0
      %4600 = vmatprep.subr.mxu0 0.0
      %4601 = vmatpush1.xpose.msra.mxu0 0.0
      %4602 = vmatprep.subr.mxu0 0.0
      %4603 = vmatpush1.xpose.msra.mxu0 0.0
      %4604 = vmatprep.subr.mxu0 0.0
      %4605 = vmatpush1.xpose.msra.mxu0 0.0
      %4606 = vmatprep.subr.mxu0 0.0
      %4607 = vmatpush1.xpose.msra.mxu0 0.0
      %4608 = vmatprep.subr.mxu0 0.0
      %4609 = vmatpush1.xpose.msra.mxu0 0.0
      %4610 = vmatprep.subr.mxu0 0.0
      %4611 = vmatpush1.xpose.msra.mxu0 0.0
      %4612 = vmatprep.subr.mxu0 0.0
      %4613 = vmatpush1.xpose.msra.mxu0 0.0
      %4614 = vmatprep.subr.mxu0 0.0
      %4615 = vmatpush1.xpose.msra.mxu0 0.0
      %4616 = vmatprep.subr.mxu0 0.0
      %4617 = vmatpush1.xpose.msra.mxu0 0.0
      %4618 = vmatprep.subr.mxu0 0.0
      %4619 = vmatpush1.xpose.msra.mxu0 0.0
      %4620 = vmatprep.subr.mxu0 0.0
      %4621 = vmatpush1.xpose.msra.mxu0 0.0
      %4622 = vmatprep.subr.mxu0 0.0
      %4623 = vmatpush1.xpose.msra.mxu0 0.0
      %4624 = vmatprep.subr.mxu0 0.0
      %4625 = vmatpush1.xpose.msra.mxu0 0.0
      %4626 = vmatprep.subr.mxu0 0.0
      %4627 = vmatpush1.xpose.msra.mxu0 0.0
      %4628 = vmatprep.subr.mxu0 0.0
      %4629 = vmatpush1.xpose.msra.mxu0 0.0
      %4630 = vmatprep.subr.mxu0 0.0
      %4631 = vmatpush1.xpose.msra.mxu0 0.0
      %4632 = vmatprep.subr.mxu0 0.0
      %4633 = vmatpush1.xpose.msra.mxu0 0.0
      %4634 = vmatprep.mubr.f32.mxu0 0.0
      %v4635 = vand.u32 %v4191, 4294901760
      %4636 = vmatmul.mubr.f32.gmra.mrb[0].mxu0 %v4635
      %v4637 = vpop.f32.mrb[0].mxu0
      %v4638 = vadd.f32 %v4566, %v4637
      %v4639 = vpop.f32.mrb[0].mxu0
      %4640 = vdwg.mxu0
      %v4645 = vrot.slane %v3209, 7
      %v4646 = vsel %vm3259, %v4645, %v3207
      %v4647 = vrot.slane %v3211, 6
      %v4648 = vsel %vm3262, %v4647, %v4646
      %v4649 = vrot.slane %v3213, 5
      %v4650 = vsel %vm3265, %v4649, %v4648
      %v4652 = vsel %vm3267, %v3205, 0
      %v4654 = vsel %vm3267, %v4650, 0
      %4656 = vmatprep.subr.mxu0 0.0
      %v4657 = vand.u32 %v4654, 4294901760
      %4658 = vmatpush1.xpose.msra.mxu0 %v4657
      %4659 = vmatprep.subr.mxu0 0.0
      %4660 = vmatpush1.xpose.msra.mxu0 0.0
      %4661 = vmatprep.subr.mxu0 0.0
      %4662 = vmatpush1.xpose.msra.mxu0 0.0
      %4663 = vmatprep.subr.mxu0 0.0
      %4664 = vmatpush1.xpose.msra.mxu0 0.0
      %4665 = vmatprep.subr.mxu0 0.0
      %4666 = vmatpush1.xpose.msra.mxu0 0.0
      %4667 = vmatprep.subr.mxu0 0.0
      %4668 = vmatpush1.xpose.msra.mxu0 0.0
      %4669 = vmatprep.subr.mxu0 0.0
      %4670 = vmatpush1.xpose.msra.mxu0 0.0
      %4671 = vmatprep.subr.mxu0 0.0
      %4672 = vmatpush1.xpose.msra.mxu0 0.0
      %4673 = vmatprep.subr.mxu0 0.0
      %4674 = vmatpush1.xpose.msra.mxu0 0.0
      %4675 = vmatprep.subr.mxu0 0.0
      %4676 = vmatpush1.xpose.msra.mxu0 0.0
      %4677 = vmatprep.subr.mxu0 0.0
      %4678 = vmatpush1.xpose.msra.mxu0 0.0
      %4679 = vmatprep.subr.mxu0 0.0
      %4680 = vmatpush1.xpose.msra.mxu0 0.0
      %4681 = vmatprep.subr.mxu0 0.0
      %4682 = vmatpush1.xpose.msra.mxu0 0.0
      %4683 = vmatprep.subr.mxu0 0.0
      %4684 = vmatpush1.xpose.msra.mxu0 0.0
      %4685 = vmatprep.subr.mxu0 0.0
      %4686 = vmatpush1.xpose.msra.mxu0 0.0
      %4687 = vmatprep.subr.mxu0 0.0
      %4688 = vmatpush1.xpose.msra.mxu0 0.0
      %4689 = vmatprep.subr.mxu0 0.0
      %4690 = vmatpush1.xpose.msra.mxu0 0.0
      %4691 = vmatprep.subr.mxu0 0.0
      %4692 = vmatpush1.xpose.msra.mxu0 0.0
      %4693 = vmatprep.subr.mxu0 0.0
      %4694 = vmatpush1.xpose.msra.mxu0 0.0
      %4695 = vmatprep.subr.mxu0 0.0
      %4696 = vmatpush1.xpose.msra.mxu0 0.0
      %4697 = vmatprep.subr.mxu0 0.0
      %4698 = vmatpush1.xpose.msra.mxu0 0.0
      %4699 = vmatprep.subr.mxu0 0.0
      %4700 = vmatpush1.xpose.msra.mxu0 0.0
      %4701 = vmatprep.subr.mxu0 0.0
      %4702 = vmatpush1.xpose.msra.mxu0 0.0
      %4703 = vmatprep.subr.mxu0 0.0
      %4704 = vmatpush1.xpose.msra.mxu0 0.0
      %4705 = vmatprep.subr.mxu0 0.0
      %4706 = vmatpush1.xpose.msra.mxu0 0.0
      %4707 = vmatprep.subr.mxu0 0.0
      %4708 = vmatpush1.xpose.msra.mxu0 0.0
      %4709 = vmatprep.subr.mxu0 0.0
      %4710 = vmatpush1.xpose.msra.mxu0 0.0
      %4711 = vmatprep.subr.mxu0 0.0
      %4712 = vmatpush1.xpose.msra.mxu0 0.0
      %4713 = vmatprep.subr.mxu0 0.0
      %4714 = vmatpush1.xpose.msra.mxu0 0.0
      %4715 = vmatprep.subr.mxu0 0.0
      %4716 = vmatpush1.xpose.msra.mxu0 0.0
      %4717 = vmatprep.subr.mxu0 0.0
      %4718 = vmatpush1.xpose.msra.mxu0 0.0
      %4719 = vmatprep.subr.mxu0 0.0
      %4720 = vmatpush1.xpose.msra.mxu0 0.0
      %4721 = vmatprep.mubr.f32.mxu0 0.0
      %v4722 = vand.u32 %v4652, 4294901760
      %v4723 = vsub.f32 %v4652, %v4722
      %v4724 = vand.u32 %v4723, 4294901760
      %v4725 = vsub.f32 %v4723, %v4724
      %v4726 = vand.u32 %v4725, 4294901760
      %4727 = vmatmul.mubr.f32.gmra.mrb[0].mxu0 %v4726
      %v4728 = vpop.f32.mrb[0].mxu0
      %v4729 = vadd.f32 0.0, %v4728
      %v4730 = vpop.f32.mrb[0].mxu0
      %4731 = vdwg.mxu0
      %4732 = vmatprep.subr.mxu0 0.0
      %v4733 = vand.u32 %v4654, 4294901760
      %v4734 = vsub.f32 %v4654, %v4733
      %v4735 = vand.u32 %v4734, 4294901760
      %v4736 = vsub.f32 %v4734, %v4735
      %v4737 = vand.u32 %v4736, 4294901760
      %4738 = vmatpush1.xpose.msra.mxu0 %v4737
      %4739 = vmatprep.subr.mxu0 0.0
      %4740 = vmatpush1.xpose.msra.mxu0 0.0
      %4741 = vmatprep.subr.mxu0 0.0
      %4742 = vmatpush1.xpose.msra.mxu0 0.0
      %4743 = vmatprep.subr.mxu0 0.0
      %4744 = vmatpush1.xpose.msra.mxu0 0.0
      %4745 = vmatprep.subr.mxu0 0.0
      %4746 = vmatpush1.xpose.msra.mxu0 0.0
      %4747 = vmatprep.subr.mxu0 0.0
      %4748 = vmatpush1.xpose.msra.mxu0 0.0
      %4749 = vmatprep.subr.mxu0 0.0
      %4750 = vmatpush1.xpose.msra.mxu0 0.0
      %4751 = vmatprep.subr.mxu0 0.0
      %4752 = vmatpush1.xpose.msra.mxu0 0.0
      %4753 = vmatprep.subr.mxu0 0.0
      %4754 = vmatpush1.xpose.msra.mxu0 0.0
      %4755 = vmatprep.subr.mxu0 0.0
      %4756 = vmatpush1.xpose.msra.mxu0 0.0
      %4757 = vmatprep.subr.mxu0 0.0
      %4758 = vmatpush1.xpose.msra.mxu0 0.0
      %4759 = vmatprep.subr.mxu0 0.0
      %4760 = vmatpush1.xpose.msra.mxu0 0.0
      %4761 = vmatprep.subr.mxu0 0.0
      %4762 = vmatpush1.xpose.msra.mxu0 0.0
      %4763 = vmatprep.subr.mxu0 0.0
      %4764 = vmatpush1.xpose.msra.mxu0 0.0
      %4765 = vmatprep.subr.mxu0 0.0
      %4766 = vmatpush1.xpose.msra.mxu0 0.0
      %4767 = vmatprep.subr.mxu0 0.0
      %4768 = vmatpush1.xpose.msra.mxu0 0.0
      %4769 = vmatprep.subr.mxu0 0.0
      %4770 = vmatpush1.xpose.msra.mxu0 0.0
      %4771 = vmatprep.subr.mxu0 0.0
      %4772 = vmatpush1.xpose.msra.mxu0 0.0
      %4773 = vmatprep.subr.mxu0 0.0
      %4774 = vmatpush1.xpose.msra.mxu0 0.0
      %4775 = vmatprep.subr.mxu0 0.0
      %4776 = vmatpush1.xpose.msra.mxu0 0.0
      %4777 = vmatprep.subr.mxu0 0.0
      %4778 = vmatpush1.xpose.msra.mxu0 0.0
      %4779 = vmatprep.subr.mxu0 0.0
      %4780 = vmatpush1.xpose.msra.mxu0 0.0
      %4781 = vmatprep.subr.mxu0 0.0
      %4782 = vmatpush1.xpose.msra.mxu0 0.0
      %4783 = vmatprep.subr.mxu0 0.0
      %4784 = vmatpush1.xpose.msra.mxu0 0.0
      %4785 = vmatprep.subr.mxu0 0.0
      %4786 = vmatpush1.xpose.msra.mxu0 0.0
      %4787 = vmatprep.subr.mxu0 0.0
      %4788 = vmatpush1.xpose.msra.mxu0 0.0
      %4789 = vmatprep.subr.mxu0 0.0
      %4790 = vmatpush1.xpose.msra.mxu0 0.0
      %4791 = vmatprep.subr.mxu0 0.0
      %4792 = vmatpush1.xpose.msra.mxu0 0.0
      %4793 = vmatprep.subr.mxu0 0.0
      %4794 = vmatpush1.xpose.msra.mxu0 0.0
      %4795 = vmatprep.subr.mxu0 0.0
      %4796 = vmatpush1.xpose.msra.mxu0 0.0
      %4797 = vmatprep.subr.mxu0 0.0
      %4798 = vmatpush1.xpose.msra.mxu0 0.0
      %4799 = vmatprep.subr.mxu0 0.0
      %4800 = vmatpush1.xpose.msra.mxu0 0.0
      %4801 = vmatprep.mubr.f32.mxu0 0.0
      %v4802 = vand.u32 %v4652, 4294901760
      %4803 = vmatmul.mubr.f32.gmra.mrb[0].mxu0 %v4802
      %v4804 = vpop.f32.mrb[0].mxu0
      %v4805 = vadd.f32 %v4729, %v4804
      %v4806 = vpop.f32.mrb[0].mxu0
      %4807 = vdwg.mxu0
      %4808 = vmatprep.subr.mxu0 0.0
      %v4809 = vand.u32 %v4654, 4294901760
      %v4810 = vsub.f32 %v4654, %v4809
      %4811 = vmatpush1.xpose.msra.mxu0 %v4810
      %4812 = vmatprep.subr.mxu0 0.0
      %4813 = vmatpush1.xpose.msra.mxu0 0.0
      %4814 = vmatprep.subr.mxu0 0.0
      %4815 = vmatpush1.xpose.msra.mxu0 0.0
      %4816 = vmatprep.subr.mxu0 0.0
      %4817 = vmatpush1.xpose.msra.mxu0 0.0
      %4818 = vmatprep.subr.mxu0 0.0
      %4819 = vmatpush1.xpose.msra.mxu0 0.0
      %4820 = vmatprep.subr.mxu0 0.0
      %4821 = vmatpush1.xpose.msra.mxu0 0.0
      %4822 = vmatprep.subr.mxu0 0.0
      %4823 = vmatpush1.xpose.msra.mxu0 0.0
      %4824 = vmatprep.subr.mxu0 0.0
      %4825 = vmatpush1.xpose.msra.mxu0 0.0
      %4826 = vmatprep.subr.mxu0 0.0
      %4827 = vmatpush1.xpose.msra.mxu0 0.0
      %4828 = vmatprep.subr.mxu0 0.0
      %4829 = vmatpush1.xpose.msra.mxu0 0.0
      %4830 = vmatprep.subr.mxu0 0.0
      %4831 = vmatpush1.xpose.msra.mxu0 0.0
      %4832 = vmatprep.subr.mxu0 0.0
      %4833 = vmatpush1.xpose.msra.mxu0 0.0
      %4834 = vmatprep.subr.mxu0 0.0
      %4835 = vmatpush1.xpose.msra.mxu0 0.0
      %4836 = vmatprep.subr.mxu0 0.0
      %4837 = vmatpush1.xpose.msra.mxu0 0.0
      %4838 = vmatprep.subr.mxu0 0.0
      %4839 = vmatpush1.xpose.msra.mxu0 0.0
      %4840 = vmatprep.subr.mxu0 0.0
      %4841 = vmatpush1.xpose.msra.mxu0 0.0
      %4842 = vmatprep.subr.mxu0 0.0
      %4843 = vmatpush1.xpose.msra.mxu0 0.0
      %4844 = vmatprep.subr.mxu0 0.0
      %4845 = vmatpush1.xpose.msra.mxu0 0.0
      %4846 = vmatprep.subr.mxu0 0.0
      %4847 = vmatpush1.xpose.msra.mxu0 0.0
      %4848 = vmatprep.subr.mxu0 0.0
      %4849 = vmatpush1.xpose.msra.mxu0 0.0
      %4850 = vmatprep.subr.mxu0 0.0
      %4851 = vmatpush1.xpose.msra.mxu0 0.0
      %4852 = vmatprep.subr.mxu0 0.0
      %4853 = vmatpush1.xpose.msra.mxu0 0.0
      %4854 = vmatprep.subr.mxu0 0.0
      %4855 = vmatpush1.xpose.msra.mxu0 0.0
      %4856 = vmatprep.subr.mxu0 0.0
      %4857 = vmatpush1.xpose.msra.mxu0 0.0
      %4858 = vmatprep.subr.mxu0 0.0
      %4859 = vmatpush1.xpose.msra.mxu0 0.0
      %4860 = vmatprep.subr.mxu0 0.0
      %4861 = vmatpush1.xpose.msra.mxu0 0.0
      %4862 = vmatprep.subr.mxu0 0.0
      %4863 = vmatpush1.xpose.msra.mxu0 0.0
      %4864 = vmatprep.subr.mxu0 0.0
      %4865 = vmatpush1.xpose.msra.mxu0 0.0
      %4866 = vmatprep.subr.mxu0 0.0
      %4867 = vmatpush1.xpose.msra.mxu0 0.0
      %4868 = vmatprep.subr.mxu0 0.0
      %4869 = vmatpush1.xpose.msra.mxu0 0.0
      %4870 = vmatprep.subr.mxu0 0.0
      %4871 = vmatpush1.xpose.msra.mxu0 0.0
      %4872 = vmatprep.subr.mxu0 0.0
      %4873 = vmatpush1.xpose.msra.mxu0 0.0
      %4874 = vmatprep.mubr.f32.mxu0 0.0
      %v4875 = vand.u32 %v4652, 4294901760
      %v4876 = vsub.f32 %v4652, %v4875
      %4877 = vmatmul.mubr.f32.gmra.mrb[0].mxu0 %v4876
      %v4878 = vpop.f32.mrb[0].mxu0
      %v4879 = vadd.f32 %v4805, %v4878
      %v4880 = vpop.f32.mrb[0].mxu0
      %4881 = vdwg.mxu0
      %4882 = vmatprep.subr.mxu0 0.0
      %v4883 = vand.u32 %v4654, 4294901760
      %4884 = vmatpush1.xpose.msra.mxu0 %v4883
      %4885 = vmatprep.subr.mxu0 0.0
      %4886 = vmatpush1.xpose.msra.mxu0 0.0
      %4887 = vmatprep.subr.mxu0 0.0
      %4888 = vmatpush1.xpose.msra.mxu0 0.0
      %4889 = vmatprep.subr.mxu0 0.0
      %4890 = vmatpush1.xpose.msra.mxu0 0.0
      %4891 = vmatprep.subr.mxu0 0.0
      %4892 = vmatpush1.xpose.msra.mxu0 0.0
      %4893 = vmatprep.subr.mxu0 0.0
      %4894 = vmatpush1.xpose.msra.mxu0 0.0
      %4895 = vmatprep.subr.mxu0 0.0
      %4896 = vmatpush1.xpose.msra.mxu0 0.0
      %4897 = vmatprep.subr.mxu0 0.0
      %4898 = vmatpush1.xpose.msra.mxu0 0.0
      %4899 = vmatprep.subr.mxu0 0.0
      %4900 = vmatpush1.xpose.msra.mxu0 0.0
      %4901 = vmatprep.subr.mxu0 0.0
      %4902 = vmatpush1.xpose.msra.mxu0 0.0
      %4903 = vmatprep.subr.mxu0 0.0
      %4904 = vmatpush1.xpose.msra.mxu0 0.0
      %4905 = vmatprep.subr.mxu0 0.0
      %4906 = vmatpush1.xpose.msra.mxu0 0.0
      %4907 = vmatprep.subr.mxu0 0.0
      %4908 = vmatpush1.xpose.msra.mxu0 0.0
      %4909 = vmatprep.subr.mxu0 0.0
      %4910 = vmatpush1.xpose.msra.mxu0 0.0
      %4911 = vmatprep.subr.mxu0 0.0
      %4912 = vmatpush1.xpose.msra.mxu0 0.0
      %4913 = vmatprep.subr.mxu0 0.0
      %4914 = vmatpush1.xpose.msra.mxu0 0.0
      %4915 = vmatprep.subr.mxu0 0.0
      %4916 = vmatpush1.xpose.msra.mxu0 0.0
      %4917 = vmatprep.subr.mxu0 0.0
      %4918 = vmatpush1.xpose.msra.mxu0 0.0
      %4919 = vmatprep.subr.mxu0 0.0
      %4920 = vmatpush1.xpose.msra.mxu0 0.0
      %4921 = vmatprep.subr.mxu0 0.0
      %4922 = vmatpush1.xpose.msra.mxu0 0.0
      %4923 = vmatprep.subr.mxu0 0.0
      %4924 = vmatpush1.xpose.msra.mxu0 0.0
      %4925 = vmatprep.subr.mxu0 0.0
      %4926 = vmatpush1.xpose.msra.mxu0 0.0
      %4927 = vmatprep.subr.mxu0 0.0
      %4928 = vmatpush1.xpose.msra.mxu0 0.0
      %4929 = vmatprep.subr.mxu0 0.0
      %4930 = vmatpush1.xpose.msra.mxu0 0.0
      %4931 = vmatprep.subr.mxu0 0.0
      %4932 = vmatpush1.xpose.msra.mxu0 0.0
      %4933 = vmatprep.subr.mxu0 0.0
      %4934 = vmatpush1.xpose.msra.mxu0 0.0
      %4935 = vmatprep.subr.mxu0 0.0
      %4936 = vmatpush1.xpose.msra.mxu0 0.0
      %4937 = vmatprep.subr.mxu0 0.0
      %4938 = vmatpush1.xpose.msra.mxu0 0.0
      %4939 = vmatprep.subr.mxu0 0.0
      %4940 = vmatpush1.xpose.msra.mxu0 0.0
      %4941 = vmatprep.subr.mxu0 0.0
      %4942 = vmatpush1.xpose.msra.mxu0 0.0
      %4943 = vmatprep.subr.mxu0 0.0
      %4944 = vmatpush1.xpose.msra.mxu0 0.0
      %4945 = vmatprep.subr.mxu0 0.0
      %4946 = vmatpush1.xpose.msra.mxu0 0.0
      %4947 = vmatprep.mubr.f32.mxu0 0.0
      %v4948 = vand.u32 %v4652, 4294901760
      %v4949 = vsub.f32 %v4652, %v4948
      %v4950 = vand.u32 %v4949, 4294901760
      %4951 = vmatmul.mubr.f32.gmra.mrb[0].mxu0 %v4950
      %v4952 = vpop.f32.mrb[0].mxu0
      %v4953 = vadd.f32 %v4879, %v4952
      %v4954 = vpop.f32.mrb[0].mxu0
      %4955 = vdwg.mxu0
      %4956 = vmatprep.subr.mxu0 0.0
      %v4957 = vand.u32 %v4654, 4294901760
      %v4958 = vsub.f32 %v4654, %v4957
      %v4959 = vand.u32 %v4958, 4294901760
      %4960 = vmatpush1.xpose.msra.mxu0 %v4959
      %4961 = vmatprep.subr.mxu0 0.0
      %4962 = vmatpush1.xpose.msra.mxu0 0.0
      %4963 = vmatprep.subr.mxu0 0.0
      %4964 = vmatpush1.xpose.msra.mxu0 0.0
      %4965 = vmatprep.subr.mxu0 0.0
      %4966 = vmatpush1.xpose.msra.mxu0 0.0
      %4967 = vmatprep.subr.mxu0 0.0
      %4968 = vmatpush1.xpose.msra.mxu0 0.0
      %4969 = vmatprep.subr.mxu0 0.0
      %4970 = vmatpush1.xpose.msra.mxu0 0.0
      %4971 = vmatprep.subr.mxu0 0.0
      %4972 = vmatpush1.xpose.msra.mxu0 0.0
      %4973 = vmatprep.subr.mxu0 0.0
      %4974 = vmatpush1.xpose.msra.mxu0 0.0
      %4975 = vmatprep.subr.mxu0 0.0
      %4976 = vmatpush1.xpose.msra.mxu0 0.0
      %4977 = vmatprep.subr.mxu0 0.0
      %4978 = vmatpush1.xpose.msra.mxu0 0.0
      %4979 = vmatprep.subr.mxu0 0.0
      %4980 = vmatpush1.xpose.msra.mxu0 0.0
      %4981 = vmatprep.subr.mxu0 0.0
      %4982 = vmatpush1.xpose.msra.mxu0 0.0
      %4983 = vmatprep.subr.mxu0 0.0
      %4984 = vmatpush1.xpose.msra.mxu0 0.0
      %4985 = vmatprep.subr.mxu0 0.0
      %4986 = vmatpush1.xpose.msra.mxu0 0.0
      %4987 = vmatprep.subr.mxu0 0.0
      %4988 = vmatpush1.xpose.msra.mxu0 0.0
      %4989 = vmatprep.subr.mxu0 0.0
      %4990 = vmatpush1.xpose.msra.mxu0 0.0
      %4991 = vmatprep.subr.mxu0 0.0
      %4992 = vmatpush1.xpose.msra.mxu0 0.0
      %4993 = vmatprep.subr.mxu0 0.0
      %4994 = vmatpush1.xpose.msra.mxu0 0.0
      %4995 = vmatprep.subr.mxu0 0.0
      %4996 = vmatpush1.xpose.msra.mxu0 0.0
      %4997 = vmatprep.subr.mxu0 0.0
      %4998 = vmatpush1.xpose.msra.mxu0 0.0
      %4999 = vmatprep.subr.mxu0 0.0
      %5000 = vmatpush1.xpose.msra.mxu0 0.0
      %5001 = vmatprep.subr.mxu0 0.0
      %5002 = vmatpush1.xpose.msra.mxu0 0.0
      %5003 = vmatprep.subr.mxu0 0.0
      %5004 = vmatpush1.xpose.msra.mxu0 0.0
      %5005 = vmatprep.subr.mxu0 0.0
      %5006 = vmatpush1.xpose.msra.mxu0 0.0
      %5007 = vmatprep.subr.mxu0 0.0
      %5008 = vmatpush1.xpose.msra.mxu0 0.0
      %5009 = vmatprep.subr.mxu0 0.0
      %5010 = vmatpush1.xpose.msra.mxu0 0.0
      %5011 = vmatprep.subr.mxu0 0.0
      %5012 = vmatpush1.xpose.msra.mxu0 0.0
      %5013 = vmatprep.subr.mxu0 0.0
      %5014 = vmatpush1.xpose.msra.mxu0 0.0
      %5015 = vmatprep.subr.mxu0 0.0
      %5016 = vmatpush1.xpose.msra.mxu0 0.0
      %5017 = vmatprep.subr.mxu0 0.0
      %5018 = vmatpush1.xpose.msra.mxu0 0.0
      %5019 = vmatprep.subr.mxu0 0.0
      %5020 = vmatpush1.xpose.msra.mxu0 0.0
      %5021 = vmatprep.subr.mxu0 0.0
      %5022 = vmatpush1.xpose.msra.mxu0 0.0
      %5023 = vmatprep.mubr.f32.mxu0 0.0
      %v5024 = vand.u32 %v4652, 4294901760
      %5025 = vmatmul.mubr.f32.gmra.mrb[0].mxu0 %v5024
      %v5026 = vpop.f32.mrb[0].mxu0
      %v5027 = vadd.f32 %v4953, %v5026
      %v5028 = vpop.f32.mrb[0].mxu0
      %5029 = vdwg.mxu0
      %5030 = vmatprep.subr.mxu0 0.0
      %v5031 = vand.u32 %v4654, 4294901760
      %5032 = vmatpush1.xpose.msra.mxu0 %v5031
      %5033 = vmatprep.subr.mxu0 0.0
      %5034 = vmatpush1.xpose.msra.mxu0 0.0
      %5035 = vmatprep.subr.mxu0 0.0
      %5036 = vmatpush1.xpose.msra.mxu0 0.0
      %5037 = vmatprep.subr.mxu0 0.0
      %5038 = vmatpush1.xpose.msra.mxu0 0.0
      %5039 = vmatprep.subr.mxu0 0.0
      %5040 = vmatpush1.xpose.msra.mxu0 0.0
      %5041 = vmatprep.subr.mxu0 0.0
      %5042 = vmatpush1.xpose.msra.mxu0 0.0
      %5043 = vmatprep.subr.mxu0 0.0
      %5044 = vmatpush1.xpose.msra.mxu0 0.0
      %5045 = vmatprep.subr.mxu0 0.0
      %5046 = vmatpush1.xpose.msra.mxu0 0.0
      %5047 = vmatprep.subr.mxu0 0.0
      %5048 = vmatpush1.xpose.msra.mxu0 0.0
      %5049 = vmatprep.subr.mxu0 0.0
      %5050 = vmatpush1.xpose.msra.mxu0 0.0
      %5051 = vmatprep.subr.mxu0 0.0
      %5052 = vmatpush1.xpose.msra.mxu0 0.0
      %5053 = vmatprep.subr.mxu0 0.0
      %5054 = vmatpush1.xpose.msra.mxu0 0.0
      %5055 = vmatprep.subr.mxu0 0.0
      %5056 = vmatpush1.xpose.msra.mxu0 0.0
      %5057 = vmatprep.subr.mxu0 0.0
      %5058 = vmatpush1.xpose.msra.mxu0 0.0
      %5059 = vmatprep.subr.mxu0 0.0
      %5060 = vmatpush1.xpose.msra.mxu0 0.0
      %5061 = vmatprep.subr.mxu0 0.0
      %5062 = vmatpush1.xpose.msra.mxu0 0.0
      %5063 = vmatprep.subr.mxu0 0.0
      %5064 = vmatpush1.xpose.msra.mxu0 0.0
      %5065 = vmatprep.subr.mxu0 0.0
      %5066 = vmatpush1.xpose.msra.mxu0 0.0
      %5067 = vmatprep.subr.mxu0 0.0
      %5068 = vmatpush1.xpose.msra.mxu0 0.0
      %5069 = vmatprep.subr.mxu0 0.0
      %5070 = vmatpush1.xpose.msra.mxu0 0.0
      %5071 = vmatprep.subr.mxu0 0.0
      %5072 = vmatpush1.xpose.msra.mxu0 0.0
      %5073 = vmatprep.subr.mxu0 0.0
      %5074 = vmatpush1.xpose.msra.mxu0 0.0
      %5075 = vmatprep.subr.mxu0 0.0
      %5076 = vmatpush1.xpose.msra.mxu0 0.0
      %5077 = vmatprep.subr.mxu0 0.0
      %5078 = vmatpush1.xpose.msra.mxu0 0.0
      %5079 = vmatprep.subr.mxu0 0.0
      %5080 = vmatpush1.xpose.msra.mxu0 0.0
      %5081 = vmatprep.subr.mxu0 0.0
      %5082 = vmatpush1.xpose.msra.mxu0 0.0
      %5083 = vmatprep.subr.mxu0 0.0
      %5084 = vmatpush1.xpose.msra.mxu0 0.0
      %5085 = vmatprep.subr.mxu0 0.0
      %5086 = vmatpush1.xpose.msra.mxu0 0.0
      %5087 = vmatprep.subr.mxu0 0.0
      %5088 = vmatpush1.xpose.msra.mxu0 0.0
      %5089 = vmatprep.subr.mxu0 0.0
      %5090 = vmatpush1.xpose.msra.mxu0 0.0
      %5091 = vmatprep.subr.mxu0 0.0
      %5092 = vmatpush1.xpose.msra.mxu0 0.0
      %5093 = vmatprep.subr.mxu0 0.0
      %5094 = vmatpush1.xpose.msra.mxu0 0.0
      %5095 = vmatprep.mubr.f32.mxu0 0.0
      %v5096 = vand.u32 %v4652, 4294901760
      %5097 = vmatmul.mubr.f32.gmra.mrb[0].mxu0 %v5096
      %v5098 = vpop.f32.mrb[0].mxu0
      %v5099 = vadd.f32 %v5027, %v5098
      %v5100 = vpop.f32.mrb[0].mxu0
      %5101 = vdwg.mxu0
      %v5106 = vrot.slane %v3219, 7
      %v5107 = vsel %vm3259, %v5106, %v3217
      %v5108 = vrot.slane %v3221, 6
      %v5109 = vsel %vm3262, %v5108, %v5107
      %v5110 = vrot.slane %v3223, 5
      %v5111 = vsel %vm3265, %v5110, %v5109
      %v5113 = vsel %vm3267, %v3215, 0
      %v5115 = vsel %vm3267, %v5111, 0
      %5117 = vmatprep.subr.mxu0 0.0
      %v5118 = vand.u32 %v5115, 4294901760
      %5119 = vmatpush1.xpose.msra.mxu0 %v5118
      %5120 = vmatprep.subr.mxu0 0.0
      %5121 = vmatpush1.xpose.msra.mxu0 0.0
      %5122 = vmatprep.subr.mxu0 0.0
      %5123 = vmatpush1.xpose.msra.mxu0 0.0
      %5124 = vmatprep.subr.mxu0 0.0
      %5125 = vmatpush1.xpose.msra.mxu0 0.0
      %5126 = vmatprep.subr.mxu0 0.0
      %5127 = vmatpush1.xpose.msra.mxu0 0.0
      %5128 = vmatprep.subr.mxu0 0.0
      %5129 = vmatpush1.xpose.msra.mxu0 0.0
      %5130 = vmatprep.subr.mxu0 0.0
      %5131 = vmatpush1.xpose.msra.mxu0 0.0
      %5132 = vmatprep.subr.mxu0 0.0
      %5133 = vmatpush1.xpose.msra.mxu0 0.0
      %5134 = vmatprep.subr.mxu0 0.0
      %5135 = vmatpush1.xpose.msra.mxu0 0.0
      %5136 = vmatprep.subr.mxu0 0.0
      %5137 = vmatpush1.xpose.msra.mxu0 0.0
      %5138 = vmatprep.subr.mxu0 0.0
      %5139 = vmatpush1.xpose.msra.mxu0 0.0
      %5140 = vmatprep.subr.mxu0 0.0
      %5141 = vmatpush1.xpose.msra.mxu0 0.0
      %5142 = vmatprep.subr.mxu0 0.0
      %5143 = vmatpush1.xpose.msra.mxu0 0.0
      %5144 = vmatprep.subr.mxu0 0.0
      %5145 = vmatpush1.xpose.msra.mxu0 0.0
      %5146 = vmatprep.subr.mxu0 0.0
      %5147 = vmatpush1.xpose.msra.mxu0 0.0
      %5148 = vmatprep.subr.mxu0 0.0
      %5149 = vmatpush1.xpose.msra.mxu0 0.0
      %5150 = vmatprep.subr.mxu0 0.0
      %5151 = vmatpush1.xpose.msra.mxu0 0.0
      %5152 = vmatprep.subr.mxu0 0.0
      %5153 = vmatpush1.xpose.msra.mxu0 0.0
      %5154 = vmatprep.subr.mxu0 0.0
      %5155 = vmatpush1.xpose.msra.mxu0 0.0
      %5156 = vmatprep.subr.mxu0 0.0
      %5157 = vmatpush1.xpose.msra.mxu0 0.0
      %5158 = vmatprep.subr.mxu0 0.0
      %5159 = vmatpush1.xpose.msra.mxu0 0.0
      %5160 = vmatprep.subr.mxu0 0.0
      %5161 = vmatpush1.xpose.msra.mxu0 0.0
      %5162 = vmatprep.subr.mxu0 0.0
      %5163 = vmatpush1.xpose.msra.mxu0 0.0
      %5164 = vmatprep.subr.mxu0 0.0
      %5165 = vmatpush1.xpose.msra.mxu0 0.0
      %5166 = vmatprep.subr.mxu0 0.0
      %5167 = vmatpush1.xpose.msra.mxu0 0.0
      %5168 = vmatprep.subr.mxu0 0.0
      %5169 = vmatpush1.xpose.msra.mxu0 0.0
      %5170 = vmatprep.subr.mxu0 0.0
      %5171 = vmatpush1.xpose.msra.mxu0 0.0
      %5172 = vmatprep.subr.mxu0 0.0
      %5173 = vmatpush1.xpose.msra.mxu0 0.0
      %5174 = vmatprep.subr.mxu0 0.0
      %5175 = vmatpush1.xpose.msra.mxu0 0.0
      %5176 = vmatprep.subr.mxu0 0.0
      %5177 = vmatpush1.xpose.msra.mxu0 0.0
      %5178 = vmatprep.subr.mxu0 0.0
      %5179 = vmatpush1.xpose.msra.mxu0 0.0
      %5180 = vmatprep.subr.mxu0 0.0
      %5181 = vmatpush1.xpose.msra.mxu0 0.0
      %5182 = vmatprep.mubr.f32.mxu0 0.0
      %v5183 = vand.u32 %v5113, 4294901760
      %v5184 = vsub.f32 %v5113, %v5183
      %v5185 = vand.u32 %v5184, 4294901760
      %v5186 = vsub.f32 %v5184, %v5185
      %v5187 = vand.u32 %v5186, 4294901760
      %5188 = vmatmul.mubr.f32.gmra.mrb[0].mxu0 %v5187
      %v5189 = vpop.f32.mrb[0].mxu0
      %v5190 = vadd.f32 0.0, %v5189
      %v5191 = vpop.f32.mrb[0].mxu0
      %5192 = vdwg.mxu0
      %5193 = vmatprep.subr.mxu0 0.0
      %v5194 = vand.u32 %v5115, 4294901760
      %v5195 = vsub.f32 %v5115, %v5194
      %v5196 = vand.u32 %v5195, 4294901760
      %v5197 = vsub.f32 %v5195, %v5196
      %v5198 = vand.u32 %v5197, 4294901760
      %5199 = vmatpush1.xpose.msra.mxu0 %v5198
      %5200 = vmatprep.subr.mxu0 0.0
      %5201 = vmatpush1.xpose.msra.mxu0 0.0
      %5202 = vmatprep.subr.mxu0 0.0
      %5203 = vmatpush1.xpose.msra.mxu0 0.0
      %5204 = vmatprep.subr.mxu0 0.0
      %5205 = vmatpush1.xpose.msra.mxu0 0.0
      %5206 = vmatprep.subr.mxu0 0.0
      %5207 = vmatpush1.xpose.msra.mxu0 0.0
      %5208 = vmatprep.subr.mxu0 0.0
      %5209 = vmatpush1.xpose.msra.mxu0 0.0
      %5210 = vmatprep.subr.mxu0 0.0
      %5211 = vmatpush1.xpose.msra.mxu0 0.0
      %5212 = vmatprep.subr.mxu0 0.0
      %5213 = vmatpush1.xpose.msra.mxu0 0.0
      %5214 = vmatprep.subr.mxu0 0.0
      %5215 = vmatpush1.xpose.msra.mxu0 0.0
      %5216 = vmatprep.subr.mxu0 0.0
      %5217 = vmatpush1.xpose.msra.mxu0 0.0
      %5218 = vmatprep.subr.mxu0 0.0
      %5219 = vmatpush1.xpose.msra.mxu0 0.0
      %5220 = vmatprep.subr.mxu0 0.0
      %5221 = vmatpush1.xpose.msra.mxu0 0.0
      %5222 = vmatprep.subr.mxu0 0.0
      %5223 = vmatpush1.xpose.msra.mxu0 0.0
      %5224 = vmatprep.subr.mxu0 0.0
      %5225 = vmatpush1.xpose.msra.mxu0 0.0
      %5226 = vmatprep.subr.mxu0 0.0
      %5227 = vmatpush1.xpose.msra.mxu0 0.0
      %5228 = vmatprep.subr.mxu0 0.0
      %5229 = vmatpush1.xpose.msra.mxu0 0.0
      %5230 = vmatprep.subr.mxu0 0.0
      %5231 = vmatpush1.xpose.msra.mxu0 0.0
      %5232 = vmatprep.subr.mxu0 0.0
      %5233 = vmatpush1.xpose.msra.mxu0 0.0
      %5234 = vmatprep.subr.mxu0 0.0
      %5235 = vmatpush1.xpose.msra.mxu0 0.0
      %5236 = vmatprep.subr.mxu0 0.0
      %5237 = vmatpush1.xpose.msra.mxu0 0.0
      %5238 = vmatprep.subr.mxu0 0.0
      %5239 = vmatpush1.xpose.msra.mxu0 0.0
      %5240 = vmatprep.subr.mxu0 0.0
      %5241 = vmatpush1.xpose.msra.mxu0 0.0
      %5242 = vmatprep.subr.mxu0 0.0
      %5243 = vmatpush1.xpose.msra.mxu0 0.0
      %5244 = vmatprep.subr.mxu0 0.0
      %5245 = vmatpush1.xpose.msra.mxu0 0.0
      %5246 = vmatprep.subr.mxu0 0.0
      %5247 = vmatpush1.xpose.msra.mxu0 0.0
      %5248 = vmatprep.subr.mxu0 0.0
      %5249 = vmatpush1.xpose.msra.mxu0 0.0
      %5250 = vmatprep.subr.mxu0 0.0
      %5251 = vmatpush1.xpose.msra.mxu0 0.0
      %5252 = vmatprep.subr.mxu0 0.0
      %5253 = vmatpush1.xpose.msra.mxu0 0.0
      %5254 = vmatprep.subr.mxu0 0.0
      %5255 = vmatpush1.xpose.msra.mxu0 0.0
      %5256 = vmatprep.subr.mxu0 0.0
      %5257 = vmatpush1.xpose.msra.mxu0 0.0
      %5258 = vmatprep.subr.mxu0 0.0
      %5259 = vmatpush1.xpose.msra.mxu0 0.0
      %5260 = vmatprep.subr.mxu0 0.0
      %5261 = vmatpush1.xpose.msra.mxu0 0.0
      %5262 = vmatprep.mubr.f32.mxu0 0.0
      %v5263 = vand.u32 %v5113, 4294901760
      %5264 = vmatmul.mubr.f32.gmra.mrb[0].mxu0 %v5263
      %v5265 = vpop.f32.mrb[0].mxu0
      %v5266 = vadd.f32 %v5190, %v5265
      %v5267 = vpop.f32.mrb[0].mxu0
      %5268 = vdwg.mxu0
      %5269 = vmatprep.subr.mxu0 0.0
      %v5270 = vand.u32 %v5115, 4294901760
      %v5271 = vsub.f32 %v5115, %v5270
      %5272 = vmatpush1.xpose.msra.mxu0 %v5271
      %5273 = vmatprep.subr.mxu0 0.0
      %5274 = vmatpush1.xpose.msra.mxu0 0.0
      %5275 = vmatprep.subr.mxu0 0.0
      %5276 = vmatpush1.xpose.msra.mxu0 0.0
      %5277 = vmatprep.subr.mxu0 0.0
      %5278 = vmatpush1.xpose.msra.mxu0 0.0
      %5279 = vmatprep.subr.mxu0 0.0
      %5280 = vmatpush1.xpose.msra.mxu0 0.0
      %5281 = vmatprep.subr.mxu0 0.0
      %5282 = vmatpush1.xpose.msra.mxu0 0.0
      %5283 = vmatprep.subr.mxu0 0.0
      %5284 = vmatpush1.xpose.msra.mxu0 0.0
      %5285 = vmatprep.subr.mxu0 0.0
      %5286 = vmatpush1.xpose.msra.mxu0 0.0
      %5287 = vmatprep.subr.mxu0 0.0
      %5288 = vmatpush1.xpose.msra.mxu0 0.0
      %5289 = vmatprep.subr.mxu0 0.0
      %5290 = vmatpush1.xpose.msra.mxu0 0.0
      %5291 = vmatprep.subr.mxu0 0.0
      %5292 = vmatpush1.xpose.msra.mxu0 0.0
      %5293 = vmatprep.subr.mxu0 0.0
      %5294 = vmatpush1.xpose.msra.mxu0 0.0
      %5295 = vmatprep.subr.mxu0 0.0
      %5296 = vmatpush1.xpose.msra.mxu0 0.0
      %5297 = vmatprep.subr.mxu0 0.0
      %5298 = vmatpush1.xpose.msra.mxu0 0.0
      %5299 = vmatprep.subr.mxu0 0.0
      %5300 = vmatpush1.xpose.msra.mxu0 0.0
      %5301 = vmatprep.subr.mxu0 0.0
      %5302 = vmatpush1.xpose.msra.mxu0 0.0
      %5303 = vmatprep.subr.mxu0 0.0
      %5304 = vmatpush1.xpose.msra.mxu0 0.0
      %5305 = vmatprep.subr.mxu0 0.0
      %5306 = vmatpush1.xpose.msra.mxu0 0.0
      %5307 = vmatprep.subr.mxu0 0.0
      %5308 = vmatpush1.xpose.msra.mxu0 0.0
      %5309 = vmatprep.subr.mxu0 0.0
      %5310 = vmatpush1.xpose.msra.mxu0 0.0
      %5311 = vmatprep.subr.mxu0 0.0
      %5312 = vmatpush1.xpose.msra.mxu0 0.0
      %5313 = vmatprep.subr.mxu0 0.0
      %5314 = vmatpush1.xpose.msra.mxu0 0.0
      %5315 = vmatprep.subr.mxu0 0.0
      %5316 = vmatpush1.xpose.msra.mxu0 0.0
      %5317 = vmatprep.subr.mxu0 0.0
      %5318 = vmatpush1.xpose.msra.mxu0 0.0
      %5319 = vmatprep.subr.mxu0 0.0
      %5320 = vmatpush1.xpose.msra.mxu0 0.0
      %5321 = vmatprep.subr.mxu0 0.0
      %5322 = vmatpush1.xpose.msra.mxu0 0.0
      %5323 = vmatprep.subr.mxu0 0.0
      %5324 = vmatpush1.xpose.msra.mxu0 0.0
      %5325 = vmatprep.subr.mxu0 0.0
      %5326 = vmatpush1.xpose.msra.mxu0 0.0
      %5327 = vmatprep.subr.mxu0 0.0
      %5328 = vmatpush1.xpose.msra.mxu0 0.0
      %5329 = vmatprep.subr.mxu0 0.0
      %5330 = vmatpush1.xpose.msra.mxu0 0.0
      %5331 = vmatprep.subr.mxu0 0.0
      %5332 = vmatpush1.xpose.msra.mxu0 0.0
      %5333 = vmatprep.subr.mxu0 0.0
      %5334 = vmatpush1.xpose.msra.mxu0 0.0
      %5335 = vmatprep.mubr.f32.mxu0 0.0
      %v5336 = vand.u32 %v5113, 4294901760
      %v5337 = vsub.f32 %v5113, %v5336
      %5338 = vmatmul.mubr.f32.gmra.mrb[0].mxu0 %v5337
      %v5339 = vpop.f32.mrb[0].mxu0
      %v5340 = vadd.f32 %v5266, %v5339
      %v5341 = vpop.f32.mrb[0].mxu0
      %5342 = vdwg.mxu0
      %5343 = vmatprep.subr.mxu0 0.0
      %v5344 = vand.u32 %v5115, 4294901760
      %5345 = vmatpush1.xpose.msra.mxu0 %v5344
      %5346 = vmatprep.subr.mxu0 0.0
      %5347 = vmatpush1.xpose.msra.mxu0 0.0
      %5348 = vmatprep.subr.mxu0 0.0
      %5349 = vmatpush1.xpose.msra.mxu0 0.0
      %5350 = vmatprep.subr.mxu0 0.0
      %5351 = vmatpush1.xpose.msra.mxu0 0.0
      %5352 = vmatprep.subr.mxu0 0.0
      %5353 = vmatpush1.xpose.msra.mxu0 0.0
      %5354 = vmatprep.subr.mxu0 0.0
      %5355 = vmatpush1.xpose.msra.mxu0 0.0
      %5356 = vmatprep.subr.mxu0 0.0
      %5357 = vmatpush1.xpose.msra.mxu0 0.0
      %5358 = vmatprep.subr.mxu0 0.0
      %5359 = vmatpush1.xpose.msra.mxu0 0.0
      %5360 = vmatprep.subr.mxu0 0.0
      %5361 = vmatpush1.xpose.msra.mxu0 0.0
      %5362 = vmatprep.subr.mxu0 0.0
      %5363 = vmatpush1.xpose.msra.mxu0 0.0
      %5364 = vmatprep.subr.mxu0 0.0
      %5365 = vmatpush1.xpose.msra.mxu0 0.0
      %5366 = vmatprep.subr.mxu0 0.0
      %5367 = vmatpush1.xpose.msra.mxu0 0.0
      %5368 = vmatprep.subr.mxu0 0.0
      %5369 = vmatpush1.xpose.msra.mxu0 0.0
      %5370 = vmatprep.subr.mxu0 0.0
      %5371 = vmatpush1.xpose.msra.mxu0 0.0
      %5372 = vmatprep.subr.mxu0 0.0
      %5373 = vmatpush1.xpose.msra.mxu0 0.0
      %5374 = vmatprep.subr.mxu0 0.0
      %5375 = vmatpush1.xpose.msra.mxu0 0.0
      %5376 = vmatprep.subr.mxu0 0.0
      %5377 = vmatpush1.xpose.msra.mxu0 0.0
      %5378 = vmatprep.subr.mxu0 0.0
      %5379 = vmatpush1.xpose.msra.mxu0 0.0
      %5380 = vmatprep.subr.mxu0 0.0
      %5381 = vmatpush1.xpose.msra.mxu0 0.0
      %5382 = vmatprep.subr.mxu0 0.0
      %5383 = vmatpush1.xpose.msra.mxu0 0.0
      %5384 = vmatprep.subr.mxu0 0.0
      %5385 = vmatpush1.xpose.msra.mxu0 0.0
      %5386 = vmatprep.subr.mxu0 0.0
      %5387 = vmatpush1.xpose.msra.mxu0 0.0
      %5388 = vmatprep.subr.mxu0 0.0
      %5389 = vmatpush1.xpose.msra.mxu0 0.0
      %5390 = vmatprep.subr.mxu0 0.0
      %5391 = vmatpush1.xpose.msra.mxu0 0.0
      %5392 = vmatprep.subr.mxu0 0.0
      %5393 = vmatpush1.xpose.msra.mxu0 0.0
      %5394 = vmatprep.subr.mxu0 0.0
      %5395 = vmatpush1.xpose.msra.mxu0 0.0
      %5396 = vmatprep.subr.mxu0 0.0
      %5397 = vmatpush1.xpose.msra.mxu0 0.0
      %5398 = vmatprep.subr.mxu0 0.0
      %5399 = vmatpush1.xpose.msra.mxu0 0.0
      %5400 = vmatprep.subr.mxu0 0.0
      %5401 = vmatpush1.xpose.msra.mxu0 0.0
      %5402 = vmatprep.subr.mxu0 0.0
      %5403 = vmatpush1.xpose.msra.mxu0 0.0
      %5404 = vmatprep.subr.mxu0 0.0
      %5405 = vmatpush1.xpose.msra.mxu0 0.0
      %5406 = vmatprep.subr.mxu0 0.0
      %5407 = vmatpush1.xpose.msra.mxu0 0.0
      %5408 = vmatprep.mubr.f32.mxu0 0.0
      %v5409 = vand.u32 %v5113, 4294901760
      %v5410 = vsub.f32 %v5113, %v5409
      %v5411 = vand.u32 %v5410, 4294901760
      %5412 = vmatmul.mubr.f32.gmra.mrb[0].mxu0 %v5411
      %v5413 = vpop.f32.mrb[0].mxu0
      %v5414 = vadd.f32 %v5340, %v5413
      %v5415 = vpop.f32.mrb[0].mxu0
      %5416 = vdwg.mxu0
      %5417 = vmatprep.subr.mxu0 0.0
      %v5418 = vand.u32 %v5115, 4294901760
      %v5419 = vsub.f32 %v5115, %v5418
      %v5420 = vand.u32 %v5419, 4294901760
      %5421 = vmatpush1.xpose.msra.mxu0 %v5420
      %5422 = vmatprep.subr.mxu0 0.0
      %5423 = vmatpush1.xpose.msra.mxu0 0.0
      %5424 = vmatprep.subr.mxu0 0.0
      %5425 = vmatpush1.xpose.msra.mxu0 0.0
      %5426 = vmatprep.subr.mxu0 0.0
      %5427 = vmatpush1.xpose.msra.mxu0 0.0
      %5428 = vmatprep.subr.mxu0 0.0
      %5429 = vmatpush1.xpose.msra.mxu0 0.0
      %5430 = vmatprep.subr.mxu0 0.0
      %5431 = vmatpush1.xpose.msra.mxu0 0.0
      %5432 = vmatprep.subr.mxu0 0.0
      %5433 = vmatpush1.xpose.msra.mxu0 0.0
      %5434 = vmatprep.subr.mxu0 0.0
      %5435 = vmatpush1.xpose.msra.mxu0 0.0
      %5436 = vmatprep.subr.mxu0 0.0
      %5437 = vmatpush1.xpose.msra.mxu0 0.0
      %5438 = vmatprep.subr.mxu0 0.0
      %5439 = vmatpush1.xpose.msra.mxu0 0.0
      %5440 = vmatprep.subr.mxu0 0.0
      %5441 = vmatpush1.xpose.msra.mxu0 0.0
      %5442 = vmatprep.subr.mxu0 0.0
      %5443 = vmatpush1.xpose.msra.mxu0 0.0
      %5444 = vmatprep.subr.mxu0 0.0
      %5445 = vmatpush1.xpose.msra.mxu0 0.0
      %5446 = vmatprep.subr.mxu0 0.0
      %5447 = vmatpush1.xpose.msra.mxu0 0.0
      %5448 = vmatprep.subr.mxu0 0.0
      %5449 = vmatpush1.xpose.msra.mxu0 0.0
      %5450 = vmatprep.subr.mxu0 0.0
      %5451 = vmatpush1.xpose.msra.mxu0 0.0
      %5452 = vmatprep.subr.mxu0 0.0
      %5453 = vmatpush1.xpose.msra.mxu0 0.0
      %5454 = vmatprep.subr.mxu0 0.0
      %5455 = vmatpush1.xpose.msra.mxu0 0.0
      %5456 = vmatprep.subr.mxu0 0.0
      %5457 = vmatpush1.xpose.msra.mxu0 0.0
      %5458 = vmatprep.subr.mxu0 0.0
      %5459 = vmatpush1.xpose.msra.mxu0 0.0
      %5460 = vmatprep.subr.mxu0 0.0
      %5461 = vmatpush1.xpose.msra.mxu0 0.0
      %5462 = vmatprep.subr.mxu0 0.0
      %5463 = vmatpush1.xpose.msra.mxu0 0.0
      %5464 = vmatprep.subr.mxu0 0.0
      %5465 = vmatpush1.xpose.msra.mxu0 0.0
      %5466 = vmatprep.subr.mxu0 0.0
      %5467 = vmatpush1.xpose.msra.mxu0 0.0
      %5468 = vmatprep.subr.mxu0 0.0
      %5469 = vmatpush1.xpose.msra.mxu0 0.0
      %5470 = vmatprep.subr.mxu0 0.0
      %5471 = vmatpush1.xpose.msra.mxu0 0.0
      %5472 = vmatprep.subr.mxu0 0.0
      %5473 = vmatpush1.xpose.msra.mxu0 0.0
      %5474 = vmatprep.subr.mxu0 0.0
      %5475 = vmatpush1.xpose.msra.mxu0 0.0
      %5476 = vmatprep.subr.mxu0 0.0
      %5477 = vmatpush1.xpose.msra.mxu0 0.0
      %5478 = vmatprep.subr.mxu0 0.0
      %5479 = vmatpush1.xpose.msra.mxu0 0.0
      %5480 = vmatprep.subr.mxu0 0.0
      %5481 = vmatpush1.xpose.msra.mxu0 0.0
      %5482 = vmatprep.subr.mxu0 0.0
      %5483 = vmatpush1.xpose.msra.mxu0 0.0
      %5484 = vmatprep.mubr.f32.mxu0 0.0
      %v5485 = vand.u32 %v5113, 4294901760
      %5486 = vmatmul.mubr.f32.gmra.mrb[0].mxu0 %v5485
      %v5487 = vpop.f32.mrb[0].mxu0
      %v5488 = vadd.f32 %v5414, %v5487
      %v5489 = vpop.f32.mrb[0].mxu0
      %5490 = vdwg.mxu0
      %5491 = vmatprep.subr.mxu0 0.0
      %v5492 = vand.u32 %v5115, 4294901760
      %5493 = vmatpush1.xpose.msra.mxu0 %v5492
      %5494 = vmatprep.subr.mxu0 0.0
      %5495 = vmatpush1.xpose.msra.mxu0 0.0
      %5496 = vmatprep.subr.mxu0 0.0
      %5497 = vmatpush1.xpose.msra.mxu0 0.0
      %5498 = vmatprep.subr.mxu0 0.0
      %5499 = vmatpush1.xpose.msra.mxu0 0.0
      %5500 = vmatprep.subr.mxu0 0.0
      %5501 = vmatpush1.xpose.msra.mxu0 0.0
      %5502 = vmatprep.subr.mxu0 0.0
      %5503 = vmatpush1.xpose.msra.mxu0 0.0
      %5504 = vmatprep.subr.mxu0 0.0
      %5505 = vmatpush1.xpose.msra.mxu0 0.0
      %5506 = vmatprep.subr.mxu0 0.0
      %5507 = vmatpush1.xpose.msra.mxu0 0.0
      %5508 = vmatprep.subr.mxu0 0.0
      %5509 = vmatpush1.xpose.msra.mxu0 0.0
      %5510 = vmatprep.subr.mxu0 0.0
      %5511 = vmatpush1.xpose.msra.mxu0 0.0
      %5512 = vmatprep.subr.mxu0 0.0
      %5513 = vmatpush1.xpose.msra.mxu0 0.0
      %5514 = vmatprep.subr.mxu0 0.0
      %5515 = vmatpush1.xpose.msra.mxu0 0.0
      %5516 = vmatprep.subr.mxu0 0.0
      %5517 = vmatpush1.xpose.msra.mxu0 0.0
      %5518 = vmatprep.subr.mxu0 0.0
      %5519 = vmatpush1.xpose.msra.mxu0 0.0
      %5520 = vmatprep.subr.mxu0 0.0
      %5521 = vmatpush1.xpose.msra.mxu0 0.0
      %5522 = vmatprep.subr.mxu0 0.0
      %5523 = vmatpush1.xpose.msra.mxu0 0.0
      %5524 = vmatprep.subr.mxu0 0.0
      %5525 = vmatpush1.xpose.msra.mxu0 0.0
      %5526 = vmatprep.subr.mxu0 0.0
      %5527 = vmatpush1.xpose.msra.mxu0 0.0
      %5528 = vmatprep.subr.mxu0 0.0
      %5529 = vmatpush1.xpose.msra.mxu0 0.0
      %5530 = vmatprep.subr.mxu0 0.0
      %5531 = vmatpush1.xpose.msra.mxu0 0.0
      %5532 = vmatprep.subr.mxu0 0.0
      %5533 = vmatpush1.xpose.msra.mxu0 0.0
      %5534 = vmatprep.subr.mxu0 0.0
      %5535 = vmatpush1.xpose.msra.mxu0 0.0
      %5536 = vmatprep.subr.mxu0 0.0
      %5537 = vmatpush1.xpose.msra.mxu0 0.0
      %5538 = vmatprep.subr.mxu0 0.0
      %5539 = vmatpush1.xpose.msra.mxu0 0.0
      %5540 = vmatprep.subr.mxu0 0.0
      %5541 = vmatpush1.xpose.msra.mxu0 0.0
      %5542 = vmatprep.subr.mxu0 0.0
      %5543 = vmatpush1.xpose.msra.mxu0 0.0
      %5544 = vmatprep.subr.mxu0 0.0
      %5545 = vmatpush1.xpose.msra.mxu0 0.0
      %5546 = vmatprep.subr.mxu0 0.0
      %5547 = vmatpush1.xpose.msra.mxu0 0.0
      %5548 = vmatprep.subr.mxu0 0.0
      %5549 = vmatpush1.xpose.msra.mxu0 0.0
      %5550 = vmatprep.subr.mxu0 0.0
      %5551 = vmatpush1.xpose.msra.mxu0 0.0
      %5552 = vmatprep.subr.mxu0 0.0
      %5553 = vmatpush1.xpose.msra.mxu0 0.0
      %5554 = vmatprep.subr.mxu0 0.0
      %5555 = vmatpush1.xpose.msra.mxu0 0.0
      %5556 = vmatprep.mubr.f32.mxu0 0.0
      %v5557 = vand.u32 %v5113, 4294901760
      %5558 = vmatmul.mubr.f32.gmra.mrb[0].mxu0 %v5557
      %v5559 = vpop.f32.mrb[0].mxu0
      %v5560 = vadd.f32 %v5488, %v5559
      %v5561 = vpop.f32.mrb[0].mxu0
      %5562 = vdwg.mxu0
      %v5567 = vrot.slane %v3229, 7
      %v5568 = vsel %vm3259, %v5567, %v3227
      %v5569 = vrot.slane %v3231, 6
      %v5570 = vsel %vm3262, %v5569, %v5568
      %v5571 = vrot.slane %v3233, 5
      %v5572 = vsel %vm3265, %v5571, %v5570
      %v5574 = vsel %vm3267, %v3225, 0
      %v5576 = vsel %vm3267, %v5572, 0
      %5578 = vmatprep.subr.mxu0 0.0
      %v5579 = vand.u32 %v5576, 4294901760
      %5580 = vmatpush1.xpose.msra.mxu0 %v5579
      %5581 = vmatprep.subr.mxu0 0.0
      %5582 = vmatpush1.xpose.msra.mxu0 0.0
      %5583 = vmatprep.subr.mxu0 0.0
      %5584 = vmatpush1.xpose.msra.mxu0 0.0
      %5585 = vmatprep.subr.mxu0 0.0
      %5586 = vmatpush1.xpose.msra.mxu0 0.0
      %5587 = vmatprep.subr.mxu0 0.0
      %5588 = vmatpush1.xpose.msra.mxu0 0.0
      %5589 = vmatprep.subr.mxu0 0.0
      %5590 = vmatpush1.xpose.msra.mxu0 0.0
      %5591 = vmatprep.subr.mxu0 0.0
      %5592 = vmatpush1.xpose.msra.mxu0 0.0
      %5593 = vmatprep.subr.mxu0 0.0
      %5594 = vmatpush1.xpose.msra.mxu0 0.0
      %5595 = vmatprep.subr.mxu0 0.0
      %5596 = vmatpush1.xpose.msra.mxu0 0.0
      %5597 = vmatprep.subr.mxu0 0.0
      %5598 = vmatpush1.xpose.msra.mxu0 0.0
      %5599 = vmatprep.subr.mxu0 0.0
      %5600 = vmatpush1.xpose.msra.mxu0 0.0
      %5601 = vmatprep.subr.mxu0 0.0
      %5602 = vmatpush1.xpose.msra.mxu0 0.0
      %5603 = vmatprep.subr.mxu0 0.0
      %5604 = vmatpush1.xpose.msra.mxu0 0.0
      %5605 = vmatprep.subr.mxu0 0.0
      %5606 = vmatpush1.xpose.msra.mxu0 0.0
      %5607 = vmatprep.subr.mxu0 0.0
      %5608 = vmatpush1.xpose.msra.mxu0 0.0
      %5609 = vmatprep.subr.mxu0 0.0
      %5610 = vmatpush1.xpose.msra.mxu0 0.0
      %5611 = vmatprep.subr.mxu0 0.0
      %5612 = vmatpush1.xpose.msra.mxu0 0.0
      %5613 = vmatprep.subr.mxu0 0.0
      %5614 = vmatpush1.xpose.msra.mxu0 0.0
      %5615 = vmatprep.subr.mxu0 0.0
      %5616 = vmatpush1.xpose.msra.mxu0 0.0
      %5617 = vmatprep.subr.mxu0 0.0
      %5618 = vmatpush1.xpose.msra.mxu0 0.0
      %5619 = vmatprep.subr.mxu0 0.0
      %5620 = vmatpush1.xpose.msra.mxu0 0.0
      %5621 = vmatprep.subr.mxu0 0.0
      %5622 = vmatpush1.xpose.msra.mxu0 0.0
      %5623 = vmatprep.subr.mxu0 0.0
      %5624 = vmatpush1.xpose.msra.mxu0 0.0
      %5625 = vmatprep.subr.mxu0 0.0
      %5626 = vmatpush1.xpose.msra.mxu0 0.0
      %5627 = vmatprep.subr.mxu0 0.0
      %5628 = vmatpush1.xpose.msra.mxu0 0.0
      %5629 = vmatprep.subr.mxu0 0.0
      %5630 = vmatpush1.xpose.msra.mxu0 0.0
      %5631 = vmatprep.subr.mxu0 0.0
      %5632 = vmatpush1.xpose.msra.mxu0 0.0
      %5633 = vmatprep.subr.mxu0 0.0
      %5634 = vmatpush1.xpose.msra.mxu0 0.0
      %5635 = vmatprep.subr.mxu0 0.0
      %5636 = vmatpush1.xpose.msra.mxu0 0.0
      %5637 = vmatprep.subr.mxu0 0.0
      %5638 = vmatpush1.xpose.msra.mxu0 0.0
      %5639 = vmatprep.subr.mxu0 0.0
      %5640 = vmatpush1.xpose.msra.mxu0 0.0
      %5641 = vmatprep.subr.mxu0 0.0
      %5642 = vmatpush1.xpose.msra.mxu0 0.0
      %5643 = vmatprep.mubr.f32.mxu0 0.0
      %v5644 = vand.u32 %v5574, 4294901760
      %v5645 = vsub.f32 %v5574, %v5644
      %v5646 = vand.u32 %v5645, 4294901760
      %v5647 = vsub.f32 %v5645, %v5646
      %v5648 = vand.u32 %v5647, 4294901760
      %5649 = vmatmul.mubr.f32.gmra.mrb[0].mxu0 %v5648
      %v5650 = vpop.f32.mrb[0].mxu0
      %v5651 = vadd.f32 0.0, %v5650
      %v5652 = vpop.f32.mrb[0].mxu0
      %5653 = vdwg.mxu0
      %5654 = vmatprep.subr.mxu0 0.0
      %v5655 = vand.u32 %v5576, 4294901760
      %v5656 = vsub.f32 %v5576, %v5655
      %v5657 = vand.u32 %v5656, 4294901760
      %v5658 = vsub.f32 %v5656, %v5657
      %v5659 = vand.u32 %v5658, 4294901760
      %5660 = vmatpush1.xpose.msra.mxu0 %v5659
      %5661 = vmatprep.subr.mxu0 0.0
      %5662 = vmatpush1.xpose.msra.mxu0 0.0
      %5663 = vmatprep.subr.mxu0 0.0
      %5664 = vmatpush1.xpose.msra.mxu0 0.0
      %5665 = vmatprep.subr.mxu0 0.0
      %5666 = vmatpush1.xpose.msra.mxu0 0.0
      %5667 = vmatprep.subr.mxu0 0.0
      %5668 = vmatpush1.xpose.msra.mxu0 0.0
      %5669 = vmatprep.subr.mxu0 0.0
      %5670 = vmatpush1.xpose.msra.mxu0 0.0
      %5671 = vmatprep.subr.mxu0 0.0
      %5672 = vmatpush1.xpose.msra.mxu0 0.0
      %5673 = vmatprep.subr.mxu0 0.0
      %5674 = vmatpush1.xpose.msra.mxu0 0.0
      %5675 = vmatprep.subr.mxu0 0.0
      %5676 = vmatpush1.xpose.msra.mxu0 0.0
      %5677 = vmatprep.subr.mxu0 0.0
      %5678 = vmatpush1.xpose.msra.mxu0 0.0
      %5679 = vmatprep.subr.mxu0 0.0
      %5680 = vmatpush1.xpose.msra.mxu0 0.0
      %5681 = vmatprep.subr.mxu0 0.0
      %5682 = vmatpush1.xpose.msra.mxu0 0.0
      %5683 = vmatprep.subr.mxu0 0.0
      %5684 = vmatpush1.xpose.msra.mxu0 0.0
      %5685 = vmatprep.subr.mxu0 0.0
      %5686 = vmatpush1.xpose.msra.mxu0 0.0
      %5687 = vmatprep.subr.mxu0 0.0
      %5688 = vmatpush1.xpose.msra.mxu0 0.0
      %5689 = vmatprep.subr.mxu0 0.0
      %5690 = vmatpush1.xpose.msra.mxu0 0.0
      %5691 = vmatprep.subr.mxu0 0.0
      %5692 = vmatpush1.xpose.msra.mxu0 0.0
      %5693 = vmatprep.subr.mxu0 0.0
      %5694 = vmatpush1.xpose.msra.mxu0 0.0
      %5695 = vmatprep.subr.mxu0 0.0
      %5696 = vmatpush1.xpose.msra.mxu0 0.0
      %5697 = vmatprep.subr.mxu0 0.0
      %5698 = vmatpush1.xpose.msra.mxu0 0.0
      %5699 = vmatprep.subr.mxu0 0.0
      %5700 = vmatpush1.xpose.msra.mxu0 0.0
      %5701 = vmatprep.subr.mxu0 0.0
      %5702 = vmatpush1.xpose.msra.mxu0 0.0
      %5703 = vmatprep.subr.mxu0 0.0
      %5704 = vmatpush1.xpose.msra.mxu0 0.0
      %5705 = vmatprep.subr.mxu0 0.0
      %5706 = vmatpush1.xpose.msra.mxu0 0.0
      %5707 = vmatprep.subr.mxu0 0.0
      %5708 = vmatpush1.xpose.msra.mxu0 0.0
      %5709 = vmatprep.subr.mxu0 0.0
      %5710 = vmatpush1.xpose.msra.mxu0 0.0
      %5711 = vmatprep.subr.mxu0 0.0
      %5712 = vmatpush1.xpose.msra.mxu0 0.0
      %5713 = vmatprep.subr.mxu0 0.0
      %5714 = vmatpush1.xpose.msra.mxu0 0.0
      %5715 = vmatprep.subr.mxu0 0.0
      %5716 = vmatpush1.xpose.msra.mxu0 0.0
      %5717 = vmatprep.subr.mxu0 0.0
      %5718 = vmatpush1.xpose.msra.mxu0 0.0
      %5719 = vmatprep.subr.mxu0 0.0
      %5720 = vmatpush1.xpose.msra.mxu0 0.0
      %5721 = vmatprep.subr.mxu0 0.0
      %5722 = vmatpush1.xpose.msra.mxu0 0.0
      %5723 = vmatprep.mubr.f32.mxu0 0.0
      %v5724 = vand.u32 %v5574, 4294901760
      %5725 = vmatmul.mubr.f32.gmra.mrb[0].mxu0 %v5724
      %v5726 = vpop.f32.mrb[0].mxu0
      %v5727 = vadd.f32 %v5651, %v5726
      %v5728 = vpop.f32.mrb[0].mxu0
      %5729 = vdwg.mxu0
      %5730 = vmatprep.subr.mxu0 0.0
      %v5731 = vand.u32 %v5576, 4294901760
      %v5732 = vsub.f32 %v5576, %v5731
      %5733 = vmatpush1.xpose.msra.mxu0 %v5732
      %5734 = vmatprep.subr.mxu0 0.0
      %5735 = vmatpush1.xpose.msra.mxu0 0.0
      %5736 = vmatprep.subr.mxu0 0.0
      %5737 = vmatpush1.xpose.msra.mxu0 0.0
      %5738 = vmatprep.subr.mxu0 0.0
      %5739 = vmatpush1.xpose.msra.mxu0 0.0
      %5740 = vmatprep.subr.mxu0 0.0
      %5741 = vmatpush1.xpose.msra.mxu0 0.0
      %5742 = vmatprep.subr.mxu0 0.0
      %5743 = vmatpush1.xpose.msra.mxu0 0.0
      %5744 = vmatprep.subr.mxu0 0.0
      %5745 = vmatpush1.xpose.msra.mxu0 0.0
      %5746 = vmatprep.subr.mxu0 0.0
      %5747 = vmatpush1.xpose.msra.mxu0 0.0
      %5748 = vmatprep.subr.mxu0 0.0
      %5749 = vmatpush1.xpose.msra.mxu0 0.0
      %5750 = vmatprep.subr.mxu0 0.0
      %5751 = vmatpush1.xpose.msra.mxu0 0.0
      %5752 = vmatprep.subr.mxu0 0.0
      %5753 = vmatpush1.xpose.msra.mxu0 0.0
      %5754 = vmatprep.subr.mxu0 0.0
      %5755 = vmatpush1.xpose.msra.mxu0 0.0
      %5756 = vmatprep.subr.mxu0 0.0
      %5757 = vmatpush1.xpose.msra.mxu0 0.0
      %5758 = vmatprep.subr.mxu0 0.0
      %5759 = vmatpush1.xpose.msra.mxu0 0.0
      %5760 = vmatprep.subr.mxu0 0.0
      %5761 = vmatpush1.xpose.msra.mxu0 0.0
      %5762 = vmatprep.subr.mxu0 0.0
      %5763 = vmatpush1.xpose.msra.mxu0 0.0
      %5764 = vmatprep.subr.mxu0 0.0
      %5765 = vmatpush1.xpose.msra.mxu0 0.0
      %5766 = vmatprep.subr.mxu0 0.0
      %5767 = vmatpush1.xpose.msra.mxu0 0.0
      %5768 = vmatprep.subr.mxu0 0.0
      %5769 = vmatpush1.xpose.msra.mxu0 0.0
      %5770 = vmatprep.subr.mxu0 0.0
      %5771 = vmatpush1.xpose.msra.mxu0 0.0
      %5772 = vmatprep.subr.mxu0 0.0
      %5773 = vmatpush1.xpose.msra.mxu0 0.0
      %5774 = vmatprep.subr.mxu0 0.0
      %5775 = vmatpush1.xpose.msra.mxu0 0.0
      %5776 = vmatprep.subr.mxu0 0.0
      %5777 = vmatpush1.xpose.msra.mxu0 0.0
      %5778 = vmatprep.subr.mxu0 0.0
      %5779 = vmatpush1.xpose.msra.mxu0 0.0
      %5780 = vmatprep.subr.mxu0 0.0
      %5781 = vmatpush1.xpose.msra.mxu0 0.0
      %5782 = vmatprep.subr.mxu0 0.0
      %5783 = vmatpush1.xpose.msra.mxu0 0.0
      %5784 = vmatprep.subr.mxu0 0.0
      %5785 = vmatpush1.xpose.msra.mxu0 0.0
      %5786 = vmatprep.subr.mxu0 0.0
      %5787 = vmatpush1.xpose.msra.mxu0 0.0
      %5788 = vmatprep.subr.mxu0 0.0
      %5789 = vmatpush1.xpose.msra.mxu0 0.0
      %5790 = vmatprep.subr.mxu0 0.0
      %5791 = vmatpush1.xpose.msra.mxu0 0.0
      %5792 = vmatprep.subr.mxu0 0.0
      %5793 = vmatpush1.xpose.msra.mxu0 0.0
      %5794 = vmatprep.subr.mxu0 0.0
      %5795 = vmatpush1.xpose.msra.mxu0 0.0
      %5796 = vmatprep.mubr.f32.mxu0 0.0
      %v5797 = vand.u32 %v5574, 4294901760
      %v5798 = vsub.f32 %v5574, %v5797
      %5799 = vmatmul.mubr.f32.gmra.mrb[0].mxu0 %v5798
      %v5800 = vpop.f32.mrb[0].mxu0
      %v5801 = vadd.f32 %v5727, %v5800
      %v5802 = vpop.f32.mrb[0].mxu0
      %5803 = vdwg.mxu0
      %5804 = vmatprep.subr.mxu0 0.0
      %v5805 = vand.u32 %v5576, 4294901760
      %5806 = vmatpush1.xpose.msra.mxu0 %v5805
      %5807 = vmatprep.subr.mxu0 0.0
      %5808 = vmatpush1.xpose.msra.mxu0 0.0
      %5809 = vmatprep.subr.mxu0 0.0
      %5810 = vmatpush1.xpose.msra.mxu0 0.0
      %5811 = vmatprep.subr.mxu0 0.0
      %5812 = vmatpush1.xpose.msra.mxu0 0.0
      %5813 = vmatprep.subr.mxu0 0.0
      %5814 = vmatpush1.xpose.msra.mxu0 0.0
      %5815 = vmatprep.subr.mxu0 0.0
      %5816 = vmatpush1.xpose.msra.mxu0 0.0
      %5817 = vmatprep.subr.mxu0 0.0
      %5818 = vmatpush1.xpose.msra.mxu0 0.0
      %5819 = vmatprep.subr.mxu0 0.0
      %5820 = vmatpush1.xpose.msra.mxu0 0.0
      %5821 = vmatprep.subr.mxu0 0.0
      %5822 = vmatpush1.xpose.msra.mxu0 0.0
      %5823 = vmatprep.subr.mxu0 0.0
      %5824 = vmatpush1.xpose.msra.mxu0 0.0
      %5825 = vmatprep.subr.mxu0 0.0
      %5826 = vmatpush1.xpose.msra.mxu0 0.0
      %5827 = vmatprep.subr.mxu0 0.0
      %5828 = vmatpush1.xpose.msra.mxu0 0.0
      %5829 = vmatprep.subr.mxu0 0.0
      %5830 = vmatpush1.xpose.msra.mxu0 0.0
      %5831 = vmatprep.subr.mxu0 0.0
      %5832 = vmatpush1.xpose.msra.mxu0 0.0
      %5833 = vmatprep.subr.mxu0 0.0
      %5834 = vmatpush1.xpose.msra.mxu0 0.0
      %5835 = vmatprep.subr.mxu0 0.0
      %5836 = vmatpush1.xpose.msra.mxu0 0.0
      %5837 = vmatprep.subr.mxu0 0.0
      %5838 = vmatpush1.xpose.msra.mxu0 0.0
      %5839 = vmatprep.subr.mxu0 0.0
      %5840 = vmatpush1.xpose.msra.mxu0 0.0
      %5841 = vmatprep.subr.mxu0 0.0
      %5842 = vmatpush1.xpose.msra.mxu0 0.0
      %5843 = vmatprep.subr.mxu0 0.0
      %5844 = vmatpush1.xpose.msra.mxu0 0.0
      %5845 = vmatprep.subr.mxu0 0.0
      %5846 = vmatpush1.xpose.msra.mxu0 0.0
      %5847 = vmatprep.subr.mxu0 0.0
      %5848 = vmatpush1.xpose.msra.mxu0 0.0
      %5849 = vmatprep.subr.mxu0 0.0
      %5850 = vmatpush1.xpose.msra.mxu0 0.0
      %5851 = vmatprep.subr.mxu0 0.0
      %5852 = vmatpush1.xpose.msra.mxu0 0.0
      %5853 = vmatprep.subr.mxu0 0.0
      %5854 = vmatpush1.xpose.msra.mxu0 0.0
      %5855 = vmatprep.subr.mxu0 0.0
      %5856 = vmatpush1.xpose.msra.mxu0 0.0
      %5857 = vmatprep.subr.mxu0 0.0
      %5858 = vmatpush1.xpose.msra.mxu0 0.0
      %5859 = vmatprep.subr.mxu0 0.0
      %5860 = vmatpush1.xpose.msra.mxu0 0.0
      %5861 = vmatprep.subr.mxu0 0.0
      %5862 = vmatpush1.xpose.msra.mxu0 0.0
      %5863 = vmatprep.subr.mxu0 0.0
      %5864 = vmatpush1.xpose.msra.mxu0 0.0
      %5865 = vmatprep.subr.mxu0 0.0
      %5866 = vmatpush1.xpose.msra.mxu0 0.0
      %5867 = vmatprep.subr.mxu0 0.0
      %5868 = vmatpush1.xpose.msra.mxu0 0.0
      %5869 = vmatprep.mubr.f32.mxu0 0.0
      %v5870 = vand.u32 %v5574, 4294901760
      %v5871 = vsub.f32 %v5574, %v5870
      %v5872 = vand.u32 %v5871, 4294901760
      %5873 = vmatmul.mubr.f32.gmra.mrb[0].mxu0 %v5872
      %v5874 = vpop.f32.mrb[0].mxu0
      %v5875 = vadd.f32 %v5801, %v5874
      %v5876 = vpop.f32.mrb[0].mxu0
      %5877 = vdwg.mxu0
      %5878 = vmatprep.subr.mxu0 0.0
      %v5879 = vand.u32 %v5576, 4294901760
      %v5880 = vsub.f32 %v5576, %v5879
      %v5881 = vand.u32 %v5880, 4294901760
      %5882 = vmatpush1.xpose.msra.mxu0 %v5881
      %5883 = vmatprep.subr.mxu0 0.0
      %5884 = vmatpush1.xpose.msra.mxu0 0.0
      %5885 = vmatprep.subr.mxu0 0.0
      %5886 = vmatpush1.xpose.msra.mxu0 0.0
      %5887 = vmatprep.subr.mxu0 0.0
      %5888 = vmatpush1.xpose.msra.mxu0 0.0
      %5889 = vmatprep.subr.mxu0 0.0
      %5890 = vmatpush1.xpose.msra.mxu0 0.0
      %5891 = vmatprep.subr.mxu0 0.0
      %5892 = vmatpush1.xpose.msra.mxu0 0.0
      %5893 = vmatprep.subr.mxu0 0.0
      %5894 = vmatpush1.xpose.msra.mxu0 0.0
      %5895 = vmatprep.subr.mxu0 0.0
      %5896 = vmatpush1.xpose.msra.mxu0 0.0
      %5897 = vmatprep.subr.mxu0 0.0
      %5898 = vmatpush1.xpose.msra.mxu0 0.0
      %5899 = vmatprep.subr.mxu0 0.0
      %5900 = vmatpush1.xpose.msra.mxu0 0.0
      %5901 = vmatprep.subr.mxu0 0.0
      %5902 = vmatpush1.xpose.msra.mxu0 0.0
      %5903 = vmatprep.subr.mxu0 0.0
      %5904 = vmatpush1.xpose.msra.mxu0 0.0
      %5905 = vmatprep.subr.mxu0 0.0
      %5906 = vmatpush1.xpose.msra.mxu0 0.0
      %5907 = vmatprep.subr.mxu0 0.0
      %5908 = vmatpush1.xpose.msra.mxu0 0.0
      %5909 = vmatprep.subr.mxu0 0.0
      %5910 = vmatpush1.xpose.msra.mxu0 0.0
      %5911 = vmatprep.subr.mxu0 0.0
      %5912 = vmatpush1.xpose.msra.mxu0 0.0
      %5913 = vmatprep.subr.mxu0 0.0
      %5914 = vmatpush1.xpose.msra.mxu0 0.0
      %5915 = vmatprep.subr.mxu0 0.0
      %5916 = vmatpush1.xpose.msra.mxu0 0.0
      %5917 = vmatprep.subr.mxu0 0.0
      %5918 = vmatpush1.xpose.msra.mxu0 0.0
      %5919 = vmatprep.subr.mxu0 0.0
      %5920 = vmatpush1.xpose.msra.mxu0 0.0
      %5921 = vmatprep.subr.mxu0 0.0
      %5922 = vmatpush1.xpose.msra.mxu0 0.0
      %5923 = vmatprep.subr.mxu0 0.0
      %5924 = vmatpush1.xpose.msra.mxu0 0.0
      %5925 = vmatprep.subr.mxu0 0.0
      %5926 = vmatpush1.xpose.msra.mxu0 0.0
      %5927 = vmatprep.subr.mxu0 0.0
      %5928 = vmatpush1.xpose.msra.mxu0 0.0
      %5929 = vmatprep.subr.mxu0 0.0
      %5930 = vmatpush1.xpose.msra.mxu0 0.0
      %5931 = vmatprep.subr.mxu0 0.0
      %5932 = vmatpush1.xpose.msra.mxu0 0.0
      %5933 = vmatprep.subr.mxu0 0.0
      %5934 = vmatpush1.xpose.msra.mxu0 0.0
      %5935 = vmatprep.subr.mxu0 0.0
      %5936 = vmatpush1.xpose.msra.mxu0 0.0
      %5937 = vmatprep.subr.mxu0 0.0
      %5938 = vmatpush1.xpose.msra.mxu0 0.0
      %5939 = vmatprep.subr.mxu0 0.0
      %5940 = vmatpush1.xpose.msra.mxu0 0.0
      %5941 = vmatprep.subr.mxu0 0.0
      %5942 = vmatpush1.xpose.msra.mxu0 0.0
      %5943 = vmatprep.subr.mxu0 0.0
      %5944 = vmatpush1.xpose.msra.mxu0 0.0
      %5945 = vmatprep.mubr.f32.mxu0 0.0
      %v5946 = vand.u32 %v5574, 4294901760
      %5947 = vmatmul.mubr.f32.gmra.mrb[0].mxu0 %v5946
      %v5948 = vpop.f32.mrb[0].mxu0
      %v5949 = vadd.f32 %v5875, %v5948
      %v5950 = vpop.f32.mrb[0].mxu0
      %5951 = vdwg.mxu0
      %5952 = vmatprep.subr.mxu0 0.0
      %v5953 = vand.u32 %v5576, 4294901760
      %5954 = vmatpush1.xpose.msra.mxu0 %v5953
      %5955 = vmatprep.subr.mxu0 0.0
      %5956 = vmatpush1.xpose.msra.mxu0 0.0
      %5957 = vmatprep.subr.mxu0 0.0
      %5958 = vmatpush1.xpose.msra.mxu0 0.0
      %5959 = vmatprep.subr.mxu0 0.0
      %5960 = vmatpush1.xpose.msra.mxu0 0.0
      %5961 = vmatprep.subr.mxu0 0.0
      %5962 = vmatpush1.xpose.msra.mxu0 0.0
      %5963 = vmatprep.subr.mxu0 0.0
      %5964 = vmatpush1.xpose.msra.mxu0 0.0
      %5965 = vmatprep.subr.mxu0 0.0
      %5966 = vmatpush1.xpose.msra.mxu0 0.0
      %5967 = vmatprep.subr.mxu0 0.0
      %5968 = vmatpush1.xpose.msra.mxu0 0.0
      %5969 = vmatprep.subr.mxu0 0.0
      %5970 = vmatpush1.xpose.msra.mxu0 0.0
      %5971 = vmatprep.subr.mxu0 0.0
      %5972 = vmatpush1.xpose.msra.mxu0 0.0
      %5973 = vmatprep.subr.mxu0 0.0
      %5974 = vmatpush1.xpose.msra.mxu0 0.0
      %5975 = vmatprep.subr.mxu0 0.0
      %5976 = vmatpush1.xpose.msra.mxu0 0.0
      %5977 = vmatprep.subr.mxu0 0.0
      %5978 = vmatpush1.xpose.msra.mxu0 0.0
      %5979 = vmatprep.subr.mxu0 0.0
      %5980 = vmatpush1.xpose.msra.mxu0 0.0
      %5981 = vmatprep.subr.mxu0 0.0
      %5982 = vmatpush1.xpose.msra.mxu0 0.0
      %5983 = vmatprep.subr.mxu0 0.0
      %5984 = vmatpush1.xpose.msra.mxu0 0.0
      %5985 = vmatprep.subr.mxu0 0.0
      %5986 = vmatpush1.xpose.msra.mxu0 0.0
      %5987 = vmatprep.subr.mxu0 0.0
      %5988 = vmatpush1.xpose.msra.mxu0 0.0
      %5989 = vmatprep.subr.mxu0 0.0
      %5990 = vmatpush1.xpose.msra.mxu0 0.0
      %5991 = vmatprep.subr.mxu0 0.0
      %5992 = vmatpush1.xpose.msra.mxu0 0.0
      %5993 = vmatprep.subr.mxu0 0.0
      %5994 = vmatpush1.xpose.msra.mxu0 0.0
      %5995 = vmatprep.subr.mxu0 0.0
      %5996 = vmatpush1.xpose.msra.mxu0 0.0
      %5997 = vmatprep.subr.mxu0 0.0
      %5998 = vmatpush1.xpose.msra.mxu0 0.0
      %5999 = vmatprep.subr.mxu0 0.0
      %6000 = vmatpush1.xpose.msra.mxu0 0.0
      %6001 = vmatprep.subr.mxu0 0.0
      %6002 = vmatpush1.xpose.msra.mxu0 0.0
      %6003 = vmatprep.subr.mxu0 0.0
      %6004 = vmatpush1.xpose.msra.mxu0 0.0
      %6005 = vmatprep.subr.mxu0 0.0
      %6006 = vmatpush1.xpose.msra.mxu0 0.0
      %6007 = vmatprep.subr.mxu0 0.0
      %6008 = vmatpush1.xpose.msra.mxu0 0.0
      %6009 = vmatprep.subr.mxu0 0.0
      %6010 = vmatpush1.xpose.msra.mxu0 0.0
      %6011 = vmatprep.subr.mxu0 0.0
      %6012 = vmatpush1.xpose.msra.mxu0 0.0
      %6013 = vmatprep.subr.mxu0 0.0
      %6014 = vmatpush1.xpose.msra.mxu0 0.0
      %6015 = vmatprep.subr.mxu0 0.0
      %6016 = vmatpush1.xpose.msra.mxu0 0.0
      %6017 = vmatprep.mubr.f32.mxu0 0.0
      %v6018 = vand.u32 %v5574, 4294901760
      %6019 = vmatmul.mubr.f32.gmra.mrb[0].mxu0 %v6018
      %v6020 = vpop.f32.mrb[0].mxu0
      %v6021 = vadd.f32 %v5949, %v6020
      %v6022 = vpop.f32.mrb[0].mxu0
      %6023 = vdwg.mxu0
      %v6028 = vrot.slane %v3239, 7
      %v6029 = vsel %vm3259, %v6028, %v3237
      %v6030 = vrot.slane %v3241, 6
      %v6031 = vsel %vm3262, %v6030, %v6029
      %v6032 = vrot.slane %v3243, 5
      %v6033 = vsel %vm3265, %v6032, %v6031
      %v6035 = vsel %vm3267, %v3235, 0
      %v6037 = vsel %vm3267, %v6033, 0
      %6039 = vmatprep.subr.mxu0 0.0
      %v6040 = vand.u32 %v6037, 4294901760
      %6041 = vmatpush1.xpose.msra.mxu0 %v6040
      %6042 = vmatprep.subr.mxu0 0.0
      %6043 = vmatpush1.xpose.msra.mxu0 0.0
      %6044 = vmatprep.subr.mxu0 0.0
      %6045 = vmatpush1.xpose.msra.mxu0 0.0
      %6046 = vmatprep.subr.mxu0 0.0
      %6047 = vmatpush1.xpose.msra.mxu0 0.0
      %6048 = vmatprep.subr.mxu0 0.0
      %6049 = vmatpush1.xpose.msra.mxu0 0.0
      %6050 = vmatprep.subr.mxu0 0.0
      %6051 = vmatpush1.xpose.msra.mxu0 0.0
      %6052 = vmatprep.subr.mxu0 0.0
      %6053 = vmatpush1.xpose.msra.mxu0 0.0
      %6054 = vmatprep.subr.mxu0 0.0
      %6055 = vmatpush1.xpose.msra.mxu0 0.0
      %6056 = vmatprep.subr.mxu0 0.0
      %6057 = vmatpush1.xpose.msra.mxu0 0.0
      %6058 = vmatprep.subr.mxu0 0.0
      %6059 = vmatpush1.xpose.msra.mxu0 0.0
      %6060 = vmatprep.subr.mxu0 0.0
      %6061 = vmatpush1.xpose.msra.mxu0 0.0
      %6062 = vmatprep.subr.mxu0 0.0
      %6063 = vmatpush1.xpose.msra.mxu0 0.0
      %6064 = vmatprep.subr.mxu0 0.0
      %6065 = vmatpush1.xpose.msra.mxu0 0.0
      %6066 = vmatprep.subr.mxu0 0.0
      %6067 = vmatpush1.xpose.msra.mxu0 0.0
      %6068 = vmatprep.subr.mxu0 0.0
      %6069 = vmatpush1.xpose.msra.mxu0 0.0
      %6070 = vmatprep.subr.mxu0 0.0
      %6071 = vmatpush1.xpose.msra.mxu0 0.0
      %6072 = vmatprep.subr.mxu0 0.0
      %6073 = vmatpush1.xpose.msra.mxu0 0.0
      %6074 = vmatprep.subr.mxu0 0.0
      %6075 = vmatpush1.xpose.msra.mxu0 0.0
      %6076 = vmatprep.subr.mxu0 0.0
      %6077 = vmatpush1.xpose.msra.mxu0 0.0
      %6078 = vmatprep.subr.mxu0 0.0
      %6079 = vmatpush1.xpose.msra.mxu0 0.0
      %6080 = vmatprep.subr.mxu0 0.0
      %6081 = vmatpush1.xpose.msra.mxu0 0.0
      %6082 = vmatprep.subr.mxu0 0.0
      %6083 = vmatpush1.xpose.msra.mxu0 0.0
      %6084 = vmatprep.subr.mxu0 0.0
      %6085 = vmatpush1.xpose.msra.mxu0 0.0
      %6086 = vmatprep.subr.mxu0 0.0
      %6087 = vmatpush1.xpose.msra.mxu0 0.0
      %6088 = vmatprep.subr.mxu0 0.0
      %6089 = vmatpush1.xpose.msra.mxu0 0.0
      %6090 = vmatprep.subr.mxu0 0.0
      %6091 = vmatpush1.xpose.msra.mxu0 0.0
      %6092 = vmatprep.subr.mxu0 0.0
      %6093 = vmatpush1.xpose.msra.mxu0 0.0
      %6094 = vmatprep.subr.mxu0 0.0
      %6095 = vmatpush1.xpose.msra.mxu0 0.0
      %6096 = vmatprep.subr.mxu0 0.0
      %6097 = vmatpush1.xpose.msra.mxu0 0.0
      %6098 = vmatprep.subr.mxu0 0.0
      %6099 = vmatpush1.xpose.msra.mxu0 0.0
      %6100 = vmatprep.subr.mxu0 0.0
      %6101 = vmatpush1.xpose.msra.mxu0 0.0
      %6102 = vmatprep.subr.mxu0 0.0
      %6103 = vmatpush1.xpose.msra.mxu0 0.0
      %6104 = vmatprep.mubr.f32.mxu0 0.0
      %v6105 = vand.u32 %v6035, 4294901760
      %v6106 = vsub.f32 %v6035, %v6105
      %v6107 = vand.u32 %v6106, 4294901760
      %v6108 = vsub.f32 %v6106, %v6107
      %v6109 = vand.u32 %v6108, 4294901760
      %6110 = vmatmul.mubr.f32.gmra.mrb[0].mxu0 %v6109
      %v6111 = vpop.f32.mrb[0].mxu0
      %v6112 = vadd.f32 0.0, %v6111
      %v6113 = vpop.f32.mrb[0].mxu0
      %6114 = vdwg.mxu0
      %6115 = vmatprep.subr.mxu0 0.0
      %v6116 = vand.u32 %v6037, 4294901760
      %v6117 = vsub.f32 %v6037, %v6116
      %v6118 = vand.u32 %v6117, 4294901760
      %v6119 = vsub.f32 %v6117, %v6118
      %v6120 = vand.u32 %v6119, 4294901760
      %6121 = vmatpush1.xpose.msra.mxu0 %v6120
      %6122 = vmatprep.subr.mxu0 0.0
      %6123 = vmatpush1.xpose.msra.mxu0 0.0
      %6124 = vmatprep.subr.mxu0 0.0
      %6125 = vmatpush1.xpose.msra.mxu0 0.0
      %6126 = vmatprep.subr.mxu0 0.0
      %6127 = vmatpush1.xpose.msra.mxu0 0.0
      %6128 = vmatprep.subr.mxu0 0.0
      %6129 = vmatpush1.xpose.msra.mxu0 0.0
      %6130 = vmatprep.subr.mxu0 0.0
      %6131 = vmatpush1.xpose.msra.mxu0 0.0
      %6132 = vmatprep.subr.mxu0 0.0
      %6133 = vmatpush1.xpose.msra.mxu0 0.0
      %6134 = vmatprep.subr.mxu0 0.0
      %6135 = vmatpush1.xpose.msra.mxu0 0.0
      %6136 = vmatprep.subr.mxu0 0.0
      %6137 = vmatpush1.xpose.msra.mxu0 0.0
      %6138 = vmatprep.subr.mxu0 0.0
      %6139 = vmatpush1.xpose.msra.mxu0 0.0
      %6140 = vmatprep.subr.mxu0 0.0
      %6141 = vmatpush1.xpose.msra.mxu0 0.0
      %6142 = vmatprep.subr.mxu0 0.0
      %6143 = vmatpush1.xpose.msra.mxu0 0.0
      %6144 = vmatprep.subr.mxu0 0.0
      %6145 = vmatpush1.xpose.msra.mxu0 0.0
      %6146 = vmatprep.subr.mxu0 0.0
      %6147 = vmatpush1.xpose.msra.mxu0 0.0
      %6148 = vmatprep.subr.mxu0 0.0
      %6149 = vmatpush1.xpose.msra.mxu0 0.0
      %6150 = vmatprep.subr.mxu0 0.0
      %6151 = vmatpush1.xpose.msra.mxu0 0.0
      %6152 = vmatprep.subr.mxu0 0.0
      %6153 = vmatpush1.xpose.msra.mxu0 0.0
      %6154 = vmatprep.subr.mxu0 0.0
      %6155 = vmatpush1.xpose.msra.mxu0 0.0
      %6156 = vmatprep.subr.mxu0 0.0
      %6157 = vmatpush1.xpose.msra.mxu0 0.0
      %6158 = vmatprep.subr.mxu0 0.0
      %6159 = vmatpush1.xpose.msra.mxu0 0.0
      %6160 = vmatprep.subr.mxu0 0.0
      %6161 = vmatpush1.xpose.msra.mxu0 0.0
      %6162 = vmatprep.subr.mxu0 0.0
      %6163 = vmatpush1.xpose.msra.mxu0 0.0
      %6164 = vmatprep.subr.mxu0 0.0
      %6165 = vmatpush1.xpose.msra.mxu0 0.0
      %6166 = vmatprep.subr.mxu0 0.0
      %6167 = vmatpush1.xpose.msra.mxu0 0.0
      %6168 = vmatprep.subr.mxu0 0.0
      %6169 = vmatpush1.xpose.msra.mxu0 0.0
      %6170 = vmatprep.subr.mxu0 0.0
      %6171 = vmatpush1.xpose.msra.mxu0 0.0
      %6172 = vmatprep.subr.mxu0 0.0
      %6173 = vmatpush1.xpose.msra.mxu0 0.0
      %6174 = vmatprep.subr.mxu0 0.0
      %6175 = vmatpush1.xpose.msra.mxu0 0.0
      %6176 = vmatprep.subr.mxu0 0.0
      %6177 = vmatpush1.xpose.msra.mxu0 0.0
      %6178 = vmatprep.subr.mxu0 0.0
      %6179 = vmatpush1.xpose.msra.mxu0 0.0
      %6180 = vmatprep.subr.mxu0 0.0
      %6181 = vmatpush1.xpose.msra.mxu0 0.0
      %6182 = vmatprep.subr.mxu0 0.0
      %6183 = vmatpush1.xpose.msra.mxu0 0.0
      %6184 = vmatprep.mubr.f32.mxu0 0.0
      %v6185 = vand.u32 %v6035, 4294901760
      %6186 = vmatmul.mubr.f32.gmra.mrb[0].mxu0 %v6185
      %v6187 = vpop.f32.mrb[0].mxu0
      %v6188 = vadd.f32 %v6112, %v6187
      %v6189 = vpop.f32.mrb[0].mxu0
      %6190 = vdwg.mxu0
      %6191 = vmatprep.subr.mxu0 0.0
      %v6192 = vand.u32 %v6037, 4294901760
      %v6193 = vsub.f32 %v6037, %v6192
      %6194 = vmatpush1.xpose.msra.mxu0 %v6193
      %6195 = vmatprep.subr.mxu0 0.0
      %6196 = vmatpush1.xpose.msra.mxu0 0.0
      %6197 = vmatprep.subr.mxu0 0.0
      %6198 = vmatpush1.xpose.msra.mxu0 0.0
      %6199 = vmatprep.subr.mxu0 0.0
      %6200 = vmatpush1.xpose.msra.mxu0 0.0
      %6201 = vmatprep.subr.mxu0 0.0
      %6202 = vmatpush1.xpose.msra.mxu0 0.0
      %6203 = vmatprep.subr.mxu0 0.0
      %6204 = vmatpush1.xpose.msra.mxu0 0.0
      %6205 = vmatprep.subr.mxu0 0.0
      %6206 = vmatpush1.xpose.msra.mxu0 0.0
      %6207 = vmatprep.subr.mxu0 0.0
      %6208 = vmatpush1.xpose.msra.mxu0 0.0
      %6209 = vmatprep.subr.mxu0 0.0
      %6210 = vmatpush1.xpose.msra.mxu0 0.0
      %6211 = vmatprep.subr.mxu0 0.0
      %6212 = vmatpush1.xpose.msra.mxu0 0.0
      %6213 = vmatprep.subr.mxu0 0.0
      %6214 = vmatpush1.xpose.msra.mxu0 0.0
      %6215 = vmatprep.subr.mxu0 0.0
      %6216 = vmatpush1.xpose.msra.mxu0 0.0
      %6217 = vmatprep.subr.mxu0 0.0
      %6218 = vmatpush1.xpose.msra.mxu0 0.0
      %6219 = vmatprep.subr.mxu0 0.0
      %6220 = vmatpush1.xpose.msra.mxu0 0.0
      %6221 = vmatprep.subr.mxu0 0.0
      %6222 = vmatpush1.xpose.msra.mxu0 0.0
      %6223 = vmatprep.subr.mxu0 0.0
      %6224 = vmatpush1.xpose.msra.mxu0 0.0
      %6225 = vmatprep.subr.mxu0 0.0
      %6226 = vmatpush1.xpose.msra.mxu0 0.0
      %6227 = vmatprep.subr.mxu0 0.0
      %6228 = vmatpush1.xpose.msra.mxu0 0.0
      %6229 = vmatprep.subr.mxu0 0.0
      %6230 = vmatpush1.xpose.msra.mxu0 0.0
      %6231 = vmatprep.subr.mxu0 0.0
      %6232 = vmatpush1.xpose.msra.mxu0 0.0
      %6233 = vmatprep.subr.mxu0 0.0
      %6234 = vmatpush1.xpose.msra.mxu0 0.0
      %6235 = vmatprep.subr.mxu0 0.0
      %6236 = vmatpush1.xpose.msra.mxu0 0.0
      %6237 = vmatprep.subr.mxu0 0.0
      %6238 = vmatpush1.xpose.msra.mxu0 0.0
      %6239 = vmatprep.subr.mxu0 0.0
      %6240 = vmatpush1.xpose.msra.mxu0 0.0
      %6241 = vmatprep.subr.mxu0 0.0
      %6242 = vmatpush1.xpose.msra.mxu0 0.0
      %6243 = vmatprep.subr.mxu0 0.0
      %6244 = vmatpush1.xpose.msra.mxu0 0.0
      %6245 = vmatprep.subr.mxu0 0.0
      %6246 = vmatpush1.xpose.msra.mxu0 0.0
      %6247 = vmatprep.subr.mxu0 0.0
      %6248 = vmatpush1.xpose.msra.mxu0 0.0
      %6249 = vmatprep.subr.mxu0 0.0
      %6250 = vmatpush1.xpose.msra.mxu0 0.0
      %6251 = vmatprep.subr.mxu0 0.0
      %6252 = vmatpush1.xpose.msra.mxu0 0.0
      %6253 = vmatprep.subr.mxu0 0.0
      %6254 = vmatpush1.xpose.msra.mxu0 0.0
      %6255 = vmatprep.subr.mxu0 0.0
      %6256 = vmatpush1.xpose.msra.mxu0 0.0
      %6257 = vmatprep.mubr.f32.mxu0 0.0
      %v6258 = vand.u32 %v6035, 4294901760
      %v6259 = vsub.f32 %v6035, %v6258
      %6260 = vmatmul.mubr.f32.gmra.mrb[0].mxu0 %v6259
      %v6261 = vpop.f32.mrb[0].mxu0
      %v6262 = vadd.f32 %v6188, %v6261
      %v6263 = vpop.f32.mrb[0].mxu0
      %6264 = vdwg.mxu0
      %6265 = vmatprep.subr.mxu0 0.0
      %v6266 = vand.u32 %v6037, 4294901760
      %6267 = vmatpush1.xpose.msra.mxu0 %v6266
      %6268 = vmatprep.subr.mxu0 0.0
      %6269 = vmatpush1.xpose.msra.mxu0 0.0
      %6270 = vmatprep.subr.mxu0 0.0
      %6271 = vmatpush1.xpose.msra.mxu0 0.0
      %6272 = vmatprep.subr.mxu0 0.0
      %6273 = vmatpush1.xpose.msra.mxu0 0.0
      %6274 = vmatprep.subr.mxu0 0.0
      %6275 = vmatpush1.xpose.msra.mxu0 0.0
      %6276 = vmatprep.subr.mxu0 0.0
      %6277 = vmatpush1.xpose.msra.mxu0 0.0
      %6278 = vmatprep.subr.mxu0 0.0
      %6279 = vmatpush1.xpose.msra.mxu0 0.0
      %6280 = vmatprep.subr.mxu0 0.0
      %6281 = vmatpush1.xpose.msra.mxu0 0.0
      %6282 = vmatprep.subr.mxu0 0.0
      %6283 = vmatpush1.xpose.msra.mxu0 0.0
      %6284 = vmatprep.subr.mxu0 0.0
      %6285 = vmatpush1.xpose.msra.mxu0 0.0
      %6286 = vmatprep.subr.mxu0 0.0
      %6287 = vmatpush1.xpose.msra.mxu0 0.0
      %6288 = vmatprep.subr.mxu0 0.0
      %6289 = vmatpush1.xpose.msra.mxu0 0.0
      %6290 = vmatprep.subr.mxu0 0.0
      %6291 = vmatpush1.xpose.msra.mxu0 0.0
      %6292 = vmatprep.subr.mxu0 0.0
      %6293 = vmatpush1.xpose.msra.mxu0 0.0
      %6294 = vmatprep.subr.mxu0 0.0
      %6295 = vmatpush1.xpose.msra.mxu0 0.0
      %6296 = vmatprep.subr.mxu0 0.0
      %6297 = vmatpush1.xpose.msra.mxu0 0.0
      %6298 = vmatprep.subr.mxu0 0.0
      %6299 = vmatpush1.xpose.msra.mxu0 0.0
      %6300 = vmatprep.subr.mxu0 0.0
      %6301 = vmatpush1.xpose.msra.mxu0 0.0
      %6302 = vmatprep.subr.mxu0 0.0
      %6303 = vmatpush1.xpose.msra.mxu0 0.0
      %6304 = vmatprep.subr.mxu0 0.0
      %6305 = vmatpush1.xpose.msra.mxu0 0.0
      %6306 = vmatprep.subr.mxu0 0.0
      %6307 = vmatpush1.xpose.msra.mxu0 0.0
      %6308 = vmatprep.subr.mxu0 0.0
      %6309 = vmatpush1.xpose.msra.mxu0 0.0
      %6310 = vmatprep.subr.mxu0 0.0
      %6311 = vmatpush1.xpose.msra.mxu0 0.0
      %6312 = vmatprep.subr.mxu0 0.0
      %6313 = vmatpush1.xpose.msra.mxu0 0.0
      %6314 = vmatprep.subr.mxu0 0.0
      %6315 = vmatpush1.xpose.msra.mxu0 0.0
      %6316 = vmatprep.subr.mxu0 0.0
      %6317 = vmatpush1.xpose.msra.mxu0 0.0
      %6318 = vmatprep.subr.mxu0 0.0
      %6319 = vmatpush1.xpose.msra.mxu0 0.0
      %6320 = vmatprep.subr.mxu0 0.0
      %6321 = vmatpush1.xpose.msra.mxu0 0.0
      %6322 = vmatprep.subr.mxu0 0.0
      %6323 = vmatpush1.xpose.msra.mxu0 0.0
      %6324 = vmatprep.subr.mxu0 0.0
      %6325 = vmatpush1.xpose.msra.mxu0 0.0
      %6326 = vmatprep.subr.mxu0 0.0
      %6327 = vmatpush1.xpose.msra.mxu0 0.0
      %6328 = vmatprep.subr.mxu0 0.0
      %6329 = vmatpush1.xpose.msra.mxu0 0.0
      %6330 = vmatprep.mubr.f32.mxu0 0.0
      %v6331 = vand.u32 %v6035, 4294901760
      %v6332 = vsub.f32 %v6035, %v6331
      %v6333 = vand.u32 %v6332, 4294901760
      %6334 = vmatmul.mubr.f32.gmra.mrb[0].mxu0 %v6333
      %v6335 = vpop.f32.mrb[0].mxu0
      %v6336 = vadd.f32 %v6262, %v6335
      %v6337 = vpop.f32.mrb[0].mxu0
      %6338 = vdwg.mxu0
      %6339 = vmatprep.subr.mxu0 0.0
      %v6340 = vand.u32 %v6037, 4294901760
      %v6341 = vsub.f32 %v6037, %v6340
      %v6342 = vand.u32 %v6341, 4294901760
      %6343 = vmatpush1.xpose.msra.mxu0 %v6342
      %6344 = vmatprep.subr.mxu0 0.0
      %6345 = vmatpush1.xpose.msra.mxu0 0.0
      %6346 = vmatprep.subr.mxu0 0.0
      %6347 = vmatpush1.xpose.msra.mxu0 0.0
      %6348 = vmatprep.subr.mxu0 0.0
      %6349 = vmatpush1.xpose.msra.mxu0 0.0
      %6350 = vmatprep.subr.mxu0 0.0
      %6351 = vmatpush1.xpose.msra.mxu0 0.0
      %6352 = vmatprep.subr.mxu0 0.0
      %6353 = vmatpush1.xpose.msra.mxu0 0.0
      %6354 = vmatprep.subr.mxu0 0.0
      %6355 = vmatpush1.xpose.msra.mxu0 0.0
      %6356 = vmatprep.subr.mxu0 0.0
      %6357 = vmatpush1.xpose.msra.mxu0 0.0
      %6358 = vmatprep.subr.mxu0 0.0
      %6359 = vmatpush1.xpose.msra.mxu0 0.0
      %6360 = vmatprep.subr.mxu0 0.0
      %6361 = vmatpush1.xpose.msra.mxu0 0.0
      %6362 = vmatprep.subr.mxu0 0.0
      %6363 = vmatpush1.xpose.msra.mxu0 0.0
      %6364 = vmatprep.subr.mxu0 0.0
      %6365 = vmatpush1.xpose.msra.mxu0 0.0
      %6366 = vmatprep.subr.mxu0 0.0
      %6367 = vmatpush1.xpose.msra.mxu0 0.0
      %6368 = vmatprep.subr.mxu0 0.0
      %6369 = vmatpush1.xpose.msra.mxu0 0.0
      %6370 = vmatprep.subr.mxu0 0.0
      %6371 = vmatpush1.xpose.msra.mxu0 0.0
      %6372 = vmatprep.subr.mxu0 0.0
      %6373 = vmatpush1.xpose.msra.mxu0 0.0
      %6374 = vmatprep.subr.mxu0 0.0
      %6375 = vmatpush1.xpose.msra.mxu0 0.0
      %6376 = vmatprep.subr.mxu0 0.0
      %6377 = vmatpush1.xpose.msra.mxu0 0.0
      %6378 = vmatprep.subr.mxu0 0.0
      %6379 = vmatpush1.xpose.msra.mxu0 0.0
      %6380 = vmatprep.subr.mxu0 0.0
      %6381 = vmatpush1.xpose.msra.mxu0 0.0
      %6382 = vmatprep.subr.mxu0 0.0
      %6383 = vmatpush1.xpose.msra.mxu0 0.0
      %6384 = vmatprep.subr.mxu0 0.0
      %6385 = vmatpush1.xpose.msra.mxu0 0.0
      %6386 = vmatprep.subr.mxu0 0.0
      %6387 = vmatpush1.xpose.msra.mxu0 0.0
      %6388 = vmatprep.subr.mxu0 0.0
      %6389 = vmatpush1.xpose.msra.mxu0 0.0
      %6390 = vmatprep.subr.mxu0 0.0
      %6391 = vmatpush1.xpose.msra.mxu0 0.0
      %6392 = vmatprep.subr.mxu0 0.0
      %6393 = vmatpush1.xpose.msra.mxu0 0.0
      %6394 = vmatprep.subr.mxu0 0.0
      %6395 = vmatpush1.xpose.msra.mxu0 0.0
      %6396 = vmatprep.subr.mxu0 0.0
      %6397 = vmatpush1.xpose.msra.mxu0 0.0
      %6398 = vmatprep.subr.mxu0 0.0
      %6399 = vmatpush1.xpose.msra.mxu0 0.0
      %6400 = vmatprep.subr.mxu0 0.0
      %6401 = vmatpush1.xpose.msra.mxu0 0.0
      %6402 = vmatprep.subr.mxu0 0.0
      %6403 = vmatpush1.xpose.msra.mxu0 0.0
      %6404 = vmatprep.subr.mxu0 0.0
      %6405 = vmatpush1.xpose.msra.mxu0 0.0
      %6406 = vmatprep.mubr.f32.mxu0 0.0
      %v6407 = vand.u32 %v6035, 4294901760
      %6408 = vmatmul.mubr.f32.gmra.mrb[0].mxu0 %v6407
      %v6409 = vpop.f32.mrb[0].mxu0
      %v6410 = vadd.f32 %v6336, %v6409
      %v6411 = vpop.f32.mrb[0].mxu0
      %6412 = vdwg.mxu0
      %6413 = vmatprep.subr.mxu0 0.0
      %v6414 = vand.u32 %v6037, 4294901760
      %6415 = vmatpush1.xpose.msra.mxu0 %v6414
      %6416 = vmatprep.subr.mxu0 0.0
      %6417 = vmatpush1.xpose.msra.mxu0 0.0
      %6418 = vmatprep.subr.mxu0 0.0
      %6419 = vmatpush1.xpose.msra.mxu0 0.0
      %6420 = vmatprep.subr.mxu0 0.0
      %6421 = vmatpush1.xpose.msra.mxu0 0.0
      %6422 = vmatprep.subr.mxu0 0.0
      %6423 = vmatpush1.xpose.msra.mxu0 0.0
      %6424 = vmatprep.subr.mxu0 0.0
      %6425 = vmatpush1.xpose.msra.mxu0 0.0
      %6426 = vmatprep.subr.mxu0 0.0
      %6427 = vmatpush1.xpose.msra.mxu0 0.0
      %6428 = vmatprep.subr.mxu0 0.0
      %6429 = vmatpush1.xpose.msra.mxu0 0.0
      %6430 = vmatprep.subr.mxu0 0.0
      %6431 = vmatpush1.xpose.msra.mxu0 0.0
      %6432 = vmatprep.subr.mxu0 0.0
      %6433 = vmatpush1.xpose.msra.mxu0 0.0
      %6434 = vmatprep.subr.mxu0 0.0
      %6435 = vmatpush1.xpose.msra.mxu0 0.0
      %6436 = vmatprep.subr.mxu0 0.0
      %6437 = vmatpush1.xpose.msra.mxu0 0.0
      %6438 = vmatprep.subr.mxu0 0.0
      %6439 = vmatpush1.xpose.msra.mxu0 0.0
      %6440 = vmatprep.subr.mxu0 0.0
      %6441 = vmatpush1.xpose.msra.mxu0 0.0
      %6442 = vmatprep.subr.mxu0 0.0
      %6443 = vmatpush1.xpose.msra.mxu0 0.0
      %6444 = vmatprep.subr.mxu0 0.0
      %6445 = vmatpush1.xpose.msra.mxu0 0.0
      %6446 = vmatprep.subr.mxu0 0.0
      %6447 = vmatpush1.xpose.msra.mxu0 0.0
      %6448 = vmatprep.subr.mxu0 0.0
      %6449 = vmatpush1.xpose.msra.mxu0 0.0
      %6450 = vmatprep.subr.mxu0 0.0
      %6451 = vmatpush1.xpose.msra.mxu0 0.0
      %6452 = vmatprep.subr.mxu0 0.0
      %6453 = vmatpush1.xpose.msra.mxu0 0.0
      %6454 = vmatprep.subr.mxu0 0.0
      %6455 = vmatpush1.xpose.msra.mxu0 0.0
      %6456 = vmatprep.subr.mxu0 0.0
      %6457 = vmatpush1.xpose.msra.mxu0 0.0
      %6458 = vmatprep.subr.mxu0 0.0
      %6459 = vmatpush1.xpose.msra.mxu0 0.0
      %6460 = vmatprep.subr.mxu0 0.0
      %6461 = vmatpush1.xpose.msra.mxu0 0.0
      %6462 = vmatprep.subr.mxu0 0.0
      %6463 = vmatpush1.xpose.msra.mxu0 0.0
      %6464 = vmatprep.subr.mxu0 0.0
      %6465 = vmatpush1.xpose.msra.mxu0 0.0
      %6466 = vmatprep.subr.mxu0 0.0
      %6467 = vmatpush1.xpose.msra.mxu0 0.0
      %6468 = vmatprep.subr.mxu0 0.0
      %6469 = vmatpush1.xpose.msra.mxu0 0.0
      %6470 = vmatprep.subr.mxu0 0.0
      %6471 = vmatpush1.xpose.msra.mxu0 0.0
      %6472 = vmatprep.subr.mxu0 0.0
      %6473 = vmatpush1.xpose.msra.mxu0 0.0
      %6474 = vmatprep.subr.mxu0 0.0
      %6475 = vmatpush1.xpose.msra.mxu0 0.0
      %6476 = vmatprep.subr.mxu0 0.0
      %6477 = vmatpush1.xpose.msra.mxu0 0.0
      %6478 = vmatprep.mubr.f32.mxu0 0.0
      %v6479 = vand.u32 %v6035, 4294901760
      %6480 = vmatmul.mubr.f32.gmra.mrb[0].mxu0 %v6479
      %v6481 = vpop.f32.mrb[0].mxu0
      %v6482 = vadd.f32 %v6410, %v6481
      %v6483 = vpop.f32.mrb[0].mxu0
      %6484 = vdwg.mxu0
      %v6489 = vrot.slane %v3249, 7
      %v6490 = vsel %vm3259, %v6489, %v3247
      %v6491 = vrot.slane %v3251, 6
      %v6492 = vsel %vm3262, %v6491, %v6490
      %v6493 = vrot.slane %v3253, 5
      %v6494 = vsel %vm3265, %v6493, %v6492
      %v6496 = vsel %vm3267, %v3245, 0
      %v6498 = vsel %vm3267, %v6494, 0
      %6500 = vmatprep.subr.mxu0 0.0
      %v6501 = vand.u32 %v6498, 4294901760
      %6502 = vmatpush1.xpose.msra.mxu0 %v6501
      %6503 = vmatprep.subr.mxu0 0.0
      %6504 = vmatpush1.xpose.msra.mxu0 0.0
      %6505 = vmatprep.subr.mxu0 0.0
      %6506 = vmatpush1.xpose.msra.mxu0 0.0
      %6507 = vmatprep.subr.mxu0 0.0
      %6508 = vmatpush1.xpose.msra.mxu0 0.0
      %6509 = vmatprep.subr.mxu0 0.0
      %6510 = vmatpush1.xpose.msra.mxu0 0.0
      %6511 = vmatprep.subr.mxu0 0.0
      %6512 = vmatpush1.xpose.msra.mxu0 0.0
      %6513 = vmatprep.subr.mxu0 0.0
      %6514 = vmatpush1.xpose.msra.mxu0 0.0
      %6515 = vmatprep.subr.mxu0 0.0
      %6516 = vmatpush1.xpose.msra.mxu0 0.0
      %6517 = vmatprep.subr.mxu0 0.0
      %6518 = vmatpush1.xpose.msra.mxu0 0.0
      %6519 = vmatprep.subr.mxu0 0.0
      %6520 = vmatpush1.xpose.msra.mxu0 0.0
      %6521 = vmatprep.subr.mxu0 0.0
      %6522 = vmatpush1.xpose.msra.mxu0 0.0
      %6523 = vmatprep.subr.mxu0 0.0
      %6524 = vmatpush1.xpose.msra.mxu0 0.0
      %6525 = vmatprep.subr.mxu0 0.0
      %6526 = vmatpush1.xpose.msra.mxu0 0.0
      %6527 = vmatprep.subr.mxu0 0.0
      %6528 = vmatpush1.xpose.msra.mxu0 0.0
      %6529 = vmatprep.subr.mxu0 0.0
      %6530 = vmatpush1.xpose.msra.mxu0 0.0
      %6531 = vmatprep.subr.mxu0 0.0
      %6532 = vmatpush1.xpose.msra.mxu0 0.0
      %6533 = vmatprep.subr.mxu0 0.0
      %6534 = vmatpush1.xpose.msra.mxu0 0.0
      %6535 = vmatprep.subr.mxu0 0.0
      %6536 = vmatpush1.xpose.msra.mxu0 0.0
      %6537 = vmatprep.subr.mxu0 0.0
      %6538 = vmatpush1.xpose.msra.mxu0 0.0
      %6539 = vmatprep.subr.mxu0 0.0
      %6540 = vmatpush1.xpose.msra.mxu0 0.0
      %6541 = vmatprep.subr.mxu0 0.0
      %6542 = vmatpush1.xpose.msra.mxu0 0.0
      %6543 = vmatprep.subr.mxu0 0.0
      %6544 = vmatpush1.xpose.msra.mxu0 0.0
      %6545 = vmatprep.subr.mxu0 0.0
      %6546 = vmatpush1.xpose.msra.mxu0 0.0
      %6547 = vmatprep.subr.mxu0 0.0
      %6548 = vmatpush1.xpose.msra.mxu0 0.0
      %6549 = vmatprep.subr.mxu0 0.0
      %6550 = vmatpush1.xpose.msra.mxu0 0.0
      %6551 = vmatprep.subr.mxu0 0.0
      %6552 = vmatpush1.xpose.msra.mxu0 0.0
      %6553 = vmatprep.subr.mxu0 0.0
      %6554 = vmatpush1.xpose.msra.mxu0 0.0
      %6555 = vmatprep.subr.mxu0 0.0
      %6556 = vmatpush1.xpose.msra.mxu0 0.0
      %6557 = vmatprep.subr.mxu0 0.0
      %6558 = vmatpush1.xpose.msra.mxu0 0.0
      %6559 = vmatprep.subr.mxu0 0.0
      %6560 = vmatpush1.xpose.msra.mxu0 0.0
      %6561 = vmatprep.subr.mxu0 0.0
      %6562 = vmatpush1.xpose.msra.mxu0 0.0
      %6563 = vmatprep.subr.mxu0 0.0
      %6564 = vmatpush1.xpose.msra.mxu0 0.0
      %6565 = vmatprep.mubr.f32.mxu0 0.0
      %v6566 = vand.u32 %v6496, 4294901760
      %v6567 = vsub.f32 %v6496, %v6566
      %v6568 = vand.u32 %v6567, 4294901760
      %v6569 = vsub.f32 %v6567, %v6568
      %v6570 = vand.u32 %v6569, 4294901760
      %6571 = vmatmul.mubr.f32.gmra.mrb[0].mxu0 %v6570
      %v6572 = vpop.f32.mrb[0].mxu0
      %v6573 = vadd.f32 0.0, %v6572
      %v6574 = vpop.f32.mrb[0].mxu0
      %6575 = vdwg.mxu0
      %6576 = vmatprep.subr.mxu0 0.0
      %v6577 = vand.u32 %v6498, 4294901760
      %v6578 = vsub.f32 %v6498, %v6577
      %v6579 = vand.u32 %v6578, 4294901760
      %v6580 = vsub.f32 %v6578, %v6579
      %v6581 = vand.u32 %v6580, 4294901760
      %6582 = vmatpush1.xpose.msra.mxu0 %v6581
      %6583 = vmatprep.subr.mxu0 0.0
      %6584 = vmatpush1.xpose.msra.mxu0 0.0
      %6585 = vmatprep.subr.mxu0 0.0
      %6586 = vmatpush1.xpose.msra.mxu0 0.0
      %6587 = vmatprep.subr.mxu0 0.0
      %6588 = vmatpush1.xpose.msra.mxu0 0.0
      %6589 = vmatprep.subr.mxu0 0.0
      %6590 = vmatpush1.xpose.msra.mxu0 0.0
      %6591 = vmatprep.subr.mxu0 0.0
      %6592 = vmatpush1.xpose.msra.mxu0 0.0
      %6593 = vmatprep.subr.mxu0 0.0
      %6594 = vmatpush1.xpose.msra.mxu0 0.0
      %6595 = vmatprep.subr.mxu0 0.0
      %6596 = vmatpush1.xpose.msra.mxu0 0.0
      %6597 = vmatprep.subr.mxu0 0.0
      %6598 = vmatpush1.xpose.msra.mxu0 0.0
      %6599 = vmatprep.subr.mxu0 0.0
      %6600 = vmatpush1.xpose.msra.mxu0 0.0
      %6601 = vmatprep.subr.mxu0 0.0
      %6602 = vmatpush1.xpose.msra.mxu0 0.0
      %6603 = vmatprep.subr.mxu0 0.0
      %6604 = vmatpush1.xpose.msra.mxu0 0.0
      %6605 = vmatprep.subr.mxu0 0.0
      %6606 = vmatpush1.xpose.msra.mxu0 0.0
      %6607 = vmatprep.subr.mxu0 0.0
      %6608 = vmatpush1.xpose.msra.mxu0 0.0
      %6609 = vmatprep.subr.mxu0 0.0
      %6610 = vmatpush1.xpose.msra.mxu0 0.0
      %6611 = vmatprep.subr.mxu0 0.0
      %6612 = vmatpush1.xpose.msra.mxu0 0.0
      %6613 = vmatprep.subr.mxu0 0.0
      %6614 = vmatpush1.xpose.msra.mxu0 0.0
      %6615 = vmatprep.subr.mxu0 0.0
      %6616 = vmatpush1.xpose.msra.mxu0 0.0
      %6617 = vmatprep.subr.mxu0 0.0
      %6618 = vmatpush1.xpose.msra.mxu0 0.0
      %6619 = vmatprep.subr.mxu0 0.0
      %6620 = vmatpush1.xpose.msra.mxu0 0.0
      %6621 = vmatprep.subr.mxu0 0.0
      %6622 = vmatpush1.xpose.msra.mxu0 0.0
      %6623 = vmatprep.subr.mxu0 0.0
      %6624 = vmatpush1.xpose.msra.mxu0 0.0
      %6625 = vmatprep.subr.mxu0 0.0
      %6626 = vmatpush1.xpose.msra.mxu0 0.0
      %6627 = vmatprep.subr.mxu0 0.0
      %6628 = vmatpush1.xpose.msra.mxu0 0.0
      %6629 = vmatprep.subr.mxu0 0.0
      %6630 = vmatpush1.xpose.msra.mxu0 0.0
      %6631 = vmatprep.subr.mxu0 0.0
      %6632 = vmatpush1.xpose.msra.mxu0 0.0
      %6633 = vmatprep.subr.mxu0 0.0
      %6634 = vmatpush1.xpose.msra.mxu0 0.0
      %6635 = vmatprep.subr.mxu0 0.0
      %6636 = vmatpush1.xpose.msra.mxu0 0.0
      %6637 = vmatprep.subr.mxu0 0.0
      %6638 = vmatpush1.xpose.msra.mxu0 0.0
      %6639 = vmatprep.subr.mxu0 0.0
      %6640 = vmatpush1.xpose.msra.mxu0 0.0
      %6641 = vmatprep.subr.mxu0 0.0
      %6642 = vmatpush1.xpose.msra.mxu0 0.0
      %6643 = vmatprep.subr.mxu0 0.0
      %6644 = vmatpush1.xpose.msra.mxu0 0.0
      %6645 = vmatprep.mubr.f32.mxu0 0.0
      %v6646 = vand.u32 %v6496, 4294901760
      %6647 = vmatmul.mubr.f32.gmra.mrb[0].mxu0 %v6646
      %v6648 = vpop.f32.mrb[0].mxu0
      %v6649 = vadd.f32 %v6573, %v6648
      %v6650 = vpop.f32.mrb[0].mxu0
      %6651 = vdwg.mxu0
      %6652 = vmatprep.subr.mxu0 0.0
      %v6653 = vand.u32 %v6498, 4294901760
      %v6654 = vsub.f32 %v6498, %v6653
      %6655 = vmatpush1.xpose.msra.mxu0 %v6654
      %6656 = vmatprep.subr.mxu0 0.0
      %6657 = vmatpush1.xpose.msra.mxu0 0.0
      %6658 = vmatprep.subr.mxu0 0.0
      %6659 = vmatpush1.xpose.msra.mxu0 0.0
      %6660 = vmatprep.subr.mxu0 0.0
      %6661 = vmatpush1.xpose.msra.mxu0 0.0
      %6662 = vmatprep.subr.mxu0 0.0
      %6663 = vmatpush1.xpose.msra.mxu0 0.0
      %6664 = vmatprep.subr.mxu0 0.0
      %6665 = vmatpush1.xpose.msra.mxu0 0.0
      %6666 = vmatprep.subr.mxu0 0.0
      %6667 = vmatpush1.xpose.msra.mxu0 0.0
      %6668 = vmatprep.subr.mxu0 0.0
      %6669 = vmatpush1.xpose.msra.mxu0 0.0
      %6670 = vmatprep.subr.mxu0 0.0
      %6671 = vmatpush1.xpose.msra.mxu0 0.0
      %6672 = vmatprep.subr.mxu0 0.0
      %6673 = vmatpush1.xpose.msra.mxu0 0.0
      %6674 = vmatprep.subr.mxu0 0.0
      %6675 = vmatpush1.xpose.msra.mxu0 0.0
      %6676 = vmatprep.subr.mxu0 0.0
      %6677 = vmatpush1.xpose.msra.mxu0 0.0
      %6678 = vmatprep.subr.mxu0 0.0
      %6679 = vmatpush1.xpose.msra.mxu0 0.0
      %6680 = vmatprep.subr.mxu0 0.0
      %6681 = vmatpush1.xpose.msra.mxu0 0.0
      %6682 = vmatprep.subr.mxu0 0.0
      %6683 = vmatpush1.xpose.msra.mxu0 0.0
      %6684 = vmatprep.subr.mxu0 0.0
      %6685 = vmatpush1.xpose.msra.mxu0 0.0
      %6686 = vmatprep.subr.mxu0 0.0
      %6687 = vmatpush1.xpose.msra.mxu0 0.0
      %6688 = vmatprep.subr.mxu0 0.0
      %6689 = vmatpush1.xpose.msra.mxu0 0.0
      %6690 = vmatprep.subr.mxu0 0.0
      %6691 = vmatpush1.xpose.msra.mxu0 0.0
      %6692 = vmatprep.subr.mxu0 0.0
      %6693 = vmatpush1.xpose.msra.mxu0 0.0
      %6694 = vmatprep.subr.mxu0 0.0
      %6695 = vmatpush1.xpose.msra.mxu0 0.0
      %6696 = vmatprep.subr.mxu0 0.0
      %6697 = vmatpush1.xpose.msra.mxu0 0.0
      %6698 = vmatprep.subr.mxu0 0.0
      %6699 = vmatpush1.xpose.msra.mxu0 0.0
      %6700 = vmatprep.subr.mxu0 0.0
      %6701 = vmatpush1.xpose.msra.mxu0 0.0
      %6702 = vmatprep.subr.mxu0 0.0
      %6703 = vmatpush1.xpose.msra.mxu0 0.0
      %6704 = vmatprep.subr.mxu0 0.0
      %6705 = vmatpush1.xpose.msra.mxu0 0.0
      %6706 = vmatprep.subr.mxu0 0.0
      %6707 = vmatpush1.xpose.msra.mxu0 0.0
      %6708 = vmatprep.subr.mxu0 0.0
      %6709 = vmatpush1.xpose.msra.mxu0 0.0
      %6710 = vmatprep.subr.mxu0 0.0
      %6711 = vmatpush1.xpose.msra.mxu0 0.0
      %6712 = vmatprep.subr.mxu0 0.0
      %6713 = vmatpush1.xpose.msra.mxu0 0.0
      %6714 = vmatprep.subr.mxu0 0.0
      %6715 = vmatpush1.xpose.msra.mxu0 0.0
      %6716 = vmatprep.subr.mxu0 0.0
      %6717 = vmatpush1.xpose.msra.mxu0 0.0
      %6718 = vmatprep.mubr.f32.mxu0 0.0
      %v6719 = vand.u32 %v6496, 4294901760
      %v6720 = vsub.f32 %v6496, %v6719
      %6721 = vmatmul.mubr.f32.gmra.mrb[0].mxu0 %v6720
      %v6722 = vpop.f32.mrb[0].mxu0
      %v6723 = vadd.f32 %v6649, %v6722
      %v6724 = vpop.f32.mrb[0].mxu0
      %6725 = vdwg.mxu0
      %6726 = vmatprep.subr.mxu0 0.0
      %v6727 = vand.u32 %v6498, 4294901760
      %6728 = vmatpush1.xpose.msra.mxu0 %v6727
      %6729 = vmatprep.subr.mxu0 0.0
      %6730 = vmatpush1.xpose.msra.mxu0 0.0
      %6731 = vmatprep.subr.mxu0 0.0
      %6732 = vmatpush1.xpose.msra.mxu0 0.0
      %6733 = vmatprep.subr.mxu0 0.0
      %6734 = vmatpush1.xpose.msra.mxu0 0.0
      %6735 = vmatprep.subr.mxu0 0.0
      %6736 = vmatpush1.xpose.msra.mxu0 0.0
      %6737 = vmatprep.subr.mxu0 0.0
      %6738 = vmatpush1.xpose.msra.mxu0 0.0
      %6739 = vmatprep.subr.mxu0 0.0
      %6740 = vmatpush1.xpose.msra.mxu0 0.0
      %6741 = vmatprep.subr.mxu0 0.0
      %6742 = vmatpush1.xpose.msra.mxu0 0.0
      %6743 = vmatprep.subr.mxu0 0.0
      %6744 = vmatpush1.xpose.msra.mxu0 0.0
      %6745 = vmatprep.subr.mxu0 0.0
      %6746 = vmatpush1.xpose.msra.mxu0 0.0
      %6747 = vmatprep.subr.mxu0 0.0
      %6748 = vmatpush1.xpose.msra.mxu0 0.0
      %6749 = vmatprep.subr.mxu0 0.0
      %6750 = vmatpush1.xpose.msra.mxu0 0.0
      %6751 = vmatprep.subr.mxu0 0.0
      %6752 = vmatpush1.xpose.msra.mxu0 0.0
      %6753 = vmatprep.subr.mxu0 0.0
      %6754 = vmatpush1.xpose.msra.mxu0 0.0
      %6755 = vmatprep.subr.mxu0 0.0
      %6756 = vmatpush1.xpose.msra.mxu0 0.0
      %6757 = vmatprep.subr.mxu0 0.0
      %6758 = vmatpush1.xpose.msra.mxu0 0.0
      %6759 = vmatprep.subr.mxu0 0.0
      %6760 = vmatpush1.xpose.msra.mxu0 0.0
      %6761 = vmatprep.subr.mxu0 0.0
      %6762 = vmatpush1.xpose.msra.mxu0 0.0
      %6763 = vmatprep.subr.mxu0 0.0
      %6764 = vmatpush1.xpose.msra.mxu0 0.0
      %6765 = vmatprep.subr.mxu0 0.0
      %6766 = vmatpush1.xpose.msra.mxu0 0.0
      %6767 = vmatprep.subr.mxu0 0.0
      %6768 = vmatpush1.xpose.msra.mxu0 0.0
      %6769 = vmatprep.subr.mxu0 0.0
      %6770 = vmatpush1.xpose.msra.mxu0 0.0
      %6771 = vmatprep.subr.mxu0 0.0
      %6772 = vmatpush1.xpose.msra.mxu0 0.0
      %6773 = vmatprep.subr.mxu0 0.0
      %6774 = vmatpush1.xpose.msra.mxu0 0.0
      %6775 = vmatprep.subr.mxu0 0.0
      %6776 = vmatpush1.xpose.msra.mxu0 0.0
      %6777 = vmatprep.subr.mxu0 0.0
      %6778 = vmatpush1.xpose.msra.mxu0 0.0
      %6779 = vmatprep.subr.mxu0 0.0
      %6780 = vmatpush1.xpose.msra.mxu0 0.0
      %6781 = vmatprep.subr.mxu0 0.0
      %6782 = vmatpush1.xpose.msra.mxu0 0.0
      %6783 = vmatprep.subr.mxu0 0.0
      %6784 = vmatpush1.xpose.msra.mxu0 0.0
      %6785 = vmatprep.subr.mxu0 0.0
      %6786 = vmatpush1.xpose.msra.mxu0 0.0
      %6787 = vmatprep.subr.mxu0 0.0
      %6788 = vmatpush1.xpose.msra.mxu0 0.0
      %6789 = vmatprep.subr.mxu0 0.0
      %6790 = vmatpush1.xpose.msra.mxu0 0.0
      %6791 = vmatprep.mubr.f32.mxu0 0.0
      %v6792 = vand.u32 %v6496, 4294901760
      %v6793 = vsub.f32 %v6496, %v6792
      %v6794 = vand.u32 %v6793, 4294901760
      %6795 = vmatmul.mubr.f32.gmra.mrb[0].mxu0 %v6794
      %v6796 = vpop.f32.mrb[0].mxu0
      %v6797 = vadd.f32 %v6723, %v6796
      %v6798 = vpop.f32.mrb[0].mxu0
      %6799 = vdwg.mxu0
      %6800 = vmatprep.subr.mxu0 0.0
      %v6801 = vand.u32 %v6498, 4294901760
      %v6802 = vsub.f32 %v6498, %v6801
      %v6803 = vand.u32 %v6802, 4294901760
      %6804 = vmatpush1.xpose.msra.mxu0 %v6803
      %6805 = vmatprep.subr.mxu0 0.0
      %6806 = vmatpush1.xpose.msra.mxu0 0.0
      %6807 = vmatprep.subr.mxu0 0.0
      %6808 = vmatpush1.xpose.msra.mxu0 0.0
      %6809 = vmatprep.subr.mxu0 0.0
      %6810 = vmatpush1.xpose.msra.mxu0 0.0
      %6811 = vmatprep.subr.mxu0 0.0
      %6812 = vmatpush1.xpose.msra.mxu0 0.0
      %6813 = vmatprep.subr.mxu0 0.0
      %6814 = vmatpush1.xpose.msra.mxu0 0.0
      %6815 = vmatprep.subr.mxu0 0.0
      %6816 = vmatpush1.xpose.msra.mxu0 0.0
      %6817 = vmatprep.subr.mxu0 0.0
      %6818 = vmatpush1.xpose.msra.mxu0 0.0
      %6819 = vmatprep.subr.mxu0 0.0
      %6820 = vmatpush1.xpose.msra.mxu0 0.0
      %6821 = vmatprep.subr.mxu0 0.0
      %6822 = vmatpush1.xpose.msra.mxu0 0.0
      %6823 = vmatprep.subr.mxu0 0.0
      %6824 = vmatpush1.xpose.msra.mxu0 0.0
      %6825 = vmatprep.subr.mxu0 0.0
      %6826 = vmatpush1.xpose.msra.mxu0 0.0
      %6827 = vmatprep.subr.mxu0 0.0
      %6828 = vmatpush1.xpose.msra.mxu0 0.0
      %6829 = vmatprep.subr.mxu0 0.0
      %6830 = vmatpush1.xpose.msra.mxu0 0.0
      %6831 = vmatprep.subr.mxu0 0.0
      %6832 = vmatpush1.xpose.msra.mxu0 0.0
      %6833 = vmatprep.subr.mxu0 0.0
      %6834 = vmatpush1.xpose.msra.mxu0 0.0
      %6835 = vmatprep.subr.mxu0 0.0
      %6836 = vmatpush1.xpose.msra.mxu0 0.0
      %6837 = vmatprep.subr.mxu0 0.0
      %6838 = vmatpush1.xpose.msra.mxu0 0.0
      %6839 = vmatprep.subr.mxu0 0.0
      %6840 = vmatpush1.xpose.msra.mxu0 0.0
      %6841 = vmatprep.subr.mxu0 0.0
      %6842 = vmatpush1.xpose.msra.mxu0 0.0
      %6843 = vmatprep.subr.mxu0 0.0
      %6844 = vmatpush1.xpose.msra.mxu0 0.0
      %6845 = vmatprep.subr.mxu0 0.0
      %6846 = vmatpush1.xpose.msra.mxu0 0.0
      %6847 = vmatprep.subr.mxu0 0.0
      %6848 = vmatpush1.xpose.msra.mxu0 0.0
      %6849 = vmatprep.subr.mxu0 0.0
      %6850 = vmatpush1.xpose.msra.mxu0 0.0
      %6851 = vmatprep.subr.mxu0 0.0
      %6852 = vmatpush1.xpose.msra.mxu0 0.0
      %6853 = vmatprep.subr.mxu0 0.0
      %6854 = vmatpush1.xpose.msra.mxu0 0.0
      %6855 = vmatprep.subr.mxu0 0.0
      %6856 = vmatpush1.xpose.msra.mxu0 0.0
      %6857 = vmatprep.subr.mxu0 0.0
      %6858 = vmatpush1.xpose.msra.mxu0 0.0
      %6859 = vmatprep.subr.mxu0 0.0
      %6860 = vmatpush1.xpose.msra.mxu0 0.0
      %6861 = vmatprep.subr.mxu0 0.0
      %6862 = vmatpush1.xpose.msra.mxu0 0.0
      %6863 = vmatprep.subr.mxu0 0.0
      %6864 = vmatpush1.xpose.msra.mxu0 0.0
      %6865 = vmatprep.subr.mxu0 0.0
      %6866 = vmatpush1.xpose.msra.mxu0 0.0
      %6867 = vmatprep.mubr.f32.mxu0 0.0
      %v6868 = vand.u32 %v6496, 4294901760
      %6869 = vmatmul.mubr.f32.gmra.mrb[0].mxu0 %v6868
      %v6870 = vpop.f32.mrb[0].mxu0
      %v6871 = vadd.f32 %v6797, %v6870
      %v6872 = vpop.f32.mrb[0].mxu0
      %6873 = vdwg.mxu0
      %6874 = vmatprep.subr.mxu0 0.0
      %v6875 = vand.u32 %v6498, 4294901760
      %6876 = vmatpush1.xpose.msra.mxu0 %v6875
      %6877 = vmatprep.subr.mxu0 0.0
      %6878 = vmatpush1.xpose.msra.mxu0 0.0
      %6879 = vmatprep.subr.mxu0 0.0
      %6880 = vmatpush1.xpose.msra.mxu0 0.0
      %6881 = vmatprep.subr.mxu0 0.0
      %6882 = vmatpush1.xpose.msra.mxu0 0.0
      %6883 = vmatprep.subr.mxu0 0.0
      %6884 = vmatpush1.xpose.msra.mxu0 0.0
      %6885 = vmatprep.subr.mxu0 0.0
      %6886 = vmatpush1.xpose.msra.mxu0 0.0
      %6887 = vmatprep.subr.mxu0 0.0
      %6888 = vmatpush1.xpose.msra.mxu0 0.0
      %6889 = vmatprep.subr.mxu0 0.0
      %6890 = vmatpush1.xpose.msra.mxu0 0.0
      %6891 = vmatprep.subr.mxu0 0.0
      %6892 = vmatpush1.xpose.msra.mxu0 0.0
      %6893 = vmatprep.subr.mxu0 0.0
      %6894 = vmatpush1.xpose.msra.mxu0 0.0
      %6895 = vmatprep.subr.mxu0 0.0
      %6896 = vmatpush1.xpose.msra.mxu0 0.0
      %6897 = vmatprep.subr.mxu0 0.0
      %6898 = vmatpush1.xpose.msra.mxu0 0.0
      %6899 = vmatprep.subr.mxu0 0.0
      %6900 = vmatpush1.xpose.msra.mxu0 0.0
      %6901 = vmatprep.subr.mxu0 0.0
      %6902 = vmatpush1.xpose.msra.mxu0 0.0
      %6903 = vmatprep.subr.mxu0 0.0
      %6904 = vmatpush1.xpose.msra.mxu0 0.0
      %6905 = vmatprep.subr.mxu0 0.0
      %6906 = vmatpush1.xpose.msra.mxu0 0.0
      %6907 = vmatprep.subr.mxu0 0.0
      %6908 = vmatpush1.xpose.msra.mxu0 0.0
      %6909 = vmatprep.subr.mxu0 0.0
      %6910 = vmatpush1.xpose.msra.mxu0 0.0
      %6911 = vmatprep.subr.mxu0 0.0
      %6912 = vmatpush1.xpose.msra.mxu0 0.0
      %6913 = vmatprep.subr.mxu0 0.0
      %6914 = vmatpush1.xpose.msra.mxu0 0.0
      %6915 = vmatprep.subr.mxu0 0.0
      %6916 = vmatpush1.xpose.msra.mxu0 0.0
      %6917 = vmatprep.subr.mxu0 0.0
      %6918 = vmatpush1.xpose.msra.mxu0 0.0
      %6919 = vmatprep.subr.mxu0 0.0
      %6920 = vmatpush1.xpose.msra.mxu0 0.0
      %6921 = vmatprep.subr.mxu0 0.0
      %6922 = vmatpush1.xpose.msra.mxu0 0.0
      %6923 = vmatprep.subr.mxu0 0.0
      %6924 = vmatpush1.xpose.msra.mxu0 0.0
      %6925 = vmatprep.subr.mxu0 0.0
      %6926 = vmatpush1.xpose.msra.mxu0 0.0
      %6927 = vmatprep.subr.mxu0 0.0
      %6928 = vmatpush1.xpose.msra.mxu0 0.0
      %6929 = vmatprep.subr.mxu0 0.0
      %6930 = vmatpush1.xpose.msra.mxu0 0.0
      %6931 = vmatprep.subr.mxu0 0.0
      %6932 = vmatpush1.xpose.msra.mxu0 0.0
      %6933 = vmatprep.subr.mxu0 0.0
      %6934 = vmatpush1.xpose.msra.mxu0 0.0
      %6935 = vmatprep.subr.mxu0 0.0
      %6936 = vmatpush1.xpose.msra.mxu0 0.0
      %6937 = vmatprep.subr.mxu0 0.0
      %6938 = vmatpush1.xpose.msra.mxu0 0.0
      %6939 = vmatprep.mubr.f32.mxu0 0.0
      %v6940 = vand.u32 %v6496, 4294901760
      %6941 = vmatmul.mubr.f32.gmra.mrb[0].mxu0 %v6940
      %v6942 = vpop.f32.mrb[0].mxu0
      %v6943 = vadd.f32 %v6871, %v6942
      %v6944 = vpop.f32.mrb[0].mxu0
      %6945 = vdwg.mxu0
      %v6946 = vmul.f32 %v3175, %v3175
      %v6947 = vmul.f32 %v3185, %v3185
      %v6948 = vmul.f32 %v3195, %v3195
      %v6949 = vmul.f32 %v3205, %v3205
      %v6950 = vmul.f32 %v3215, %v3215
      %v6951 = vmul.f32 %v3225, %v3225
      %v6952 = vmul.f32 %v3235, %v3235
      %v6953 = vmul.f32 %v3245, %v3245
      %v6962 = vrot.slane %v6947, 7
      %v6963 = vsel %vm3259, %v6962, %v6946
      %v6964 = vrot.slane %v6948, 6
      %v6965 = vsel %vm3262, %v6964, %v6963
      %v6966 = vrot.slane %v6949, 5
      %v6967 = vsel %vm3265, %v6966, %v6965
      %v6968 = vrot.slane %v6950, 4
      %vm6969 = vcmask 1044484
      %v6970 = vsel %vm6969, %v6968, %v6967
      %v6971 = vrot.slane %v6951, 3
      %vm6972 = vcmask 1045509
      %v6973 = vsel %vm6972, %v6971, %v6970
      %v6974 = vrot.slane %v6952, 2
      %vm6975 = vcmask 1046534
      %v6976 = vsel %vm6975, %v6974, %v6973
      %v6977 = vrot.slane %v6953, 1
      %vm6978 = vcmask 1047559
      %v6979 = vsel %vm6978, %v6977, %v6976
      %v6981 = vsel %vm3267, %v6979, 0.0
      %6982 = vadd.xlane.f32.xlu0 %v6981
      %v6983 = vpop.xlane.xlu0 %6982
      %v6984 = vrsqrt.pop %v6983
      %v6985 = vmul.f32 %v6983, %v6984
      %vm6986 = vcmp.eq.f32.partialorder %v6983, inf
      %v6987 = vsel %vm6986, %v6983, %v6985
      %vm6988 = vcmp.eq.f32.partialorder %v6983, 0.0
      %v6989 = vand.u32 %v6983, 2147483648
      %v6990 = vsel %vm6988, %v6989, %v6987
      %v6991 = vmul.f32 %v3177, %v3177
      %v6992 = vmul.f32 %v3179, %v3179
      %v6993 = vmul.f32 %v3181, %v3181
      %v6994 = vmul.f32 %v3183, %v3183
      %v6995 = vmul.f32 %v3187, %v3187
      %v6996 = vmul.f32 %v3189, %v3189
      %v6997 = vmul.f32 %v3191, %v3191
      %v6998 = vmul.f32 %v3193, %v3193
      %v6999 = vmul.f32 %v3197, %v3197
      %v7000 = vmul.f32 %v3199, %v3199
      %v7001 = vmul.f32 %v3201, %v3201
      %v7002 = vmul.f32 %v3203, %v3203
      %v7003 = vmul.f32 %v3207, %v3207
      %v7004 = vmul.f32 %v3209, %v3209
      %v7005 = vmul.f32 %v3211, %v3211
      %v7006 = vmul.f32 %v3213, %v3213
      %v7007 = vmul.f32 %v3217, %v3217
      %v7008 = vmul.f32 %v3219, %v3219
      %v7009 = vmul.f32 %v3221, %v3221
      %v7010 = vmul.f32 %v3223, %v3223
      %v7011 = vmul.f32 %v3227, %v3227
      %v7012 = vmul.f32 %v3229, %v3229
      %v7013 = vmul.f32 %v3231, %v3231
      %v7014 = vmul.f32 %v3233, %v3233
      %v7015 = vmul.f32 %v3237, %v3237
      %v7016 = vmul.f32 %v3239, %v3239
      %v7017 = vmul.f32 %v3241, %v3241
      %v7018 = vmul.f32 %v3243, %v3243
      %v7019 = vmul.f32 %v3247, %v3247
      %v7020 = vmul.f32 %v3249, %v3249
      %v7021 = vmul.f32 %v3251, %v3251
      %v7022 = vmul.f32 %v3253, %v3253
      %v7055 = vrot.slane %v6992, 7
      %v7056 = vsel %vm3259, %v7055, %v6991
      %v7057 = vrot.slane %v6993, 6
      %v7058 = vsel %vm3262, %v7057, %v7056
      %v7059 = vrot.slane %v6994, 5
      %v7060 = vsel %vm3265, %v7059, %v7058
      %v7061 = vrot.slane %v6996, 7
      %v7062 = vsel %vm3259, %v7061, %v6995
      %v7063 = vrot.slane %v6997, 6
      %v7064 = vsel %vm3262, %v7063, %v7062
      %v7065 = vrot.slane %v6998, 5
      %v7066 = vsel %vm3265, %v7065, %v7064
      %v7067 = vrot.slane %v7000, 7
      %v7068 = vsel %vm3259, %v7067, %v6999
      %v7069 = vrot.slane %v7001, 6
      %v7070 = vsel %vm3262, %v7069, %v7068
      %v7071 = vrot.slane %v7002, 5
      %v7072 = vsel %vm3265, %v7071, %v7070
      %v7073 = vrot.slane %v7004, 7
      %v7074 = vsel %vm3259, %v7073, %v7003
      %v7075 = vrot.slane %v7005, 6
      %v7076 = vsel %vm3262, %v7075, %v7074
      %v7077 = vrot.slane %v7006, 5
      %v7078 = vsel %vm3265, %v7077, %v7076
      %v7079 = vrot.slane %v7008, 7
      %v7080 = vsel %vm3259, %v7079, %v7007
      %v7081 = vrot.slane %v7009, 6
      %v7082 = vsel %vm3262, %v7081, %v7080
      %v7083 = vrot.slane %v7010, 5
      %v7084 = vsel %vm3265, %v7083, %v7082
      %v7085 = vrot.slane %v7012, 7
      %v7086 = vsel %vm3259, %v7085, %v7011
      %v7087 = vrot.slane %v7013, 6
      %v7088 = vsel %vm3262, %v7087, %v7086
      %v7089 = vrot.slane %v7014, 5
      %v7090 = vsel %vm3265, %v7089, %v7088
      %v7091 = vrot.slane %v7016, 7
      %v7092 = vsel %vm3259, %v7091, %v7015
      %v7093 = vrot.slane %v7017, 6
      %v7094 = vsel %vm3262, %v7093, %v7092
      %v7095 = vrot.slane %v7018, 5
      %v7096 = vsel %vm3265, %v7095, %v7094
      %v7097 = vrot.slane %v7020, 7
      %v7098 = vsel %vm3259, %v7097, %v7019
      %v7099 = vrot.slane %v7021, 6
      %v7100 = vsel %vm3262, %v7099, %v7098
      %v7101 = vrot.slane %v7022, 5
      %v7102 = vsel %vm3265, %v7101, %v7100
      %vm7111 = vcmask 257024
      %v7112 = vsel %vm7111, %v7060, 0.0
      %7113 = vadd.xlane.f32.xlu0 %v7112
      %v7114 = vpop.xlane.xlu0 %7113
      %v7115 = vsel %vm7111, %v7066, 0.0
      %7116 = vadd.xlane.f32.xlu0 %v7115
      %v7117 = vpop.xlane.xlu0 %7116
      %v7118 = vsel %vm7111, %v7072, 0.0
      %7119 = vadd.xlane.f32.xlu0 %v7118
      %v7120 = vpop.xlane.xlu0 %7119
      %v7121 = vsel %vm7111, %v7078, 0.0
      %7122 = vadd.xlane.f32.xlu0 %v7121
      %v7123 = vpop.xlane.xlu0 %7122
      %v7124 = vsel %vm7111, %v7084, 0.0
      %7125 = vadd.xlane.f32.xlu0 %v7124
      %v7126 = vpop.xlane.xlu0 %7125
      %v7127 = vsel %vm7111, %v7090, 0.0
      %7128 = vadd.xlane.f32.xlu0 %v7127
      %v7129 = vpop.xlane.xlu0 %7128
      %v7130 = vsel %vm7111, %v7096, 0.0
      %7131 = vadd.xlane.f32.xlu0 %v7130
      %v7132 = vpop.xlane.xlu0 %7131
      %v7133 = vsel %vm7111, %v7102, 0.0
      %7134 = vadd.xlane.f32.xlu0 %v7133
      %v7135 = vpop.xlane.xlu0 %7134
      %v7136 = vrsqrt.pop %v7114
      %v7137 = vmul.f32 %v7114, %v7136
      %vm7138 = vcmp.eq.f32.partialorder %v7114, inf
      %v7139 = vsel %vm7138, %v7114, %v7137
      %vm7140 = vcmp.eq.f32.partialorder %v7114, 0.0
      %v7141 = vand.u32 %v7114, 2147483648
      %v7142 = vsel %vm7140, %v7141, %v7139
      %v7143 = vrsqrt.pop %v7117
      %v7144 = vmul.f32 %v7117, %v7143
      %vm7145 = vcmp.eq.f32.partialorder %v7117, inf
      %v7146 = vsel %vm7145, %v7117, %v7144
      %vm7147 = vcmp.eq.f32.partialorder %v7117, 0.0
      %v7148 = vand.u32 %v7117, 2147483648
      %v7149 = vsel %vm7147, %v7148, %v7146
      %v7150 = vrsqrt.pop %v7120
      %v7151 = vmul.f32 %v7120, %v7150
      %vm7152 = vcmp.eq.f32.partialorder %v7120, inf
      %v7153 = vsel %vm7152, %v7120, %v7151
      %vm7154 = vcmp.eq.f32.partialorder %v7120, 0.0
      %v7155 = vand.u32 %v7120, 2147483648
      %v7156 = vsel %vm7154, %v7155, %v7153
      %v7157 = vrsqrt.pop %v7123
      %v7158 = vmul.f32 %v7123, %v7157
      %vm7159 = vcmp.eq.f32.partialorder %v7123, inf
      %v7160 = vsel %vm7159, %v7123, %v7158
      %vm7161 = vcmp.eq.f32.partialorder %v7123, 0.0
      %v7162 = vand.u32 %v7123, 2147483648
      %v7163 = vsel %vm7161, %v7162, %v7160
      %v7164 = vrsqrt.pop %v7126
      %v7165 = vmul.f32 %v7126, %v7164
      %vm7166 = vcmp.eq.f32.partialorder %v7126, inf
      %v7167 = vsel %vm7166, %v7126, %v7165
      %vm7168 = vcmp.eq.f32.partialorder %v7126, 0.0
      %v7169 = vand.u32 %v7126, 2147483648
      %v7170 = vsel %vm7168, %v7169, %v7167
      %v7171 = vrsqrt.pop %v7129
      %v7172 = vmul.f32 %v7129, %v7171
      %vm7173 = vcmp.eq.f32.partialorder %v7129, inf
      %v7174 = vsel %vm7173, %v7129, %v7172
      %vm7175 = vcmp.eq.f32.partialorder %v7129, 0.0
      %v7176 = vand.u32 %v7129, 2147483648
      %v7177 = vsel %vm7175, %v7176, %v7174
      %v7178 = vrsqrt.pop %v7132
      %v7179 = vmul.f32 %v7132, %v7178
      %vm7180 = vcmp.eq.f32.partialorder %v7132, inf
      %v7181 = vsel %vm7180, %v7132, %v7179
      %vm7182 = vcmp.eq.f32.partialorder %v7132, 0.0
      %v7183 = vand.u32 %v7132, 2147483648
      %v7184 = vsel %vm7182, %v7183, %v7181
      %v7185 = vrsqrt.pop %v7135
      %v7186 = vmul.f32 %v7135, %v7185
      %vm7187 = vcmp.eq.f32.partialorder %v7135, inf
      %v7188 = vsel %vm7187, %v7135, %v7186
      %vm7189 = vcmp.eq.f32.partialorder %v7135, 0.0
      %v7190 = vand.u32 %v7135, 2147483648
      %v7191 = vsel %vm7189, %v7190, %v7188
      %v7192 = vmax.f32 %v6990, 1e-08
      %v7193 = vmax.f32 %v7142, 1e-08
      %v7194 = vmax.f32 %v7149, 1e-08
      %v7195 = vmax.f32 %v7156, 1e-08
      %v7196 = vmax.f32 %v7163, 1e-08
      %v7197 = vmax.f32 %v7170, 1e-08
      %v7198 = vmax.f32 %v7177, 1e-08
      %v7199 = vmax.f32 %v7184, 1e-08
      %v7200 = vmax.f32 %v7191, 1e-08
      %v7209 = vlaneseq
      %v7210 = vand.u32 %v7209, 127
      %v7211 = vlaneseq
      %v7212 = vshrl.u32 %v7211, 7
      %v7213 = vsub.s32 %v7210, %v7212
      %v7214 = vrot.slane %v7193, %v7213
      %v7215 = vlaneseq
      %v7216 = vshrl.u32 %v7215, 7
      %v7217 = vsub.s32 %v7210, %v7216
      %v7218 = vrot.slane %v7194, %v7217
      %v7219 = vlaneseq
      %v7220 = vshrl.u32 %v7219, 7
      %v7221 = vsub.s32 %v7210, %v7220
      %v7222 = vrot.slane %v7195, %v7221
      %v7223 = vlaneseq
      %v7224 = vshrl.u32 %v7223, 7
      %v7225 = vsub.s32 %v7210, %v7224
      %v7226 = vrot.slane %v7196, %v7225
      %v7227 = vlaneseq
      %v7228 = vshrl.u32 %v7227, 7
      %v7229 = vsub.s32 %v7210, %v7228
      %v7230 = vrot.slane %v7197, %v7229
      %v7231 = vlaneseq
      %v7232 = vshrl.u32 %v7231, 7
      %v7233 = vsub.s32 %v7210, %v7232
      %v7234 = vrot.slane %v7198, %v7233
      %v7235 = vlaneseq
      %v7236 = vshrl.u32 %v7235, 7
      %v7237 = vsub.s32 %v7210, %v7236
      %v7238 = vrot.slane %v7199, %v7237
      %v7239 = vlaneseq
      %v7240 = vshrl.u32 %v7239, 7
      %v7241 = vsub.s32 %v7210, %v7240
      %v7242 = vrot.slane %v7200, %v7241
      %v7243 = vsel %vm3259, %v7218, %v7214
      %v7244 = vsel %vm3262, %v7222, %v7243
      %v7245 = vsel %vm3265, %v7226, %v7244
      %v7246 = vsel %vm6969, %v7230, %v7245
      %v7247 = vsel %vm6972, %v7234, %v7246
      %v7248 = vsel %vm6975, %v7238, %v7247
      %v7249 = vsel %vm6978, %v7242, %v7248
      %v7251 = vmul.f32 %v7192, %v7249
      %v7253 = vrot.slane %v7251, 1
      %v7254 = vrot.slane %v7251, 2
      %v7255 = vrot.slane %v7251, 3
      %v7256 = vrot.slane %v7251, 4
      %v7257 = vrot.slane %v7251, 5
      %v7258 = vrot.slane %v7251, 6
      %v7259 = vrot.slane %v7251, 7
      %v7268 = vrcp.pop %v7251
      %v7269 = vmul.f32 %v3716, %v7268
      %v7270 = vrcp.pop %v7253
      %v7271 = vmul.f32 %v4177, %v7270
      %v7272 = vrcp.pop %v7254
      %v7273 = vmul.f32 %v4638, %v7272
      %v7274 = vrcp.pop %v7255
      %v7275 = vmul.f32 %v5099, %v7274
      %v7276 = vrcp.pop %v7256
      %v7277 = vmul.f32 %v5560, %v7276
      %v7278 = vrcp.pop %v7257
      %v7279 = vmul.f32 %v6021, %v7278
      %v7280 = vrcp.pop %v7258
      %v7281 = vmul.f32 %v6482, %v7280
      %v7282 = vrcp.pop %v7259
      %v7283 = vmul.f32 %v6943, %v7282
      %v7284 = vmax.f32 %v7269, 0.0
      %v7285 = vmax.f32 %v7271, 0.0
      %v7286 = vmax.f32 %v7273, 0.0
      %v7287 = vmax.f32 %v7275, 0.0
      %v7288 = vmax.f32 %v7277, 0.0
      %v7289 = vmax.f32 %v7279, 0.0
      %v7290 = vmax.f32 %v7281, 0.0
      %v7291 = vmax.f32 %v7283, 0.0
      %v7292 = vld [vmem:[%s239] sm:$0x1f]
      %v7293 = vld [vmem:[%s239 + $0x8] sm:$0x1f]
      %v7294 = vld [vmem:[%s239 + $0x10] sm:$0x1f]
      %v7295 = vld [vmem:[%s239 + $0x18] sm:$0x1f]
      %v7296 = vld [vmem:[%s239 + $0x20] sm:$0x1f]
      %v7297 = vld [vmem:[%s239 + $0x28] sm:$0x1f]
      %v7298 = vld [vmem:[%s239 + $0x30] sm:$0x1f]
      %v7299 = vld [vmem:[%s239 + $0x38] sm:$0x1f]
      %vm7300 = vcmask 1044480
      %v7301 = vsel %vm7300, %v7292, 0.0
      %7302 = vadd.xlane.f32.xlu0 %v7301
      %v7303 = vpop.xlane.xlu0 %7302
      %v7304 = vsel %vm7300, %v7293, 0.0
      %7305 = vadd.xlane.f32.xlu0 %v7304
      %v7306 = vpop.xlane.xlu0 %7305
      %v7307 = vsel %vm7300, %v7294, 0.0
      %7308 = vadd.xlane.f32.xlu0 %v7307
      %v7309 = vpop.xlane.xlu0 %7308
      %v7310 = vsel %vm7300, %v7295, 0.0
      %7311 = vadd.xlane.f32.xlu0 %v7310
      %v7312 = vpop.xlane.xlu0 %7311
      %v7313 = vsel %vm7300, %v7296, 0.0
      %7314 = vadd.xlane.f32.xlu0 %v7313
      %v7315 = vpop.xlane.xlu0 %7314
      %v7316 = vsel %vm7300, %v7297, 0.0
      %7317 = vadd.xlane.f32.xlu0 %v7316
      %v7318 = vpop.xlane.xlu0 %7317
      %v7319 = vsel %vm7300, %v7298, 0.0
      %7320 = vadd.xlane.f32.xlu0 %v7319
      %v7321 = vpop.xlane.xlu0 %7320
      %v7322 = vsel %vm7300, %v7299, 0.0
      %7323 = vadd.xlane.f32.xlu0 %v7322
      %v7324 = vpop.xlane.xlu0 %7323
      %v7326 = vrot.slane %v7292, 1
      %7328 = vmatprep.subr.mxu0 0.0
      %7329 = vmatpush1.xpose.msra.mxu0 %v7326
      %7330 = vmatprep.subr.mxu0 0.0
      %7331 = vmatpush1.xpose.msra.mxu0 0.0
      %7332 = vmatprep.subr.mxu0 0.0
      %7333 = vmatpush1.xpose.msra.mxu0 0.0
      %7334 = vmatprep.subr.mxu0 0.0
      %7335 = vmatpush1.xpose.msra.mxu0 0.0
      %7336 = vmatprep.subr.mxu0 0.0
      %7337 = vmatpush1.xpose.msra.mxu0 0.0
      %7338 = vmatprep.subr.mxu0 0.0
      %7339 = vmatpush1.xpose.msra.mxu0 0.0
      %7340 = vmatprep.subr.mxu0 0.0
      %7341 = vmatpush1.xpose.msra.mxu0 0.0
      %7342 = vmatprep.subr.mxu0 0.0
      %7343 = vmatpush1.xpose.msra.mxu0 0.0
      %7344 = vmatprep.subr.mxu0 0.0
      %7345 = vmatpush1.xpose.msra.mxu0 0.0
      %7346 = vmatprep.subr.mxu0 0.0
      %7347 = vmatpush1.xpose.msra.mxu0 0.0
      %7348 = vmatprep.subr.mxu0 0.0
      %7349 = vmatpush1.xpose.msra.mxu0 0.0
      %7350 = vmatprep.subr.mxu0 0.0
      %7351 = vmatpush1.xpose.msra.mxu0 0.0
      %7352 = vmatprep.subr.mxu0 0.0
      %7353 = vmatpush1.xpose.msra.mxu0 0.0
      %7354 = vmatprep.subr.mxu0 0.0
      %7355 = vmatpush1.xpose.msra.mxu0 0.0
      %7356 = vmatprep.subr.mxu0 0.0
      %7357 = vmatpush1.xpose.msra.mxu0 0.0
      %7358 = vmatprep.subr.mxu0 0.0
      %7359 = vmatpush1.xpose.msra.mxu0 0.0
      %7360 = vmatprep.subr.mxu0 0.0
      %7361 = vmatpush1.xpose.msra.mxu0 0.0
      %7362 = vmatprep.subr.mxu0 0.0
      %7363 = vmatpush1.xpose.msra.mxu0 0.0
      %7364 = vmatprep.subr.mxu0 0.0
      %7365 = vmatpush1.xpose.msra.mxu0 0.0
      %7366 = vmatprep.subr.mxu0 0.0
      %7367 = vmatpush1.xpose.msra.mxu0 0.0
      %7368 = vmatprep.subr.mxu0 0.0
      %7369 = vmatpush1.xpose.msra.mxu0 0.0
      %7370 = vmatprep.subr.mxu0 0.0
      %7371 = vmatpush1.xpose.msra.mxu0 0.0
      %7372 = vmatprep.subr.mxu0 0.0
      %7373 = vmatpush1.xpose.msra.mxu0 0.0
      %7374 = vmatprep.subr.mxu0 0.0
      %7375 = vmatpush1.xpose.msra.mxu0 0.0
      %7376 = vmatprep.subr.mxu0 0.0
      %7377 = vmatpush1.xpose.msra.mxu0 0.0
      %7378 = vmatprep.subr.mxu0 0.0
      %7379 = vmatpush1.xpose.msra.mxu0 0.0
      %7380 = vmatprep.subr.mxu0 0.0
      %7381 = vmatpush1.xpose.msra.mxu0 0.0
      %7382 = vmatprep.subr.mxu0 0.0
      %7383 = vmatpush1.xpose.msra.mxu0 0.0
      %7384 = vmatprep.subr.mxu0 0.0
      %7385 = vmatpush1.xpose.msra.mxu0 0.0
      %7386 = vmatprep.subr.mxu0 0.0
      %7387 = vmatpush1.xpose.msra.mxu0 0.0
      %7388 = vmatprep.subr.mxu0 0.0
      %7389 = vmatpush1.xpose.msra.mxu0 0.0
      %7390 = vmatprep.subr.mxu0 0.0
      %7391 = vmatpush1.xpose.msra.mxu0 0.0
      %7392 = vmatprep.mubr.f32.mxu0 0.0
      %7393 = vmatmul.mubr.f32.gmra.mrb[0].mxu0 %v7292
      %v7394 = vpop.f32.mrb[0].mxu0
      %v7395 = vadd.f32 0.0, %v7394
      %v7396 = vpop.f32.mrb[0].mxu0
      %7397 = vdwg.mxu0
      %v7399 = vrot.slane %v7293, 1
      %7401 = vmatprep.subr.mxu0 0.0
      %7402 = vmatpush1.xpose.msra.mxu0 %v7399
      %7403 = vmatprep.subr.mxu0 0.0
      %7404 = vmatpush1.xpose.msra.mxu0 0.0
      %7405 = vmatprep.subr.mxu0 0.0
      %7406 = vmatpush1.xpose.msra.mxu0 0.0
      %7407 = vmatprep.subr.mxu0 0.0
      %7408 = vmatpush1.xpose.msra.mxu0 0.0
      %7409 = vmatprep.subr.mxu0 0.0
      %7410 = vmatpush1.xpose.msra.mxu0 0.0
      %7411 = vmatprep.subr.mxu0 0.0
      %7412 = vmatpush1.xpose.msra.mxu0 0.0
      %7413 = vmatprep.subr.mxu0 0.0
      %7414 = vmatpush1.xpose.msra.mxu0 0.0
      %7415 = vmatprep.subr.mxu0 0.0
      %7416 = vmatpush1.xpose.msra.mxu0 0.0
      %7417 = vmatprep.subr.mxu0 0.0
      %7418 = vmatpush1.xpose.msra.mxu0 0.0
      %7419 = vmatprep.subr.mxu0 0.0
      %7420 = vmatpush1.xpose.msra.mxu0 0.0
      %7421 = vmatprep.subr.mxu0 0.0
      %7422 = vmatpush1.xpose.msra.mxu0 0.0
      %7423 = vmatprep.subr.mxu0 0.0
      %7424 = vmatpush1.xpose.msra.mxu0 0.0
      %7425 = vmatprep.subr.mxu0 0.0
      %7426 = vmatpush1.xpose.msra.mxu0 0.0
      %7427 = vmatprep.subr.mxu0 0.0
      %7428 = vmatpush1.xpose.msra.mxu0 0.0
      %7429 = vmatprep.subr.mxu0 0.0
      %7430 = vmatpush1.xpose.msra.mxu0 0.0
      %7431 = vmatprep.subr.mxu0 0.0
      %7432 = vmatpush1.xpose.msra.mxu0 0.0
      %7433 = vmatprep.subr.mxu0 0.0
      %7434 = vmatpush1.xpose.msra.mxu0 0.0
      %7435 = vmatprep.subr.mxu0 0.0
      %7436 = vmatpush1.xpose.msra.mxu0 0.0
      %7437 = vmatprep.subr.mxu0 0.0
      %7438 = vmatpush1.xpose.msra.mxu0 0.0
      %7439 = vmatprep.subr.mxu0 0.0
      %7440 = vmatpush1.xpose.msra.mxu0 0.0
      %7441 = vmatprep.subr.mxu0 0.0
      %7442 = vmatpush1.xpose.msra.mxu0 0.0
      %7443 = vmatprep.subr.mxu0 0.0
      %7444 = vmatpush1.xpose.msra.mxu0 0.0
      %7445 = vmatprep.subr.mxu0 0.0
      %7446 = vmatpush1.xpose.msra.mxu0 0.0
      %7447 = vmatprep.subr.mxu0 0.0
      %7448 = vmatpush1.xpose.msra.mxu0 0.0
      %7449 = vmatprep.subr.mxu0 0.0
      %7450 = vmatpush1.xpose.msra.mxu0 0.0
      %7451 = vmatprep.subr.mxu0 0.0
      %7452 = vmatpush1.xpose.msra.mxu0 0.0
      %7453 = vmatprep.subr.mxu0 0.0
      %7454 = vmatpush1.xpose.msra.mxu0 0.0
      %7455 = vmatprep.subr.mxu0 0.0
      %7456 = vmatpush1.xpose.msra.mxu0 0.0
      %7457 = vmatprep.subr.mxu0 0.0
      %7458 = vmatpush1.xpose.msra.mxu0 0.0
      %7459 = vmatprep.subr.mxu0 0.0
      %7460 = vmatpush1.xpose.msra.mxu0 0.0
      %7461 = vmatprep.subr.mxu0 0.0
      %7462 = vmatpush1.xpose.msra.mxu0 0.0
      %7463 = vmatprep.subr.mxu0 0.0
      %7464 = vmatpush1.xpose.msra.mxu0 0.0
      %7465 = vmatprep.mubr.f32.mxu0 0.0
      %7466 = vmatmul.mubr.f32.gmra.mrb[0].mxu0 %v7293
      %v7467 = vpop.f32.mrb[0].mxu0
      %v7468 = vadd.f32 0.0, %v7467
      %v7469 = vpop.f32.mrb[0].mxu0
      %7470 = vdwg.mxu0
      %v7472 = vrot.slane %v7294, 1
      %7474 = vmatprep.subr.mxu0 0.0
      %7475 = vmatpush1.xpose.msra.mxu0 %v7472
      %7476 = vmatprep.subr.mxu0 0.0
      %7477 = vmatpush1.xpose.msra.mxu0 0.0
      %7478 = vmatprep.subr.mxu0 0.0
      %7479 = vmatpush1.xpose.msra.mxu0 0.0
      %7480 = vmatprep.subr.mxu0 0.0
      %7481 = vmatpush1.xpose.msra.mxu0 0.0
      %7482 = vmatprep.subr.mxu0 0.0
      %7483 = vmatpush1.xpose.msra.mxu0 0.0
      %7484 = vmatprep.subr.mxu0 0.0
      %7485 = vmatpush1.xpose.msra.mxu0 0.0
      %7486 = vmatprep.subr.mxu0 0.0
      %7487 = vmatpush1.xpose.msra.mxu0 0.0
      %7488 = vmatprep.subr.mxu0 0.0
      %7489 = vmatpush1.xpose.msra.mxu0 0.0
      %7490 = vmatprep.subr.mxu0 0.0
      %7491 = vmatpush1.xpose.msra.mxu0 0.0
      %7492 = vmatprep.subr.mxu0 0.0
      %7493 = vmatpush1.xpose.msra.mxu0 0.0
      %7494 = vmatprep.subr.mxu0 0.0
      %7495 = vmatpush1.xpose.msra.mxu0 0.0
      %7496 = vmatprep.subr.mxu0 0.0
      %7497 = vmatpush1.xpose.msra.mxu0 0.0
      %7498 = vmatprep.subr.mxu0 0.0
      %7499 = vmatpush1.xpose.msra.mxu0 0.0
      %7500 = vmatprep.subr.mxu0 0.0
      %7501 = vmatpush1.xpose.msra.mxu0 0.0
      %7502 = vmatprep.subr.mxu0 0.0
      %7503 = vmatpush1.xpose.msra.mxu0 0.0
      %7504 = vmatprep.subr.mxu0 0.0
      %7505 = vmatpush1.xpose.msra.mxu0 0.0
      %7506 = vmatprep.subr.mxu0 0.0
      %7507 = vmatpush1.xpose.msra.mxu0 0.0
      %7508 = vmatprep.subr.mxu0 0.0
      %7509 = vmatpush1.xpose.msra.mxu0 0.0
      %7510 = vmatprep.subr.mxu0 0.0
      %7511 = vmatpush1.xpose.msra.mxu0 0.0
      %7512 = vmatprep.subr.mxu0 0.0
      %7513 = vmatpush1.xpose.msra.mxu0 0.0
      %7514 = vmatprep.subr.mxu0 0.0
      %7515 = vmatpush1.xpose.msra.mxu0 0.0
      %7516 = vmatprep.subr.mxu0 0.0
      %7517 = vmatpush1.xpose.msra.mxu0 0.0
      %7518 = vmatprep.subr.mxu0 0.0
      %7519 = vmatpush1.xpose.msra.mxu0 0.0
      %7520 = vmatprep.subr.mxu0 0.0
      %7521 = vmatpush1.xpose.msra.mxu0 0.0
      %7522 = vmatprep.subr.mxu0 0.0
      %7523 = vmatpush1.xpose.msra.mxu0 0.0
      %7524 = vmatprep.subr.mxu0 0.0
      %7525 = vmatpush1.xpose.msra.mxu0 0.0
      %7526 = vmatprep.subr.mxu0 0.0
      %7527 = vmatpush1.xpose.msra.mxu0 0.0
      %7528 = vmatprep.subr.mxu0 0.0
      %7529 = vmatpush1.xpose.msra.mxu0 0.0
      %7530 = vmatprep.subr.mxu0 0.0
      %7531 = vmatpush1.xpose.msra.mxu0 0.0
      %7532 = vmatprep.subr.mxu0 0.0
      %7533 = vmatpush1.xpose.msra.mxu0 0.0
      %7534 = vmatprep.subr.mxu0 0.0
      %7535 = vmatpush1.xpose.msra.mxu0 0.0
      %7536 = vmatprep.subr.mxu0 0.0
      %7537 = vmatpush1.xpose.msra.mxu0 0.0
      %7538 = vmatprep.mubr.f32.mxu0 0.0
      %7539 = vmatmul.mubr.f32.gmra.mrb[0].mxu0 %v7294
      %v7540 = vpop.f32.mrb[0].mxu0
      %v7541 = vadd.f32 0.0, %v7540
      %v7542 = vpop.f32.mrb[0].mxu0
      %7543 = vdwg.mxu0
      %v7545 = vrot.slane %v7295, 1
      %7547 = vmatprep.subr.mxu0 0.0
      %7548 = vmatpush1.xpose.msra.mxu0 %v7545
      %7549 = vmatprep.subr.mxu0 0.0
      %7550 = vmatpush1.xpose.msra.mxu0 0.0
      %7551 = vmatprep.subr.mxu0 0.0
      %7552 = vmatpush1.xpose.msra.mxu0 0.0
      %7553 = vmatprep.subr.mxu0 0.0
      %7554 = vmatpush1.xpose.msra.mxu0 0.0
      %7555 = vmatprep.subr.mxu0 0.0
      %7556 = vmatpush1.xpose.msra.mxu0 0.0
      %7557 = vmatprep.subr.mxu0 0.0
      %7558 = vmatpush1.xpose.msra.mxu0 0.0
      %7559 = vmatprep.subr.mxu0 0.0
      %7560 = vmatpush1.xpose.msra.mxu0 0.0
      %7561 = vmatprep.subr.mxu0 0.0
      %7562 = vmatpush1.xpose.msra.mxu0 0.0
      %7563 = vmatprep.subr.mxu0 0.0
      %7564 = vmatpush1.xpose.msra.mxu0 0.0
      %7565 = vmatprep.subr.mxu0 0.0
      %7566 = vmatpush1.xpose.msra.mxu0 0.0
      %7567 = vmatprep.subr.mxu0 0.0
      %7568 = vmatpush1.xpose.msra.mxu0 0.0
      %7569 = vmatprep.subr.mxu0 0.0
      %7570 = vmatpush1.xpose.msra.mxu0 0.0
      %7571 = vmatprep.subr.mxu0 0.0
      %7572 = vmatpush1.xpose.msra.mxu0 0.0
      %7573 = vmatprep.subr.mxu0 0.0
      %7574 = vmatpush1.xpose.msra.mxu0 0.0
      %7575 = vmatprep.subr.mxu0 0.0
      %7576 = vmatpush1.xpose.msra.mxu0 0.0
      %7577 = vmatprep.subr.mxu0 0.0
      %7578 = vmatpush1.xpose.msra.mxu0 0.0
      %7579 = vmatprep.subr.mxu0 0.0
      %7580 = vmatpush1.xpose.msra.mxu0 0.0
      %7581 = vmatprep.subr.mxu0 0.0
      %7582 = vmatpush1.xpose.msra.mxu0 0.0
      %7583 = vmatprep.subr.mxu0 0.0
      %7584 = vmatpush1.xpose.msra.mxu0 0.0
      %7585 = vmatprep.subr.mxu0 0.0
      %7586 = vmatpush1.xpose.msra.mxu0 0.0
      %7587 = vmatprep.subr.mxu0 0.0
      %7588 = vmatpush1.xpose.msra.mxu0 0.0
      %7589 = vmatprep.subr.mxu0 0.0
      %7590 = vmatpush1.xpose.msra.mxu0 0.0
      %7591 = vmatprep.subr.mxu0 0.0
      %7592 = vmatpush1.xpose.msra.mxu0 0.0
      %7593 = vmatprep.subr.mxu0 0.0
      %7594 = vmatpush1.xpose.msra.mxu0 0.0
      %7595 = vmatprep.subr.mxu0 0.0
      %7596 = vmatpush1.xpose.msra.mxu0 0.0
      %7597 = vmatprep.subr.mxu0 0.0
      %7598 = vmatpush1.xpose.msra.mxu0 0.0
      %7599 = vmatprep.subr.mxu0 0.0
      %7600 = vmatpush1.xpose.msra.mxu0 0.0
      %7601 = vmatprep.subr.mxu0 0.0
      %7602 = vmatpush1.xpose.msra.mxu0 0.0
      %7603 = vmatprep.subr.mxu0 0.0
      %7604 = vmatpush1.xpose.msra.mxu0 0.0
      %7605 = vmatprep.subr.mxu0 0.0
      %7606 = vmatpush1.xpose.msra.mxu0 0.0
      %7607 = vmatprep.subr.mxu0 0.0
      %7608 = vmatpush1.xpose.msra.mxu0 0.0
      %7609 = vmatprep.subr.mxu0 0.0
      %7610 = vmatpush1.xpose.msra.mxu0 0.0
      %7611 = vmatprep.mubr.f32.mxu0 0.0
      %7612 = vmatmul.mubr.f32.gmra.mrb[0].mxu0 %v7295
      %v7613 = vpop.f32.mrb[0].mxu0
      %v7614 = vadd.f32 0.0, %v7613
      %v7615 = vpop.f32.mrb[0].mxu0
      %7616 = vdwg.mxu0
      %v7618 = vrot.slane %v7296, 1
      %7620 = vmatprep.subr.mxu0 0.0
      %7621 = vmatpush1.xpose.msra.mxu0 %v7618
      %7622 = vmatprep.subr.mxu0 0.0
      %7623 = vmatpush1.xpose.msra.mxu0 0.0
      %7624 = vmatprep.subr.mxu0 0.0
      %7625 = vmatpush1.xpose.msra.mxu0 0.0
      %7626 = vmatprep.subr.mxu0 0.0
      %7627 = vmatpush1.xpose.msra.mxu0 0.0
      %7628 = vmatprep.subr.mxu0 0.0
      %7629 = vmatpush1.xpose.msra.mxu0 0.0
      %7630 = vmatprep.subr.mxu0 0.0
      %7631 = vmatpush1.xpose.msra.mxu0 0.0
      %7632 = vmatprep.subr.mxu0 0.0
      %7633 = vmatpush1.xpose.msra.mxu0 0.0
      %7634 = vmatprep.subr.mxu0 0.0
      %7635 = vmatpush1.xpose.msra.mxu0 0.0
      %7636 = vmatprep.subr.mxu0 0.0
      %7637 = vmatpush1.xpose.msra.mxu0 0.0
      %7638 = vmatprep.subr.mxu0 0.0
      %7639 = vmatpush1.xpose.msra.mxu0 0.0
      %7640 = vmatprep.subr.mxu0 0.0
      %7641 = vmatpush1.xpose.msra.mxu0 0.0
      %7642 = vmatprep.subr.mxu0 0.0
      %7643 = vmatpush1.xpose.msra.mxu0 0.0
      %7644 = vmatprep.subr.mxu0 0.0
      %7645 = vmatpush1.xpose.msra.mxu0 0.0
      %7646 = vmatprep.subr.mxu0 0.0
      %7647 = vmatpush1.xpose.msra.mxu0 0.0
      %7648 = vmatprep.subr.mxu0 0.0
      %7649 = vmatpush1.xpose.msra.mxu0 0.0
      %7650 = vmatprep.subr.mxu0 0.0
      %7651 = vmatpush1.xpose.msra.mxu0 0.0
      %7652 = vmatprep.subr.mxu0 0.0
      %7653 = vmatpush1.xpose.msra.mxu0 0.0
      %7654 = vmatprep.subr.mxu0 0.0
      %7655 = vmatpush1.xpose.msra.mxu0 0.0
      %7656 = vmatprep.subr.mxu0 0.0
      %7657 = vmatpush1.xpose.msra.mxu0 0.0
      %7658 = vmatprep.subr.mxu0 0.0
      %7659 = vmatpush1.xpose.msra.mxu0 0.0
      %7660 = vmatprep.subr.mxu0 0.0
      %7661 = vmatpush1.xpose.msra.mxu0 0.0
      %7662 = vmatprep.subr.mxu0 0.0
      %7663 = vmatpush1.xpose.msra.mxu0 0.0
      %7664 = vmatprep.subr.mxu0 0.0
      %7665 = vmatpush1.xpose.msra.mxu0 0.0
      %7666 = vmatprep.subr.mxu0 0.0
      %7667 = vmatpush1.xpose.msra.mxu0 0.0
      %7668 = vmatprep.subr.mxu0 0.0
      %7669 = vmatpush1.xpose.msra.mxu0 0.0
      %7670 = vmatprep.subr.mxu0 0.0
      %7671 = vmatpush1.xpose.msra.mxu0 0.0
      %7672 = vmatprep.subr.mxu0 0.0
      %7673 = vmatpush1.xpose.msra.mxu0 0.0
      %7674 = vmatprep.subr.mxu0 0.0
      %7675 = vmatpush1.xpose.msra.mxu0 0.0
      %7676 = vmatprep.subr.mxu0 0.0
      %7677 = vmatpush1.xpose.msra.mxu0 0.0
      %7678 = vmatprep.subr.mxu0 0.0
      %7679 = vmatpush1.xpose.msra.mxu0 0.0
      %7680 = vmatprep.subr.mxu0 0.0
      %7681 = vmatpush1.xpose.msra.mxu0 0.0
      %7682 = vmatprep.subr.mxu0 0.0
      %7683 = vmatpush1.xpose.msra.mxu0 0.0
      %7684 = vmatprep.mubr.f32.mxu0 0.0
      %7685 = vmatmul.mubr.f32.gmra.mrb[0].mxu0 %v7296
      %v7686 = vpop.f32.mrb[0].mxu0
      %v7687 = vadd.f32 0.0, %v7686
      %v7688 = vpop.f32.mrb[0].mxu0
      %7689 = vdwg.mxu0
      %v7691 = vrot.slane %v7297, 1
      %7693 = vmatprep.subr.mxu0 0.0
      %7694 = vmatpush1.xpose.msra.mxu0 %v7691
      %7695 = vmatprep.subr.mxu0 0.0
      %7696 = vmatpush1.xpose.msra.mxu0 0.0
      %7697 = vmatprep.subr.mxu0 0.0
      %7698 = vmatpush1.xpose.msra.mxu0 0.0
      %7699 = vmatprep.subr.mxu0 0.0
      %7700 = vmatpush1.xpose.msra.mxu0 0.0
      %7701 = vmatprep.subr.mxu0 0.0
      %7702 = vmatpush1.xpose.msra.mxu0 0.0
      %7703 = vmatprep.subr.mxu0 0.0
      %7704 = vmatpush1.xpose.msra.mxu0 0.0
      %7705 = vmatprep.subr.mxu0 0.0
      %7706 = vmatpush1.xpose.msra.mxu0 0.0
      %7707 = vmatprep.subr.mxu0 0.0
      %7708 = vmatpush1.xpose.msra.mxu0 0.0
      %7709 = vmatprep.subr.mxu0 0.0
      %7710 = vmatpush1.xpose.msra.mxu0 0.0
      %7711 = vmatprep.subr.mxu0 0.0
      %7712 = vmatpush1.xpose.msra.mxu0 0.0
      %7713 = vmatprep.subr.mxu0 0.0
      %7714 = vmatpush1.xpose.msra.mxu0 0.0
      %7715 = vmatprep.subr.mxu0 0.0
      %7716 = vmatpush1.xpose.msra.mxu0 0.0
      %7717 = vmatprep.subr.mxu0 0.0
      %7718 = vmatpush1.xpose.msra.mxu0 0.0
      %7719 = vmatprep.subr.mxu0 0.0
      %7720 = vmatpush1.xpose.msra.mxu0 0.0
      %7721 = vmatprep.subr.mxu0 0.0
      %7722 = vmatpush1.xpose.msra.mxu0 0.0
      %7723 = vmatprep.subr.mxu0 0.0
      %7724 = vmatpush1.xpose.msra.mxu0 0.0
      %7725 = vmatprep.subr.mxu0 0.0
      %7726 = vmatpush1.xpose.msra.mxu0 0.0
      %7727 = vmatprep.subr.mxu0 0.0
      %7728 = vmatpush1.xpose.msra.mxu0 0.0
      %7729 = vmatprep.subr.mxu0 0.0
      %7730 = vmatpush1.xpose.msra.mxu0 0.0
      %7731 = vmatprep.subr.mxu0 0.0
      %7732 = vmatpush1.xpose.msra.mxu0 0.0
      %7733 = vmatprep.subr.mxu0 0.0
      %7734 = vmatpush1.xpose.msra.mxu0 0.0
      %7735 = vmatprep.subr.mxu0 0.0
      %7736 = vmatpush1.xpose.msra.mxu0 0.0
      %7737 = vmatprep.subr.mxu0 0.0
      %7738 = vmatpush1.xpose.msra.mxu0 0.0
      %7739 = vmatprep.subr.mxu0 0.0
      %7740 = vmatpush1.xpose.msra.mxu0 0.0
      %7741 = vmatprep.subr.mxu0 0.0
      %7742 = vmatpush1.xpose.msra.mxu0 0.0
      %7743 = vmatprep.subr.mxu0 0.0
      %7744 = vmatpush1.xpose.msra.mxu0 0.0
      %7745 = vmatprep.subr.mxu0 0.0
      %7746 = vmatpush1.xpose.msra.mxu0 0.0
      %7747 = vmatprep.subr.mxu0 0.0
      %7748 = vmatpush1.xpose.msra.mxu0 0.0
      %7749 = vmatprep.subr.mxu0 0.0
      %7750 = vmatpush1.xpose.msra.mxu0 0.0
      %7751 = vmatprep.subr.mxu0 0.0
      %7752 = vmatpush1.xpose.msra.mxu0 0.0
      %7753 = vmatprep.subr.mxu0 0.0
      %7754 = vmatpush1.xpose.msra.mxu0 0.0
      %7755 = vmatprep.subr.mxu0 0.0
      %7756 = vmatpush1.xpose.msra.mxu0 0.0
      %7757 = vmatprep.mubr.f32.mxu0 0.0
      %7758 = vmatmul.mubr.f32.gmra.mrb[0].mxu0 %v7297
      %v7759 = vpop.f32.mrb[0].mxu0
      %v7760 = vadd.f32 0.0, %v7759
      %v7761 = vpop.f32.mrb[0].mxu0
      %7762 = vdwg.mxu0
      %v7764 = vrot.slane %v7298, 1
      %7766 = vmatprep.subr.mxu0 0.0
      %7767 = vmatpush1.xpose.msra.mxu0 %v7764
      %7768 = vmatprep.subr.mxu0 0.0
      %7769 = vmatpush1.xpose.msra.mxu0 0.0
      %7770 = vmatprep.subr.mxu0 0.0
      %7771 = vmatpush1.xpose.msra.mxu0 0.0
      %7772 = vmatprep.subr.mxu0 0.0
      %7773 = vmatpush1.xpose.msra.mxu0 0.0
      %7774 = vmatprep.subr.mxu0 0.0
      %7775 = vmatpush1.xpose.msra.mxu0 0.0
      %7776 = vmatprep.subr.mxu0 0.0
      %7777 = vmatpush1.xpose.msra.mxu0 0.0
      %7778 = vmatprep.subr.mxu0 0.0
      %7779 = vmatpush1.xpose.msra.mxu0 0.0
      %7780 = vmatprep.subr.mxu0 0.0
      %7781 = vmatpush1.xpose.msra.mxu0 0.0
      %7782 = vmatprep.subr.mxu0 0.0
      %7783 = vmatpush1.xpose.msra.mxu0 0.0
      %7784 = vmatprep.subr.mxu0 0.0
      %7785 = vmatpush1.xpose.msra.mxu0 0.0
      %7786 = vmatprep.subr.mxu0 0.0
      %7787 = vmatpush1.xpose.msra.mxu0 0.0
      %7788 = vmatprep.subr.mxu0 0.0
      %7789 = vmatpush1.xpose.msra.mxu0 0.0
      %7790 = vmatprep.subr.mxu0 0.0
      %7791 = vmatpush1.xpose.msra.mxu0 0.0
      %7792 = vmatprep.subr.mxu0 0.0
      %7793 = vmatpush1.xpose.msra.mxu0 0.0
      %7794 = vmatprep.subr.mxu0 0.0
      %7795 = vmatpush1.xpose.msra.mxu0 0.0
      %7796 = vmatprep.subr.mxu0 0.0
      %7797 = vmatpush1.xpose.msra.mxu0 0.0
      %7798 = vmatprep.subr.mxu0 0.0
      %7799 = vmatpush1.xpose.msra.mxu0 0.0
      %7800 = vmatprep.subr.mxu0 0.0
      %7801 = vmatpush1.xpose.msra.mxu0 0.0
      %7802 = vmatprep.subr.mxu0 0.0
      %7803 = vmatpush1.xpose.msra.mxu0 0.0
      %7804 = vmatprep.subr.mxu0 0.0
      %7805 = vmatpush1.xpose.msra.mxu0 0.0
      %7806 = vmatprep.subr.mxu0 0.0
      %7807 = vmatpush1.xpose.msra.mxu0 0.0
      %7808 = vmatprep.subr.mxu0 0.0
      %7809 = vmatpush1.xpose.msra.mxu0 0.0
      %7810 = vmatprep.subr.mxu0 0.0
      %7811 = vmatpush1.xpose.msra.mxu0 0.0
      %7812 = vmatprep.subr.mxu0 0.0
      %7813 = vmatpush1.xpose.msra.mxu0 0.0
      %7814 = vmatprep.subr.mxu0 0.0
      %7815 = vmatpush1.xpose.msra.mxu0 0.0
      %7816 = vmatprep.subr.mxu0 0.0
      %7817 = vmatpush1.xpose.msra.mxu0 0.0
      %7818 = vmatprep.subr.mxu0 0.0
      %7819 = vmatpush1.xpose.msra.mxu0 0.0
      %7820 = vmatprep.subr.mxu0 0.0
      %7821 = vmatpush1.xpose.msra.mxu0 0.0
      %7822 = vmatprep.subr.mxu0 0.0
      %7823 = vmatpush1.xpose.msra.mxu0 0.0
      %7824 = vmatprep.subr.mxu0 0.0
      %7825 = vmatpush1.xpose.msra.mxu0 0.0
      %7826 = vmatprep.subr.mxu0 0.0
      %7827 = vmatpush1.xpose.msra.mxu0 0.0
      %7828 = vmatprep.subr.mxu0 0.0
      %7829 = vmatpush1.xpose.msra.mxu0 0.0
      %7830 = vmatprep.mubr.f32.mxu0 0.0
      %7831 = vmatmul.mubr.f32.gmra.mrb[0].mxu0 %v7298
      %v7832 = vpop.f32.mrb[0].mxu0
      %v7833 = vadd.f32 0.0, %v7832
      %v7834 = vpop.f32.mrb[0].mxu0
      %7835 = vdwg.mxu0
      %v7837 = vrot.slane %v7299, 1
      %7839 = vmatprep.subr.mxu0 0.0
      %7840 = vmatpush1.xpose.msra.mxu0 %v7837
      %7841 = vmatprep.subr.mxu0 0.0
      %7842 = vmatpush1.xpose.msra.mxu0 0.0
      %7843 = vmatprep.subr.mxu0 0.0
      %7844 = vmatpush1.xpose.msra.mxu0 0.0
      %7845 = vmatprep.subr.mxu0 0.0
      %7846 = vmatpush1.xpose.msra.mxu0 0.0
      %7847 = vmatprep.subr.mxu0 0.0
      %7848 = vmatpush1.xpose.msra.mxu0 0.0
      %7849 = vmatprep.subr.mxu0 0.0
      %7850 = vmatpush1.xpose.msra.mxu0 0.0
      %7851 = vmatprep.subr.mxu0 0.0
      %7852 = vmatpush1.xpose.msra.mxu0 0.0
      %7853 = vmatprep.subr.mxu0 0.0
      %7854 = vmatpush1.xpose.msra.mxu0 0.0
      %7855 = vmatprep.subr.mxu0 0.0
      %7856 = vmatpush1.xpose.msra.mxu0 0.0
      %7857 = vmatprep.subr.mxu0 0.0
      %7858 = vmatpush1.xpose.msra.mxu0 0.0
      %7859 = vmatprep.subr.mxu0 0.0
      %7860 = vmatpush1.xpose.msra.mxu0 0.0
      %7861 = vmatprep.subr.mxu0 0.0
      %7862 = vmatpush1.xpose.msra.mxu0 0.0
      %7863 = vmatprep.subr.mxu0 0.0
      %7864 = vmatpush1.xpose.msra.mxu0 0.0
      %7865 = vmatprep.subr.mxu0 0.0
      %7866 = vmatpush1.xpose.msra.mxu0 0.0
      %7867 = vmatprep.subr.mxu0 0.0
      %7868 = vmatpush1.xpose.msra.mxu0 0.0
      %7869 = vmatprep.subr.mxu0 0.0
      %7870 = vmatpush1.xpose.msra.mxu0 0.0
      %7871 = vmatprep.subr.mxu0 0.0
      %7872 = vmatpush1.xpose.msra.mxu0 0.0
      %7873 = vmatprep.subr.mxu0 0.0
      %7874 = vmatpush1.xpose.msra.mxu0 0.0
      %7875 = vmatprep.subr.mxu0 0.0
      %7876 = vmatpush1.xpose.msra.mxu0 0.0
      %7877 = vmatprep.subr.mxu0 0.0
      %7878 = vmatpush1.xpose.msra.mxu0 0.0
      %7879 = vmatprep.subr.mxu0 0.0
      %7880 = vmatpush1.xpose.msra.mxu0 0.0
      %7881 = vmatprep.subr.mxu0 0.0
      %7882 = vmatpush1.xpose.msra.mxu0 0.0
      %7883 = vmatprep.subr.mxu0 0.0
      %7884 = vmatpush1.xpose.msra.mxu0 0.0
      %7885 = vmatprep.subr.mxu0 0.0
      %7886 = vmatpush1.xpose.msra.mxu0 0.0
      %7887 = vmatprep.subr.mxu0 0.0
      %7888 = vmatpush1.xpose.msra.mxu0 0.0
      %7889 = vmatprep.subr.mxu0 0.0
      %7890 = vmatpush1.xpose.msra.mxu0 0.0
      %7891 = vmatprep.subr.mxu0 0.0
      %7892 = vmatpush1.xpose.msra.mxu0 0.0
      %7893 = vmatprep.subr.mxu0 0.0
      %7894 = vmatpush1.xpose.msra.mxu0 0.0
      %7895 = vmatprep.subr.mxu0 0.0
      %7896 = vmatpush1.xpose.msra.mxu0 0.0
      %7897 = vmatprep.subr.mxu0 0.0
      %7898 = vmatpush1.xpose.msra.mxu0 0.0
      %7899 = vmatprep.subr.mxu0 0.0
      %7900 = vmatpush1.xpose.msra.mxu0 0.0
      %7901 = vmatprep.subr.mxu0 0.0
      %7902 = vmatpush1.xpose.msra.mxu0 0.0
      %7903 = vmatprep.mubr.f32.mxu0 0.0
      %7904 = vmatmul.mubr.f32.gmra.mrb[0].mxu0 %v7299
      %v7905 = vpop.f32.mrb[0].mxu0
      %v7906 = vadd.f32 0.0, %v7905
      %v7907 = vpop.f32.mrb[0].mxu0
      %7908 = vdwg.mxu0
      %v7909 = vlaneseq
      %v7910 = vshrl.u32 %v7909, 7
      %v7911 = vsub.s32 0, %v7910
      %v7912 = vrot.slane %v7303, %v7911
      %v7913 = vlaneseq
      %v7914 = vshrl.u32 %v7913, 7
      %v7915 = vsub.s32 0, %v7914
      %v7916 = vrot.slane %v7306, %v7915
      %v7917 = vlaneseq
      %v7918 = vshrl.u32 %v7917, 7
      %v7919 = vsub.s32 0, %v7918
      %v7920 = vrot.slane %v7309, %v7919
      %v7921 = vlaneseq
      %v7922 = vshrl.u32 %v7921, 7
      %v7923 = vsub.s32 0, %v7922
      %v7924 = vrot.slane %v7312, %v7923
      %v7925 = vlaneseq
      %v7926 = vshrl.u32 %v7925, 7
      %v7927 = vsub.s32 0, %v7926
      %v7928 = vrot.slane %v7315, %v7927
      %v7929 = vlaneseq
      %v7930 = vshrl.u32 %v7929, 7
      %v7931 = vsub.s32 0, %v7930
      %v7932 = vrot.slane %v7318, %v7931
      %v7933 = vlaneseq
      %v7934 = vshrl.u32 %v7933, 7
      %v7935 = vsub.s32 0, %v7934
      %v7936 = vrot.slane %v7321, %v7935
      %v7937 = vlaneseq
      %v7938 = vshrl.u32 %v7937, 7
      %v7939 = vsub.s32 0, %v7938
      %v7940 = vrot.slane %v7324, %v7939
      %v7941 = vadd.f32 %v7912, %v7303
      %v7942 = vadd.f32 %v7916, %v7306
      %v7943 = vadd.f32 %v7920, %v7309
      %v7944 = vadd.f32 %v7924, %v7312
      %v7945 = vadd.f32 %v7928, %v7315
      %v7946 = vadd.f32 %v7932, %v7318
      %v7947 = vadd.f32 %v7936, %v7321
      %v7948 = vadd.f32 %v7940, %v7324
      %v7957 = vlaneseq
      %v7958 = vshrl.u32 %v7957, 7
      %v7959 = vsub.s32 0, %v7958
      %v7960 = vrot.slane %v7395, %v7959
      %s7962 = sor.u32 256, 255
      %7963 = vbcast.lane.b32.xlu0 %v7960, %s7962
      %v7964 = vpop.permute.xlu0 %7963
      %v7965 = vlaneseq
      %v7966 = vshrl.u32 %v7965, 7
      %v7967 = vsub.s32 0, %v7966
      %v7968 = vrot.slane %v7468, %v7967
      %s7970 = sor.u32 256, 255
      %7971 = vbcast.lane.b32.xlu0 %v7968, %s7970
      %v7972 = vpop.permute.xlu0 %7971
      %v7973 = vlaneseq
      %v7974 = vshrl.u32 %v7973, 7
      %v7975 = vsub.s32 0, %v7974
      %v7976 = vrot.slane %v7541, %v7975
      %s7978 = sor.u32 256, 255
      %7979 = vbcast.lane.b32.xlu0 %v7976, %s7978
      %v7980 = vpop.permute.xlu0 %7979
      %v7981 = vlaneseq
      %v7982 = vshrl.u32 %v7981, 7
      %v7983 = vsub.s32 0, %v7982
      %v7984 = vrot.slane %v7614, %v7983
      %s7986 = sor.u32 256, 255
      %7987 = vbcast.lane.b32.xlu0 %v7984, %s7986
      %v7988 = vpop.permute.xlu0 %7987
      %v7989 = vlaneseq
      %v7990 = vshrl.u32 %v7989, 7
      %v7991 = vsub.s32 0, %v7990
      %v7992 = vrot.slane %v7687, %v7991
      %s7994 = sor.u32 256, 255
      %7995 = vbcast.lane.b32.xlu0 %v7992, %s7994
      %v7996 = vpop.permute.xlu0 %7995
      %v7997 = vlaneseq
      %v7998 = vshrl.u32 %v7997, 7
      %v7999 = vsub.s32 0, %v7998
      %v8000 = vrot.slane %v7760, %v7999
      %s8002 = sor.u32 256, 255
      %8003 = vbcast.lane.b32.xlu0 %v8000, %s8002
      %v8004 = vpop.permute.xlu0 %8003
      %v8005 = vlaneseq
      %v8006 = vshrl.u32 %v8005, 7
      %v8007 = vsub.s32 0, %v8006
      %v8008 = vrot.slane %v7833, %v8007
      %s8010 = sor.u32 256, 255
      %8011 = vbcast.lane.b32.xlu0 %v8008, %s8010
      %v8012 = vpop.permute.xlu0 %8011
      %v8013 = vlaneseq
      %v8014 = vshrl.u32 %v8013, 7
      %v8015 = vsub.s32 0, %v8014
      %v8016 = vrot.slane %v7906, %v8015
      %s8018 = sor.u32 256, 255
      %8019 = vbcast.lane.b32.xlu0 %v8016, %s8018
      %v8020 = vpop.permute.xlu0 %8019
      %v8029 = vsub.f32 %v7941, %v7964
      %v8030 = vsub.f32 %v7942, %v7972
      %v8031 = vsub.f32 %v7943, %v7980
      %v8032 = vsub.f32 %v7944, %v7988
      %v8033 = vsub.f32 %v7945, %v7996
      %v8034 = vsub.f32 %v7946, %v8004
      %v8035 = vsub.f32 %v7947, %v8012
      %v8036 = vsub.f32 %v7948, %v8020
      %v8037 = vmax.f32 %v8029, 1e-09
      %v8038 = vmax.f32 %v8030, 1e-09
      %v8039 = vmax.f32 %v8031, 1e-09
      %v8040 = vmax.f32 %v8032, 1e-09
      %v8041 = vmax.f32 %v8033, 1e-09
      %v8042 = vmax.f32 %v8034, 1e-09
      %v8043 = vmax.f32 %v8035, 1e-09
      %v8044 = vmax.f32 %v8036, 1e-09
      %8053 = vset.pattern.permute.xlu0 0
      %8054 = vperm.xlu0 %8053, %v8037
      %v8055 = vpop.permute.xlu0 %8054
      %8056 = vset.pattern.permute.xlu0 0
      %8057 = vperm.xlu0 %8056, %v8038
      %v8058 = vpop.permute.xlu0 %8057
      %8059 = vset.pattern.permute.xlu0 0
      %8060 = vperm.xlu0 %8059, %v8039
      %v8061 = vpop.permute.xlu0 %8060
      %8062 = vset.pattern.permute.xlu0 0
      %8063 = vperm.xlu0 %8062, %v8040
      %v8064 = vpop.permute.xlu0 %8063
      %8065 = vset.pattern.permute.xlu0 0
      %8066 = vperm.xlu0 %8065, %v8041
      %v8067 = vpop.permute.xlu0 %8066
      %8068 = vset.pattern.permute.xlu0 0
      %8069 = vperm.xlu0 %8068, %v8042
      %v8070 = vpop.permute.xlu0 %8069
      %8071 = vset.pattern.permute.xlu0 0
      %8072 = vperm.xlu0 %8071, %v8043
      %v8073 = vpop.permute.xlu0 %8072
      %8074 = vset.pattern.permute.xlu0 0
      %8075 = vperm.xlu0 %8074, %v8044
      %v8076 = vpop.permute.xlu0 %8075
      %v8077 = vadd.s32 %v7210, 1
      %v8078 = vlaneseq
      %v8079 = vshrl.u32 %v8078, 7
      %v8080 = vsub.s32 %v8077, %v8079
      %v8081 = vrot.slane %v8055, %v8080
      %v8082 = vlaneseq
      %v8083 = vshrl.u32 %v8082, 7
      %v8084 = vsub.s32 %v8077, %v8083
      %v8085 = vrot.slane %v8058, %v8084
      %v8086 = vlaneseq
      %v8087 = vshrl.u32 %v8086, 7
      %v8088 = vsub.s32 %v8077, %v8087
      %v8089 = vrot.slane %v8061, %v8088
      %v8090 = vlaneseq
      %v8091 = vshrl.u32 %v8090, 7
      %v8092 = vsub.s32 %v8077, %v8091
      %v8093 = vrot.slane %v8064, %v8092
      %v8094 = vlaneseq
      %v8095 = vshrl.u32 %v8094, 7
      %v8096 = vsub.s32 %v8077, %v8095
      %v8097 = vrot.slane %v8067, %v8096
      %v8098 = vlaneseq
      %v8099 = vshrl.u32 %v8098, 7
      %v8100 = vsub.s32 %v8077, %v8099
      %v8101 = vrot.slane %v8070, %v8100
      %v8102 = vlaneseq
      %v8103 = vshrl.u32 %v8102, 7
      %v8104 = vsub.s32 %v8077, %v8103
      %v8105 = vrot.slane %v8073, %v8104
      %v8106 = vlaneseq
      %v8107 = vshrl.u32 %v8106, 7
      %v8108 = vsub.s32 %v8077, %v8107
      %v8109 = vrot.slane %v8076, %v8108
      %v8118 = vrcp.pop %v8081
      %v8119 = vmul.f32 %v7395, %v8118
      %v8120 = vrcp.pop %v8085
      %v8121 = vmul.f32 %v7468, %v8120
      %v8122 = vrcp.pop %v8089
      %v8123 = vmul.f32 %v7541, %v8122
      %v8124 = vrcp.pop %v8093
      %v8125 = vmul.f32 %v7614, %v8124
      %v8126 = vrcp.pop %v8097
      %v8127 = vmul.f32 %v7687, %v8126
      %v8128 = vrcp.pop %v8101
      %v8129 = vmul.f32 %v7760, %v8128
      %v8130 = vrcp.pop %v8105
      %v8131 = vmul.f32 %v7833, %v8130
      %v8132 = vrcp.pop %v8109
      %v8133 = vmul.f32 %v7906, %v8132
      %v8134 = vmul.f32 %v7284, 0.5
      %v8135 = vmul.f32 %v7285, 0.5
      %v8136 = vmul.f32 %v7286, 0.5
      %v8137 = vmul.f32 %v7287, 0.5
      %v8138 = vmul.f32 %v7288, 0.5
      %v8139 = vmul.f32 %v7289, 0.5
      %v8140 = vmul.f32 %v7290, 0.5
      %v8141 = vmul.f32 %v7291, 0.5
      %v8142 = vmul.f32 %v8119, 0.5
      %v8143 = vmul.f32 %v8121, 0.5
      %v8144 = vmul.f32 %v8123, 0.5
      %v8145 = vmul.f32 %v8125, 0.5
      %v8146 = vmul.f32 %v8127, 0.5
      %v8147 = vmul.f32 %v8129, 0.5
      %v8148 = vmul.f32 %v8131, 0.5
      %v8149 = vmul.f32 %v8133, 0.5
      %v8150 = vadd.f32 %v8134, %v8142
      %v8151 = vadd.f32 %v8135, %v8143
      %v8152 = vadd.f32 %v8136, %v8144
      %v8153 = vadd.f32 %v8137, %v8145
      %v8154 = vadd.f32 %v8138, %v8146
      %v8155 = vadd.f32 %v8139, %v8147
      %v8156 = vadd.f32 %v8140, %v8148
      %v8157 = vadd.f32 %v8141, %v8149
      %v8166 = vrot.slane %v8151, 7
      %v8167 = vsel %vm3259, %v8166, %v8150
      %v8168 = vrot.slane %v8152, 6
      %v8169 = vsel %vm3262, %v8168, %v8167
      %v8170 = vrot.slane %v8153, 5
      %v8171 = vsel %vm3265, %v8170, %v8169
      %v8172 = vrot.slane %v8154, 4
      %v8173 = vsel %vm6969, %v8172, %v8171
      %v8174 = vrot.slane %v8155, 3
      %v8175 = vsel %vm6972, %v8174, %v8173
      %v8176 = vrot.slane %v8156, 2
      %v8177 = vsel %vm6975, %v8176, %v8175
      %v8178 = vrot.slane %v8157, 1
      %v8179 = vsel %vm6978, %v8178, %v8177
      %vm8181 = vcmask 31744
      %v8182 = vsel %vm8181, %v8179, -inf
      %8183 = vmax.xlane.f32.xlu0 %v8182
      %v8184 = vpop.xlane.xlu0 %8183
      %8185 = vmax.index.xlane.f32.xlu0 %v8182
      %v8186 = vpop.xlane.xlu0 %8185
      %vm8187 = vcmp.eq.s32.totalorder %v7210, %v8186
      %v8188 = vsel %vm8187, 1, 0
      %v8189 = vcvt.s32.f32 %v8188
      %v8190 = vld [vmem:[%s3] sm:$0x1]
      %v8192 = vlaneseq
      %v8193 = vshrl.u32 %v8192, 7
      %v8194 = vsub.s32 0, %v8193
      %v8195 = vrot.slane %v8190, %v8194
      %v8197 = vmul.f32 %v8189, %v8195
      %v8198 = vsel %vm8181, %v8197, 0.0
      %8199 = vadd.xlane.f32.xlu0 %v8198
      %v8200 = vpop.xlane.xlu0 %8199
      %v8201 = vmul.f32 %v8184, %v8200
      %vm8202 = vcmask 7168
      %8203 = vst.msk [vmem:[%s244] sm:$0xff] %vm8202, %v8201
      %p8204 = scmp.lt.s32.totalorder %s15, 1
      %s8205 = scalar_select %p8204, %s15, 1
      %s8206 = smul.addr %s8205, 8
      %s8207 = scalar_lea.vmem %s4, %s8206
      // Predicated region
      $region37: #{tpu_custom_call.1} parent=35 // pred_check
        %p8208 = pneg %p132
      $region38: #{tpu_custom_call.1} parent=35 // pred_check_branch
        %8210 = sbr.rel (%p8208) target = $region40
      $region39: #{tpu_custom_call.1} parent=35 // pred_region
        _
      $region40: #{tpu_custom_call.1} parent=35 // pred_fallthru
        _
    $region36: #{tpu_custom_call.1} parent=5 // pred_fallthru
      _
    %p8211 = scmp.le.s32.totalorder 2, %s10
    // Predicated region
    $region41: #{tpu_custom_call.1} parent=5 // pred_check
      %p8212 = pneg %p8211
    $region42: #{tpu_custom_call.1} parent=5 // pred_check_branch
      %8214 = sbr.rel (%p8212) target = $region44
    $region43: #{tpu_custom_call.1} parent=5 // pred_region
      %s8215 = ssub.s32 %s10, 2
      // Predicated region
      $region45: #{tpu_custom_call.1} parent=43 // pred_check
        %p8216 = pneg %p138
      $region46: #{tpu_custom_call.1} parent=43 // pred_check_branch
        %8218 = sbr.rel (%p8216) target = $region48
      $region47: #{tpu_custom_call.1} parent=43 // pred_region
        %p8219 = scmp.lt.s32.totalorder %s16, 1
        %s8220 = scalar_select %p8219, %s16, 1
        %s8221 = smul.addr %s8220, 8
        %s8222 = scalar_lea.vmem %s4, %s8221
      $region48: #{tpu_custom_call.1} parent=43 // pred_fallthru
        _
    $region44: #{tpu_custom_call.1} parent=5 // pred_fallthru
      _
  $region6: #{tpu_custom_call.1} parent=0 // loop_footer
    %s14 = sadd.s32 1, %s10
  $region7: #{tpu_custom_call.1} parent=0 // loop_footer_branch
    %9 = sbr.rel target = $region3
  $region8: #{tpu_custom_call.1} parent=0 // loop_exit
    _

</llo_original>
